<compile_context>
chip_gen: v6e
topology: v6e:2x2x1
jax: 0.10.0
libtpu: 0.0.40
codegen_flags: <defaults>
</compile_context>

<pallas_src>
import math

import jax
import jax.numpy as jnp
from jax.experimental import pallas as pl
from jax.experimental.pallas import tpu as pltpu

# ---- module hyper-parameters (PyTorch defaults) ----
POINT_DIM = 256
TEXT_DIM = 768
JOINT_DIM = 512
NUM_HEADS = 8
HEAD_DIM = JOINT_DIM // NUM_HEADS


def _cross_modal_attn_kernel(
    point_ref,   # [TB, Np, Pd]
    text_ref,    # [TB, Nt, Td]
    wpq_ref,     # [Pd, E]   fused point_proj -> q_proj (softmax scale folded in)
    bpq_ref,     # [1, E]
    wtkv_ref,    # [Td, 2E]  fused text_proj -> [k_proj | v_proj]
    btkv_ref,    # [1, 2E]
    wo_ref,      # [E, E]    attention output projection (pre-transposed)
    bo_ref,      # [1, E]
    out_ref,     # [TB, Np, E]
):
    TB, Np, Pd = point_ref.shape
    _, Nt, Td = text_ref.shape
    E = JOINT_DIM

    # Flatten the batch block into the matmul M dimension -> MXU-friendly shapes.
    pt = point_ref[...].reshape(TB * Np, Pd)
    tx = text_ref[...].reshape(TB * Nt, Td)

    # Fused input projections (scale already folded into wpq/bpq).
    q = jnp.dot(pt, wpq_ref[...], preferred_element_type=jnp.float32) + bpq_ref[...]
    kv = jnp.dot(tx, wtkv_ref[...], preferred_element_type=jnp.float32) + btkv_ref[...]
    k = kv[:, :E]          # lane slices at the 512 boundary (cheap)
    v = kv[:, E:]

    acc = jnp.zeros((TB * Np, E), jnp.float32)

    # Static loop over heads: attention batched over TB per head, then the
    # output projection is applied per head and accumulated on the MXU
    # (no [M, E] concatenate, no explicit k transpose).
    for h in range(NUM_HEADS):
        lo = h * HEAD_DIM
        qh = q[:, lo:lo + HEAD_DIM].reshape(TB, Np, HEAD_DIM)
        kh = k[:, lo:lo + HEAD_DIM].reshape(TB, Nt, HEAD_DIM)
        vh = v[:, lo:lo + HEAD_DIM].reshape(TB, Nt, HEAD_DIM)

        s = jnp.einsum("bqd,bkd->bqk", qh, kh,
                       preferred_element_type=jnp.float32)        # [TB, Np, Nt]
        s = s - jnp.max(s, axis=-1, keepdims=True)
        p = jnp.exp(s)
        denom = jnp.sum(p, axis=-1, keepdims=True)
        # approx=True rides the otherwise-idle EUP slot; kept exact here to
        # hold the tight 1e-4 comparison against the fp32 reference.
        p = p * pl.reciprocal(denom, approx=False)

        oh = jnp.einsum("bqk,bkd->bqd", p, vh,
                        preferred_element_type=jnp.float32)        # [TB, Np, hd]
        acc = acc + jnp.dot(oh.reshape(TB * Np, HEAD_DIM),
                            wo_ref[lo:lo + HEAD_DIM, :],
                            preferred_element_type=jnp.float32)

    out = acc + bo_ref[...]
    out_ref[...] = out.reshape(TB, Np, E).astype(out_ref.dtype)


def _fuse_params(params):
    """Exact algebraic fusion of the cascaded Linear layers (done once, outside
    the kernel): point_proj->q_proj and text_proj->{k,v}_proj, with the 1/sqrt(hd)
    softmax scale folded into the q path."""
    Wp, bp = params["point_proj"]   # [E, Pd], [E]
    Wt, bt = params["text_proj"]    # [E, Td], [E]
    Wq, bq = params["q"]            # [E, E],  [E]
    Wk, bk = params["k"]
    Wv, bv = params["v"]
    Wo, bo = params["out_proj"]

    scale = 1.0 / math.sqrt(HEAD_DIM)
    # q = (x @ Wp.T + bp) @ Wq.T + bq  ==  x @ (Wp.T @ Wq.T) + (bp @ Wq.T + bq)
    w_pq = (Wp.T @ Wq.T) * scale                        # [Pd, E]
    b_pq = (bp @ Wq.T + bq) * scale                     # [E]
    w_kv = jnp.concatenate([Wk.T, Wv.T], axis=1)        # [E, 2E]
    w_tkv = Wt.T @ w_kv                                 # [Td, 2E]
    b_tkv = bt @ w_kv + jnp.concatenate([bk, bv])       # [2E]
    return (w_pq, b_pq.reshape(1, -1),
            w_tkv, b_tkv.reshape(1, -1),
            Wo.T, bo.reshape(1, -1))


def cross_modal_attention(point_features, text_features, params, *, tile_b=None):
    """point_features: [B, Np, POINT_DIM], text_features: [B, Nt, TEXT_DIM]."""
    B, Np, Pd = point_features.shape
    _, Nt, Td = text_features.shape
    E = JOINT_DIM

    if tile_b is None:
        # Aim for >= 256 rows per projection matmul (v6e/v7x MXU); cap at B so a
        # tiny batch collapses to a single grid step.
        tile_b = max(1, min(B, pl.cdiv(256, Np)))
    grid_b = pl.cdiv(B, tile_b)
    b_pad = grid_b * tile_b
    if b_pad != B:
        pad = b_pad - B
        point_features = jnp.pad(point_features, ((0, pad), (0, 0), (0, 0)))
        text_features = jnp.pad(text_features, ((0, pad), (0, 0), (0, 0)))

    w_args = _fuse_params(params)

    def _const_spec(shape):
        zeros = (0,) * len(shape)
        return pl.BlockSpec(shape, lambda b, _z=zeros: _z)

    in_specs = [
        pl.BlockSpec((tile_b, Np, Pd), lambda b: (b, 0, 0)),
        pl.BlockSpec((tile_b, Nt, Td), lambda b: (b, 0, 0)),
    ] + [_const_spec(w.shape) for w in w_args]

    out_spec = pl.BlockSpec((tile_b, Np, E), lambda b: (b, 0, 0))

    out = pl.pallas_call(
        _cross_modal_attn_kernel,
        out_shape=jax.ShapeDtypeStruct((b_pad, Np, E), jnp.float32),
        grid_spec=pltpu.PrefetchScalarGridSpec(
            num_scalar_prefetch=0,
            grid=(grid_b,),
            in_specs=in_specs,
            out_specs=out_spec,
        ),
        compiler_params=pltpu.CompilerParams(
            dimension_semantics=("parallel",),
            vmem_limit_bytes=32 << 20,   # actual need ~16 MiB; safe on v7x (64 MiB VMEM)
        ),
    )(point_features, text_features, *w_args)

    if b_pad != B:
        out = out[:B]
    return out


def _reference(point_features, text_features, params):
    """Pure-JAX reference mirroring the PyTorch forward pass (unfused)."""
    Wp, bp = params["point_proj"]
    Wt, bt = params["text_proj"]
    Wq, bq = params["q"]
    Wk, bk = params["k"]
    Wv, bv = params["v"]
    Wo, bo = params["out_proj"]

    q_in = point_features @ Wp.T + bp
    kv_in = text_features @ Wt.T + bt
    q = q_in @ Wq.T + bq
    k = kv_in @ Wk.T + bk
    v = kv_in @ Wv.T + bv

    B, Np, E = q.shape
    Nt = k.shape[1]
    qh = q.reshape(B, Np, NUM_HEADS, HEAD_DIM).transpose(0, 2, 1, 3)
    kh = k.reshape(B, Nt, NUM_HEADS, HEAD_DIM).transpose(0, 2, 1, 3)
    vh = v.reshape(B, Nt, NUM_HEADS, HEAD_DIM).transpose(0, 2, 1, 3)
    s = jnp.einsum("bhqd,bhkd->bhqk", qh, kh) / math.sqrt(HEAD_DIM)
    p = jax.nn.softmax(s, axis=-1)
    o = jnp.einsum("bhqk,bhkd->bhqd", p, vh)
    o = o.transpose(0, 2, 1, 3).reshape(B, Np, E)
    return o @ Wo.T + bo


def _init_params(key):
    """Deterministic synthetic parameters (same shapes as the PyTorch module)."""
    ks = jax.random.split(key, 12)

    def lin(kw, kb, out_dim, in_dim):
        W = jax.random.normal(kw, (out_dim, in_dim), jnp.float32) * 0.02
        b = jax.random.normal(kb, (out_dim,), jnp.float32) * 0.02
        return W, b

    return {
        "point_proj": lin(ks[0], ks[1], JOINT_DIM, POINT_DIM),
        "text_proj":  lin(ks[2], ks[3], JOINT_DIM, TEXT_DIM),
        # in_proj_weight (3E, E) of nn.MultiheadAttention, split into q/k/v
        "q": lin(ks[4], ks[5], JOINT_DIM, JOINT_DIM),
        "k": lin(ks[6], ks[7], JOINT_DIM, JOINT_DIM),
        "v": lin(ks[8], ks[9], JOINT_DIM, JOINT_DIM),
        "out_proj": lin(ks[10], ks[11], JOINT_DIM, JOINT_DIM),
    }


if __name__ == "__main__":
    key = jax.random.PRNGKey(0)
    kp, kt, kparam = jax.random.split(key, 3)

    B, Np, Nt = 2, 8, 8
    point_features = jax.random.normal(kp, (B, Np, POINT_DIM), jnp.float32)
    text_features = jax.random.normal(kt, (B, Nt, TEXT_DIM), jnp.float32)
    params = _init_params(kparam)

    out = cross_modal_attention(point_features, text_features, params)
    out = jax.block_until_ready(out)
    ref = _reference(point_features, text_features, params)
    assert out.shape == (B, Np, JOINT_DIM)
    assert jnp.allclose(out, ref, atol=1e-4, rtol=1e-4), "mismatch vs JAX reference"

    # Also exercise the multi-step grid + batch-padding path.
    kp2, kt2 = jax.random.split(jax.random.PRNGKey(1))
    B2 = 5
    pf2 = jax.random.normal(kp2, (B2, Np, POINT_DIM), jnp.float32)
    tf2 = jax.random.normal(kt2, (B2, Nt, TEXT_DIM), jnp.float32)
    out2 = jax.block_until_ready(cross_modal_attention(pf2, tf2, params, tile_b=2))
    ref2 = _reference(pf2, tf2, params)
    assert out2.shape == (B2, Np, JOINT_DIM)
    assert jnp.allclose(out2, ref2, atol=1e-4, rtol=1e-4), "mismatch (padded grid path)"

    print("KERNEL_OK")
</pallas_src>

<mosaic_0001>
module attributes {stable_mosaic.version = 11 : i64} {
  func.func @_cross_modal_attn_kernel(%arg0: i32, %arg1: memref<2x8x256xf32, #tpu.memory_space<vmem>>, %arg2: memref<2x8x768xf32, #tpu.memory_space<vmem>>, %arg3: memref<256x512xf32, #tpu.memory_space<vmem>>, %arg4: memref<1x512xf32, #tpu.memory_space<vmem>>, %arg5: memref<768x1024xf32, #tpu.memory_space<vmem>>, %arg6: memref<1x1024xf32, #tpu.memory_space<vmem>>, %arg7: memref<512x512xf32, #tpu.memory_space<vmem>>, %arg8: memref<1x512xf32, #tpu.memory_space<vmem>>, %arg9: memref<2x8x512xf32, #tpu.memory_space<vmem>>) attributes {dimension_semantics = [#tpu.dimension_semantics<parallel>], iteration_bounds = array<i64: 1>, scalar_prefetch = 0 : i64, scratch_operands = 0 : i64, tpu.core_type = #tpu.core_type<tc>, window_params = [{transform_indices = @transform_0, window_bounds = array<i64: 2, 8, 256>}, {transform_indices = @transform_1, window_bounds = array<i64: 2, 8, 768>}, {pipeline_mode = #tpu.pipeline_mode<synchronous>, transform_indices = @transform_2, window_bounds = array<i64: 256, 512>}, {pipeline_mode = #tpu.pipeline_mode<synchronous>, transform_indices = @transform_3, window_bounds = array<i64: 1, 512>}, {pipeline_mode = #tpu.pipeline_mode<synchronous>, transform_indices = @transform_4, window_bounds = array<i64: 768, 1024>}, {pipeline_mode = #tpu.pipeline_mode<synchronous>, transform_indices = @transform_5, window_bounds = array<i64: 1, 1024>}, {pipeline_mode = #tpu.pipeline_mode<synchronous>, transform_indices = @transform_6, window_bounds = array<i64: 512, 512>}, {pipeline_mode = #tpu.pipeline_mode<synchronous>, transform_indices = @transform_7, window_bounds = array<i64: 1, 512>}, {transform_indices = @transform_8, window_bounds = array<i64: 2, 8, 512>}]} {
    %c0 = arith.constant 0 : index
    %c0_0 = arith.constant 0 : index
    %c0_1 = arith.constant 0 : index
    %0 = vector.load %arg1[%c0, %c0_0, %c0_1] : memref<2x8x256xf32, #tpu.memory_space<vmem>>, vector<2x8x256xf32>
    %1 = vector.shape_cast %0 : vector<2x8x256xf32> to vector<16x256xf32>
    %c0_2 = arith.constant 0 : index
    %c0_3 = arith.constant 0 : index
    %c0_4 = arith.constant 0 : index
    %2 = vector.load %arg2[%c0_2, %c0_3, %c0_4] : memref<2x8x768xf32, #tpu.memory_space<vmem>>, vector<2x8x768xf32>
    %3 = vector.shape_cast %2 : vector<2x8x768xf32> to vector<16x768xf32>
    %c0_5 = arith.constant 0 : index
    %c0_6 = arith.constant 0 : index
    %4 = vector.load %arg3[%c0_5, %c0_6] : memref<256x512xf32, #tpu.memory_space<vmem>>, vector<256x512xf32>
    %cst = arith.constant dense<0.000000e+00> : vector<16x512xf32>
    %5 = tpu.matmul %1, %4, %cst {dimension_numbers = #tpu.dot_dimension_numbers<[1], [0], [0], [1], [0, 0, 1, 1], [], []>} : vector<16x256xf32>, vector<256x512xf32>, vector<16x512xf32> -> vector<16x512xf32>
    %c0_7 = arith.constant 0 : index
    %c0_8 = arith.constant 0 : index
    %6 = vector.load %arg4[%c0_7, %c0_8] : memref<1x512xf32, #tpu.memory_space<vmem>>, vector<1x512xf32>
    %7 = vector.broadcast %6 : vector<1x512xf32> to vector<16x512xf32>
    %8 = arith.addf %5, %7 : vector<16x512xf32>
    %c0_9 = arith.constant 0 : index
    %c0_10 = arith.constant 0 : index
    %9 = vector.load %arg5[%c0_9, %c0_10] : memref<768x1024xf32, #tpu.memory_space<vmem>>, vector<768x1024xf32>
    %cst_11 = arith.constant dense<0.000000e+00> : vector<16x1024xf32>
    %10 = tpu.matmul %3, %9, %cst_11 {dimension_numbers = #tpu.dot_dimension_numbers<[1], [0], [0], [1], [0, 0, 1, 1], [], []>} : vector<16x768xf32>, vector<768x1024xf32>, vector<16x1024xf32> -> vector<16x1024xf32>
    %c0_12 = arith.constant 0 : index
    %c0_13 = arith.constant 0 : index
    %11 = vector.load %arg6[%c0_12, %c0_13] : memref<1x1024xf32, #tpu.memory_space<vmem>>, vector<1x1024xf32>
    %12 = vector.broadcast %11 : vector<1x1024xf32> to vector<16x1024xf32>
    %13 = arith.addf %10, %12 : vector<16x1024xf32>
    %14 = vector.extract_strided_slice %13 {offsets = [0, 0], sizes = [16, 512], strides = [1, 1]} : vector<16x1024xf32> to vector<16x512xf32>
    %15 = vector.extract_strided_slice %13 {offsets = [0, 512], sizes = [16, 512], strides = [1, 1]} : vector<16x1024xf32> to vector<16x512xf32>
    %cst_14 = arith.constant 0.000000e+00 : f32
    %16 = vector.broadcast %cst_14 : f32 to vector<16x512xf32>
    %17 = vector.extract_strided_slice %8 {offsets = [0, 0], sizes = [16, 64], strides = [1, 1]} : vector<16x512xf32> to vector<16x64xf32>
    %18 = vector.shape_cast %17 : vector<16x64xf32> to vector<2x8x64xf32>
    %19 = vector.extract_strided_slice %14 {offsets = [0, 0], sizes = [16, 64], strides = [1, 1]} : vector<16x512xf32> to vector<16x64xf32>
    %20 = vector.shape_cast %19 : vector<16x64xf32> to vector<2x8x64xf32>
    %21 = vector.extract_strided_slice %15 {offsets = [0, 0], sizes = [16, 64], strides = [1, 1]} : vector<16x512xf32> to vector<16x64xf32>
    %22 = vector.shape_cast %21 : vector<16x64xf32> to vector<2x8x64xf32>
    "tpu.trace_start"() <{level = 10 : i32, message = "bqd,bkd->bqk"}> : () -> ()
    %cst_15 = arith.constant dense<0.000000e+00> : vector<2x8x8xf32>
    %23 = tpu.matmul %18, %20, %cst_15 {dimension_numbers = #tpu.dot_dimension_numbers<[2], [2], [1], [1], [0, 0, 0, 1, 1, 1], [0], [0]>} : vector<2x8x64xf32>, vector<2x8x64xf32>, vector<2x8x8xf32> -> vector<2x8x8xf32>
    "tpu.trace_stop"() : () -> ()
    %cst_16 = arith.constant dense<0xFF800000> : vector<2x8xf32>
    %24 = vector.multi_reduction <maximumf>, %23, %cst_16 [2] : vector<2x8x8xf32> to vector<2x8xf32>
    %25 = vector.shape_cast %24 : vector<2x8xf32> to vector<2x8x1xf32>
    %26 = vector.broadcast %25 : vector<2x8x1xf32> to vector<2x8x8xf32>
    %27 = arith.subf %23, %26 : vector<2x8x8xf32>
    %28 = math.exp %27 : vector<2x8x8xf32>
    %cst_17 = arith.constant dense<0.000000e+00> : vector<2x8xf32>
    %29 = vector.multi_reduction <add>, %28, %cst_17 [2] : vector<2x8x8xf32> to vector<2x8xf32>
    %30 = vector.shape_cast %29 : vector<2x8xf32> to vector<2x8x1xf32>
    %31 = tpu.reciprocal %30 : vector<2x8x1xf32> -> vector<2x8x1xf32>
    %32 = vector.broadcast %31 : vector<2x8x1xf32> to vector<2x8x8xf32>
    %33 = arith.mulf %28, %32 : vector<2x8x8xf32>
    "tpu.trace_start"() <{level = 10 : i32, message = "bqk,bkd->bqd"}> : () -> ()
    %cst_18 = arith.constant dense<0.000000e+00> : vector<2x8x64xf32>
    %34 = tpu.matmul %33, %22, %cst_18 {dimension_numbers = #tpu.dot_dimension_numbers<[2], [1], [1], [2], [0, 0, 0, 1, 1, 2], [0], [0]>} : vector<2x8x8xf32>, vector<2x8x64xf32>, vector<2x8x64xf32> -> vector<2x8x64xf32>
    "tpu.trace_stop"() : () -> ()
    %35 = vector.shape_cast %34 : vector<2x8x64xf32> to vector<16x64xf32>
    %c0_19 = arith.constant 0 : index
    %c0_20 = arith.constant 0 : index
    %36 = vector.load %arg7[%c0_19, %c0_20] : memref<512x512xf32, #tpu.memory_space<vmem>>, vector<64x512xf32>
    %cst_21 = arith.constant dense<0.000000e+00> : vector<16x512xf32>
    %37 = tpu.matmul %35, %36, %cst_21 {dimension_numbers = #tpu.dot_dimension_numbers<[1], [0], [0], [1], [0, 0, 1, 1], [], []>} : vector<16x64xf32>, vector<64x512xf32>, vector<16x512xf32> -> vector<16x512xf32>
    %38 = arith.addf %16, %37 : vector<16x512xf32>
    %39 = vector.extract_strided_slice %8 {offsets = [0, 64], sizes = [16, 64], strides = [1, 1]} : vector<16x512xf32> to vector<16x64xf32>
    %40 = vector.shape_cast %39 : vector<16x64xf32> to vector<2x8x64xf32>
    %41 = vector.extract_strided_slice %14 {offsets = [0, 64], sizes = [16, 64], strides = [1, 1]} : vector<16x512xf32> to vector<16x64xf32>
    %42 = vector.shape_cast %41 : vector<16x64xf32> to vector<2x8x64xf32>
    %43 = vector.extract_strided_slice %15 {offsets = [0, 64], sizes = [16, 64], strides = [1, 1]} : vector<16x512xf32> to vector<16x64xf32>
    %44 = vector.shape_cast %43 : vector<16x64xf32> to vector<2x8x64xf32>
    "tpu.trace_start"() <{level = 10 : i32, message = "bqd,bkd->bqk"}> : () -> ()
    %cst_22 = arith.constant dense<0.000000e+00> : vector<2x8x8xf32>
    %45 = tpu.matmul %40, %42, %cst_22 {dimension_numbers = #tpu.dot_dimension_numbers<[2], [2], [1], [1], [0, 0, 0, 1, 1, 1], [0], [0]>} : vector<2x8x64xf32>, vector<2x8x64xf32>, vector<2x8x8xf32> -> vector<2x8x8xf32>
    "tpu.trace_stop"() : () -> ()
    %cst_23 = arith.constant dense<0xFF800000> : vector<2x8xf32>
    %46 = vector.multi_reduction <maximumf>, %45, %cst_23 [2] : vector<2x8x8xf32> to vector<2x8xf32>
    %47 = vector.shape_cast %46 : vector<2x8xf32> to vector<2x8x1xf32>
    %48 = vector.broadcast %47 : vector<2x8x1xf32> to vector<2x8x8xf32>
    %49 = arith.subf %45, %48 : vector<2x8x8xf32>
    %50 = math.exp %49 : vector<2x8x8xf32>
    %cst_24 = arith.constant dense<0.000000e+00> : vector<2x8xf32>
    %51 = vector.multi_reduction <add>, %50, %cst_24 [2] : vector<2x8x8xf32> to vector<2x8xf32>
    %52 = vector.shape_cast %51 : vector<2x8xf32> to vector<2x8x1xf32>
    %53 = tpu.reciprocal %52 : vector<2x8x1xf32> -> vector<2x8x1xf32>
    %54 = vector.broadcast %53 : vector<2x8x1xf32> to vector<2x8x8xf32>
    %55 = arith.mulf %50, %54 : vector<2x8x8xf32>
    "tpu.trace_start"() <{level = 10 : i32, message = "bqk,bkd->bqd"}> : () -> ()
    %cst_25 = arith.constant dense<0.000000e+00> : vector<2x8x64xf32>
    %56 = tpu.matmul %55, %44, %cst_25 {dimension_numbers = #tpu.dot_dimension_numbers<[2], [1], [1], [2], [0, 0, 0, 1, 1, 2], [0], [0]>} : vector<2x8x8xf32>, vector<2x8x64xf32>, vector<2x8x64xf32> -> vector<2x8x64xf32>
    "tpu.trace_stop"() : () -> ()
    %57 = vector.shape_cast %56 : vector<2x8x64xf32> to vector<16x64xf32>
    %c64 = arith.constant 64 : index
    %c0_26 = arith.constant 0 : index
    %58 = vector.load %arg7[%c64, %c0_26] : memref<512x512xf32, #tpu.memory_space<vmem>>, vector<64x512xf32>
    %cst_27 = arith.constant dense<0.000000e+00> : vector<16x512xf32>
    %59 = tpu.matmul %57, %58, %cst_27 {dimension_numbers = #tpu.dot_dimension_numbers<[1], [0], [0], [1], [0, 0, 1, 1], [], []>} : vector<16x64xf32>, vector<64x512xf32>, vector<16x512xf32> -> vector<16x512xf32>
    %60 = arith.addf %38, %59 : vector<16x512xf32>
    %61 = vector.extract_strided_slice %8 {offsets = [0, 128], sizes = [16, 64], strides = [1, 1]} : vector<16x512xf32> to vector<16x64xf32>
    %62 = vector.shape_cast %61 : vector<16x64xf32> to vector<2x8x64xf32>
    %63 = vector.extract_strided_slice %14 {offsets = [0, 128], sizes = [16, 64], strides = [1, 1]} : vector<16x512xf32> to vector<16x64xf32>
    %64 = vector.shape_cast %63 : vector<16x64xf32> to vector<2x8x64xf32>
    %65 = vector.extract_strided_slice %15 {offsets = [0, 128], sizes = [16, 64], strides = [1, 1]} : vector<16x512xf32> to vector<16x64xf32>
    %66 = vector.shape_cast %65 : vector<16x64xf32> to vector<2x8x64xf32>
    "tpu.trace_start"() <{level = 10 : i32, message = "bqd,bkd->bqk"}> : () -> ()
    %cst_28 = arith.constant dense<0.000000e+00> : vector<2x8x8xf32>
    %67 = tpu.matmul %62, %64, %cst_28 {dimension_numbers = #tpu.dot_dimension_numbers<[2], [2], [1], [1], [0, 0, 0, 1, 1, 1], [0], [0]>} : vector<2x8x64xf32>, vector<2x8x64xf32>, vector<2x8x8xf32> -> vector<2x8x8xf32>
    "tpu.trace_stop"() : () -> ()
    %cst_29 = arith.constant dense<0xFF800000> : vector<2x8xf32>
    %68 = vector.multi_reduction <maximumf>, %67, %cst_29 [2] : vector<2x8x8xf32> to vector<2x8xf32>
    %69 = vector.shape_cast %68 : vector<2x8xf32> to vector<2x8x1xf32>
    %70 = vector.broadcast %69 : vector<2x8x1xf32> to vector<2x8x8xf32>
    %71 = arith.subf %67, %70 : vector<2x8x8xf32>
    %72 = math.exp %71 : vector<2x8x8xf32>
    %cst_30 = arith.constant dense<0.000000e+00> : vector<2x8xf32>
    %73 = vector.multi_reduction <add>, %72, %cst_30 [2] : vector<2x8x8xf32> to vector<2x8xf32>
    %74 = vector.shape_cast %73 : vector<2x8xf32> to vector<2x8x1xf32>
    %75 = tpu.reciprocal %74 : vector<2x8x1xf32> -> vector<2x8x1xf32>
    %76 = vector.broadcast %75 : vector<2x8x1xf32> to vector<2x8x8xf32>
    %77 = arith.mulf %72, %76 : vector<2x8x8xf32>
    "tpu.trace_start"() <{level = 10 : i32, message = "bqk,bkd->bqd"}> : () -> ()
    %cst_31 = arith.constant dense<0.000000e+00> : vector<2x8x64xf32>
    %78 = tpu.matmul %77, %66, %cst_31 {dimension_numbers = #tpu.dot_dimension_numbers<[2], [1], [1], [2], [0, 0, 0, 1, 1, 2], [0], [0]>} : vector<2x8x8xf32>, vector<2x8x64xf32>, vector<2x8x64xf32> -> vector<2x8x64xf32>
    "tpu.trace_stop"() : () -> ()
    %79 = vector.shape_cast %78 : vector<2x8x64xf32> to vector<16x64xf32>
    %c128 = arith.constant 128 : index
    %c0_32 = arith.constant 0 : index
    %80 = vector.load %arg7[%c128, %c0_32] : memref<512x512xf32, #tpu.memory_space<vmem>>, vector<64x512xf32>
    %cst_33 = arith.constant dense<0.000000e+00> : vector<16x512xf32>
    %81 = tpu.matmul %79, %80, %cst_33 {dimension_numbers = #tpu.dot_dimension_numbers<[1], [0], [0], [1], [0, 0, 1, 1], [], []>} : vector<16x64xf32>, vector<64x512xf32>, vector<16x512xf32> -> vector<16x512xf32>
    %82 = arith.addf %60, %81 : vector<16x512xf32>
    %83 = vector.extract_strided_slice %8 {offsets = [0, 192], sizes = [16, 64], strides = [1, 1]} : vector<16x512xf32> to vector<16x64xf32>
    %84 = vector.shape_cast %83 : vector<16x64xf32> to vector<2x8x64xf32>
    %85 = vector.extract_strided_slice %14 {offsets = [0, 192], sizes = [16, 64], strides = [1, 1]} : vector<16x512xf32> to vector<16x64xf32>
    %86 = vector.shape_cast %85 : vector<16x64xf32> to vector<2x8x64xf32>
    %87 = vector.extract_strided_slice %15 {offsets = [0, 192], sizes = [16, 64], strides = [1, 1]} : vector<16x512xf32> to vector<16x64xf32>
    %88 = vector.shape_cast %87 : vector<16x64xf32> to vector<2x8x64xf32>
    "tpu.trace_start"() <{level = 10 : i32, message = "bqd,bkd->bqk"}> : () -> ()
    %cst_34 = arith.constant dense<0.000000e+00> : vector<2x8x8xf32>
    %89 = tpu.matmul %84, %86, %cst_34 {dimension_numbers = #tpu.dot_dimension_numbers<[2], [2], [1], [1], [0, 0, 0, 1, 1, 1], [0], [0]>} : vector<2x8x64xf32>, vector<2x8x64xf32>, vector<2x8x8xf32> -> vector<2x8x8xf32>
    "tpu.trace_stop"() : () -> ()
    %cst_35 = arith.constant dense<0xFF800000> : vector<2x8xf32>
    %90 = vector.multi_reduction <maximumf>, %89, %cst_35 [2] : vector<2x8x8xf32> to vector<2x8xf32>
    %91 = vector.shape_cast %90 : vector<2x8xf32> to vector<2x8x1xf32>
    %92 = vector.broadcast %91 : vector<2x8x1xf32> to vector<2x8x8xf32>
    %93 = arith.subf %89, %92 : vector<2x8x8xf32>
    %94 = math.exp %93 : vector<2x8x8xf32>
    %cst_36 = arith.constant dense<0.000000e+00> : vector<2x8xf32>
    %95 = vector.multi_reduction <add>, %94, %cst_36 [2] : vector<2x8x8xf32> to vector<2x8xf32>
    %96 = vector.shape_cast %95 : vector<2x8xf32> to vector<2x8x1xf32>
    %97 = tpu.reciprocal %96 : vector<2x8x1xf32> -> vector<2x8x1xf32>
    %98 = vector.broadcast %97 : vector<2x8x1xf32> to vector<2x8x8xf32>
    %99 = arith.mulf %94, %98 : vector<2x8x8xf32>
    "tpu.trace_start"() <{level = 10 : i32, message = "bqk,bkd->bqd"}> : () -> ()
    %cst_37 = arith.constant dense<0.000000e+00> : vector<2x8x64xf32>
    %100 = tpu.matmul %99, %88, %cst_37 {dimension_numbers = #tpu.dot_dimension_numbers<[2], [1], [1], [2], [0, 0, 0, 1, 1, 2], [0], [0]>} : vector<2x8x8xf32>, vector<2x8x64xf32>, vector<2x8x64xf32> -> vector<2x8x64xf32>
    "tpu.trace_stop"() : () -> ()
    %101 = vector.shape_cast %100 : vector<2x8x64xf32> to vector<16x64xf32>
    %c192 = arith.constant 192 : index
    %c0_38 = arith.constant 0 : index
    %102 = vector.load %arg7[%c192, %c0_38] : memref<512x512xf32, #tpu.memory_space<vmem>>, vector<64x512xf32>
    %cst_39 = arith.constant dense<0.000000e+00> : vector<16x512xf32>
    %103 = tpu.matmul %101, %102, %cst_39 {dimension_numbers = #tpu.dot_dimension_numbers<[1], [0], [0], [1], [0, 0, 1, 1], [], []>} : vector<16x64xf32>, vector<64x512xf32>, vector<16x512xf32> -> vector<16x512xf32>
    %104 = arith.addf %82, %103 : vector<16x512xf32>
    %105 = vector.extract_strided_slice %8 {offsets = [0, 256], sizes = [16, 64], strides = [1, 1]} : vector<16x512xf32> to vector<16x64xf32>
    %106 = vector.shape_cast %105 : vector<16x64xf32> to vector<2x8x64xf32>
    %107 = vector.extract_strided_slice %14 {offsets = [0, 256], sizes = [16, 64], strides = [1, 1]} : vector<16x512xf32> to vector<16x64xf32>
    %108 = vector.shape_cast %107 : vector<16x64xf32> to vector<2x8x64xf32>
    %109 = vector.extract_strided_slice %15 {offsets = [0, 256], sizes = [16, 64], strides = [1, 1]} : vector<16x512xf32> to vector<16x64xf32>
    %110 = vector.shape_cast %109 : vector<16x64xf32> to vector<2x8x64xf32>
    "tpu.trace_start"() <{level = 10 : i32, message = "bqd,bkd->bqk"}> : () -> ()
    %cst_40 = arith.constant dense<0.000000e+00> : vector<2x8x8xf32>
    %111 = tpu.matmul %106, %108, %cst_40 {dimension_numbers = #tpu.dot_dimension_numbers<[2], [2], [1], [1], [0, 0, 0, 1, 1, 1], [0], [0]>} : vector<2x8x64xf32>, vector<2x8x64xf32>, vector<2x8x8xf32> -> vector<2x8x8xf32>
    "tpu.trace_stop"() : () -> ()
    %cst_41 = arith.constant dense<0xFF800000> : vector<2x8xf32>
    %112 = vector.multi_reduction <maximumf>, %111, %cst_41 [2] : vector<2x8x8xf32> to vector<2x8xf32>
    %113 = vector.shape_cast %112 : vector<2x8xf32> to vector<2x8x1xf32>
    %114 = vector.broadcast %113 : vector<2x8x1xf32> to vector<2x8x8xf32>
    %115 = arith.subf %111, %114 : vector<2x8x8xf32>
    %116 = math.exp %115 : vector<2x8x8xf32>
    %cst_42 = arith.constant dense<0.000000e+00> : vector<2x8xf32>
    %117 = vector.multi_reduction <add>, %116, %cst_42 [2] : vector<2x8x8xf32> to vector<2x8xf32>
    %118 = vector.shape_cast %117 : vector<2x8xf32> to vector<2x8x1xf32>
    %119 = tpu.reciprocal %118 : vector<2x8x1xf32> -> vector<2x8x1xf32>
    %120 = vector.broadcast %119 : vector<2x8x1xf32> to vector<2x8x8xf32>
    %121 = arith.mulf %116, %120 : vector<2x8x8xf32>
    "tpu.trace_start"() <{level = 10 : i32, message = "bqk,bkd->bqd"}> : () -> ()
    %cst_43 = arith.constant dense<0.000000e+00> : vector<2x8x64xf32>
    %122 = tpu.matmul %121, %110, %cst_43 {dimension_numbers = #tpu.dot_dimension_numbers<[2], [1], [1], [2], [0, 0, 0, 1, 1, 2], [0], [0]>} : vector<2x8x8xf32>, vector<2x8x64xf32>, vector<2x8x64xf32> -> vector<2x8x64xf32>
    "tpu.trace_stop"() : () -> ()
    %123 = vector.shape_cast %122 : vector<2x8x64xf32> to vector<16x64xf32>
    %c256 = arith.constant 256 : index
    %c0_44 = arith.constant 0 : index
    %124 = vector.load %arg7[%c256, %c0_44] : memref<512x512xf32, #tpu.memory_space<vmem>>, vector<64x512xf32>
    %cst_45 = arith.constant dense<0.000000e+00> : vector<16x512xf32>
    %125 = tpu.matmul %123, %124, %cst_45 {dimension_numbers = #tpu.dot_dimension_numbers<[1], [0], [0], [1], [0, 0, 1, 1], [], []>} : vector<16x64xf32>, vector<64x512xf32>, vector<16x512xf32> -> vector<16x512xf32>
    %126 = arith.addf %104, %125 : vector<16x512xf32>
    %127 = vector.extract_strided_slice %8 {offsets = [0, 320], sizes = [16, 64], strides = [1, 1]} : vector<16x512xf32> to vector<16x64xf32>
    %128 = vector.shape_cast %127 : vector<16x64xf32> to vector<2x8x64xf32>
    %129 = vector.extract_strided_slice %14 {offsets = [0, 320], sizes = [16, 64], strides = [1, 1]} : vector<16x512xf32> to vector<16x64xf32>
    %130 = vector.shape_cast %129 : vector<16x64xf32> to vector<2x8x64xf32>
    %131 = vector.extract_strided_slice %15 {offsets = [0, 320], sizes = [16, 64], strides = [1, 1]} : vector<16x512xf32> to vector<16x64xf32>
    %132 = vector.shape_cast %131 : vector<16x64xf32> to vector<2x8x64xf32>
    "tpu.trace_start"() <{level = 10 : i32, message = "bqd,bkd->bqk"}> : () -> ()
    %cst_46 = arith.constant dense<0.000000e+00> : vector<2x8x8xf32>
    %133 = tpu.matmul %128, %130, %cst_46 {dimension_numbers = #tpu.dot_dimension_numbers<[2], [2], [1], [1], [0, 0, 0, 1, 1, 1], [0], [0]>} : vector<2x8x64xf32>, vector<2x8x64xf32>, vector<2x8x8xf32> -> vector<2x8x8xf32>
    "tpu.trace_stop"() : () -> ()
    %cst_47 = arith.constant dense<0xFF800000> : vector<2x8xf32>
    %134 = vector.multi_reduction <maximumf>, %133, %cst_47 [2] : vector<2x8x8xf32> to vector<2x8xf32>
    %135 = vector.shape_cast %134 : vector<2x8xf32> to vector<2x8x1xf32>
    %136 = vector.broadcast %135 : vector<2x8x1xf32> to vector<2x8x8xf32>
    %137 = arith.subf %133, %136 : vector<2x8x8xf32>
    %138 = math.exp %137 : vector<2x8x8xf32>
    %cst_48 = arith.constant dense<0.000000e+00> : vector<2x8xf32>
    %139 = vector.multi_reduction <add>, %138, %cst_48 [2] : vector<2x8x8xf32> to vector<2x8xf32>
    %140 = vector.shape_cast %139 : vector<2x8xf32> to vector<2x8x1xf32>
    %141 = tpu.reciprocal %140 : vector<2x8x1xf32> -> vector<2x8x1xf32>
    %142 = vector.broadcast %141 : vector<2x8x1xf32> to vector<2x8x8xf32>
    %143 = arith.mulf %138, %142 : vector<2x8x8xf32>
    "tpu.trace_start"() <{level = 10 : i32, message = "bqk,bkd->bqd"}> : () -> ()
    %cst_49 = arith.constant dense<0.000000e+00> : vector<2x8x64xf32>
    %144 = tpu.matmul %143, %132, %cst_49 {dimension_numbers = #tpu.dot_dimension_numbers<[2], [1], [1], [2], [0, 0, 0, 1, 1, 2], [0], [0]>} : vector<2x8x8xf32>, vector<2x8x64xf32>, vector<2x8x64xf32> -> vector<2x8x64xf32>
    "tpu.trace_stop"() : () -> ()
    %145 = vector.shape_cast %144 : vector<2x8x64xf32> to vector<16x64xf32>
    %c320 = arith.constant 320 : index
    %c0_50 = arith.constant 0 : index
    %146 = vector.load %arg7[%c320, %c0_50] : memref<512x512xf32, #tpu.memory_space<vmem>>, vector<64x512xf32>
    %cst_51 = arith.constant dense<0.000000e+00> : vector<16x512xf32>
    %147 = tpu.matmul %145, %146, %cst_51 {dimension_numbers = #tpu.dot_dimension_numbers<[1], [0], [0], [1], [0, 0, 1, 1], [], []>} : vector<16x64xf32>, vector<64x512xf32>, vector<16x512xf32> -> vector<16x512xf32>
    %148 = arith.addf %126, %147 : vector<16x512xf32>
    %149 = vector.extract_strided_slice %8 {offsets = [0, 384], sizes = [16, 64], strides = [1, 1]} : vector<16x512xf32> to vector<16x64xf32>
    %150 = vector.shape_cast %149 : vector<16x64xf32> to vector<2x8x64xf32>
    %151 = vector.extract_strided_slice %14 {offsets = [0, 384], sizes = [16, 64], strides = [1, 1]} : vector<16x512xf32> to vector<16x64xf32>
    %152 = vector.shape_cast %151 : vector<16x64xf32> to vector<2x8x64xf32>
    %153 = vector.extract_strided_slice %15 {offsets = [0, 384], sizes = [16, 64], strides = [1, 1]} : vector<16x512xf32> to vector<16x64xf32>
    %154 = vector.shape_cast %153 : vector<16x64xf32> to vector<2x8x64xf32>
    "tpu.trace_start"() <{level = 10 : i32, message = "bqd,bkd->bqk"}> : () -> ()
    %cst_52 = arith.constant dense<0.000000e+00> : vector<2x8x8xf32>
    %155 = tpu.matmul %150, %152, %cst_52 {dimension_numbers = #tpu.dot_dimension_numbers<[2], [2], [1], [1], [0, 0, 0, 1, 1, 1], [0], [0]>} : vector<2x8x64xf32>, vector<2x8x64xf32>, vector<2x8x8xf32> -> vector<2x8x8xf32>
    "tpu.trace_stop"() : () -> ()
    %cst_53 = arith.constant dense<0xFF800000> : vector<2x8xf32>
    %156 = vector.multi_reduction <maximumf>, %155, %cst_53 [2] : vector<2x8x8xf32> to vector<2x8xf32>
    %157 = vector.shape_cast %156 : vector<2x8xf32> to vector<2x8x1xf32>
    %158 = vector.broadcast %157 : vector<2x8x1xf32> to vector<2x8x8xf32>
    %159 = arith.subf %155, %158 : vector<2x8x8xf32>
    %160 = math.exp %159 : vector<2x8x8xf32>
    %cst_54 = arith.constant dense<0.000000e+00> : vector<2x8xf32>
    %161 = vector.multi_reduction <add>, %160, %cst_54 [2] : vector<2x8x8xf32> to vector<2x8xf32>
    %162 = vector.shape_cast %161 : vector<2x8xf32> to vector<2x8x1xf32>
    %163 = tpu.reciprocal %162 : vector<2x8x1xf32> -> vector<2x8x1xf32>
    %164 = vector.broadcast %163 : vector<2x8x1xf32> to vector<2x8x8xf32>
    %165 = arith.mulf %160, %164 : vector<2x8x8xf32>
    "tpu.trace_start"() <{level = 10 : i32, message = "bqk,bkd->bqd"}> : () -> ()
    %cst_55 = arith.constant dense<0.000000e+00> : vector<2x8x64xf32>
    %166 = tpu.matmul %165, %154, %cst_55 {dimension_numbers = #tpu.dot_dimension_numbers<[2], [1], [1], [2], [0, 0, 0, 1, 1, 2], [0], [0]>} : vector<2x8x8xf32>, vector<2x8x64xf32>, vector<2x8x64xf32> -> vector<2x8x64xf32>
    "tpu.trace_stop"() : () -> ()
    %167 = vector.shape_cast %166 : vector<2x8x64xf32> to vector<16x64xf32>
    %c384 = arith.constant 384 : index
    %c0_56 = arith.constant 0 : index
    %168 = vector.load %arg7[%c384, %c0_56] : memref<512x512xf32, #tpu.memory_space<vmem>>, vector<64x512xf32>
    %cst_57 = arith.constant dense<0.000000e+00> : vector<16x512xf32>
    %169 = tpu.matmul %167, %168, %cst_57 {dimension_numbers = #tpu.dot_dimension_numbers<[1], [0], [0], [1], [0, 0, 1, 1], [], []>} : vector<16x64xf32>, vector<64x512xf32>, vector<16x512xf32> -> vector<16x512xf32>
    %170 = arith.addf %148, %169 : vector<16x512xf32>
    %171 = vector.extract_strided_slice %8 {offsets = [0, 448], sizes = [16, 64], strides = [1, 1]} : vector<16x512xf32> to vector<16x64xf32>
    %172 = vector.shape_cast %171 : vector<16x64xf32> to vector<2x8x64xf32>
    %173 = vector.extract_strided_slice %14 {offsets = [0, 448], sizes = [16, 64], strides = [1, 1]} : vector<16x512xf32> to vector<16x64xf32>
    %174 = vector.shape_cast %173 : vector<16x64xf32> to vector<2x8x64xf32>
    %175 = vector.extract_strided_slice %15 {offsets = [0, 448], sizes = [16, 64], strides = [1, 1]} : vector<16x512xf32> to vector<16x64xf32>
    %176 = vector.shape_cast %175 : vector<16x64xf32> to vector<2x8x64xf32>
    "tpu.trace_start"() <{level = 10 : i32, message = "bqd,bkd->bqk"}> : () -> ()
    %cst_58 = arith.constant dense<0.000000e+00> : vector<2x8x8xf32>
    %177 = tpu.matmul %172, %174, %cst_58 {dimension_numbers = #tpu.dot_dimension_numbers<[2], [2], [1], [1], [0, 0, 0, 1, 1, 1], [0], [0]>} : vector<2x8x64xf32>, vector<2x8x64xf32>, vector<2x8x8xf32> -> vector<2x8x8xf32>
    "tpu.trace_stop"() : () -> ()
    %cst_59 = arith.constant dense<0xFF800000> : vector<2x8xf32>
    %178 = vector.multi_reduction <maximumf>, %177, %cst_59 [2] : vector<2x8x8xf32> to vector<2x8xf32>
    %179 = vector.shape_cast %178 : vector<2x8xf32> to vector<2x8x1xf32>
    %180 = vector.broadcast %179 : vector<2x8x1xf32> to vector<2x8x8xf32>
    %181 = arith.subf %177, %180 : vector<2x8x8xf32>
    %182 = math.exp %181 : vector<2x8x8xf32>
    %cst_60 = arith.constant dense<0.000000e+00> : vector<2x8xf32>
    %183 = vector.multi_reduction <add>, %182, %cst_60 [2] : vector<2x8x8xf32> to vector<2x8xf32>
    %184 = vector.shape_cast %183 : vector<2x8xf32> to vector<2x8x1xf32>
    %185 = tpu.reciprocal %184 : vector<2x8x1xf32> -> vector<2x8x1xf32>
    %186 = vector.broadcast %185 : vector<2x8x1xf32> to vector<2x8x8xf32>
    %187 = arith.mulf %182, %186 : vector<2x8x8xf32>
    "tpu.trace_start"() <{level = 10 : i32, message = "bqk,bkd->bqd"}> : () -> ()
    %cst_61 = arith.constant dense<0.000000e+00> : vector<2x8x64xf32>
    %188 = tpu.matmul %187, %176, %cst_61 {dimension_numbers = #tpu.dot_dimension_numbers<[2], [1], [1], [2], [0, 0, 0, 1, 1, 2], [0], [0]>} : vector<2x8x8xf32>, vector<2x8x64xf32>, vector<2x8x64xf32> -> vector<2x8x64xf32>
    "tpu.trace_stop"() : () -> ()
    %189 = vector.shape_cast %188 : vector<2x8x64xf32> to vector<16x64xf32>
    %c448 = arith.constant 448 : index
    %c0_62 = arith.constant 0 : index
    %190 = vector.load %arg7[%c448, %c0_62] : memref<512x512xf32, #tpu.memory_space<vmem>>, vector<64x512xf32>
    %cst_63 = arith.constant dense<0.000000e+00> : vector<16x512xf32>
    %191 = tpu.matmul %189, %190, %cst_63 {dimension_numbers = #tpu.dot_dimension_numbers<[1], [0], [0], [1], [0, 0, 1, 1], [], []>} : vector<16x64xf32>, vector<64x512xf32>, vector<16x512xf32> -> vector<16x512xf32>
    %192 = arith.addf %170, %191 : vector<16x512xf32>
    %c0_64 = arith.constant 0 : index
    %c0_65 = arith.constant 0 : index
    %193 = vector.load %arg8[%c0_64, %c0_65] : memref<1x512xf32, #tpu.memory_space<vmem>>, vector<1x512xf32>
    %194 = vector.broadcast %193 : vector<1x512xf32> to vector<16x512xf32>
    %195 = arith.addf %192, %194 : vector<16x512xf32>
    %196 = vector.shape_cast %195 : vector<16x512xf32> to vector<2x8x512xf32>
    %c0_66 = arith.constant 0 : index
    %c0_67 = arith.constant 0 : index
    %c0_68 = arith.constant 0 : index
    %197 = vector.load %arg9[%c0_66, %c0_67, %c0_68] : memref<2x8x512xf32, #tpu.memory_space<vmem>>, vector<2x8x512xf32>
    tpu.vector_store %arg9[%c0_66, %c0_67, %c0_68], %196 {strides = array<i32>} : memref<2x8x512xf32, #tpu.memory_space<vmem>>, vector<2x8x512xf32>,
    return
  }
  func.func @transform_0(%arg0: i32) -> (i32, i32, i32) {
    %c0_i32 = arith.constant 0 : i32
    %c0_i32_0 = arith.constant 0 : i32
    %c0_i32_1 = arith.constant 0 : i32
    return %arg0, %c0_i32, %c0_i32_0 : i32, i32, i32
  }
  func.func @transform_1(%arg0: i32) -> (i32, i32, i32) {
    %c0_i32 = arith.constant 0 : i32
    %c0_i32_0 = arith.constant 0 : i32
    %c0_i32_1 = arith.constant 0 : i32
    return %arg0, %c0_i32, %c0_i32_0 : i32, i32, i32
  }
  func.func @transform_2(%arg0: i32) -> (i32, i32) {
    %c0_i32 = arith.constant 0 : i32
    %c0_i32_0 = arith.constant 0 : i32
    %c0_i32_1 = arith.constant 0 : i32
    return %c0_i32, %c0_i32_0 : i32, i32
  }
  func.func @transform_3(%arg0: i32) -> (i32, i32) {
    %c0_i32 = arith.constant 0 : i32
    %c0_i32_0 = arith.constant 0 : i32
    %c0_i32_1 = arith.constant 0 : i32
    return %c0_i32, %c0_i32_0 : i32, i32
  }
  func.func @transform_4(%arg0: i32) -> (i32, i32) {
    %c0_i32 = arith.constant 0 : i32
    %c0_i32_0 = arith.constant 0 : i32
    %c0_i32_1 = arith.constant 0 : i32
    return %c0_i32, %c0_i32_0 : i32, i32
  }
  func.func @transform_5(%arg0: i32) -> (i32, i32) {
    %c0_i32 = arith.constant 0 : i32
    %c0_i32_0 = arith.constant 0 : i32
    %c0_i32_1 = arith.constant 0 : i32
    return %c0_i32, %c0_i32_0 : i32, i32
  }
  func.func @transform_6(%arg0: i32) -> (i32, i32) {
    %c0_i32 = arith.constant 0 : i32
    %c0_i32_0 = arith.constant 0 : i32
    %c0_i32_1 = arith.constant 0 : i32
    return %c0_i32, %c0_i32_0 : i32, i32
  }
  func.func @transform_7(%arg0: i32) -> (i32, i32) {
    %c0_i32 = arith.constant 0 : i32
    %c0_i32_0 = arith.constant 0 : i32
    %c0_i32_1 = arith.constant 0 : i32
    return %c0_i32, %c0_i32_0 : i32, i32
  }
  func.func @transform_8(%arg0: i32) -> (i32, i32, i32) {
    %c0_i32 = arith.constant 0 : i32
    %c0_i32_0 = arith.constant 0 : i32
    %c0_i32_1 = arith.constant 0 : i32
    return %arg0, %c0_i32, %c0_i32_0 : i32, i32, i32
  }
}

</mosaic_0001>

<llo_original>
// kernel: tpu_custom_call.1
$region0: #{tpu_custom_call.1}
  #allocation0 [shape = 'u32[]', space=smem, size = 0x4, offset = 0x4, fixed_abs, tag = 'smem constant byte address 0x4 - core index']
  #allocation1 [shape = 'u32[144,128]{1,0:T(1,128)}', space=vmem, size = 0x12000, scoped, tag = 'internal scratch']
  %s0 = inlined_call_operand.hbm [shape: f32[2,8,256], index: 0, kind: input, shape index: {}]
  %s1 = inlined_call_operand.hbm [shape: f32[2,8,768], index: 1, kind: input, shape index: {}]
  %s2 = inlined_call_operand.hbm [shape: f32[256,512], index: 2, kind: input, shape index: {}]
  %s3 = inlined_call_operand.hbm [shape: f32[1,512], index: 3, kind: input, shape index: {}]
  %s4 = inlined_call_operand.hbm [shape: f32[768,1024], index: 4, kind: input, shape index: {}]
  %s5 = inlined_call_operand.hbm [shape: f32[1,1024], index: 5, kind: input, shape index: {}]
  %s6 = inlined_call_operand.hbm [shape: f32[512,512], index: 6, kind: input, shape index: {}]
  %s7 = inlined_call_operand.hbm [shape: f32[1,512], index: 7, kind: input, shape index: {}]
  %s8 = inlined_call_operand.hbm [shape: f32[2,8,512], index: 8, kind: output, shape index: {}]
  %s9 = sld [smem:[#allocation0]]
  $region74: #{tpu_custom_call.1} parent=0
    _
  %s11 = ssub.s32 1, %s9
  %s12 = scalar_select 0, %s11, %s9
  $region1: #{tpu_custom_call.1} parent=0
    #allocation2 [shape = 'u8[16384]{0}', space=vmem, size = 0x4000, scoped, tag = 'input window, operand 0, single buffered']
    #allocation3 [shape = 's32[1]{0}', space=sflag, size = 0x4, scoped, tag = 'scoped memory for tpu_custom_call.1']
    #allocation4 [shape = 's32[1]{0}', space=sflag, size = 0x4, scoped, tag = 'scoped memory for tpu_custom_call.1']
    #allocation5 [shape = 'u8[49152]{0}', space=vmem, size = 0xc000, scoped, tag = 'input window, operand 1, single buffered']
    #allocation6 [shape = 's32[1]{0}', space=sflag, size = 0x4, scoped, tag = 'scoped memory for tpu_custom_call.1']
    #allocation7 [shape = 'u8[524288]{0}', space=vmem, size = 0x80000, scoped, tag = 'input window, operand 2, single buffered']
    #allocation8 [shape = 'u8[2048]{0}', space=vmem, size = 0x800, scoped, tag = 'input window, operand 3, single buffered']
    #allocation9 [shape = 's32[1]{0}', space=sflag, size = 0x4, scoped, tag = 'scoped memory for tpu_custom_call.1']
    #allocation10 [shape = 'u8[3145728]{0}', space=vmem, size = 0x300000, scoped, tag = 'input window, operand 4, single buffered']
    #allocation11 [shape = 'u8[4096]{0}', space=vmem, size = 0x1000, scoped, tag = 'input window, operand 5, single buffered']
    #allocation12 [shape = 's32[1]{0}', space=sflag, size = 0x4, scoped, tag = 'scoped memory for tpu_custom_call.1']
    #allocation13 [shape = 'u8[1048576]{0}', space=vmem, size = 0x100000, scoped, tag = 'input window, operand 6, single buffered']
    #allocation14 [shape = 'u8[2048]{0}', space=vmem, size = 0x800, scoped, tag = 'input window, operand 7, single buffered']
    #allocation15 [shape = 's32[1]{0}', space=sflag, size = 0x4, scoped, tag = 'scoped memory for tpu_custom_call.1']
    #allocation16 [shape = 'u8[32768]{0}', space=vmem, size = 0x8000, scoped, tag = 'output window, operand 0, single buffered']
    %13 = vsyncpa [#allocation3], 0
    %14 = vsyncpa [#allocation6], 0
    %15 = vsyncpa [#allocation9], 0
    %16 = vsyncpa [#allocation12], 0
    %17 = vsyncpa [#allocation15], 0
    %18 = vsyncpa [#allocation4], 0
    // Predicated region
    $region2: #{tpu_custom_call.1} parent=1 // pred_check
      _
    $region3: #{tpu_custom_call.1} parent=1 // pred_check_branch
      %20 = sbr.rel (0) target = $region5
    $region4: #{tpu_custom_call.1} parent=1 // pred_region
      %s22 = ssub.s32 512, 512
      %23 = vsyncadd [#allocation3], %s22
      %s24 = sshll.u32 [#allocation2], 4
      %s25 = int_to_ptr.vmem [resolvable:$true] %s24
      %30 = dma.hbm_to_vmem [thread:$0]  %s0, 512, %s25, [#allocation3], 256, 256, 16
    $region5: #{tpu_custom_call.1} parent=1 // pred_fallthru
      _
    // Predicated region
    $region6: #{tpu_custom_call.1} parent=1 // pred_check
      _
    $region7: #{tpu_custom_call.1} parent=1 // pred_check_branch
      %32 = sbr.rel (0) target = $region9
    $region8: #{tpu_custom_call.1} parent=1 // pred_region
      %s34 = ssub.s32 1536, 1536
      %35 = vsyncadd [#allocation6], %s34
      %s36 = sshll.u32 [#allocation5], 4
      %s37 = int_to_ptr.vmem [resolvable:$true] %s36
      %42 = dma.hbm_to_vmem [thread:$0]  %s1, 1536, %s37, [#allocation6], 768, 768, 48
    $region9: #{tpu_custom_call.1} parent=1 // pred_fallthru
      _
    // Predicated region
    $region10: #{tpu_custom_call.1} parent=1 // pred_check
      _
    $region11: #{tpu_custom_call.1} parent=1 // pred_check_branch
      %44 = sbr.rel (0) target = $region13
    $region12: #{tpu_custom_call.1} parent=1 // pred_region
      %s46 = ssub.s32 16384, 16384
      %47 = vsyncadd [#allocation6], %s46
      %s48 = sshll.u32 [#allocation7], 4
      %s49 = int_to_ptr.vmem [resolvable:$true] %s48
      %54 = dma.hbm_to_vmem [thread:$0]  %s2, 16384, %s49, [#allocation6], 512, 512, 32
    $region13: #{tpu_custom_call.1} parent=1 // pred_fallthru
      _
    // Predicated region
    $region14: #{tpu_custom_call.1} parent=1 // pred_check
      _
    $region15: #{tpu_custom_call.1} parent=1 // pred_check_branch
      %56 = sbr.rel (0) target = $region17
    $region16: #{tpu_custom_call.1} parent=1 // pred_region
      %s58 = ssub.s32 64, 64
      %59 = vsyncadd [#allocation9], %s58
      %s61 = sshll.u32 [#allocation8], 4
      %s62 = int_to_ptr.vmem [resolvable:$true] %s61
      %64 = dma.hbm_to_vmem [thread:$0]  %s3, 64, %s62, [#allocation9]
    $region17: #{tpu_custom_call.1} parent=1 // pred_fallthru
      _
    // Predicated region
    $region18: #{tpu_custom_call.1} parent=1 // pred_check
      _
    $region19: #{tpu_custom_call.1} parent=1 // pred_check_branch
      %66 = sbr.rel (0) target = $region21
    $region20: #{tpu_custom_call.1} parent=1 // pred_region
      %s68 = ssub.s32 98304, 98304
      %69 = vsyncadd [#allocation9], %s68
      %s70 = sshll.u32 [#allocation10], 4
      %s71 = int_to_ptr.vmem [resolvable:$true] %s70
      %76 = dma.hbm_to_vmem [thread:$0]  %s4, 98304, %s71, [#allocation9], 1024, 1024, 64
    $region21: #{tpu_custom_call.1} parent=1 // pred_fallthru
      _
    // Predicated region
    $region22: #{tpu_custom_call.1} parent=1 // pred_check
      _
    $region23: #{tpu_custom_call.1} parent=1 // pred_check_branch
      %78 = sbr.rel (0) target = $region25
    $region24: #{tpu_custom_call.1} parent=1 // pred_region
      %s80 = ssub.s32 128, 128
      %81 = vsyncadd [#allocation12], %s80
      %s83 = sshll.u32 [#allocation11], 4
      %s84 = int_to_ptr.vmem [resolvable:$true] %s83
      %86 = dma.hbm_to_vmem [thread:$0]  %s5, 128, %s84, [#allocation12]
    $region25: #{tpu_custom_call.1} parent=1 // pred_fallthru
      _
    // Predicated region
    $region26: #{tpu_custom_call.1} parent=1 // pred_check
      _
    $region27: #{tpu_custom_call.1} parent=1 // pred_check_branch
      %88 = sbr.rel (0) target = $region29
    $region28: #{tpu_custom_call.1} parent=1 // pred_region
      %s90 = ssub.s32 32768, 32768
      %91 = vsyncadd [#allocation12], %s90
      %s92 = sshll.u32 [#allocation13], 4
      %s93 = int_to_ptr.vmem [resolvable:$true] %s92
      %98 = dma.hbm_to_vmem [thread:$0]  %s6, 32768, %s93, [#allocation12], 512, 512, 32
    $region29: #{tpu_custom_call.1} parent=1 // pred_fallthru
      _
    // Predicated region
    $region30: #{tpu_custom_call.1} parent=1 // pred_check
      _
    $region31: #{tpu_custom_call.1} parent=1 // pred_check_branch
      %100 = sbr.rel (0) target = $region33
    $region32: #{tpu_custom_call.1} parent=1 // pred_region
      %s102 = ssub.s32 64, 64
      %103 = vsyncadd [#allocation15], %s102
      %s105 = sshll.u32 [#allocation14], 4
      %s106 = int_to_ptr.vmem [resolvable:$true] %s105
      %108 = dma.hbm_to_vmem [thread:$0]  %s7, 64, %s106, [#allocation15]
    $region33: #{tpu_custom_call.1} parent=1 // pred_fallthru
      _
    // Predicated region
    $region34: #{tpu_custom_call.1} parent=1 // pred_check
      _
    $region35: #{tpu_custom_call.1} parent=1 // pred_check_branch
      %110 = sbr.rel (0) target = $region37
    $region36: #{tpu_custom_call.1} parent=1 // pred_region
      %111 = dma.done [#allocation3], 512
    $region37: #{tpu_custom_call.1} parent=1 // pred_fallthru
      _
    // Predicated region
    $region38: #{tpu_custom_call.1} parent=1 // pred_check
      _
    $region39: #{tpu_custom_call.1} parent=1 // pred_check_branch
      %113 = sbr.rel (0) target = $region41
    $region40: #{tpu_custom_call.1} parent=1 // pred_region
      %114 = dma.done [#allocation6], 1536
    $region41: #{tpu_custom_call.1} parent=1 // pred_fallthru
      _
    // Predicated region
    $region42: #{tpu_custom_call.1} parent=1 // pred_check
      _
    $region43: #{tpu_custom_call.1} parent=1 // pred_check_branch
      %116 = sbr.rel (0) target = $region45
    $region44: #{tpu_custom_call.1} parent=1 // pred_region
      %117 = dma.done [#allocation6], 16384
    $region45: #{tpu_custom_call.1} parent=1 // pred_fallthru
      _
    // Predicated region
    $region46: #{tpu_custom_call.1} parent=1 // pred_check
      _
    $region47: #{tpu_custom_call.1} parent=1 // pred_check_branch
      %119 = sbr.rel (0) target = $region49
    $region48: #{tpu_custom_call.1} parent=1 // pred_region
      %120 = dma.done [#allocation9], 64
    $region49: #{tpu_custom_call.1} parent=1 // pred_fallthru
      _
    // Predicated region
    $region50: #{tpu_custom_call.1} parent=1 // pred_check
      _
    $region51: #{tpu_custom_call.1} parent=1 // pred_check_branch
      %122 = sbr.rel (0) target = $region53
    $region52: #{tpu_custom_call.1} parent=1 // pred_region
      %123 = dma.done [#allocation9], 98304
    $region53: #{tpu_custom_call.1} parent=1 // pred_fallthru
      _
    // Predicated region
    $region54: #{tpu_custom_call.1} parent=1 // pred_check
      _
    $region55: #{tpu_custom_call.1} parent=1 // pred_check_branch
      %125 = sbr.rel (0) target = $region57
    $region56: #{tpu_custom_call.1} parent=1 // pred_region
      %126 = dma.done [#allocation12], 128
    $region57: #{tpu_custom_call.1} parent=1 // pred_fallthru
      _
    // Predicated region
    $region58: #{tpu_custom_call.1} parent=1 // pred_check
      _
    $region59: #{tpu_custom_call.1} parent=1 // pred_check_branch
      %128 = sbr.rel (0) target = $region61
    $region60: #{tpu_custom_call.1} parent=1 // pred_region
      %129 = dma.done [#allocation12], 32768
    $region61: #{tpu_custom_call.1} parent=1 // pred_fallthru
      _
    // Predicated region
    $region62: #{tpu_custom_call.1} parent=1 // pred_check
      _
    $region63: #{tpu_custom_call.1} parent=1 // pred_check_branch
      %131 = sbr.rel (0) target = $region65
    $region64: #{tpu_custom_call.1} parent=1 // pred_region
      %132 = dma.done [#allocation15], 64
    $region65: #{tpu_custom_call.1} parent=1 // pred_fallthru
      _
    %v133 = vld [vmem:[#allocation2] sm:$0xff]
    %v134 = vld [vmem:[#allocation2 + $0x8] sm:$0xff]
    %v135 = vld [vmem:[#allocation2 + $0x10] sm:$0xff]
    %v136 = vld [vmem:[#allocation2 + $0x18] sm:$0xff]
    %v137 = vld [vmem:[#allocation5] sm:$0xff]
    %v138 = vld [vmem:[#allocation5 + $0x8] sm:$0xff]
    %v139 = vld [vmem:[#allocation5 + $0x10] sm:$0xff]
    %v140 = vld [vmem:[#allocation5 + $0x18] sm:$0xff]
    %v141 = vld [vmem:[#allocation5 + $0x20] sm:$0xff]
    %v142 = vld [vmem:[#allocation5 + $0x28] sm:$0xff]
    %v143 = vld [vmem:[#allocation5 + $0x30] sm:$0xff]
    %v144 = vld [vmem:[#allocation5 + $0x38] sm:$0xff]
    %v145 = vld [vmem:[#allocation5 + $0x40] sm:$0xff]
    %v146 = vld [vmem:[#allocation5 + $0x48] sm:$0xff]
    %v147 = vld [vmem:[#allocation5 + $0x50] sm:$0xff]
    %v148 = vld [vmem:[#allocation5 + $0x58] sm:$0xff]
    %v149 = vld [vmem:[#allocation7] sm:$0xff]
    %v150 = vld [vmem:[#allocation7 + $0x8] sm:$0xff]
    %v151 = vld [vmem:[#allocation7 + $0x10] sm:$0xff]
    %v152 = vld [vmem:[#allocation7 + $0x18] sm:$0xff]
    %v153 = vld [vmem:[#allocation7 + $0x20] sm:$0xff]
    %v154 = vld [vmem:[#allocation7 + $0x28] sm:$0xff]
    %v155 = vld [vmem:[#allocation7 + $0x30] sm:$0xff]
    %v156 = vld [vmem:[#allocation7 + $0x38] sm:$0xff]
    %v157 = vld [vmem:[#allocation7 + $0x40] sm:$0xff]
    %v158 = vld [vmem:[#allocation7 + $0x48] sm:$0xff]
    %v159 = vld [vmem:[#allocation7 + $0x50] sm:$0xff]
    %v160 = vld [vmem:[#allocation7 + $0x58] sm:$0xff]
    %v161 = vld [vmem:[#allocation7 + $0x60] sm:$0xff]
    %v162 = vld [vmem:[#allocation7 + $0x68] sm:$0xff]
    %v163 = vld [vmem:[#allocation7 + $0x70] sm:$0xff]
    %v164 = vld [vmem:[#allocation7 + $0x78] sm:$0xff]
    %v165 = vld [vmem:[#allocation7 + $0x80] sm:$0xff]
    %v166 = vld [vmem:[#allocation7 + $0x88] sm:$0xff]
    %v167 = vld [vmem:[#allocation7 + $0x90] sm:$0xff]
    %v168 = vld [vmem:[#allocation7 + $0x98] sm:$0xff]
    %v169 = vld [vmem:[#allocation7 + $0xa0] sm:$0xff]
    %v170 = vld [vmem:[#allocation7 + $0xa8] sm:$0xff]
    %v171 = vld [vmem:[#allocation7 + $0xb0] sm:$0xff]
    %v172 = vld [vmem:[#allocation7 + $0xb8] sm:$0xff]
    %v173 = vld [vmem:[#allocation7 + $0xc0] sm:$0xff]
    %v174 = vld [vmem:[#allocation7 + $0xc8] sm:$0xff]
    %v175 = vld [vmem:[#allocation7 + $0xd0] sm:$0xff]
    %v176 = vld [vmem:[#allocation7 + $0xd8] sm:$0xff]
    %v177 = vld [vmem:[#allocation7 + $0xe0] sm:$0xff]
    %v178 = vld [vmem:[#allocation7 + $0xe8] sm:$0xff]
    %v179 = vld [vmem:[#allocation7 + $0xf0] sm:$0xff]
    %v180 = vld [vmem:[#allocation7 + $0xf8] sm:$0xff]
    %v181 = vld [vmem:[#allocation7 + $0x100] sm:$0xff]
    %v182 = vld [vmem:[#allocation7 + $0x108] sm:$0xff]
    %v183 = vld [vmem:[#allocation7 + $0x110] sm:$0xff]
    %v184 = vld [vmem:[#allocation7 + $0x118] sm:$0xff]
    %v185 = vld [vmem:[#allocation7 + $0x120] sm:$0xff]
    %v186 = vld [vmem:[#allocation7 + $0x128] sm:$0xff]
    %v187 = vld [vmem:[#allocation7 + $0x130] sm:$0xff]
    %v188 = vld [vmem:[#allocation7 + $0x138] sm:$0xff]
    %v189 = vld [vmem:[#allocation7 + $0x140] sm:$0xff]
    %v190 = vld [vmem:[#allocation7 + $0x148] sm:$0xff]
    %v191 = vld [vmem:[#allocation7 + $0x150] sm:$0xff]
    %v192 = vld [vmem:[#allocation7 + $0x158] sm:$0xff]
    %v193 = vld [vmem:[#allocation7 + $0x160] sm:$0xff]
    %v194 = vld [vmem:[#allocation7 + $0x168] sm:$0xff]
    %v195 = vld [vmem:[#allocation7 + $0x170] sm:$0xff]
    %v196 = vld [vmem:[#allocation7 + $0x178] sm:$0xff]
    %v197 = vld [vmem:[#allocation7 + $0x180] sm:$0xff]
    %v198 = vld [vmem:[#allocation7 + $0x188] sm:$0xff]
    %v199 = vld [vmem:[#allocation7 + $0x190] sm:$0xff]
    %v200 = vld [vmem:[#allocation7 + $0x198] sm:$0xff]
    %v201 = vld [vmem:[#allocation7 + $0x1a0] sm:$0xff]
    %v202 = vld [vmem:[#allocation7 + $0x1a8] sm:$0xff]
    %v203 = vld [vmem:[#allocation7 + $0x1b0] sm:$0xff]
    %v204 = vld [vmem:[#allocation7 + $0x1b8] sm:$0xff]
    %v205 = vld [vmem:[#allocation7 + $0x1c0] sm:$0xff]
    %v206 = vld [vmem:[#allocation7 + $0x1c8] sm:$0xff]
    %v207 = vld [vmem:[#allocation7 + $0x1d0] sm:$0xff]
    %v208 = vld [vmem:[#allocation7 + $0x1d8] sm:$0xff]
    %v209 = vld [vmem:[#allocation7 + $0x1e0] sm:$0xff]
    %v210 = vld [vmem:[#allocation7 + $0x1e8] sm:$0xff]
    %v211 = vld [vmem:[#allocation7 + $0x1f0] sm:$0xff]
    %v212 = vld [vmem:[#allocation7 + $0x1f8] sm:$0xff]
    %v213 = vld [vmem:[#allocation7 + $0x200] sm:$0xff]
    %v214 = vld [vmem:[#allocation7 + $0x208] sm:$0xff]
    %v215 = vld [vmem:[#allocation7 + $0x210] sm:$0xff]
    %v216 = vld [vmem:[#allocation7 + $0x218] sm:$0xff]
    %v217 = vld [vmem:[#allocation7 + $0x220] sm:$0xff]
    %v218 = vld [vmem:[#allocation7 + $0x228] sm:$0xff]
    %v219 = vld [vmem:[#allocation7 + $0x230] sm:$0xff]
    %v220 = vld [vmem:[#allocation7 + $0x238] sm:$0xff]
    %v221 = vld [vmem:[#allocation7 + $0x240] sm:$0xff]
    %v222 = vld [vmem:[#allocation7 + $0x248] sm:$0xff]
    %v223 = vld [vmem:[#allocation7 + $0x250] sm:$0xff]
    %v224 = vld [vmem:[#allocation7 + $0x258] sm:$0xff]
    %v225 = vld [vmem:[#allocation7 + $0x260] sm:$0xff]
    %v226 = vld [vmem:[#allocation7 + $0x268] sm:$0xff]
    %v227 = vld [vmem:[#allocation7 + $0x270] sm:$0xff]
    %v228 = vld [vmem:[#allocation7 + $0x278] sm:$0xff]
    %v229 = vld [vmem:[#allocation7 + $0x280] sm:$0xff]
    %v230 = vld [vmem:[#allocation7 + $0x288] sm:$0xff]
    %v231 = vld [vmem:[#allocation7 + $0x290] sm:$0xff]
    %v232 = vld [vmem:[#allocation7 + $0x298] sm:$0xff]
    %v233 = vld [vmem:[#allocation7 + $0x2a0] sm:$0xff]
    %v234 = vld [vmem:[#allocation7 + $0x2a8] sm:$0xff]
    %v235 = vld [vmem:[#allocation7 + $0x2b0] sm:$0xff]
    %v236 = vld [vmem:[#allocation7 + $0x2b8] sm:$0xff]
    %v237 = vld [vmem:[#allocation7 + $0x2c0] sm:$0xff]
    %v238 = vld [vmem:[#allocation7 + $0x2c8] sm:$0xff]
    %v239 = vld [vmem:[#allocation7 + $0x2d0] sm:$0xff]
    %v240 = vld [vmem:[#allocation7 + $0x2d8] sm:$0xff]
    %v241 = vld [vmem:[#allocation7 + $0x2e0] sm:$0xff]
    %v242 = vld [vmem:[#allocation7 + $0x2e8] sm:$0xff]
    %v243 = vld [vmem:[#allocation7 + $0x2f0] sm:$0xff]
    %v244 = vld [vmem:[#allocation7 + $0x2f8] sm:$0xff]
    %v245 = vld [vmem:[#allocation7 + $0x300] sm:$0xff]
    %v246 = vld [vmem:[#allocation7 + $0x308] sm:$0xff]
    %v247 = vld [vmem:[#allocation7 + $0x310] sm:$0xff]
    %v248 = vld [vmem:[#allocation7 + $0x318] sm:$0xff]
    %v249 = vld [vmem:[#allocation7 + $0x320] sm:$0xff]
    %v250 = vld [vmem:[#allocation7 + $0x328] sm:$0xff]
    %v251 = vld [vmem:[#allocation7 + $0x330] sm:$0xff]
    %v252 = vld [vmem:[#allocation7 + $0x338] sm:$0xff]
    %v253 = vld [vmem:[#allocation7 + $0x340] sm:$0xff]
    %v254 = vld [vmem:[#allocation7 + $0x348] sm:$0xff]
    %v255 = vld [vmem:[#allocation7 + $0x350] sm:$0xff]
    %v256 = vld [vmem:[#allocation7 + $0x358] sm:$0xff]
    %v257 = vld [vmem:[#allocation7 + $0x360] sm:$0xff]
    %v258 = vld [vmem:[#allocation7 + $0x368] sm:$0xff]
    %v259 = vld [vmem:[#allocation7 + $0x370] sm:$0xff]
    %v260 = vld [vmem:[#allocation7 + $0x378] sm:$0xff]
    %v261 = vld [vmem:[#allocation7 + $0x380] sm:$0xff]
    %v262 = vld [vmem:[#allocation7 + $0x388] sm:$0xff]
    %v263 = vld [vmem:[#allocation7 + $0x390] sm:$0xff]
    %v264 = vld [vmem:[#allocation7 + $0x398] sm:$0xff]
    %v265 = vld [vmem:[#allocation7 + $0x3a0] sm:$0xff]
    %v266 = vld [vmem:[#allocation7 + $0x3a8] sm:$0xff]
    %v267 = vld [vmem:[#allocation7 + $0x3b0] sm:$0xff]
    %v268 = vld [vmem:[#allocation7 + $0x3b8] sm:$0xff]
    %v269 = vld [vmem:[#allocation7 + $0x3c0] sm:$0xff]
    %v270 = vld [vmem:[#allocation7 + $0x3c8] sm:$0xff]
    %v271 = vld [vmem:[#allocation7 + $0x3d0] sm:$0xff]
    %v272 = vld [vmem:[#allocation7 + $0x3d8] sm:$0xff]
    %v273 = vld [vmem:[#allocation7 + $0x3e0] sm:$0xff]
    %v274 = vld [vmem:[#allocation7 + $0x3e8] sm:$0xff]
    %v275 = vld [vmem:[#allocation7 + $0x3f0] sm:$0xff]
    %v276 = vld [vmem:[#allocation7 + $0x3f8] sm:$0xff]
    %v277 = vld [vmem:[#allocation8] sm:$0xf]
    %v279 = vlaneseq
    %v280 = vshrl.u32 %v279, 7
    %v281 = vsub.s32 0, %v280
    %v282 = vrot.slane %v277, %v281
    %v283 = vlaneseq
    %v284 = vshrl.u32 %v283, 7
    %v285 = vsub.s32 1, %v284
    %v286 = vrot.slane %v277, %v285
    %v287 = vlaneseq
    %v288 = vshrl.u32 %v287, 7
    %v289 = vsub.s32 2, %v288
    %v290 = vrot.slane %v277, %v289
    %v291 = vlaneseq
    %v292 = vshrl.u32 %v291, 7
    %v293 = vsub.s32 3, %v292
    %v294 = vrot.slane %v277, %v293
    %299 = vmatprep.subr.mxu0 %v210
    %300 = vmatpush1.msra.mxu0 %v209
    %301 = vmatprep.subr.mxu0 %v206
    %302 = vmatpush1.msra.mxu0 %v205
    %303 = vmatprep.subr.mxu0 %v202
    %304 = vmatpush1.msra.mxu0 %v201
    %305 = vmatprep.subr.mxu0 %v198
    %306 = vmatpush1.msra.mxu0 %v197
    %307 = vmatprep.subr.mxu0 %v194
    %308 = vmatpush1.msra.mxu0 %v193
    %309 = vmatprep.subr.mxu0 %v190
    %310 = vmatpush1.msra.mxu0 %v189
    %311 = vmatprep.subr.mxu0 %v186
    %312 = vmatpush1.msra.mxu0 %v185
    %313 = vmatprep.subr.mxu0 %v182
    %314 = vmatpush1.msra.mxu0 %v181
    %315 = vmatprep.subr.mxu0 %v178
    %316 = vmatpush1.msra.mxu0 %v177
    %317 = vmatprep.subr.mxu0 %v174
    %318 = vmatpush1.msra.mxu0 %v173
    %319 = vmatprep.subr.mxu0 %v170
    %320 = vmatpush1.msra.mxu0 %v169
    %321 = vmatprep.subr.mxu0 %v166
    %322 = vmatpush1.msra.mxu0 %v165
    %323 = vmatprep.subr.mxu0 %v162
    %324 = vmatpush1.msra.mxu0 %v161
    %325 = vmatprep.subr.mxu0 %v158
    %326 = vmatpush1.msra.mxu0 %v157
    %327 = vmatprep.subr.mxu0 %v154
    %328 = vmatpush1.msra.mxu0 %v153
    %329 = vmatprep.subr.mxu0 %v150
    %330 = vmatpush1.msra.mxu0 %v149
    %331 = vmatprep.subr.mxu0 %v274
    %332 = vmatpush2.msra.mxu0 %v273
    %333 = vmatprep.subr.mxu0 %v270
    %334 = vmatpush2.msra.mxu0 %v269
    %335 = vmatprep.subr.mxu0 %v266
    %336 = vmatpush2.msra.mxu0 %v265
    %337 = vmatprep.subr.mxu0 %v262
    %338 = vmatpush2.msra.mxu0 %v261
    %339 = vmatprep.subr.mxu0 %v258
    %340 = vmatpush2.msra.mxu0 %v257
    %341 = vmatprep.subr.mxu0 %v254
    %342 = vmatpush2.msra.mxu0 %v253
    %343 = vmatprep.subr.mxu0 %v250
    %344 = vmatpush2.msra.mxu0 %v249
    %345 = vmatprep.subr.mxu0 %v246
    %346 = vmatpush2.msra.mxu0 %v245
    %347 = vmatprep.subr.mxu0 %v242
    %348 = vmatpush2.msra.mxu0 %v241
    %349 = vmatprep.subr.mxu0 %v238
    %350 = vmatpush2.msra.mxu0 %v237
    %351 = vmatprep.subr.mxu0 %v234
    %352 = vmatpush2.msra.mxu0 %v233
    %353 = vmatprep.subr.mxu0 %v230
    %354 = vmatpush2.msra.mxu0 %v229
    %355 = vmatprep.subr.mxu0 %v226
    %356 = vmatpush2.msra.mxu0 %v225
    %357 = vmatprep.subr.mxu0 %v222
    %358 = vmatpush2.msra.mxu0 %v221
    %359 = vmatprep.subr.mxu0 %v218
    %360 = vmatpush2.msra.mxu0 %v217
    %361 = vmatprep.subr.mxu0 %v214
    %362 = vmatpush2.msra.mxu0 %v213
    %363 = vmatprep.mubr.f32.mxu0 %v134
    %364 = vmatmul.mubr.f32.gmra.mxu0 %v133
    %v365 = vpop.f32.mrf.mxu0
    %v366 = vadd.f32 %v282, %v365
    %v367 = vpop.f32.mrf.mxu0
    %v368 = vadd.f32 %v286, %v367
    %369 = vmatprep.mubr.f32.mxu0 %v136
    %370 = vmatmul.mubr.f32.gmra.mxu0 %v135
    %v371 = vpop.f32.mrf.mxu0
    %v372 = vadd.f32 %v282, %v371
    %v373 = vpop.f32.mrf.mxu0
    %v374 = vadd.f32 %v286, %v373
    %375 = vdwg.mxu0
    %376 = vmatprep.subr.mxu0 %v212
    %377 = vmatpush1.msra.mxu0 %v211
    %378 = vmatprep.subr.mxu0 %v208
    %379 = vmatpush1.msra.mxu0 %v207
    %380 = vmatprep.subr.mxu0 %v204
    %381 = vmatpush1.msra.mxu0 %v203
    %382 = vmatprep.subr.mxu0 %v200
    %383 = vmatpush1.msra.mxu0 %v199
    %384 = vmatprep.subr.mxu0 %v196
    %385 = vmatpush1.msra.mxu0 %v195
    %386 = vmatprep.subr.mxu0 %v192
    %387 = vmatpush1.msra.mxu0 %v191
    %388 = vmatprep.subr.mxu0 %v188
    %389 = vmatpush1.msra.mxu0 %v187
    %390 = vmatprep.subr.mxu0 %v184
    %391 = vmatpush1.msra.mxu0 %v183
    %392 = vmatprep.subr.mxu0 %v180
    %393 = vmatpush1.msra.mxu0 %v179
    %394 = vmatprep.subr.mxu0 %v176
    %395 = vmatpush1.msra.mxu0 %v175
    %396 = vmatprep.subr.mxu0 %v172
    %397 = vmatpush1.msra.mxu0 %v171
    %398 = vmatprep.subr.mxu0 %v168
    %399 = vmatpush1.msra.mxu0 %v167
    %400 = vmatprep.subr.mxu0 %v164
    %401 = vmatpush1.msra.mxu0 %v163
    %402 = vmatprep.subr.mxu0 %v160
    %403 = vmatpush1.msra.mxu0 %v159
    %404 = vmatprep.subr.mxu0 %v156
    %405 = vmatpush1.msra.mxu0 %v155
    %406 = vmatprep.subr.mxu0 %v152
    %407 = vmatpush1.msra.mxu0 %v151
    %408 = vmatprep.subr.mxu0 %v276
    %409 = vmatpush2.msra.mxu0 %v275
    %410 = vmatprep.subr.mxu0 %v272
    %411 = vmatpush2.msra.mxu0 %v271
    %412 = vmatprep.subr.mxu0 %v268
    %413 = vmatpush2.msra.mxu0 %v267
    %414 = vmatprep.subr.mxu0 %v264
    %415 = vmatpush2.msra.mxu0 %v263
    %416 = vmatprep.subr.mxu0 %v260
    %417 = vmatpush2.msra.mxu0 %v259
    %418 = vmatprep.subr.mxu0 %v256
    %419 = vmatpush2.msra.mxu0 %v255
    %420 = vmatprep.subr.mxu0 %v252
    %421 = vmatpush2.msra.mxu0 %v251
    %422 = vmatprep.subr.mxu0 %v248
    %423 = vmatpush2.msra.mxu0 %v247
    %424 = vmatprep.subr.mxu0 %v244
    %425 = vmatpush2.msra.mxu0 %v243
    %426 = vmatprep.subr.mxu0 %v240
    %427 = vmatpush2.msra.mxu0 %v239
    %428 = vmatprep.subr.mxu0 %v236
    %429 = vmatpush2.msra.mxu0 %v235
    %430 = vmatprep.subr.mxu0 %v232
    %431 = vmatpush2.msra.mxu0 %v231
    %432 = vmatprep.subr.mxu0 %v228
    %433 = vmatpush2.msra.mxu0 %v227
    %434 = vmatprep.subr.mxu0 %v224
    %435 = vmatpush2.msra.mxu0 %v223
    %436 = vmatprep.subr.mxu0 %v220
    %437 = vmatpush2.msra.mxu0 %v219
    %438 = vmatprep.subr.mxu0 %v216
    %439 = vmatpush2.msra.mxu0 %v215
    %440 = vmatprep.mubr.f32.mxu0 %v134
    %441 = vmatmul.mubr.f32.gmra.mxu0 %v133
    %v442 = vpop.f32.mrf.mxu0
    %v443 = vadd.f32 %v290, %v442
    %v444 = vpop.f32.mrf.mxu0
    %v445 = vadd.f32 %v294, %v444
    %446 = vmatprep.mubr.f32.mxu0 %v136
    %447 = vmatmul.mubr.f32.gmra.mxu0 %v135
    %v448 = vpop.f32.mrf.mxu0
    %v449 = vadd.f32 %v290, %v448
    %v450 = vpop.f32.mrf.mxu0
    %v451 = vadd.f32 %v294, %v450
    %452 = vdwg.mxu0
    %v453 = vld [vmem:[#allocation10] sm:$0xff]
    %v454 = vld [vmem:[#allocation10 + $0x8] sm:$0xff]
    %v455 = vld [vmem:[#allocation10 + $0x10] sm:$0xff]
    %v456 = vld [vmem:[#allocation10 + $0x18] sm:$0xff]
    %v457 = vld [vmem:[#allocation10 + $0x20] sm:$0xff]
    %v458 = vld [vmem:[#allocation10 + $0x28] sm:$0xff]
    %v459 = vld [vmem:[#allocation10 + $0x30] sm:$0xff]
    %v460 = vld [vmem:[#allocation10 + $0x38] sm:$0xff]
    %v461 = vld [vmem:[#allocation10 + $0x40] sm:$0xff]
    %v462 = vld [vmem:[#allocation10 + $0x48] sm:$0xff]
    %v463 = vld [vmem:[#allocation10 + $0x50] sm:$0xff]
    %v464 = vld [vmem:[#allocation10 + $0x58] sm:$0xff]
    %v465 = vld [vmem:[#allocation10 + $0x60] sm:$0xff]
    %v466 = vld [vmem:[#allocation10 + $0x68] sm:$0xff]
    %v467 = vld [vmem:[#allocation10 + $0x70] sm:$0xff]
    %v468 = vld [vmem:[#allocation10 + $0x78] sm:$0xff]
    %v469 = vld [vmem:[#allocation10 + $0x80] sm:$0xff]
    %v470 = vld [vmem:[#allocation10 + $0x88] sm:$0xff]
    %v471 = vld [vmem:[#allocation10 + $0x90] sm:$0xff]
    %v472 = vld [vmem:[#allocation10 + $0x98] sm:$0xff]
    %v473 = vld [vmem:[#allocation10 + $0xa0] sm:$0xff]
    %v474 = vld [vmem:[#allocation10 + $0xa8] sm:$0xff]
    %v475 = vld [vmem:[#allocation10 + $0xb0] sm:$0xff]
    %v476 = vld [vmem:[#allocation10 + $0xb8] sm:$0xff]
    %v477 = vld [vmem:[#allocation10 + $0xc0] sm:$0xff]
    %v478 = vld [vmem:[#allocation10 + $0xc8] sm:$0xff]
    %v479 = vld [vmem:[#allocation10 + $0xd0] sm:$0xff]
    %v480 = vld [vmem:[#allocation10 + $0xd8] sm:$0xff]
    %v481 = vld [vmem:[#allocation10 + $0xe0] sm:$0xff]
    %v482 = vld [vmem:[#allocation10 + $0xe8] sm:$0xff]
    %v483 = vld [vmem:[#allocation10 + $0xf0] sm:$0xff]
    %v484 = vld [vmem:[#allocation10 + $0xf8] sm:$0xff]
    %v485 = vld [vmem:[#allocation10 + $0x100] sm:$0xff]
    %v486 = vld [vmem:[#allocation10 + $0x108] sm:$0xff]
    %v487 = vld [vmem:[#allocation10 + $0x110] sm:$0xff]
    %v488 = vld [vmem:[#allocation10 + $0x118] sm:$0xff]
    %v489 = vld [vmem:[#allocation10 + $0x120] sm:$0xff]
    %v490 = vld [vmem:[#allocation10 + $0x128] sm:$0xff]
    %v491 = vld [vmem:[#allocation10 + $0x130] sm:$0xff]
    %v492 = vld [vmem:[#allocation10 + $0x138] sm:$0xff]
    %v493 = vld [vmem:[#allocation10 + $0x140] sm:$0xff]
    %v494 = vld [vmem:[#allocation10 + $0x148] sm:$0xff]
    %v495 = vld [vmem:[#allocation10 + $0x150] sm:$0xff]
    %v496 = vld [vmem:[#allocation10 + $0x158] sm:$0xff]
    %v497 = vld [vmem:[#allocation10 + $0x160] sm:$0xff]
    %v498 = vld [vmem:[#allocation10 + $0x168] sm:$0xff]
    %v499 = vld [vmem:[#allocation10 + $0x170] sm:$0xff]
    %v500 = vld [vmem:[#allocation10 + $0x178] sm:$0xff]
    %v501 = vld [vmem:[#allocation10 + $0x180] sm:$0xff]
    %v502 = vld [vmem:[#allocation10 + $0x188] sm:$0xff]
    %v503 = vld [vmem:[#allocation10 + $0x190] sm:$0xff]
    %v504 = vld [vmem:[#allocation10 + $0x198] sm:$0xff]
    %v505 = vld [vmem:[#allocation10 + $0x1a0] sm:$0xff]
    %v506 = vld [vmem:[#allocation10 + $0x1a8] sm:$0xff]
    %v507 = vld [vmem:[#allocation10 + $0x1b0] sm:$0xff]
    %v508 = vld [vmem:[#allocation10 + $0x1b8] sm:$0xff]
    %v509 = vld [vmem:[#allocation10 + $0x1c0] sm:$0xff]
    %v510 = vld [vmem:[#allocation10 + $0x1c8] sm:$0xff]
    %v511 = vld [vmem:[#allocation10 + $0x1d0] sm:$0xff]
    %v512 = vld [vmem:[#allocation10 + $0x1d8] sm:$0xff]
    %v513 = vld [vmem:[#allocation10 + $0x1e0] sm:$0xff]
    %v514 = vld [vmem:[#allocation10 + $0x1e8] sm:$0xff]
    %v515 = vld [vmem:[#allocation10 + $0x1f0] sm:$0xff]
    %v516 = vld [vmem:[#allocation10 + $0x1f8] sm:$0xff]
    %v517 = vld [vmem:[#allocation10 + $0x200] sm:$0xff]
    %v518 = vld [vmem:[#allocation10 + $0x208] sm:$0xff]
    %v519 = vld [vmem:[#allocation10 + $0x210] sm:$0xff]
    %v520 = vld [vmem:[#allocation10 + $0x218] sm:$0xff]
    %v521 = vld [vmem:[#allocation10 + $0x220] sm:$0xff]
    %v522 = vld [vmem:[#allocation10 + $0x228] sm:$0xff]
    %v523 = vld [vmem:[#allocation10 + $0x230] sm:$0xff]
    %v524 = vld [vmem:[#allocation10 + $0x238] sm:$0xff]
    %v525 = vld [vmem:[#allocation10 + $0x240] sm:$0xff]
    %v526 = vld [vmem:[#allocation10 + $0x248] sm:$0xff]
    %v527 = vld [vmem:[#allocation10 + $0x250] sm:$0xff]
    %v528 = vld [vmem:[#allocation10 + $0x258] sm:$0xff]
    %v529 = vld [vmem:[#allocation10 + $0x260] sm:$0xff]
    %v530 = vld [vmem:[#allocation10 + $0x268] sm:$0xff]
    %v531 = vld [vmem:[#allocation10 + $0x270] sm:$0xff]
    %v532 = vld [vmem:[#allocation10 + $0x278] sm:$0xff]
    %v533 = vld [vmem:[#allocation10 + $0x280] sm:$0xff]
    %v534 = vld [vmem:[#allocation10 + $0x288] sm:$0xff]
    %v535 = vld [vmem:[#allocation10 + $0x290] sm:$0xff]
    %v536 = vld [vmem:[#allocation10 + $0x298] sm:$0xff]
    %v537 = vld [vmem:[#allocation10 + $0x2a0] sm:$0xff]
    %v538 = vld [vmem:[#allocation10 + $0x2a8] sm:$0xff]
    %v539 = vld [vmem:[#allocation10 + $0x2b0] sm:$0xff]
    %v540 = vld [vmem:[#allocation10 + $0x2b8] sm:$0xff]
    %v541 = vld [vmem:[#allocation10 + $0x2c0] sm:$0xff]
    %v542 = vld [vmem:[#allocation10 + $0x2c8] sm:$0xff]
    %v543 = vld [vmem:[#allocation10 + $0x2d0] sm:$0xff]
    %v544 = vld [vmem:[#allocation10 + $0x2d8] sm:$0xff]
    %v545 = vld [vmem:[#allocation10 + $0x2e0] sm:$0xff]
    %v546 = vld [vmem:[#allocation10 + $0x2e8] sm:$0xff]
    %v547 = vld [vmem:[#allocation10 + $0x2f0] sm:$0xff]
    %v548 = vld [vmem:[#allocation10 + $0x2f8] sm:$0xff]
    %v549 = vld [vmem:[#allocation10 + $0x300] sm:$0xff]
    %v550 = vld [vmem:[#allocation10 + $0x308] sm:$0xff]
    %v551 = vld [vmem:[#allocation10 + $0x310] sm:$0xff]
    %v552 = vld [vmem:[#allocation10 + $0x318] sm:$0xff]
    %v553 = vld [vmem:[#allocation10 + $0x320] sm:$0xff]
    %v554 = vld [vmem:[#allocation10 + $0x328] sm:$0xff]
    %v555 = vld [vmem:[#allocation10 + $0x330] sm:$0xff]
    %v556 = vld [vmem:[#allocation10 + $0x338] sm:$0xff]
    %v557 = vld [vmem:[#allocation10 + $0x340] sm:$0xff]
    %v558 = vld [vmem:[#allocation10 + $0x348] sm:$0xff]
    %v559 = vld [vmem:[#allocation10 + $0x350] sm:$0xff]
    %v560 = vld [vmem:[#allocation10 + $0x358] sm:$0xff]
    %v561 = vld [vmem:[#allocation10 + $0x360] sm:$0xff]
    %v562 = vld [vmem:[#allocation10 + $0x368] sm:$0xff]
    %v563 = vld [vmem:[#allocation10 + $0x370] sm:$0xff]
    %v564 = vld [vmem:[#allocation10 + $0x378] sm:$0xff]
    %v565 = vld [vmem:[#allocation10 + $0x380] sm:$0xff]
    %v566 = vld [vmem:[#allocation10 + $0x388] sm:$0xff]
    %v567 = vld [vmem:[#allocation10 + $0x390] sm:$0xff]
    %v568 = vld [vmem:[#allocation10 + $0x398] sm:$0xff]
    %v569 = vld [vmem:[#allocation10 + $0x3a0] sm:$0xff]
    %v570 = vld [vmem:[#allocation10 + $0x3a8] sm:$0xff]
    %v571 = vld [vmem:[#allocation10 + $0x3b0] sm:$0xff]
    %v572 = vld [vmem:[#allocation10 + $0x3b8] sm:$0xff]
    %v573 = vld [vmem:[#allocation10 + $0x3c0] sm:$0xff]
    %v574 = vld [vmem:[#allocation10 + $0x3c8] sm:$0xff]
    %v575 = vld [vmem:[#allocation10 + $0x3d0] sm:$0xff]
    %v576 = vld [vmem:[#allocation10 + $0x3d8] sm:$0xff]
    %v577 = vld [vmem:[#allocation10 + $0x3e0] sm:$0xff]
    %v578 = vld [vmem:[#allocation10 + $0x3e8] sm:$0xff]
    %v579 = vld [vmem:[#allocation10 + $0x3f0] sm:$0xff]
    %v580 = vld [vmem:[#allocation10 + $0x3f8] sm:$0xff]
    %v581 = vld [vmem:[#allocation10 + $0x400] sm:$0xff]
    %v582 = vld [vmem:[#allocation10 + $0x408] sm:$0xff]
    %v583 = vld [vmem:[#allocation10 + $0x410] sm:$0xff]
    %v584 = vld [vmem:[#allocation10 + $0x418] sm:$0xff]
    %v585 = vld [vmem:[#allocation10 + $0x420] sm:$0xff]
    %v586 = vld [vmem:[#allocation10 + $0x428] sm:$0xff]
    %v587 = vld [vmem:[#allocation10 + $0x430] sm:$0xff]
    %v588 = vld [vmem:[#allocation10 + $0x438] sm:$0xff]
    %v589 = vld [vmem:[#allocation10 + $0x440] sm:$0xff]
    %v590 = vld [vmem:[#allocation10 + $0x448] sm:$0xff]
    %v591 = vld [vmem:[#allocation10 + $0x450] sm:$0xff]
    %v592 = vld [vmem:[#allocation10 + $0x458] sm:$0xff]
    %v593 = vld [vmem:[#allocation10 + $0x460] sm:$0xff]
    %v594 = vld [vmem:[#allocation10 + $0x468] sm:$0xff]
    %v595 = vld [vmem:[#allocation10 + $0x470] sm:$0xff]
    %v596 = vld [vmem:[#allocation10 + $0x478] sm:$0xff]
    %v597 = vld [vmem:[#allocation10 + $0x480] sm:$0xff]
    %v598 = vld [vmem:[#allocation10 + $0x488] sm:$0xff]
    %v599 = vld [vmem:[#allocation10 + $0x490] sm:$0xff]
    %v600 = vld [vmem:[#allocation10 + $0x498] sm:$0xff]
    %v601 = vld [vmem:[#allocation10 + $0x4a0] sm:$0xff]
    %v602 = vld [vmem:[#allocation10 + $0x4a8] sm:$0xff]
    %v603 = vld [vmem:[#allocation10 + $0x4b0] sm:$0xff]
    %v604 = vld [vmem:[#allocation10 + $0x4b8] sm:$0xff]
    %v605 = vld [vmem:[#allocation10 + $0x4c0] sm:$0xff]
    %v606 = vld [vmem:[#allocation10 + $0x4c8] sm:$0xff]
    %v607 = vld [vmem:[#allocation10 + $0x4d0] sm:$0xff]
    %v608 = vld [vmem:[#allocation10 + $0x4d8] sm:$0xff]
    %v609 = vld [vmem:[#allocation10 + $0x4e0] sm:$0xff]
    %v610 = vld [vmem:[#allocation10 + $0x4e8] sm:$0xff]
    %v611 = vld [vmem:[#allocation10 + $0x4f0] sm:$0xff]
    %v612 = vld [vmem:[#allocation10 + $0x4f8] sm:$0xff]
    %v613 = vld [vmem:[#allocation10 + $0x500] sm:$0xff]
    %v614 = vld [vmem:[#allocation10 + $0x508] sm:$0xff]
    %v615 = vld [vmem:[#allocation10 + $0x510] sm:$0xff]
    %v616 = vld [vmem:[#allocation10 + $0x518] sm:$0xff]
    %v617 = vld [vmem:[#allocation10 + $0x520] sm:$0xff]
    %v618 = vld [vmem:[#allocation10 + $0x528] sm:$0xff]
    %v619 = vld [vmem:[#allocation10 + $0x530] sm:$0xff]
    %v620 = vld [vmem:[#allocation10 + $0x538] sm:$0xff]
    %v621 = vld [vmem:[#allocation10 + $0x540] sm:$0xff]
    %v622 = vld [vmem:[#allocation10 + $0x548] sm:$0xff]
    %v623 = vld [vmem:[#allocation10 + $0x550] sm:$0xff]
    %v624 = vld [vmem:[#allocation10 + $0x558] sm:$0xff]
    %v625 = vld [vmem:[#allocation10 + $0x560] sm:$0xff]
    %v626 = vld [vmem:[#allocation10 + $0x568] sm:$0xff]
    %v627 = vld [vmem:[#allocation10 + $0x570] sm:$0xff]
    %v628 = vld [vmem:[#allocation10 + $0x578] sm:$0xff]
    %v629 = vld [vmem:[#allocation10 + $0x580] sm:$0xff]
    %v630 = vld [vmem:[#allocation10 + $0x588] sm:$0xff]
    %v631 = vld [vmem:[#allocation10 + $0x590] sm:$0xff]
    %v632 = vld [vmem:[#allocation10 + $0x598] sm:$0xff]
    %v633 = vld [vmem:[#allocation10 + $0x5a0] sm:$0xff]
    %v634 = vld [vmem:[#allocation10 + $0x5a8] sm:$0xff]
    %v635 = vld [vmem:[#allocation10 + $0x5b0] sm:$0xff]
    %v636 = vld [vmem:[#allocation10 + $0x5b8] sm:$0xff]
    %v637 = vld [vmem:[#allocation10 + $0x5c0] sm:$0xff]
    %v638 = vld [vmem:[#allocation10 + $0x5c8] sm:$0xff]
    %v639 = vld [vmem:[#allocation10 + $0x5d0] sm:$0xff]
    %v640 = vld [vmem:[#allocation10 + $0x5d8] sm:$0xff]
    %v641 = vld [vmem:[#allocation10 + $0x5e0] sm:$0xff]
    %v642 = vld [vmem:[#allocation10 + $0x5e8] sm:$0xff]
    %v643 = vld [vmem:[#allocation10 + $0x5f0] sm:$0xff]
    %v644 = vld [vmem:[#allocation10 + $0x5f8] sm:$0xff]
    %v645 = vld [vmem:[#allocation10 + $0x600] sm:$0xff]
    %v646 = vld [vmem:[#allocation10 + $0x608] sm:$0xff]
    %v647 = vld [vmem:[#allocation10 + $0x610] sm:$0xff]
    %v648 = vld [vmem:[#allocation10 + $0x618] sm:$0xff]
    %v649 = vld [vmem:[#allocation10 + $0x620] sm:$0xff]
    %v650 = vld [vmem:[#allocation10 + $0x628] sm:$0xff]
    %v651 = vld [vmem:[#allocation10 + $0x630] sm:$0xff]
    %v652 = vld [vmem:[#allocation10 + $0x638] sm:$0xff]
    %v653 = vld [vmem:[#allocation10 + $0x640] sm:$0xff]
    %v654 = vld [vmem:[#allocation10 + $0x648] sm:$0xff]
    %v655 = vld [vmem:[#allocation10 + $0x650] sm:$0xff]
    %v656 = vld [vmem:[#allocation10 + $0x658] sm:$0xff]
    %v657 = vld [vmem:[#allocation10 + $0x660] sm:$0xff]
    %v658 = vld [vmem:[#allocation10 + $0x668] sm:$0xff]
    %v659 = vld [vmem:[#allocation10 + $0x670] sm:$0xff]
    %v660 = vld [vmem:[#allocation10 + $0x678] sm:$0xff]
    %v661 = vld [vmem:[#allocation10 + $0x680] sm:$0xff]
    %v662 = vld [vmem:[#allocation10 + $0x688] sm:$0xff]
    %v663 = vld [vmem:[#allocation10 + $0x690] sm:$0xff]
    %v664 = vld [vmem:[#allocation10 + $0x698] sm:$0xff]
    %v665 = vld [vmem:[#allocation10 + $0x6a0] sm:$0xff]
    %v666 = vld [vmem:[#allocation10 + $0x6a8] sm:$0xff]
    %v667 = vld [vmem:[#allocation10 + $0x6b0] sm:$0xff]
    %v668 = vld [vmem:[#allocation10 + $0x6b8] sm:$0xff]
    %v669 = vld [vmem:[#allocation10 + $0x6c0] sm:$0xff]
    %v670 = vld [vmem:[#allocation10 + $0x6c8] sm:$0xff]
    %v671 = vld [vmem:[#allocation10 + $0x6d0] sm:$0xff]
    %v672 = vld [vmem:[#allocation10 + $0x6d8] sm:$0xff]
    %v673 = vld [vmem:[#allocation10 + $0x6e0] sm:$0xff]
    %v674 = vld [vmem:[#allocation10 + $0x6e8] sm:$0xff]
    %v675 = vld [vmem:[#allocation10 + $0x6f0] sm:$0xff]
    %v676 = vld [vmem:[#allocation10 + $0x6f8] sm:$0xff]
    %v677 = vld [vmem:[#allocation10 + $0x700] sm:$0xff]
    %v678 = vld [vmem:[#allocation10 + $0x708] sm:$0xff]
    %v679 = vld [vmem:[#allocation10 + $0x710] sm:$0xff]
    %v680 = vld [vmem:[#allocation10 + $0x718] sm:$0xff]
    %v681 = vld [vmem:[#allocation10 + $0x720] sm:$0xff]
    %v682 = vld [vmem:[#allocation10 + $0x728] sm:$0xff]
    %v683 = vld [vmem:[#allocation10 + $0x730] sm:$0xff]
    %v684 = vld [vmem:[#allocation10 + $0x738] sm:$0xff]
    %v685 = vld [vmem:[#allocation10 + $0x740] sm:$0xff]
    %v686 = vld [vmem:[#allocation10 + $0x748] sm:$0xff]
    %v687 = vld [vmem:[#allocation10 + $0x750] sm:$0xff]
    %v688 = vld [vmem:[#allocation10 + $0x758] sm:$0xff]
    %v689 = vld [vmem:[#allocation10 + $0x760] sm:$0xff]
    %v690 = vld [vmem:[#allocation10 + $0x768] sm:$0xff]
    %v691 = vld [vmem:[#allocation10 + $0x770] sm:$0xff]
    %v692 = vld [vmem:[#allocation10 + $0x778] sm:$0xff]
    %v693 = vld [vmem:[#allocation10 + $0x780] sm:$0xff]
    %v694 = vld [vmem:[#allocation10 + $0x788] sm:$0xff]
    %v695 = vld [vmem:[#allocation10 + $0x790] sm:$0xff]
    %v696 = vld [vmem:[#allocation10 + $0x798] sm:$0xff]
    %v697 = vld [vmem:[#allocation10 + $0x7a0] sm:$0xff]
    %v698 = vld [vmem:[#allocation10 + $0x7a8] sm:$0xff]
    %v699 = vld [vmem:[#allocation10 + $0x7b0] sm:$0xff]
    %v700 = vld [vmem:[#allocation10 + $0x7b8] sm:$0xff]
    %v701 = vld [vmem:[#allocation10 + $0x7c0] sm:$0xff]
    %v702 = vld [vmem:[#allocation10 + $0x7c8] sm:$0xff]
    %v703 = vld [vmem:[#allocation10 + $0x7d0] sm:$0xff]
    %v704 = vld [vmem:[#allocation10 + $0x7d8] sm:$0xff]
    %v705 = vld [vmem:[#allocation10 + $0x7e0] sm:$0xff]
    %v706 = vld [vmem:[#allocation10 + $0x7e8] sm:$0xff]
    %v707 = vld [vmem:[#allocation10 + $0x7f0] sm:$0xff]
    %v708 = vld [vmem:[#allocation10 + $0x7f8] sm:$0xff]
    %v709 = vld [vmem:[#allocation10 + $0x800] sm:$0xff]
    %v710 = vld [vmem:[#allocation10 + $0x808] sm:$0xff]
    %v711 = vld [vmem:[#allocation10 + $0x810] sm:$0xff]
    %v712 = vld [vmem:[#allocation10 + $0x818] sm:$0xff]
    %v713 = vld [vmem:[#allocation10 + $0x820] sm:$0xff]
    %v714 = vld [vmem:[#allocation10 + $0x828] sm:$0xff]
    %v715 = vld [vmem:[#allocation10 + $0x830] sm:$0xff]
    %v716 = vld [vmem:[#allocation10 + $0x838] sm:$0xff]
    %v717 = vld [vmem:[#allocation10 + $0x840] sm:$0xff]
    %v718 = vld [vmem:[#allocation10 + $0x848] sm:$0xff]
    %v719 = vld [vmem:[#allocation10 + $0x850] sm:$0xff]
    %v720 = vld [vmem:[#allocation10 + $0x858] sm:$0xff]
    %v721 = vld [vmem:[#allocation10 + $0x860] sm:$0xff]
    %v722 = vld [vmem:[#allocation10 + $0x868] sm:$0xff]
    %v723 = vld [vmem:[#allocation10 + $0x870] sm:$0xff]
    %v724 = vld [vmem:[#allocation10 + $0x878] sm:$0xff]
    %v725 = vld [vmem:[#allocation10 + $0x880] sm:$0xff]
    %v726 = vld [vmem:[#allocation10 + $0x888] sm:$0xff]
    %v727 = vld [vmem:[#allocation10 + $0x890] sm:$0xff]
    %v728 = vld [vmem:[#allocation10 + $0x898] sm:$0xff]
    %v729 = vld [vmem:[#allocation10 + $0x8a0] sm:$0xff]
    %v730 = vld [vmem:[#allocation10 + $0x8a8] sm:$0xff]
    %v731 = vld [vmem:[#allocation10 + $0x8b0] sm:$0xff]
    %v732 = vld [vmem:[#allocation10 + $0x8b8] sm:$0xff]
    %v733 = vld [vmem:[#allocation10 + $0x8c0] sm:$0xff]
    %v734 = vld [vmem:[#allocation10 + $0x8c8] sm:$0xff]
    %v735 = vld [vmem:[#allocation10 + $0x8d0] sm:$0xff]
    %v736 = vld [vmem:[#allocation10 + $0x8d8] sm:$0xff]
    %v737 = vld [vmem:[#allocation10 + $0x8e0] sm:$0xff]
    %v738 = vld [vmem:[#allocation10 + $0x8e8] sm:$0xff]
    %v739 = vld [vmem:[#allocation10 + $0x8f0] sm:$0xff]
    %v740 = vld [vmem:[#allocation10 + $0x8f8] sm:$0xff]
    %v741 = vld [vmem:[#allocation10 + $0x900] sm:$0xff]
    %v742 = vld [vmem:[#allocation10 + $0x908] sm:$0xff]
    %v743 = vld [vmem:[#allocation10 + $0x910] sm:$0xff]
    %v744 = vld [vmem:[#allocation10 + $0x918] sm:$0xff]
    %v745 = vld [vmem:[#allocation10 + $0x920] sm:$0xff]
    %v746 = vld [vmem:[#allocation10 + $0x928] sm:$0xff]
    %v747 = vld [vmem:[#allocation10 + $0x930] sm:$0xff]
    %v748 = vld [vmem:[#allocation10 + $0x938] sm:$0xff]
    %v749 = vld [vmem:[#allocation10 + $0x940] sm:$0xff]
    %v750 = vld [vmem:[#allocation10 + $0x948] sm:$0xff]
    %v751 = vld [vmem:[#allocation10 + $0x950] sm:$0xff]
    %v752 = vld [vmem:[#allocation10 + $0x958] sm:$0xff]
    %v753 = vld [vmem:[#allocation10 + $0x960] sm:$0xff]
    %v754 = vld [vmem:[#allocation10 + $0x968] sm:$0xff]
    %v755 = vld [vmem:[#allocation10 + $0x970] sm:$0xff]
    %v756 = vld [vmem:[#allocation10 + $0x978] sm:$0xff]
    %v757 = vld [vmem:[#allocation10 + $0x980] sm:$0xff]
    %v758 = vld [vmem:[#allocation10 + $0x988] sm:$0xff]
    %v759 = vld [vmem:[#allocation10 + $0x990] sm:$0xff]
    %v760 = vld [vmem:[#allocation10 + $0x998] sm:$0xff]
    %v761 = vld [vmem:[#allocation10 + $0x9a0] sm:$0xff]
    %v762 = vld [vmem:[#allocation10 + $0x9a8] sm:$0xff]
    %v763 = vld [vmem:[#allocation10 + $0x9b0] sm:$0xff]
    %v764 = vld [vmem:[#allocation10 + $0x9b8] sm:$0xff]
    %v765 = vld [vmem:[#allocation10 + $0x9c0] sm:$0xff]
    %v766 = vld [vmem:[#allocation10 + $0x9c8] sm:$0xff]
    %v767 = vld [vmem:[#allocation10 + $0x9d0] sm:$0xff]
    %v768 = vld [vmem:[#allocation10 + $0x9d8] sm:$0xff]
    %v769 = vld [vmem:[#allocation10 + $0x9e0] sm:$0xff]
    %v770 = vld [vmem:[#allocation10 + $0x9e8] sm:$0xff]
    %v771 = vld [vmem:[#allocation10 + $0x9f0] sm:$0xff]
    %v772 = vld [vmem:[#allocation10 + $0x9f8] sm:$0xff]
    %v773 = vld [vmem:[#allocation10 + $0xa00] sm:$0xff]
    %v774 = vld [vmem:[#allocation10 + $0xa08] sm:$0xff]
    %v775 = vld [vmem:[#allocation10 + $0xa10] sm:$0xff]
    %v776 = vld [vmem:[#allocation10 + $0xa18] sm:$0xff]
    %v777 = vld [vmem:[#allocation10 + $0xa20] sm:$0xff]
    %v778 = vld [vmem:[#allocation10 + $0xa28] sm:$0xff]
    %v779 = vld [vmem:[#allocation10 + $0xa30] sm:$0xff]
    %v780 = vld [vmem:[#allocation10 + $0xa38] sm:$0xff]
    %v781 = vld [vmem:[#allocation10 + $0xa40] sm:$0xff]
    %v782 = vld [vmem:[#allocation10 + $0xa48] sm:$0xff]
    %v783 = vld [vmem:[#allocation10 + $0xa50] sm:$0xff]
    %v784 = vld [vmem:[#allocation10 + $0xa58] sm:$0xff]
    %v785 = vld [vmem:[#allocation10 + $0xa60] sm:$0xff]
    %v786 = vld [vmem:[#allocation10 + $0xa68] sm:$0xff]
    %v787 = vld [vmem:[#allocation10 + $0xa70] sm:$0xff]
    %v788 = vld [vmem:[#allocation10 + $0xa78] sm:$0xff]
    %v789 = vld [vmem:[#allocation10 + $0xa80] sm:$0xff]
    %v790 = vld [vmem:[#allocation10 + $0xa88] sm:$0xff]
    %v791 = vld [vmem:[#allocation10 + $0xa90] sm:$0xff]
    %v792 = vld [vmem:[#allocation10 + $0xa98] sm:$0xff]
    %v793 = vld [vmem:[#allocation10 + $0xaa0] sm:$0xff]
    %v794 = vld [vmem:[#allocation10 + $0xaa8] sm:$0xff]
    %v795 = vld [vmem:[#allocation10 + $0xab0] sm:$0xff]
    %v796 = vld [vmem:[#allocation10 + $0xab8] sm:$0xff]
    %v797 = vld [vmem:[#allocation10 + $0xac0] sm:$0xff]
    %v798 = vld [vmem:[#allocation10 + $0xac8] sm:$0xff]
    %v799 = vld [vmem:[#allocation10 + $0xad0] sm:$0xff]
    %v800 = vld [vmem:[#allocation10 + $0xad8] sm:$0xff]
    %v801 = vld [vmem:[#allocation10 + $0xae0] sm:$0xff]
    %v802 = vld [vmem:[#allocation10 + $0xae8] sm:$0xff]
    %v803 = vld [vmem:[#allocation10 + $0xaf0] sm:$0xff]
    %v804 = vld [vmem:[#allocation10 + $0xaf8] sm:$0xff]
    %v805 = vld [vmem:[#allocation10 + $0xb00] sm:$0xff]
    %v806 = vld [vmem:[#allocation10 + $0xb08] sm:$0xff]
    %v807 = vld [vmem:[#allocation10 + $0xb10] sm:$0xff]
    %v808 = vld [vmem:[#allocation10 + $0xb18] sm:$0xff]
    %v809 = vld [vmem:[#allocation10 + $0xb20] sm:$0xff]
    %v810 = vld [vmem:[#allocation10 + $0xb28] sm:$0xff]
    %v811 = vld [vmem:[#allocation10 + $0xb30] sm:$0xff]
    %v812 = vld [vmem:[#allocation10 + $0xb38] sm:$0xff]
    %v813 = vld [vmem:[#allocation10 + $0xb40] sm:$0xff]
    %v814 = vld [vmem:[#allocation10 + $0xb48] sm:$0xff]
    %v815 = vld [vmem:[#allocation10 + $0xb50] sm:$0xff]
    %v816 = vld [vmem:[#allocation10 + $0xb58] sm:$0xff]
    %v817 = vld [vmem:[#allocation10 + $0xb60] sm:$0xff]
    %v818 = vld [vmem:[#allocation10 + $0xb68] sm:$0xff]
    %v819 = vld [vmem:[#allocation10 + $0xb70] sm:$0xff]
    %v820 = vld [vmem:[#allocation10 + $0xb78] sm:$0xff]
    %v821 = vld [vmem:[#allocation10 + $0xb80] sm:$0xff]
    %v822 = vld [vmem:[#allocation10 + $0xb88] sm:$0xff]
    %v823 = vld [vmem:[#allocation10 + $0xb90] sm:$0xff]
    %v824 = vld [vmem:[#allocation10 + $0xb98] sm:$0xff]
    %v825 = vld [vmem:[#allocation10 + $0xba0] sm:$0xff]
    %v826 = vld [vmem:[#allocation10 + $0xba8] sm:$0xff]
    %v827 = vld [vmem:[#allocation10 + $0xbb0] sm:$0xff]
    %v828 = vld [vmem:[#allocation10 + $0xbb8] sm:$0xff]
    %v829 = vld [vmem:[#allocation10 + $0xbc0] sm:$0xff]
    %v830 = vld [vmem:[#allocation10 + $0xbc8] sm:$0xff]
    %v831 = vld [vmem:[#allocation10 + $0xbd0] sm:$0xff]
    %v832 = vld [vmem:[#allocation10 + $0xbd8] sm:$0xff]
    %v833 = vld [vmem:[#allocation10 + $0xbe0] sm:$0xff]
    %v834 = vld [vmem:[#allocation10 + $0xbe8] sm:$0xff]
    %v835 = vld [vmem:[#allocation10 + $0xbf0] sm:$0xff]
    %v836 = vld [vmem:[#allocation10 + $0xbf8] sm:$0xff]
    %v837 = vld [vmem:[#allocation10 + $0xc00] sm:$0xff]
    %v838 = vld [vmem:[#allocation10 + $0xc08] sm:$0xff]
    %v839 = vld [vmem:[#allocation10 + $0xc10] sm:$0xff]
    %v840 = vld [vmem:[#allocation10 + $0xc18] sm:$0xff]
    %v841 = vld [vmem:[#allocation10 + $0xc20] sm:$0xff]
    %v842 = vld [vmem:[#allocation10 + $0xc28] sm:$0xff]
    %v843 = vld [vmem:[#allocation10 + $0xc30] sm:$0xff]
    %v844 = vld [vmem:[#allocation10 + $0xc38] sm:$0xff]
    %v845 = vld [vmem:[#allocation10 + $0xc40] sm:$0xff]
    %v846 = vld [vmem:[#allocation10 + $0xc48] sm:$0xff]
    %v847 = vld [vmem:[#allocation10 + $0xc50] sm:$0xff]
    %v848 = vld [vmem:[#allocation10 + $0xc58] sm:$0xff]
    %v849 = vld [vmem:[#allocation10 + $0xc60] sm:$0xff]
    %v850 = vld [vmem:[#allocation10 + $0xc68] sm:$0xff]
    %v851 = vld [vmem:[#allocation10 + $0xc70] sm:$0xff]
    %v852 = vld [vmem:[#allocation10 + $0xc78] sm:$0xff]
    %v853 = vld [vmem:[#allocation10 + $0xc80] sm:$0xff]
    %v854 = vld [vmem:[#allocation10 + $0xc88] sm:$0xff]
    %v855 = vld [vmem:[#allocation10 + $0xc90] sm:$0xff]
    %v856 = vld [vmem:[#allocation10 + $0xc98] sm:$0xff]
    %v857 = vld [vmem:[#allocation10 + $0xca0] sm:$0xff]
    %v858 = vld [vmem:[#allocation10 + $0xca8] sm:$0xff]
    %v859 = vld [vmem:[#allocation10 + $0xcb0] sm:$0xff]
    %v860 = vld [vmem:[#allocation10 + $0xcb8] sm:$0xff]
    %v861 = vld [vmem:[#allocation10 + $0xcc0] sm:$0xff]
    %v862 = vld [vmem:[#allocation10 + $0xcc8] sm:$0xff]
    %v863 = vld [vmem:[#allocation10 + $0xcd0] sm:$0xff]
    %v864 = vld [vmem:[#allocation10 + $0xcd8] sm:$0xff]
    %v865 = vld [vmem:[#allocation10 + $0xce0] sm:$0xff]
    %v866 = vld [vmem:[#allocation10 + $0xce8] sm:$0xff]
    %v867 = vld [vmem:[#allocation10 + $0xcf0] sm:$0xff]
    %v868 = vld [vmem:[#allocation10 + $0xcf8] sm:$0xff]
    %v869 = vld [vmem:[#allocation10 + $0xd00] sm:$0xff]
    %v870 = vld [vmem:[#allocation10 + $0xd08] sm:$0xff]
    %v871 = vld [vmem:[#allocation10 + $0xd10] sm:$0xff]
    %v872 = vld [vmem:[#allocation10 + $0xd18] sm:$0xff]
    %v873 = vld [vmem:[#allocation10 + $0xd20] sm:$0xff]
    %v874 = vld [vmem:[#allocation10 + $0xd28] sm:$0xff]
    %v875 = vld [vmem:[#allocation10 + $0xd30] sm:$0xff]
    %v876 = vld [vmem:[#allocation10 + $0xd38] sm:$0xff]
    %v877 = vld [vmem:[#allocation10 + $0xd40] sm:$0xff]
    %v878 = vld [vmem:[#allocation10 + $0xd48] sm:$0xff]
    %v879 = vld [vmem:[#allocation10 + $0xd50] sm:$0xff]
    %v880 = vld [vmem:[#allocation10 + $0xd58] sm:$0xff]
    %v881 = vld [vmem:[#allocation10 + $0xd60] sm:$0xff]
    %v882 = vld [vmem:[#allocation10 + $0xd68] sm:$0xff]
    %v883 = vld [vmem:[#allocation10 + $0xd70] sm:$0xff]
    %v884 = vld [vmem:[#allocation10 + $0xd78] sm:$0xff]
    %v885 = vld [vmem:[#allocation10 + $0xd80] sm:$0xff]
    %v886 = vld [vmem:[#allocation10 + $0xd88] sm:$0xff]
    %v887 = vld [vmem:[#allocation10 + $0xd90] sm:$0xff]
    %v888 = vld [vmem:[#allocation10 + $0xd98] sm:$0xff]
    %v889 = vld [vmem:[#allocation10 + $0xda0] sm:$0xff]
    %v890 = vld [vmem:[#allocation10 + $0xda8] sm:$0xff]
    %v891 = vld [vmem:[#allocation10 + $0xdb0] sm:$0xff]
    %v892 = vld [vmem:[#allocation10 + $0xdb8] sm:$0xff]
    %v893 = vld [vmem:[#allocation10 + $0xdc0] sm:$0xff]
    %v894 = vld [vmem:[#allocation10 + $0xdc8] sm:$0xff]
    %v895 = vld [vmem:[#allocation10 + $0xdd0] sm:$0xff]
    %v896 = vld [vmem:[#allocation10 + $0xdd8] sm:$0xff]
    %v897 = vld [vmem:[#allocation10 + $0xde0] sm:$0xff]
    %v898 = vld [vmem:[#allocation10 + $0xde8] sm:$0xff]
    %v899 = vld [vmem:[#allocation10 + $0xdf0] sm:$0xff]
    %v900 = vld [vmem:[#allocation10 + $0xdf8] sm:$0xff]
    %v901 = vld [vmem:[#allocation10 + $0xe00] sm:$0xff]
    %v902 = vld [vmem:[#allocation10 + $0xe08] sm:$0xff]
    %v903 = vld [vmem:[#allocation10 + $0xe10] sm:$0xff]
    %v904 = vld [vmem:[#allocation10 + $0xe18] sm:$0xff]
    %v905 = vld [vmem:[#allocation10 + $0xe20] sm:$0xff]
    %v906 = vld [vmem:[#allocation10 + $0xe28] sm:$0xff]
    %v907 = vld [vmem:[#allocation10 + $0xe30] sm:$0xff]
    %v908 = vld [vmem:[#allocation10 + $0xe38] sm:$0xff]
    %v909 = vld [vmem:[#allocation10 + $0xe40] sm:$0xff]
    %v910 = vld [vmem:[#allocation10 + $0xe48] sm:$0xff]
    %v911 = vld [vmem:[#allocation10 + $0xe50] sm:$0xff]
    %v912 = vld [vmem:[#allocation10 + $0xe58] sm:$0xff]
    %v913 = vld [vmem:[#allocation10 + $0xe60] sm:$0xff]
    %v914 = vld [vmem:[#allocation10 + $0xe68] sm:$0xff]
    %v915 = vld [vmem:[#allocation10 + $0xe70] sm:$0xff]
    %v916 = vld [vmem:[#allocation10 + $0xe78] sm:$0xff]
    %v917 = vld [vmem:[#allocation10 + $0xe80] sm:$0xff]
    %v918 = vld [vmem:[#allocation10 + $0xe88] sm:$0xff]
    %v919 = vld [vmem:[#allocation10 + $0xe90] sm:$0xff]
    %v920 = vld [vmem:[#allocation10 + $0xe98] sm:$0xff]
    %v921 = vld [vmem:[#allocation10 + $0xea0] sm:$0xff]
    %v922 = vld [vmem:[#allocation10 + $0xea8] sm:$0xff]
    %v923 = vld [vmem:[#allocation10 + $0xeb0] sm:$0xff]
    %v924 = vld [vmem:[#allocation10 + $0xeb8] sm:$0xff]
    %v925 = vld [vmem:[#allocation10 + $0xec0] sm:$0xff]
    %v926 = vld [vmem:[#allocation10 + $0xec8] sm:$0xff]
    %v927 = vld [vmem:[#allocation10 + $0xed0] sm:$0xff]
    %v928 = vld [vmem:[#allocation10 + $0xed8] sm:$0xff]
    %v929 = vld [vmem:[#allocation10 + $0xee0] sm:$0xff]
    %v930 = vld [vmem:[#allocation10 + $0xee8] sm:$0xff]
    %v931 = vld [vmem:[#allocation10 + $0xef0] sm:$0xff]
    %v932 = vld [vmem:[#allocation10 + $0xef8] sm:$0xff]
    %v933 = vld [vmem:[#allocation10 + $0xf00] sm:$0xff]
    %v934 = vld [vmem:[#allocation10 + $0xf08] sm:$0xff]
    %v935 = vld [vmem:[#allocation10 + $0xf10] sm:$0xff]
    %v936 = vld [vmem:[#allocation10 + $0xf18] sm:$0xff]
    %v937 = vld [vmem:[#allocation10 + $0xf20] sm:$0xff]
    %v938 = vld [vmem:[#allocation10 + $0xf28] sm:$0xff]
    %v939 = vld [vmem:[#allocation10 + $0xf30] sm:$0xff]
    %v940 = vld [vmem:[#allocation10 + $0xf38] sm:$0xff]
    %v941 = vld [vmem:[#allocation10 + $0xf40] sm:$0xff]
    %v942 = vld [vmem:[#allocation10 + $0xf48] sm:$0xff]
    %v943 = vld [vmem:[#allocation10 + $0xf50] sm:$0xff]
    %v944 = vld [vmem:[#allocation10 + $0xf58] sm:$0xff]
    %v945 = vld [vmem:[#allocation10 + $0xf60] sm:$0xff]
    %v946 = vld [vmem:[#allocation10 + $0xf68] sm:$0xff]
    %v947 = vld [vmem:[#allocation10 + $0xf70] sm:$0xff]
    %v948 = vld [vmem:[#allocation10 + $0xf78] sm:$0xff]
    %v949 = vld [vmem:[#allocation10 + $0xf80] sm:$0xff]
    %v950 = vld [vmem:[#allocation10 + $0xf88] sm:$0xff]
    %v951 = vld [vmem:[#allocation10 + $0xf90] sm:$0xff]
    %v952 = vld [vmem:[#allocation10 + $0xf98] sm:$0xff]
    %v953 = vld [vmem:[#allocation10 + $0xfa0] sm:$0xff]
    %v954 = vld [vmem:[#allocation10 + $0xfa8] sm:$0xff]
    %v955 = vld [vmem:[#allocation10 + $0xfb0] sm:$0xff]
    %v956 = vld [vmem:[#allocation10 + $0xfb8] sm:$0xff]
    %v957 = vld [vmem:[#allocation10 + $0xfc0] sm:$0xff]
    %v958 = vld [vmem:[#allocation10 + $0xfc8] sm:$0xff]
    %v959 = vld [vmem:[#allocation10 + $0xfd0] sm:$0xff]
    %v960 = vld [vmem:[#allocation10 + $0xfd8] sm:$0xff]
    %v961 = vld [vmem:[#allocation10 + $0xfe0] sm:$0xff]
    %v962 = vld [vmem:[#allocation10 + $0xfe8] sm:$0xff]
    %v963 = vld [vmem:[#allocation10 + $0xff0] sm:$0xff]
    %v964 = vld [vmem:[#allocation10 + $0xff8] sm:$0xff]
    %v965 = vld [vmem:[#allocation10 + $0x1000] sm:$0xff]
    %v966 = vld [vmem:[#allocation10 + $0x1008] sm:$0xff]
    %v967 = vld [vmem:[#allocation10 + $0x1010] sm:$0xff]
    %v968 = vld [vmem:[#allocation10 + $0x1018] sm:$0xff]
    %v969 = vld [vmem:[#allocation10 + $0x1020] sm:$0xff]
    %v970 = vld [vmem:[#allocation10 + $0x1028] sm:$0xff]
    %v971 = vld [vmem:[#allocation10 + $0x1030] sm:$0xff]
    %v972 = vld [vmem:[#allocation10 + $0x1038] sm:$0xff]
    %v973 = vld [vmem:[#allocation10 + $0x1040] sm:$0xff]
    %v974 = vld [vmem:[#allocation10 + $0x1048] sm:$0xff]
    %v975 = vld [vmem:[#allocation10 + $0x1050] sm:$0xff]
    %v976 = vld [vmem:[#allocation10 + $0x1058] sm:$0xff]
    %v977 = vld [vmem:[#allocation10 + $0x1060] sm:$0xff]
    %v978 = vld [vmem:[#allocation10 + $0x1068] sm:$0xff]
    %v979 = vld [vmem:[#allocation10 + $0x1070] sm:$0xff]
    %v980 = vld [vmem:[#allocation10 + $0x1078] sm:$0xff]
    %v981 = vld [vmem:[#allocation10 + $0x1080] sm:$0xff]
    %v982 = vld [vmem:[#allocation10 + $0x1088] sm:$0xff]
    %v983 = vld [vmem:[#allocation10 + $0x1090] sm:$0xff]
    %v984 = vld [vmem:[#allocation10 + $0x1098] sm:$0xff]
    %v985 = vld [vmem:[#allocation10 + $0x10a0] sm:$0xff]
    %v986 = vld [vmem:[#allocation10 + $0x10a8] sm:$0xff]
    %v987 = vld [vmem:[#allocation10 + $0x10b0] sm:$0xff]
    %v988 = vld [vmem:[#allocation10 + $0x10b8] sm:$0xff]
    %v989 = vld [vmem:[#allocation10 + $0x10c0] sm:$0xff]
    %v990 = vld [vmem:[#allocation10 + $0x10c8] sm:$0xff]
    %v991 = vld [vmem:[#allocation10 + $0x10d0] sm:$0xff]
    %v992 = vld [vmem:[#allocation10 + $0x10d8] sm:$0xff]
    %v993 = vld [vmem:[#allocation10 + $0x10e0] sm:$0xff]
    %v994 = vld [vmem:[#allocation10 + $0x10e8] sm:$0xff]
    %v995 = vld [vmem:[#allocation10 + $0x10f0] sm:$0xff]
    %v996 = vld [vmem:[#allocation10 + $0x10f8] sm:$0xff]
    %v997 = vld [vmem:[#allocation10 + $0x1100] sm:$0xff]
    %v998 = vld [vmem:[#allocation10 + $0x1108] sm:$0xff]
    %v999 = vld [vmem:[#allocation10 + $0x1110] sm:$0xff]
    %v1000 = vld [vmem:[#allocation10 + $0x1118] sm:$0xff]
    %v1001 = vld [vmem:[#allocation10 + $0x1120] sm:$0xff]
    %v1002 = vld [vmem:[#allocation10 + $0x1128] sm:$0xff]
    %v1003 = vld [vmem:[#allocation10 + $0x1130] sm:$0xff]
    %v1004 = vld [vmem:[#allocation10 + $0x1138] sm:$0xff]
    %v1005 = vld [vmem:[#allocation10 + $0x1140] sm:$0xff]
    %v1006 = vld [vmem:[#allocation10 + $0x1148] sm:$0xff]
    %v1007 = vld [vmem:[#allocation10 + $0x1150] sm:$0xff]
    %v1008 = vld [vmem:[#allocation10 + $0x1158] sm:$0xff]
    %v1009 = vld [vmem:[#allocation10 + $0x1160] sm:$0xff]
    %v1010 = vld [vmem:[#allocation10 + $0x1168] sm:$0xff]
    %v1011 = vld [vmem:[#allocation10 + $0x1170] sm:$0xff]
    %v1012 = vld [vmem:[#allocation10 + $0x1178] sm:$0xff]
    %v1013 = vld [vmem:[#allocation10 + $0x1180] sm:$0xff]
    %v1014 = vld [vmem:[#allocation10 + $0x1188] sm:$0xff]
    %v1015 = vld [vmem:[#allocation10 + $0x1190] sm:$0xff]
    %v1016 = vld [vmem:[#allocation10 + $0x1198] sm:$0xff]
    %v1017 = vld [vmem:[#allocation10 + $0x11a0] sm:$0xff]
    %v1018 = vld [vmem:[#allocation10 + $0x11a8] sm:$0xff]
    %v1019 = vld [vmem:[#allocation10 + $0x11b0] sm:$0xff]
    %v1020 = vld [vmem:[#allocation10 + $0x11b8] sm:$0xff]
    %v1021 = vld [vmem:[#allocation10 + $0x11c0] sm:$0xff]
    %v1022 = vld [vmem:[#allocation10 + $0x11c8] sm:$0xff]
    %v1023 = vld [vmem:[#allocation10 + $0x11d0] sm:$0xff]
    %v1024 = vld [vmem:[#allocation10 + $0x11d8] sm:$0xff]
    %v1025 = vld [vmem:[#allocation10 + $0x11e0] sm:$0xff]
    %v1026 = vld [vmem:[#allocation10 + $0x11e8] sm:$0xff]
    %v1027 = vld [vmem:[#allocation10 + $0x11f0] sm:$0xff]
    %v1028 = vld [vmem:[#allocation10 + $0x11f8] sm:$0xff]
    %v1029 = vld [vmem:[#allocation10 + $0x1200] sm:$0xff]
    %v1030 = vld [vmem:[#allocation10 + $0x1208] sm:$0xff]
    %v1031 = vld [vmem:[#allocation10 + $0x1210] sm:$0xff]
    %v1032 = vld [vmem:[#allocation10 + $0x1218] sm:$0xff]
    %v1033 = vld [vmem:[#allocation10 + $0x1220] sm:$0xff]
    %v1034 = vld [vmem:[#allocation10 + $0x1228] sm:$0xff]
    %v1035 = vld [vmem:[#allocation10 + $0x1230] sm:$0xff]
    %v1036 = vld [vmem:[#allocation10 + $0x1238] sm:$0xff]
    %v1037 = vld [vmem:[#allocation10 + $0x1240] sm:$0xff]
    %v1038 = vld [vmem:[#allocation10 + $0x1248] sm:$0xff]
    %v1039 = vld [vmem:[#allocation10 + $0x1250] sm:$0xff]
    %v1040 = vld [vmem:[#allocation10 + $0x1258] sm:$0xff]
    %v1041 = vld [vmem:[#allocation10 + $0x1260] sm:$0xff]
    %v1042 = vld [vmem:[#allocation10 + $0x1268] sm:$0xff]
    %v1043 = vld [vmem:[#allocation10 + $0x1270] sm:$0xff]
    %v1044 = vld [vmem:[#allocation10 + $0x1278] sm:$0xff]
    %v1045 = vld [vmem:[#allocation10 + $0x1280] sm:$0xff]
    %v1046 = vld [vmem:[#allocation10 + $0x1288] sm:$0xff]
    %v1047 = vld [vmem:[#allocation10 + $0x1290] sm:$0xff]
    %v1048 = vld [vmem:[#allocation10 + $0x1298] sm:$0xff]
    %v1049 = vld [vmem:[#allocation10 + $0x12a0] sm:$0xff]
    %v1050 = vld [vmem:[#allocation10 + $0x12a8] sm:$0xff]
    %v1051 = vld [vmem:[#allocation10 + $0x12b0] sm:$0xff]
    %v1052 = vld [vmem:[#allocation10 + $0x12b8] sm:$0xff]
    %v1053 = vld [vmem:[#allocation10 + $0x12c0] sm:$0xff]
    %v1054 = vld [vmem:[#allocation10 + $0x12c8] sm:$0xff]
    %v1055 = vld [vmem:[#allocation10 + $0x12d0] sm:$0xff]
    %v1056 = vld [vmem:[#allocation10 + $0x12d8] sm:$0xff]
    %v1057 = vld [vmem:[#allocation10 + $0x12e0] sm:$0xff]
    %v1058 = vld [vmem:[#allocation10 + $0x12e8] sm:$0xff]
    %v1059 = vld [vmem:[#allocation10 + $0x12f0] sm:$0xff]
    %v1060 = vld [vmem:[#allocation10 + $0x12f8] sm:$0xff]
    %v1061 = vld [vmem:[#allocation10 + $0x1300] sm:$0xff]
    %v1062 = vld [vmem:[#allocation10 + $0x1308] sm:$0xff]
    %v1063 = vld [vmem:[#allocation10 + $0x1310] sm:$0xff]
    %v1064 = vld [vmem:[#allocation10 + $0x1318] sm:$0xff]
    %v1065 = vld [vmem:[#allocation10 + $0x1320] sm:$0xff]
    %v1066 = vld [vmem:[#allocation10 + $0x1328] sm:$0xff]
    %v1067 = vld [vmem:[#allocation10 + $0x1330] sm:$0xff]
    %v1068 = vld [vmem:[#allocation10 + $0x1338] sm:$0xff]
    %v1069 = vld [vmem:[#allocation10 + $0x1340] sm:$0xff]
    %v1070 = vld [vmem:[#allocation10 + $0x1348] sm:$0xff]
    %v1071 = vld [vmem:[#allocation10 + $0x1350] sm:$0xff]
    %v1072 = vld [vmem:[#allocation10 + $0x1358] sm:$0xff]
    %v1073 = vld [vmem:[#allocation10 + $0x1360] sm:$0xff]
    %v1074 = vld [vmem:[#allocation10 + $0x1368] sm:$0xff]
    %v1075 = vld [vmem:[#allocation10 + $0x1370] sm:$0xff]
    %v1076 = vld [vmem:[#allocation10 + $0x1378] sm:$0xff]
    %v1077 = vld [vmem:[#allocation10 + $0x1380] sm:$0xff]
    %v1078 = vld [vmem:[#allocation10 + $0x1388] sm:$0xff]
    %v1079 = vld [vmem:[#allocation10 + $0x1390] sm:$0xff]
    %v1080 = vld [vmem:[#allocation10 + $0x1398] sm:$0xff]
    %v1081 = vld [vmem:[#allocation10 + $0x13a0] sm:$0xff]
    %v1082 = vld [vmem:[#allocation10 + $0x13a8] sm:$0xff]
    %v1083 = vld [vmem:[#allocation10 + $0x13b0] sm:$0xff]
    %v1084 = vld [vmem:[#allocation10 + $0x13b8] sm:$0xff]
    %v1085 = vld [vmem:[#allocation10 + $0x13c0] sm:$0xff]
    %v1086 = vld [vmem:[#allocation10 + $0x13c8] sm:$0xff]
    %v1087 = vld [vmem:[#allocation10 + $0x13d0] sm:$0xff]
    %v1088 = vld [vmem:[#allocation10 + $0x13d8] sm:$0xff]
    %v1089 = vld [vmem:[#allocation10 + $0x13e0] sm:$0xff]
    %v1090 = vld [vmem:[#allocation10 + $0x13e8] sm:$0xff]
    %v1091 = vld [vmem:[#allocation10 + $0x13f0] sm:$0xff]
    %v1092 = vld [vmem:[#allocation10 + $0x13f8] sm:$0xff]
    %v1093 = vld [vmem:[#allocation10 + $0x1400] sm:$0xff]
    %v1094 = vld [vmem:[#allocation10 + $0x1408] sm:$0xff]
    %v1095 = vld [vmem:[#allocation10 + $0x1410] sm:$0xff]
    %v1096 = vld [vmem:[#allocation10 + $0x1418] sm:$0xff]
    %v1097 = vld [vmem:[#allocation10 + $0x1420] sm:$0xff]
    %v1098 = vld [vmem:[#allocation10 + $0x1428] sm:$0xff]
    %v1099 = vld [vmem:[#allocation10 + $0x1430] sm:$0xff]
    %v1100 = vld [vmem:[#allocation10 + $0x1438] sm:$0xff]
    %v1101 = vld [vmem:[#allocation10 + $0x1440] sm:$0xff]
    %v1102 = vld [vmem:[#allocation10 + $0x1448] sm:$0xff]
    %v1103 = vld [vmem:[#allocation10 + $0x1450] sm:$0xff]
    %v1104 = vld [vmem:[#allocation10 + $0x1458] sm:$0xff]
    %v1105 = vld [vmem:[#allocation10 + $0x1460] sm:$0xff]
    %v1106 = vld [vmem:[#allocation10 + $0x1468] sm:$0xff]
    %v1107 = vld [vmem:[#allocation10 + $0x1470] sm:$0xff]
    %v1108 = vld [vmem:[#allocation10 + $0x1478] sm:$0xff]
    %v1109 = vld [vmem:[#allocation10 + $0x1480] sm:$0xff]
    %v1110 = vld [vmem:[#allocation10 + $0x1488] sm:$0xff]
    %v1111 = vld [vmem:[#allocation10 + $0x1490] sm:$0xff]
    %v1112 = vld [vmem:[#allocation10 + $0x1498] sm:$0xff]
    %v1113 = vld [vmem:[#allocation10 + $0x14a0] sm:$0xff]
    %v1114 = vld [vmem:[#allocation10 + $0x14a8] sm:$0xff]
    %v1115 = vld [vmem:[#allocation10 + $0x14b0] sm:$0xff]
    %v1116 = vld [vmem:[#allocation10 + $0x14b8] sm:$0xff]
    %v1117 = vld [vmem:[#allocation10 + $0x14c0] sm:$0xff]
    %v1118 = vld [vmem:[#allocation10 + $0x14c8] sm:$0xff]
    %v1119 = vld [vmem:[#allocation10 + $0x14d0] sm:$0xff]
    %v1120 = vld [vmem:[#allocation10 + $0x14d8] sm:$0xff]
    %v1121 = vld [vmem:[#allocation10 + $0x14e0] sm:$0xff]
    %v1122 = vld [vmem:[#allocation10 + $0x14e8] sm:$0xff]
    %v1123 = vld [vmem:[#allocation10 + $0x14f0] sm:$0xff]
    %v1124 = vld [vmem:[#allocation10 + $0x14f8] sm:$0xff]
    %v1125 = vld [vmem:[#allocation10 + $0x1500] sm:$0xff]
    %v1126 = vld [vmem:[#allocation10 + $0x1508] sm:$0xff]
    %v1127 = vld [vmem:[#allocation10 + $0x1510] sm:$0xff]
    %v1128 = vld [vmem:[#allocation10 + $0x1518] sm:$0xff]
    %v1129 = vld [vmem:[#allocation10 + $0x1520] sm:$0xff]
    %v1130 = vld [vmem:[#allocation10 + $0x1528] sm:$0xff]
    %v1131 = vld [vmem:[#allocation10 + $0x1530] sm:$0xff]
    %v1132 = vld [vmem:[#allocation10 + $0x1538] sm:$0xff]
    %v1133 = vld [vmem:[#allocation10 + $0x1540] sm:$0xff]
    %v1134 = vld [vmem:[#allocation10 + $0x1548] sm:$0xff]
    %v1135 = vld [vmem:[#allocation10 + $0x1550] sm:$0xff]
    %v1136 = vld [vmem:[#allocation10 + $0x1558] sm:$0xff]
    %v1137 = vld [vmem:[#allocation10 + $0x1560] sm:$0xff]
    %v1138 = vld [vmem:[#allocation10 + $0x1568] sm:$0xff]
    %v1139 = vld [vmem:[#allocation10 + $0x1570] sm:$0xff]
    %v1140 = vld [vmem:[#allocation10 + $0x1578] sm:$0xff]
    %v1141 = vld [vmem:[#allocation10 + $0x1580] sm:$0xff]
    %v1142 = vld [vmem:[#allocation10 + $0x1588] sm:$0xff]
    %v1143 = vld [vmem:[#allocation10 + $0x1590] sm:$0xff]
    %v1144 = vld [vmem:[#allocation10 + $0x1598] sm:$0xff]
    %v1145 = vld [vmem:[#allocation10 + $0x15a0] sm:$0xff]
    %v1146 = vld [vmem:[#allocation10 + $0x15a8] sm:$0xff]
    %v1147 = vld [vmem:[#allocation10 + $0x15b0] sm:$0xff]
    %v1148 = vld [vmem:[#allocation10 + $0x15b8] sm:$0xff]
    %v1149 = vld [vmem:[#allocation10 + $0x15c0] sm:$0xff]
    %v1150 = vld [vmem:[#allocation10 + $0x15c8] sm:$0xff]
    %v1151 = vld [vmem:[#allocation10 + $0x15d0] sm:$0xff]
    %v1152 = vld [vmem:[#allocation10 + $0x15d8] sm:$0xff]
    %v1153 = vld [vmem:[#allocation10 + $0x15e0] sm:$0xff]
    %v1154 = vld [vmem:[#allocation10 + $0x15e8] sm:$0xff]
    %v1155 = vld [vmem:[#allocation10 + $0x15f0] sm:$0xff]
    %v1156 = vld [vmem:[#allocation10 + $0x15f8] sm:$0xff]
    %v1157 = vld [vmem:[#allocation10 + $0x1600] sm:$0xff]
    %v1158 = vld [vmem:[#allocation10 + $0x1608] sm:$0xff]
    %v1159 = vld [vmem:[#allocation10 + $0x1610] sm:$0xff]
    %v1160 = vld [vmem:[#allocation10 + $0x1618] sm:$0xff]
    %v1161 = vld [vmem:[#allocation10 + $0x1620] sm:$0xff]
    %v1162 = vld [vmem:[#allocation10 + $0x1628] sm:$0xff]
    %v1163 = vld [vmem:[#allocation10 + $0x1630] sm:$0xff]
    %v1164 = vld [vmem:[#allocation10 + $0x1638] sm:$0xff]
    %v1165 = vld [vmem:[#allocation10 + $0x1640] sm:$0xff]
    %v1166 = vld [vmem:[#allocation10 + $0x1648] sm:$0xff]
    %v1167 = vld [vmem:[#allocation10 + $0x1650] sm:$0xff]
    %v1168 = vld [vmem:[#allocation10 + $0x1658] sm:$0xff]
    %v1169 = vld [vmem:[#allocation10 + $0x1660] sm:$0xff]
    %v1170 = vld [vmem:[#allocation10 + $0x1668] sm:$0xff]
    %v1171 = vld [vmem:[#allocation10 + $0x1670] sm:$0xff]
    %v1172 = vld [vmem:[#allocation10 + $0x1678] sm:$0xff]
    %v1173 = vld [vmem:[#allocation10 + $0x1680] sm:$0xff]
    %v1174 = vld [vmem:[#allocation10 + $0x1688] sm:$0xff]
    %v1175 = vld [vmem:[#allocation10 + $0x1690] sm:$0xff]
    %v1176 = vld [vmem:[#allocation10 + $0x1698] sm:$0xff]
    %v1177 = vld [vmem:[#allocation10 + $0x16a0] sm:$0xff]
    %v1178 = vld [vmem:[#allocation10 + $0x16a8] sm:$0xff]
    %v1179 = vld [vmem:[#allocation10 + $0x16b0] sm:$0xff]
    %v1180 = vld [vmem:[#allocation10 + $0x16b8] sm:$0xff]
    %v1181 = vld [vmem:[#allocation10 + $0x16c0] sm:$0xff]
    %v1182 = vld [vmem:[#allocation10 + $0x16c8] sm:$0xff]
    %v1183 = vld [vmem:[#allocation10 + $0x16d0] sm:$0xff]
    %v1184 = vld [vmem:[#allocation10 + $0x16d8] sm:$0xff]
    %v1185 = vld [vmem:[#allocation10 + $0x16e0] sm:$0xff]
    %v1186 = vld [vmem:[#allocation10 + $0x16e8] sm:$0xff]
    %v1187 = vld [vmem:[#allocation10 + $0x16f0] sm:$0xff]
    %v1188 = vld [vmem:[#allocation10 + $0x16f8] sm:$0xff]
    %v1189 = vld [vmem:[#allocation10 + $0x1700] sm:$0xff]
    %v1190 = vld [vmem:[#allocation10 + $0x1708] sm:$0xff]
    %v1191 = vld [vmem:[#allocation10 + $0x1710] sm:$0xff]
    %v1192 = vld [vmem:[#allocation10 + $0x1718] sm:$0xff]
    %v1193 = vld [vmem:[#allocation10 + $0x1720] sm:$0xff]
    %v1194 = vld [vmem:[#allocation10 + $0x1728] sm:$0xff]
    %v1195 = vld [vmem:[#allocation10 + $0x1730] sm:$0xff]
    %v1196 = vld [vmem:[#allocation10 + $0x1738] sm:$0xff]
    %v1197 = vld [vmem:[#allocation10 + $0x1740] sm:$0xff]
    %v1198 = vld [vmem:[#allocation10 + $0x1748] sm:$0xff]
    %v1199 = vld [vmem:[#allocation10 + $0x1750] sm:$0xff]
    %v1200 = vld [vmem:[#allocation10 + $0x1758] sm:$0xff]
    %v1201 = vld [vmem:[#allocation10 + $0x1760] sm:$0xff]
    %v1202 = vld [vmem:[#allocation10 + $0x1768] sm:$0xff]
    %v1203 = vld [vmem:[#allocation10 + $0x1770] sm:$0xff]
    %v1204 = vld [vmem:[#allocation10 + $0x1778] sm:$0xff]
    %v1205 = vld [vmem:[#allocation10 + $0x1780] sm:$0xff]
    %v1206 = vld [vmem:[#allocation10 + $0x1788] sm:$0xff]
    %v1207 = vld [vmem:[#allocation10 + $0x1790] sm:$0xff]
    %v1208 = vld [vmem:[#allocation10 + $0x1798] sm:$0xff]
    %v1209 = vld [vmem:[#allocation10 + $0x17a0] sm:$0xff]
    %v1210 = vld [vmem:[#allocation10 + $0x17a8] sm:$0xff]
    %v1211 = vld [vmem:[#allocation10 + $0x17b0] sm:$0xff]
    %v1212 = vld [vmem:[#allocation10 + $0x17b8] sm:$0xff]
    %v1213 = vld [vmem:[#allocation10 + $0x17c0] sm:$0xff]
    %v1214 = vld [vmem:[#allocation10 + $0x17c8] sm:$0xff]
    %v1215 = vld [vmem:[#allocation10 + $0x17d0] sm:$0xff]
    %v1216 = vld [vmem:[#allocation10 + $0x17d8] sm:$0xff]
    %v1217 = vld [vmem:[#allocation10 + $0x17e0] sm:$0xff]
    %v1218 = vld [vmem:[#allocation10 + $0x17e8] sm:$0xff]
    %v1219 = vld [vmem:[#allocation10 + $0x17f0] sm:$0xff]
    %v1220 = vld [vmem:[#allocation10 + $0x17f8] sm:$0xff]
    %v1221 = vld [vmem:[#allocation11] sm:$0xff]
    %v1223 = vlaneseq
    %v1224 = vshrl.u32 %v1223, 7
    %v1225 = vsub.s32 0, %v1224
    %v1226 = vrot.slane %v1221, %v1225
    %v1227 = vlaneseq
    %v1228 = vshrl.u32 %v1227, 7
    %v1229 = vsub.s32 1, %v1228
    %v1230 = vrot.slane %v1221, %v1229
    %v1231 = vlaneseq
    %v1232 = vshrl.u32 %v1231, 7
    %v1233 = vsub.s32 2, %v1232
    %v1234 = vrot.slane %v1221, %v1233
    %v1235 = vlaneseq
    %v1236 = vshrl.u32 %v1235, 7
    %v1237 = vsub.s32 3, %v1236
    %v1238 = vrot.slane %v1221, %v1237
    %v1239 = vlaneseq
    %v1240 = vshrl.u32 %v1239, 7
    %v1241 = vsub.s32 4, %v1240
    %v1242 = vrot.slane %v1221, %v1241
    %v1243 = vlaneseq
    %v1244 = vshrl.u32 %v1243, 7
    %v1245 = vsub.s32 5, %v1244
    %v1246 = vrot.slane %v1221, %v1245
    %v1247 = vlaneseq
    %v1248 = vshrl.u32 %v1247, 7
    %v1249 = vsub.s32 6, %v1248
    %v1250 = vrot.slane %v1221, %v1249
    %v1251 = vlaneseq
    %v1252 = vshrl.u32 %v1251, 7
    %v1253 = vsub.s32 7, %v1252
    %v1254 = vrot.slane %v1221, %v1253
    %1263 = vmatprep.subr.mxu0 %v574
    %1264 = vmatpush1.msra.mxu0 %v573
    %1265 = vmatprep.subr.mxu0 %v566
    %1266 = vmatpush1.msra.mxu0 %v565
    %1267 = vmatprep.subr.mxu0 %v558
    %1268 = vmatpush1.msra.mxu0 %v557
    %1269 = vmatprep.subr.mxu0 %v550
    %1270 = vmatpush1.msra.mxu0 %v549
    %1271 = vmatprep.subr.mxu0 %v542
    %1272 = vmatpush1.msra.mxu0 %v541
    %1273 = vmatprep.subr.mxu0 %v534
    %1274 = vmatpush1.msra.mxu0 %v533
    %1275 = vmatprep.subr.mxu0 %v526
    %1276 = vmatpush1.msra.mxu0 %v525
    %1277 = vmatprep.subr.mxu0 %v518
    %1278 = vmatpush1.msra.mxu0 %v517
    %1279 = vmatprep.subr.mxu0 %v510
    %1280 = vmatpush1.msra.mxu0 %v509
    %1281 = vmatprep.subr.mxu0 %v502
    %1282 = vmatpush1.msra.mxu0 %v501
    %1283 = vmatprep.subr.mxu0 %v494
    %1284 = vmatpush1.msra.mxu0 %v493
    %1285 = vmatprep.subr.mxu0 %v486
    %1286 = vmatpush1.msra.mxu0 %v485
    %1287 = vmatprep.subr.mxu0 %v478
    %1288 = vmatpush1.msra.mxu0 %v477
    %1289 = vmatprep.subr.mxu0 %v470
    %1290 = vmatpush1.msra.mxu0 %v469
    %1291 = vmatprep.subr.mxu0 %v462
    %1292 = vmatpush1.msra.mxu0 %v461
    %1293 = vmatprep.subr.mxu0 %v454
    %1294 = vmatpush1.msra.mxu0 %v453
    %1295 = vmatprep.subr.mxu0 %v702
    %1296 = vmatpush2.msra.mxu0 %v701
    %1297 = vmatprep.subr.mxu0 %v694
    %1298 = vmatpush2.msra.mxu0 %v693
    %1299 = vmatprep.subr.mxu0 %v686
    %1300 = vmatpush2.msra.mxu0 %v685
    %1301 = vmatprep.subr.mxu0 %v678
    %1302 = vmatpush2.msra.mxu0 %v677
    %1303 = vmatprep.subr.mxu0 %v670
    %1304 = vmatpush2.msra.mxu0 %v669
    %1305 = vmatprep.subr.mxu0 %v662
    %1306 = vmatpush2.msra.mxu0 %v661
    %1307 = vmatprep.subr.mxu0 %v654
    %1308 = vmatpush2.msra.mxu0 %v653
    %1309 = vmatprep.subr.mxu0 %v646
    %1310 = vmatpush2.msra.mxu0 %v645
    %1311 = vmatprep.subr.mxu0 %v638
    %1312 = vmatpush2.msra.mxu0 %v637
    %1313 = vmatprep.subr.mxu0 %v630
    %1314 = vmatpush2.msra.mxu0 %v629
    %1315 = vmatprep.subr.mxu0 %v622
    %1316 = vmatpush2.msra.mxu0 %v621
    %1317 = vmatprep.subr.mxu0 %v614
    %1318 = vmatpush2.msra.mxu0 %v613
    %1319 = vmatprep.subr.mxu0 %v606
    %1320 = vmatpush2.msra.mxu0 %v605
    %1321 = vmatprep.subr.mxu0 %v598
    %1322 = vmatpush2.msra.mxu0 %v597
    %1323 = vmatprep.subr.mxu0 %v590
    %1324 = vmatpush2.msra.mxu0 %v589
    %1325 = vmatprep.subr.mxu0 %v582
    %1326 = vmatpush2.msra.mxu0 %v581
    %1327 = vmatprep.mubr.f32.mxu0 %v138
    %1328 = vmatmul.mubr.f32.gmra.mxu0 %v137
    %v1329 = vpop.f32.mrf.mxu0
    %v1330 = vadd.f32 %v1226, %v1329
    %v1331 = vpop.f32.mrf.mxu0
    %v1332 = vadd.f32 %v1230, %v1331
    %1333 = vmatprep.mubr.f32.mxu0 %v144
    %1334 = vmatmul.mubr.f32.gmra.mxu0 %v143
    %v1335 = vpop.f32.mrf.mxu0
    %v1336 = vadd.f32 %v1226, %v1335
    %v1337 = vpop.f32.mrf.mxu0
    %v1338 = vadd.f32 %v1230, %v1337
    %1339 = vdwg.mxu0
    %1340 = vmatprep.subr.mxu0 %v830
    %1341 = vmatpush1.msra.mxu0 %v829
    %1342 = vmatprep.subr.mxu0 %v822
    %1343 = vmatpush1.msra.mxu0 %v821
    %1344 = vmatprep.subr.mxu0 %v814
    %1345 = vmatpush1.msra.mxu0 %v813
    %1346 = vmatprep.subr.mxu0 %v806
    %1347 = vmatpush1.msra.mxu0 %v805
    %1348 = vmatprep.subr.mxu0 %v798
    %1349 = vmatpush1.msra.mxu0 %v797
    %1350 = vmatprep.subr.mxu0 %v790
    %1351 = vmatpush1.msra.mxu0 %v789
    %1352 = vmatprep.subr.mxu0 %v782
    %1353 = vmatpush1.msra.mxu0 %v781
    %1354 = vmatprep.subr.mxu0 %v774
    %1355 = vmatpush1.msra.mxu0 %v773
    %1356 = vmatprep.subr.mxu0 %v766
    %1357 = vmatpush1.msra.mxu0 %v765
    %1358 = vmatprep.subr.mxu0 %v758
    %1359 = vmatpush1.msra.mxu0 %v757
    %1360 = vmatprep.subr.mxu0 %v750
    %1361 = vmatpush1.msra.mxu0 %v749
    %1362 = vmatprep.subr.mxu0 %v742
    %1363 = vmatpush1.msra.mxu0 %v741
    %1364 = vmatprep.subr.mxu0 %v734
    %1365 = vmatpush1.msra.mxu0 %v733
    %1366 = vmatprep.subr.mxu0 %v726
    %1367 = vmatpush1.msra.mxu0 %v725
    %1368 = vmatprep.subr.mxu0 %v718
    %1369 = vmatpush1.msra.mxu0 %v717
    %1370 = vmatprep.subr.mxu0 %v710
    %1371 = vmatpush1.msra.mxu0 %v709
    %1372 = vmatprep.subr.mxu0 %v958
    %1373 = vmatpush2.msra.mxu0 %v957
    %1374 = vmatprep.subr.mxu0 %v950
    %1375 = vmatpush2.msra.mxu0 %v949
    %1376 = vmatprep.subr.mxu0 %v942
    %1377 = vmatpush2.msra.mxu0 %v941
    %1378 = vmatprep.subr.mxu0 %v934
    %1379 = vmatpush2.msra.mxu0 %v933
    %1380 = vmatprep.subr.mxu0 %v926
    %1381 = vmatpush2.msra.mxu0 %v925
    %1382 = vmatprep.subr.mxu0 %v918
    %1383 = vmatpush2.msra.mxu0 %v917
    %1384 = vmatprep.subr.mxu0 %v910
    %1385 = vmatpush2.msra.mxu0 %v909
    %1386 = vmatprep.subr.mxu0 %v902
    %1387 = vmatpush2.msra.mxu0 %v901
    %1388 = vmatprep.subr.mxu0 %v894
    %1389 = vmatpush2.msra.mxu0 %v893
    %1390 = vmatprep.subr.mxu0 %v886
    %1391 = vmatpush2.msra.mxu0 %v885
    %1392 = vmatprep.subr.mxu0 %v878
    %1393 = vmatpush2.msra.mxu0 %v877
    %1394 = vmatprep.subr.mxu0 %v870
    %1395 = vmatpush2.msra.mxu0 %v869
    %1396 = vmatprep.subr.mxu0 %v862
    %1397 = vmatpush2.msra.mxu0 %v861
    %1398 = vmatprep.subr.mxu0 %v854
    %1399 = vmatpush2.msra.mxu0 %v853
    %1400 = vmatprep.subr.mxu0 %v846
    %1401 = vmatpush2.msra.mxu0 %v845
    %1402 = vmatprep.subr.mxu0 %v838
    %1403 = vmatpush2.msra.mxu0 %v837
    %1404 = vmatprep.mubr.f32.mxu0 %v140
    %1405 = vmatmul.mubr.f32.gmra.mxu0 %v139
    %v1406 = vpop.f32.mrf.mxu0
    %v1407 = vadd.f32 %v1330, %v1406
    %v1408 = vpop.f32.mrf.mxu0
    %v1409 = vadd.f32 %v1332, %v1408
    %1410 = vmatprep.mubr.f32.mxu0 %v146
    %1411 = vmatmul.mubr.f32.gmra.mxu0 %v145
    %v1412 = vpop.f32.mrf.mxu0
    %v1413 = vadd.f32 %v1336, %v1412
    %v1414 = vpop.f32.mrf.mxu0
    %v1415 = vadd.f32 %v1338, %v1414
    %1416 = vdwg.mxu0
    %1417 = vmatprep.subr.mxu0 %v1086
    %1418 = vmatpush1.msra.mxu0 %v1085
    %1419 = vmatprep.subr.mxu0 %v1078
    %1420 = vmatpush1.msra.mxu0 %v1077
    %1421 = vmatprep.subr.mxu0 %v1070
    %1422 = vmatpush1.msra.mxu0 %v1069
    %1423 = vmatprep.subr.mxu0 %v1062
    %1424 = vmatpush1.msra.mxu0 %v1061
    %1425 = vmatprep.subr.mxu0 %v1054
    %1426 = vmatpush1.msra.mxu0 %v1053
    %1427 = vmatprep.subr.mxu0 %v1046
    %1428 = vmatpush1.msra.mxu0 %v1045
    %1429 = vmatprep.subr.mxu0 %v1038
    %1430 = vmatpush1.msra.mxu0 %v1037
    %1431 = vmatprep.subr.mxu0 %v1030
    %1432 = vmatpush1.msra.mxu0 %v1029
    %1433 = vmatprep.subr.mxu0 %v1022
    %1434 = vmatpush1.msra.mxu0 %v1021
    %1435 = vmatprep.subr.mxu0 %v1014
    %1436 = vmatpush1.msra.mxu0 %v1013
    %1437 = vmatprep.subr.mxu0 %v1006
    %1438 = vmatpush1.msra.mxu0 %v1005
    %1439 = vmatprep.subr.mxu0 %v998
    %1440 = vmatpush1.msra.mxu0 %v997
    %1441 = vmatprep.subr.mxu0 %v990
    %1442 = vmatpush1.msra.mxu0 %v989
    %1443 = vmatprep.subr.mxu0 %v982
    %1444 = vmatpush1.msra.mxu0 %v981
    %1445 = vmatprep.subr.mxu0 %v974
    %1446 = vmatpush1.msra.mxu0 %v973
    %1447 = vmatprep.subr.mxu0 %v966
    %1448 = vmatpush1.msra.mxu0 %v965
    %1449 = vmatprep.subr.mxu0 %v1214
    %1450 = vmatpush2.msra.mxu0 %v1213
    %1451 = vmatprep.subr.mxu0 %v1206
    %1452 = vmatpush2.msra.mxu0 %v1205
    %1453 = vmatprep.subr.mxu0 %v1198
    %1454 = vmatpush2.msra.mxu0 %v1197
    %1455 = vmatprep.subr.mxu0 %v1190
    %1456 = vmatpush2.msra.mxu0 %v1189
    %1457 = vmatprep.subr.mxu0 %v1182
    %1458 = vmatpush2.msra.mxu0 %v1181
    %1459 = vmatprep.subr.mxu0 %v1174
    %1460 = vmatpush2.msra.mxu0 %v1173
    %1461 = vmatprep.subr.mxu0 %v1166
    %1462 = vmatpush2.msra.mxu0 %v1165
    %1463 = vmatprep.subr.mxu0 %v1158
    %1464 = vmatpush2.msra.mxu0 %v1157
    %1465 = vmatprep.subr.mxu0 %v1150
    %1466 = vmatpush2.msra.mxu0 %v1149
    %1467 = vmatprep.subr.mxu0 %v1142
    %1468 = vmatpush2.msra.mxu0 %v1141
    %1469 = vmatprep.subr.mxu0 %v1134
    %1470 = vmatpush2.msra.mxu0 %v1133
    %1471 = vmatprep.subr.mxu0 %v1126
    %1472 = vmatpush2.msra.mxu0 %v1125
    %1473 = vmatprep.subr.mxu0 %v1118
    %1474 = vmatpush2.msra.mxu0 %v1117
    %1475 = vmatprep.subr.mxu0 %v1110
    %1476 = vmatpush2.msra.mxu0 %v1109
    %1477 = vmatprep.subr.mxu0 %v1102
    %1478 = vmatpush2.msra.mxu0 %v1101
    %1479 = vmatprep.subr.mxu0 %v1094
    %1480 = vmatpush2.msra.mxu0 %v1093
    %1481 = vmatprep.mubr.f32.mxu0 %v142
    %1482 = vmatmul.mubr.f32.gmra.mxu0 %v141
    %v1483 = vpop.f32.mrf.mxu0
    %v1484 = vadd.f32 %v1407, %v1483
    %v1485 = vpop.f32.mrf.mxu0
    %v1486 = vadd.f32 %v1409, %v1485
    %1487 = vmatprep.mubr.f32.mxu0 %v148
    %1488 = vmatmul.mubr.f32.gmra.mxu0 %v147
    %v1489 = vpop.f32.mrf.mxu0
    %v1490 = vadd.f32 %v1413, %v1489
    %v1491 = vpop.f32.mrf.mxu0
    %v1492 = vadd.f32 %v1415, %v1491
    %1493 = vdwg.mxu0
    %1494 = vmatprep.subr.mxu0 %v576
    %1495 = vmatpush1.msra.mxu0 %v575
    %1496 = vmatprep.subr.mxu0 %v568
    %1497 = vmatpush1.msra.mxu0 %v567
    %1498 = vmatprep.subr.mxu0 %v560
    %1499 = vmatpush1.msra.mxu0 %v559
    %1500 = vmatprep.subr.mxu0 %v552
    %1501 = vmatpush1.msra.mxu0 %v551
    %1502 = vmatprep.subr.mxu0 %v544
    %1503 = vmatpush1.msra.mxu0 %v543
    %1504 = vmatprep.subr.mxu0 %v536
    %1505 = vmatpush1.msra.mxu0 %v535
    %1506 = vmatprep.subr.mxu0 %v528
    %1507 = vmatpush1.msra.mxu0 %v527
    %1508 = vmatprep.subr.mxu0 %v520
    %1509 = vmatpush1.msra.mxu0 %v519
    %1510 = vmatprep.subr.mxu0 %v512
    %1511 = vmatpush1.msra.mxu0 %v511
    %1512 = vmatprep.subr.mxu0 %v504
    %1513 = vmatpush1.msra.mxu0 %v503
    %1514 = vmatprep.subr.mxu0 %v496
    %1515 = vmatpush1.msra.mxu0 %v495
    %1516 = vmatprep.subr.mxu0 %v488
    %1517 = vmatpush1.msra.mxu0 %v487
    %1518 = vmatprep.subr.mxu0 %v480
    %1519 = vmatpush1.msra.mxu0 %v479
    %1520 = vmatprep.subr.mxu0 %v472
    %1521 = vmatpush1.msra.mxu0 %v471
    %1522 = vmatprep.subr.mxu0 %v464
    %1523 = vmatpush1.msra.mxu0 %v463
    %1524 = vmatprep.subr.mxu0 %v456
    %1525 = vmatpush1.msra.mxu0 %v455
    %1526 = vmatprep.subr.mxu0 %v704
    %1527 = vmatpush2.msra.mxu0 %v703
    %1528 = vmatprep.subr.mxu0 %v696
    %1529 = vmatpush2.msra.mxu0 %v695
    %1530 = vmatprep.subr.mxu0 %v688
    %1531 = vmatpush2.msra.mxu0 %v687
    %1532 = vmatprep.subr.mxu0 %v680
    %1533 = vmatpush2.msra.mxu0 %v679
    %1534 = vmatprep.subr.mxu0 %v672
    %1535 = vmatpush2.msra.mxu0 %v671
    %1536 = vmatprep.subr.mxu0 %v664
    %1537 = vmatpush2.msra.mxu0 %v663
    %1538 = vmatprep.subr.mxu0 %v656
    %1539 = vmatpush2.msra.mxu0 %v655
    %1540 = vmatprep.subr.mxu0 %v648
    %1541 = vmatpush2.msra.mxu0 %v647
    %1542 = vmatprep.subr.mxu0 %v640
    %1543 = vmatpush2.msra.mxu0 %v639
    %1544 = vmatprep.subr.mxu0 %v632
    %1545 = vmatpush2.msra.mxu0 %v631
    %1546 = vmatprep.subr.mxu0 %v624
    %1547 = vmatpush2.msra.mxu0 %v623
    %1548 = vmatprep.subr.mxu0 %v616
    %1549 = vmatpush2.msra.mxu0 %v615
    %1550 = vmatprep.subr.mxu0 %v608
    %1551 = vmatpush2.msra.mxu0 %v607
    %1552 = vmatprep.subr.mxu0 %v600
    %1553 = vmatpush2.msra.mxu0 %v599
    %1554 = vmatprep.subr.mxu0 %v592
    %1555 = vmatpush2.msra.mxu0 %v591
    %1556 = vmatprep.subr.mxu0 %v584
    %1557 = vmatpush2.msra.mxu0 %v583
    %1558 = vmatprep.mubr.f32.mxu0 %v138
    %1559 = vmatmul.mubr.f32.gmra.mxu0 %v137
    %v1560 = vpop.f32.mrf.mxu0
    %v1561 = vadd.f32 %v1234, %v1560
    %v1562 = vpop.f32.mrf.mxu0
    %v1563 = vadd.f32 %v1238, %v1562
    %1564 = vmatprep.mubr.f32.mxu0 %v144
    %1565 = vmatmul.mubr.f32.gmra.mxu0 %v143
    %v1566 = vpop.f32.mrf.mxu0
    %v1567 = vadd.f32 %v1234, %v1566
    %v1568 = vpop.f32.mrf.mxu0
    %v1569 = vadd.f32 %v1238, %v1568
    %1570 = vdwg.mxu0
    %1571 = vmatprep.subr.mxu0 %v832
    %1572 = vmatpush1.msra.mxu0 %v831
    %1573 = vmatprep.subr.mxu0 %v824
    %1574 = vmatpush1.msra.mxu0 %v823
    %1575 = vmatprep.subr.mxu0 %v816
    %1576 = vmatpush1.msra.mxu0 %v815
    %1577 = vmatprep.subr.mxu0 %v808
    %1578 = vmatpush1.msra.mxu0 %v807
    %1579 = vmatprep.subr.mxu0 %v800
    %1580 = vmatpush1.msra.mxu0 %v799
    %1581 = vmatprep.subr.mxu0 %v792
    %1582 = vmatpush1.msra.mxu0 %v791
    %1583 = vmatprep.subr.mxu0 %v784
    %1584 = vmatpush1.msra.mxu0 %v783
    %1585 = vmatprep.subr.mxu0 %v776
    %1586 = vmatpush1.msra.mxu0 %v775
    %1587 = vmatprep.subr.mxu0 %v768
    %1588 = vmatpush1.msra.mxu0 %v767
    %1589 = vmatprep.subr.mxu0 %v760
    %1590 = vmatpush1.msra.mxu0 %v759
    %1591 = vmatprep.subr.mxu0 %v752
    %1592 = vmatpush1.msra.mxu0 %v751
    %1593 = vmatprep.subr.mxu0 %v744
    %1594 = vmatpush1.msra.mxu0 %v743
    %1595 = vmatprep.subr.mxu0 %v736
    %1596 = vmatpush1.msra.mxu0 %v735
    %1597 = vmatprep.subr.mxu0 %v728
    %1598 = vmatpush1.msra.mxu0 %v727
    %1599 = vmatprep.subr.mxu0 %v720
    %1600 = vmatpush1.msra.mxu0 %v719
    %1601 = vmatprep.subr.mxu0 %v712
    %1602 = vmatpush1.msra.mxu0 %v711
    %1603 = vmatprep.subr.mxu0 %v960
    %1604 = vmatpush2.msra.mxu0 %v959
    %1605 = vmatprep.subr.mxu0 %v952
    %1606 = vmatpush2.msra.mxu0 %v951
    %1607 = vmatprep.subr.mxu0 %v944
    %1608 = vmatpush2.msra.mxu0 %v943
    %1609 = vmatprep.subr.mxu0 %v936
    %1610 = vmatpush2.msra.mxu0 %v935
    %1611 = vmatprep.subr.mxu0 %v928
    %1612 = vmatpush2.msra.mxu0 %v927
    %1613 = vmatprep.subr.mxu0 %v920
    %1614 = vmatpush2.msra.mxu0 %v919
    %1615 = vmatprep.subr.mxu0 %v912
    %1616 = vmatpush2.msra.mxu0 %v911
    %1617 = vmatprep.subr.mxu0 %v904
    %1618 = vmatpush2.msra.mxu0 %v903
    %1619 = vmatprep.subr.mxu0 %v896
    %1620 = vmatpush2.msra.mxu0 %v895
    %1621 = vmatprep.subr.mxu0 %v888
    %1622 = vmatpush2.msra.mxu0 %v887
    %1623 = vmatprep.subr.mxu0 %v880
    %1624 = vmatpush2.msra.mxu0 %v879
    %1625 = vmatprep.subr.mxu0 %v872
    %1626 = vmatpush2.msra.mxu0 %v871
    %1627 = vmatprep.subr.mxu0 %v864
    %1628 = vmatpush2.msra.mxu0 %v863
    %1629 = vmatprep.subr.mxu0 %v856
    %1630 = vmatpush2.msra.mxu0 %v855
    %1631 = vmatprep.subr.mxu0 %v848
    %1632 = vmatpush2.msra.mxu0 %v847
    %1633 = vmatprep.subr.mxu0 %v840
    %1634 = vmatpush2.msra.mxu0 %v839
    %1635 = vmatprep.mubr.f32.mxu0 %v140
    %1636 = vmatmul.mubr.f32.gmra.mxu0 %v139
    %v1637 = vpop.f32.mrf.mxu0
    %v1638 = vadd.f32 %v1561, %v1637
    %v1639 = vpop.f32.mrf.mxu0
    %v1640 = vadd.f32 %v1563, %v1639
    %1641 = vmatprep.mubr.f32.mxu0 %v146
    %1642 = vmatmul.mubr.f32.gmra.mxu0 %v145
    %v1643 = vpop.f32.mrf.mxu0
    %v1644 = vadd.f32 %v1567, %v1643
    %v1645 = vpop.f32.mrf.mxu0
    %v1646 = vadd.f32 %v1569, %v1645
    %1647 = vdwg.mxu0
    %1648 = vmatprep.subr.mxu0 %v1088
    %1649 = vmatpush1.msra.mxu0 %v1087
    %1650 = vmatprep.subr.mxu0 %v1080
    %1651 = vmatpush1.msra.mxu0 %v1079
    %1652 = vmatprep.subr.mxu0 %v1072
    %1653 = vmatpush1.msra.mxu0 %v1071
    %1654 = vmatprep.subr.mxu0 %v1064
    %1655 = vmatpush1.msra.mxu0 %v1063
    %1656 = vmatprep.subr.mxu0 %v1056
    %1657 = vmatpush1.msra.mxu0 %v1055
    %1658 = vmatprep.subr.mxu0 %v1048
    %1659 = vmatpush1.msra.mxu0 %v1047
    %1660 = vmatprep.subr.mxu0 %v1040
    %1661 = vmatpush1.msra.mxu0 %v1039
    %1662 = vmatprep.subr.mxu0 %v1032
    %1663 = vmatpush1.msra.mxu0 %v1031
    %1664 = vmatprep.subr.mxu0 %v1024
    %1665 = vmatpush1.msra.mxu0 %v1023
    %1666 = vmatprep.subr.mxu0 %v1016
    %1667 = vmatpush1.msra.mxu0 %v1015
    %1668 = vmatprep.subr.mxu0 %v1008
    %1669 = vmatpush1.msra.mxu0 %v1007
    %1670 = vmatprep.subr.mxu0 %v1000
    %1671 = vmatpush1.msra.mxu0 %v999
    %1672 = vmatprep.subr.mxu0 %v992
    %1673 = vmatpush1.msra.mxu0 %v991
    %1674 = vmatprep.subr.mxu0 %v984
    %1675 = vmatpush1.msra.mxu0 %v983
    %1676 = vmatprep.subr.mxu0 %v976
    %1677 = vmatpush1.msra.mxu0 %v975
    %1678 = vmatprep.subr.mxu0 %v968
    %1679 = vmatpush1.msra.mxu0 %v967
    %1680 = vmatprep.subr.mxu0 %v1216
    %1681 = vmatpush2.msra.mxu0 %v1215
    %1682 = vmatprep.subr.mxu0 %v1208
    %1683 = vmatpush2.msra.mxu0 %v1207
    %1684 = vmatprep.subr.mxu0 %v1200
    %1685 = vmatpush2.msra.mxu0 %v1199
    %1686 = vmatprep.subr.mxu0 %v1192
    %1687 = vmatpush2.msra.mxu0 %v1191
    %1688 = vmatprep.subr.mxu0 %v1184
    %1689 = vmatpush2.msra.mxu0 %v1183
    %1690 = vmatprep.subr.mxu0 %v1176
    %1691 = vmatpush2.msra.mxu0 %v1175
    %1692 = vmatprep.subr.mxu0 %v1168
    %1693 = vmatpush2.msra.mxu0 %v1167
    %1694 = vmatprep.subr.mxu0 %v1160
    %1695 = vmatpush2.msra.mxu0 %v1159
    %1696 = vmatprep.subr.mxu0 %v1152
    %1697 = vmatpush2.msra.mxu0 %v1151
    %1698 = vmatprep.subr.mxu0 %v1144
    %1699 = vmatpush2.msra.mxu0 %v1143
    %1700 = vmatprep.subr.mxu0 %v1136
    %1701 = vmatpush2.msra.mxu0 %v1135
    %1702 = vmatprep.subr.mxu0 %v1128
    %1703 = vmatpush2.msra.mxu0 %v1127
    %1704 = vmatprep.subr.mxu0 %v1120
    %1705 = vmatpush2.msra.mxu0 %v1119
    %1706 = vmatprep.subr.mxu0 %v1112
    %1707 = vmatpush2.msra.mxu0 %v1111
    %1708 = vmatprep.subr.mxu0 %v1104
    %1709 = vmatpush2.msra.mxu0 %v1103
    %1710 = vmatprep.subr.mxu0 %v1096
    %1711 = vmatpush2.msra.mxu0 %v1095
    %1712 = vmatprep.mubr.f32.mxu0 %v142
    %1713 = vmatmul.mubr.f32.gmra.mxu0 %v141
    %v1714 = vpop.f32.mrf.mxu0
    %v1715 = vadd.f32 %v1638, %v1714
    %v1716 = vpop.f32.mrf.mxu0
    %v1717 = vadd.f32 %v1640, %v1716
    %1718 = vmatprep.mubr.f32.mxu0 %v148
    %1719 = vmatmul.mubr.f32.gmra.mxu0 %v147
    %v1720 = vpop.f32.mrf.mxu0
    %v1721 = vadd.f32 %v1644, %v1720
    %v1722 = vpop.f32.mrf.mxu0
    %v1723 = vadd.f32 %v1646, %v1722
    %1724 = vdwg.mxu0
    %1725 = vmatprep.subr.mxu0 %v578
    %1726 = vmatpush1.msra.mxu0 %v577
    %1727 = vmatprep.subr.mxu0 %v570
    %1728 = vmatpush1.msra.mxu0 %v569
    %1729 = vmatprep.subr.mxu0 %v562
    %1730 = vmatpush1.msra.mxu0 %v561
    %1731 = vmatprep.subr.mxu0 %v554
    %1732 = vmatpush1.msra.mxu0 %v553
    %1733 = vmatprep.subr.mxu0 %v546
    %1734 = vmatpush1.msra.mxu0 %v545
    %1735 = vmatprep.subr.mxu0 %v538
    %1736 = vmatpush1.msra.mxu0 %v537
    %1737 = vmatprep.subr.mxu0 %v530
    %1738 = vmatpush1.msra.mxu0 %v529
    %1739 = vmatprep.subr.mxu0 %v522
    %1740 = vmatpush1.msra.mxu0 %v521
    %1741 = vmatprep.subr.mxu0 %v514
    %1742 = vmatpush1.msra.mxu0 %v513
    %1743 = vmatprep.subr.mxu0 %v506
    %1744 = vmatpush1.msra.mxu0 %v505
    %1745 = vmatprep.subr.mxu0 %v498
    %1746 = vmatpush1.msra.mxu0 %v497
    %1747 = vmatprep.subr.mxu0 %v490
    %1748 = vmatpush1.msra.mxu0 %v489
    %1749 = vmatprep.subr.mxu0 %v482
    %1750 = vmatpush1.msra.mxu0 %v481
    %1751 = vmatprep.subr.mxu0 %v474
    %1752 = vmatpush1.msra.mxu0 %v473
    %1753 = vmatprep.subr.mxu0 %v466
    %1754 = vmatpush1.msra.mxu0 %v465
    %1755 = vmatprep.subr.mxu0 %v458
    %1756 = vmatpush1.msra.mxu0 %v457
    %1757 = vmatprep.subr.mxu0 %v706
    %1758 = vmatpush2.msra.mxu0 %v705
    %1759 = vmatprep.subr.mxu0 %v698
    %1760 = vmatpush2.msra.mxu0 %v697
    %1761 = vmatprep.subr.mxu0 %v690
    %1762 = vmatpush2.msra.mxu0 %v689
    %1763 = vmatprep.subr.mxu0 %v682
    %1764 = vmatpush2.msra.mxu0 %v681
    %1765 = vmatprep.subr.mxu0 %v674
    %1766 = vmatpush2.msra.mxu0 %v673
    %1767 = vmatprep.subr.mxu0 %v666
    %1768 = vmatpush2.msra.mxu0 %v665
    %1769 = vmatprep.subr.mxu0 %v658
    %1770 = vmatpush2.msra.mxu0 %v657
    %1771 = vmatprep.subr.mxu0 %v650
    %1772 = vmatpush2.msra.mxu0 %v649
    %1773 = vmatprep.subr.mxu0 %v642
    %1774 = vmatpush2.msra.mxu0 %v641
    %1775 = vmatprep.subr.mxu0 %v634
    %1776 = vmatpush2.msra.mxu0 %v633
    %1777 = vmatprep.subr.mxu0 %v626
    %1778 = vmatpush2.msra.mxu0 %v625
    %1779 = vmatprep.subr.mxu0 %v618
    %1780 = vmatpush2.msra.mxu0 %v617
    %1781 = vmatprep.subr.mxu0 %v610
    %1782 = vmatpush2.msra.mxu0 %v609
    %1783 = vmatprep.subr.mxu0 %v602
    %1784 = vmatpush2.msra.mxu0 %v601
    %1785 = vmatprep.subr.mxu0 %v594
    %1786 = vmatpush2.msra.mxu0 %v593
    %1787 = vmatprep.subr.mxu0 %v586
    %1788 = vmatpush2.msra.mxu0 %v585
    %1789 = vmatprep.mubr.f32.mxu0 %v138
    %1790 = vmatmul.mubr.f32.gmra.mxu0 %v137
    %v1791 = vpop.f32.mrf.mxu0
    %v1792 = vadd.f32 %v1242, %v1791
    %v1793 = vpop.f32.mrf.mxu0
    %v1794 = vadd.f32 %v1246, %v1793
    %1795 = vmatprep.mubr.f32.mxu0 %v144
    %1796 = vmatmul.mubr.f32.gmra.mxu0 %v143
    %v1797 = vpop.f32.mrf.mxu0
    %v1798 = vadd.f32 %v1242, %v1797
    %v1799 = vpop.f32.mrf.mxu0
    %v1800 = vadd.f32 %v1246, %v1799
    %1801 = vdwg.mxu0
    %1802 = vmatprep.subr.mxu0 %v834
    %1803 = vmatpush1.msra.mxu0 %v833
    %1804 = vmatprep.subr.mxu0 %v826
    %1805 = vmatpush1.msra.mxu0 %v825
    %1806 = vmatprep.subr.mxu0 %v818
    %1807 = vmatpush1.msra.mxu0 %v817
    %1808 = vmatprep.subr.mxu0 %v810
    %1809 = vmatpush1.msra.mxu0 %v809
    %1810 = vmatprep.subr.mxu0 %v802
    %1811 = vmatpush1.msra.mxu0 %v801
    %1812 = vmatprep.subr.mxu0 %v794
    %1813 = vmatpush1.msra.mxu0 %v793
    %1814 = vmatprep.subr.mxu0 %v786
    %1815 = vmatpush1.msra.mxu0 %v785
    %1816 = vmatprep.subr.mxu0 %v778
    %1817 = vmatpush1.msra.mxu0 %v777
    %1818 = vmatprep.subr.mxu0 %v770
    %1819 = vmatpush1.msra.mxu0 %v769
    %1820 = vmatprep.subr.mxu0 %v762
    %1821 = vmatpush1.msra.mxu0 %v761
    %1822 = vmatprep.subr.mxu0 %v754
    %1823 = vmatpush1.msra.mxu0 %v753
    %1824 = vmatprep.subr.mxu0 %v746
    %1825 = vmatpush1.msra.mxu0 %v745
    %1826 = vmatprep.subr.mxu0 %v738
    %1827 = vmatpush1.msra.mxu0 %v737
    %1828 = vmatprep.subr.mxu0 %v730
    %1829 = vmatpush1.msra.mxu0 %v729
    %1830 = vmatprep.subr.mxu0 %v722
    %1831 = vmatpush1.msra.mxu0 %v721
    %1832 = vmatprep.subr.mxu0 %v714
    %1833 = vmatpush1.msra.mxu0 %v713
    %1834 = vmatprep.subr.mxu0 %v962
    %1835 = vmatpush2.msra.mxu0 %v961
    %1836 = vmatprep.subr.mxu0 %v954
    %1837 = vmatpush2.msra.mxu0 %v953
    %1838 = vmatprep.subr.mxu0 %v946
    %1839 = vmatpush2.msra.mxu0 %v945
    %1840 = vmatprep.subr.mxu0 %v938
    %1841 = vmatpush2.msra.mxu0 %v937
    %1842 = vmatprep.subr.mxu0 %v930
    %1843 = vmatpush2.msra.mxu0 %v929
    %1844 = vmatprep.subr.mxu0 %v922
    %1845 = vmatpush2.msra.mxu0 %v921
    %1846 = vmatprep.subr.mxu0 %v914
    %1847 = vmatpush2.msra.mxu0 %v913
    %1848 = vmatprep.subr.mxu0 %v906
    %1849 = vmatpush2.msra.mxu0 %v905
    %1850 = vmatprep.subr.mxu0 %v898
    %1851 = vmatpush2.msra.mxu0 %v897
    %1852 = vmatprep.subr.mxu0 %v890
    %1853 = vmatpush2.msra.mxu0 %v889
    %1854 = vmatprep.subr.mxu0 %v882
    %1855 = vmatpush2.msra.mxu0 %v881
    %1856 = vmatprep.subr.mxu0 %v874
    %1857 = vmatpush2.msra.mxu0 %v873
    %1858 = vmatprep.subr.mxu0 %v866
    %1859 = vmatpush2.msra.mxu0 %v865
    %1860 = vmatprep.subr.mxu0 %v858
    %1861 = vmatpush2.msra.mxu0 %v857
    %1862 = vmatprep.subr.mxu0 %v850
    %1863 = vmatpush2.msra.mxu0 %v849
    %1864 = vmatprep.subr.mxu0 %v842
    %1865 = vmatpush2.msra.mxu0 %v841
    %1866 = vmatprep.mubr.f32.mxu0 %v140
    %1867 = vmatmul.mubr.f32.gmra.mxu0 %v139
    %v1868 = vpop.f32.mrf.mxu0
    %v1869 = vadd.f32 %v1792, %v1868
    %v1870 = vpop.f32.mrf.mxu0
    %v1871 = vadd.f32 %v1794, %v1870
    %1872 = vmatprep.mubr.f32.mxu0 %v146
    %1873 = vmatmul.mubr.f32.gmra.mxu0 %v145
    %v1874 = vpop.f32.mrf.mxu0
    %v1875 = vadd.f32 %v1798, %v1874
    %v1876 = vpop.f32.mrf.mxu0
    %v1877 = vadd.f32 %v1800, %v1876
    %1878 = vdwg.mxu0
    %1879 = vmatprep.subr.mxu0 %v1090
    %1880 = vmatpush1.msra.mxu0 %v1089
    %1881 = vmatprep.subr.mxu0 %v1082
    %1882 = vmatpush1.msra.mxu0 %v1081
    %1883 = vmatprep.subr.mxu0 %v1074
    %1884 = vmatpush1.msra.mxu0 %v1073
    %1885 = vmatprep.subr.mxu0 %v1066
    %1886 = vmatpush1.msra.mxu0 %v1065
    %1887 = vmatprep.subr.mxu0 %v1058
    %1888 = vmatpush1.msra.mxu0 %v1057
    %1889 = vmatprep.subr.mxu0 %v1050
    %1890 = vmatpush1.msra.mxu0 %v1049
    %1891 = vmatprep.subr.mxu0 %v1042
    %1892 = vmatpush1.msra.mxu0 %v1041
    %1893 = vmatprep.subr.mxu0 %v1034
    %1894 = vmatpush1.msra.mxu0 %v1033
    %1895 = vmatprep.subr.mxu0 %v1026
    %1896 = vmatpush1.msra.mxu0 %v1025
    %1897 = vmatprep.subr.mxu0 %v1018
    %1898 = vmatpush1.msra.mxu0 %v1017
    %1899 = vmatprep.subr.mxu0 %v1010
    %1900 = vmatpush1.msra.mxu0 %v1009
    %1901 = vmatprep.subr.mxu0 %v1002
    %1902 = vmatpush1.msra.mxu0 %v1001
    %1903 = vmatprep.subr.mxu0 %v994
    %1904 = vmatpush1.msra.mxu0 %v993
    %1905 = vmatprep.subr.mxu0 %v986
    %1906 = vmatpush1.msra.mxu0 %v985
    %1907 = vmatprep.subr.mxu0 %v978
    %1908 = vmatpush1.msra.mxu0 %v977
    %1909 = vmatprep.subr.mxu0 %v970
    %1910 = vmatpush1.msra.mxu0 %v969
    %1911 = vmatprep.subr.mxu0 %v1218
    %1912 = vmatpush2.msra.mxu0 %v1217
    %1913 = vmatprep.subr.mxu0 %v1210
    %1914 = vmatpush2.msra.mxu0 %v1209
    %1915 = vmatprep.subr.mxu0 %v1202
    %1916 = vmatpush2.msra.mxu0 %v1201
    %1917 = vmatprep.subr.mxu0 %v1194
    %1918 = vmatpush2.msra.mxu0 %v1193
    %1919 = vmatprep.subr.mxu0 %v1186
    %1920 = vmatpush2.msra.mxu0 %v1185
    %1921 = vmatprep.subr.mxu0 %v1178
    %1922 = vmatpush2.msra.mxu0 %v1177
    %1923 = vmatprep.subr.mxu0 %v1170
    %1924 = vmatpush2.msra.mxu0 %v1169
    %1925 = vmatprep.subr.mxu0 %v1162
    %1926 = vmatpush2.msra.mxu0 %v1161
    %1927 = vmatprep.subr.mxu0 %v1154
    %1928 = vmatpush2.msra.mxu0 %v1153
    %1929 = vmatprep.subr.mxu0 %v1146
    %1930 = vmatpush2.msra.mxu0 %v1145
    %1931 = vmatprep.subr.mxu0 %v1138
    %1932 = vmatpush2.msra.mxu0 %v1137
    %1933 = vmatprep.subr.mxu0 %v1130
    %1934 = vmatpush2.msra.mxu0 %v1129
    %1935 = vmatprep.subr.mxu0 %v1122
    %1936 = vmatpush2.msra.mxu0 %v1121
    %1937 = vmatprep.subr.mxu0 %v1114
    %1938 = vmatpush2.msra.mxu0 %v1113
    %1939 = vmatprep.subr.mxu0 %v1106
    %1940 = vmatpush2.msra.mxu0 %v1105
    %1941 = vmatprep.subr.mxu0 %v1098
    %1942 = vmatpush2.msra.mxu0 %v1097
    %1943 = vmatprep.mubr.f32.mxu0 %v142
    %1944 = vmatmul.mubr.f32.gmra.mxu0 %v141
    %v1945 = vpop.f32.mrf.mxu0
    %v1946 = vadd.f32 %v1869, %v1945
    %v1947 = vpop.f32.mrf.mxu0
    %v1948 = vadd.f32 %v1871, %v1947
    %1949 = vmatprep.mubr.f32.mxu0 %v148
    %1950 = vmatmul.mubr.f32.gmra.mxu0 %v147
    %v1951 = vpop.f32.mrf.mxu0
    %v1952 = vadd.f32 %v1875, %v1951
    %v1953 = vpop.f32.mrf.mxu0
    %v1954 = vadd.f32 %v1877, %v1953
    %1955 = vdwg.mxu0
    %1956 = vmatprep.subr.mxu0 %v580
    %1957 = vmatpush1.msra.mxu0 %v579
    %1958 = vmatprep.subr.mxu0 %v572
    %1959 = vmatpush1.msra.mxu0 %v571
    %1960 = vmatprep.subr.mxu0 %v564
    %1961 = vmatpush1.msra.mxu0 %v563
    %1962 = vmatprep.subr.mxu0 %v556
    %1963 = vmatpush1.msra.mxu0 %v555
    %1964 = vmatprep.subr.mxu0 %v548
    %1965 = vmatpush1.msra.mxu0 %v547
    %1966 = vmatprep.subr.mxu0 %v540
    %1967 = vmatpush1.msra.mxu0 %v539
    %1968 = vmatprep.subr.mxu0 %v532
    %1969 = vmatpush1.msra.mxu0 %v531
    %1970 = vmatprep.subr.mxu0 %v524
    %1971 = vmatpush1.msra.mxu0 %v523
    %1972 = vmatprep.subr.mxu0 %v516
    %1973 = vmatpush1.msra.mxu0 %v515
    %1974 = vmatprep.subr.mxu0 %v508
    %1975 = vmatpush1.msra.mxu0 %v507
    %1976 = vmatprep.subr.mxu0 %v500
    %1977 = vmatpush1.msra.mxu0 %v499
    %1978 = vmatprep.subr.mxu0 %v492
    %1979 = vmatpush1.msra.mxu0 %v491
    %1980 = vmatprep.subr.mxu0 %v484
    %1981 = vmatpush1.msra.mxu0 %v483
    %1982 = vmatprep.subr.mxu0 %v476
    %1983 = vmatpush1.msra.mxu0 %v475
    %1984 = vmatprep.subr.mxu0 %v468
    %1985 = vmatpush1.msra.mxu0 %v467
    %1986 = vmatprep.subr.mxu0 %v460
    %1987 = vmatpush1.msra.mxu0 %v459
    %1988 = vmatprep.subr.mxu0 %v708
    %1989 = vmatpush2.msra.mxu0 %v707
    %1990 = vmatprep.subr.mxu0 %v700
    %1991 = vmatpush2.msra.mxu0 %v699
    %1992 = vmatprep.subr.mxu0 %v692
    %1993 = vmatpush2.msra.mxu0 %v691
    %1994 = vmatprep.subr.mxu0 %v684
    %1995 = vmatpush2.msra.mxu0 %v683
    %1996 = vmatprep.subr.mxu0 %v676
    %1997 = vmatpush2.msra.mxu0 %v675
    %1998 = vmatprep.subr.mxu0 %v668
    %1999 = vmatpush2.msra.mxu0 %v667
    %2000 = vmatprep.subr.mxu0 %v660
    %2001 = vmatpush2.msra.mxu0 %v659
    %2002 = vmatprep.subr.mxu0 %v652
    %2003 = vmatpush2.msra.mxu0 %v651
    %2004 = vmatprep.subr.mxu0 %v644
    %2005 = vmatpush2.msra.mxu0 %v643
    %2006 = vmatprep.subr.mxu0 %v636
    %2007 = vmatpush2.msra.mxu0 %v635
    %2008 = vmatprep.subr.mxu0 %v628
    %2009 = vmatpush2.msra.mxu0 %v627
    %2010 = vmatprep.subr.mxu0 %v620
    %2011 = vmatpush2.msra.mxu0 %v619
    %2012 = vmatprep.subr.mxu0 %v612
    %2013 = vmatpush2.msra.mxu0 %v611
    %2014 = vmatprep.subr.mxu0 %v604
    %2015 = vmatpush2.msra.mxu0 %v603
    %2016 = vmatprep.subr.mxu0 %v596
    %2017 = vmatpush2.msra.mxu0 %v595
    %2018 = vmatprep.subr.mxu0 %v588
    %2019 = vmatpush2.msra.mxu0 %v587
    %2020 = vmatprep.mubr.f32.mxu0 %v138
    %2021 = vmatmul.mubr.f32.gmra.mxu0 %v137
    %v2022 = vpop.f32.mrf.mxu0
    %v2023 = vadd.f32 %v1250, %v2022
    %v2024 = vpop.f32.mrf.mxu0
    %v2025 = vadd.f32 %v1254, %v2024
    %2026 = vmatprep.mubr.f32.mxu0 %v144
    %2027 = vmatmul.mubr.f32.gmra.mxu0 %v143
    %v2028 = vpop.f32.mrf.mxu0
    %v2029 = vadd.f32 %v1250, %v2028
    %v2030 = vpop.f32.mrf.mxu0
    %v2031 = vadd.f32 %v1254, %v2030
    %2032 = vdwg.mxu0
    %2033 = vmatprep.subr.mxu0 %v836
    %2034 = vmatpush1.msra.mxu0 %v835
    %2035 = vmatprep.subr.mxu0 %v828
    %2036 = vmatpush1.msra.mxu0 %v827
    %2037 = vmatprep.subr.mxu0 %v820
    %2038 = vmatpush1.msra.mxu0 %v819
    %2039 = vmatprep.subr.mxu0 %v812
    %2040 = vmatpush1.msra.mxu0 %v811
    %2041 = vmatprep.subr.mxu0 %v804
    %2042 = vmatpush1.msra.mxu0 %v803
    %2043 = vmatprep.subr.mxu0 %v796
    %2044 = vmatpush1.msra.mxu0 %v795
    %2045 = vmatprep.subr.mxu0 %v788
    %2046 = vmatpush1.msra.mxu0 %v787
    %2047 = vmatprep.subr.mxu0 %v780
    %2048 = vmatpush1.msra.mxu0 %v779
    %2049 = vmatprep.subr.mxu0 %v772
    %2050 = vmatpush1.msra.mxu0 %v771
    %2051 = vmatprep.subr.mxu0 %v764
    %2052 = vmatpush1.msra.mxu0 %v763
    %2053 = vmatprep.subr.mxu0 %v756
    %2054 = vmatpush1.msra.mxu0 %v755
    %2055 = vmatprep.subr.mxu0 %v748
    %2056 = vmatpush1.msra.mxu0 %v747
    %2057 = vmatprep.subr.mxu0 %v740
    %2058 = vmatpush1.msra.mxu0 %v739
    %2059 = vmatprep.subr.mxu0 %v732
    %2060 = vmatpush1.msra.mxu0 %v731
    %2061 = vmatprep.subr.mxu0 %v724
    %2062 = vmatpush1.msra.mxu0 %v723
    %2063 = vmatprep.subr.mxu0 %v716
    %2064 = vmatpush1.msra.mxu0 %v715
    %2065 = vmatprep.subr.mxu0 %v964
    %2066 = vmatpush2.msra.mxu0 %v963
    %2067 = vmatprep.subr.mxu0 %v956
    %2068 = vmatpush2.msra.mxu0 %v955
    %2069 = vmatprep.subr.mxu0 %v948
    %2070 = vmatpush2.msra.mxu0 %v947
    %2071 = vmatprep.subr.mxu0 %v940
    %2072 = vmatpush2.msra.mxu0 %v939
    %2073 = vmatprep.subr.mxu0 %v932
    %2074 = vmatpush2.msra.mxu0 %v931
    %2075 = vmatprep.subr.mxu0 %v924
    %2076 = vmatpush2.msra.mxu0 %v923
    %2077 = vmatprep.subr.mxu0 %v916
    %2078 = vmatpush2.msra.mxu0 %v915
    %2079 = vmatprep.subr.mxu0 %v908
    %2080 = vmatpush2.msra.mxu0 %v907
    %2081 = vmatprep.subr.mxu0 %v900
    %2082 = vmatpush2.msra.mxu0 %v899
    %2083 = vmatprep.subr.mxu0 %v892
    %2084 = vmatpush2.msra.mxu0 %v891
    %2085 = vmatprep.subr.mxu0 %v884
    %2086 = vmatpush2.msra.mxu0 %v883
    %2087 = vmatprep.subr.mxu0 %v876
    %2088 = vmatpush2.msra.mxu0 %v875
    %2089 = vmatprep.subr.mxu0 %v868
    %2090 = vmatpush2.msra.mxu0 %v867
    %2091 = vmatprep.subr.mxu0 %v860
    %2092 = vmatpush2.msra.mxu0 %v859
    %2093 = vmatprep.subr.mxu0 %v852
    %2094 = vmatpush2.msra.mxu0 %v851
    %2095 = vmatprep.subr.mxu0 %v844
    %2096 = vmatpush2.msra.mxu0 %v843
    %2097 = vmatprep.mubr.f32.mxu0 %v140
    %2098 = vmatmul.mubr.f32.gmra.mxu0 %v139
    %v2099 = vpop.f32.mrf.mxu0
    %v2100 = vadd.f32 %v2023, %v2099
    %v2101 = vpop.f32.mrf.mxu0
    %v2102 = vadd.f32 %v2025, %v2101
    %2103 = vmatprep.mubr.f32.mxu0 %v146
    %2104 = vmatmul.mubr.f32.gmra.mxu0 %v145
    %v2105 = vpop.f32.mrf.mxu0
    %v2106 = vadd.f32 %v2029, %v2105
    %v2107 = vpop.f32.mrf.mxu0
    %v2108 = vadd.f32 %v2031, %v2107
    %2109 = vdwg.mxu0
    %2110 = vmatprep.subr.mxu0 %v1092
    %2111 = vmatpush1.msra.mxu0 %v1091
    %2112 = vmatprep.subr.mxu0 %v1084
    %2113 = vmatpush1.msra.mxu0 %v1083
    %2114 = vmatprep.subr.mxu0 %v1076
    %2115 = vmatpush1.msra.mxu0 %v1075
    %2116 = vmatprep.subr.mxu0 %v1068
    %2117 = vmatpush1.msra.mxu0 %v1067
    %2118 = vmatprep.subr.mxu0 %v1060
    %2119 = vmatpush1.msra.mxu0 %v1059
    %2120 = vmatprep.subr.mxu0 %v1052
    %2121 = vmatpush1.msra.mxu0 %v1051
    %2122 = vmatprep.subr.mxu0 %v1044
    %2123 = vmatpush1.msra.mxu0 %v1043
    %2124 = vmatprep.subr.mxu0 %v1036
    %2125 = vmatpush1.msra.mxu0 %v1035
    %2126 = vmatprep.subr.mxu0 %v1028
    %2127 = vmatpush1.msra.mxu0 %v1027
    %2128 = vmatprep.subr.mxu0 %v1020
    %2129 = vmatpush1.msra.mxu0 %v1019
    %2130 = vmatprep.subr.mxu0 %v1012
    %2131 = vmatpush1.msra.mxu0 %v1011
    %2132 = vmatprep.subr.mxu0 %v1004
    %2133 = vmatpush1.msra.mxu0 %v1003
    %2134 = vmatprep.subr.mxu0 %v996
    %2135 = vmatpush1.msra.mxu0 %v995
    %2136 = vmatprep.subr.mxu0 %v988
    %2137 = vmatpush1.msra.mxu0 %v987
    %2138 = vmatprep.subr.mxu0 %v980
    %2139 = vmatpush1.msra.mxu0 %v979
    %2140 = vmatprep.subr.mxu0 %v972
    %2141 = vmatpush1.msra.mxu0 %v971
    %2142 = vmatprep.subr.mxu0 %v1220
    %2143 = vmatpush2.msra.mxu0 %v1219
    %2144 = vmatprep.subr.mxu0 %v1212
    %2145 = vmatpush2.msra.mxu0 %v1211
    %2146 = vmatprep.subr.mxu0 %v1204
    %2147 = vmatpush2.msra.mxu0 %v1203
    %2148 = vmatprep.subr.mxu0 %v1196
    %2149 = vmatpush2.msra.mxu0 %v1195
    %2150 = vmatprep.subr.mxu0 %v1188
    %2151 = vmatpush2.msra.mxu0 %v1187
    %2152 = vmatprep.subr.mxu0 %v1180
    %2153 = vmatpush2.msra.mxu0 %v1179
    %2154 = vmatprep.subr.mxu0 %v1172
    %2155 = vmatpush2.msra.mxu0 %v1171
    %2156 = vmatprep.subr.mxu0 %v1164
    %2157 = vmatpush2.msra.mxu0 %v1163
    %2158 = vmatprep.subr.mxu0 %v1156
    %2159 = vmatpush2.msra.mxu0 %v1155
    %2160 = vmatprep.subr.mxu0 %v1148
    %2161 = vmatpush2.msra.mxu0 %v1147
    %2162 = vmatprep.subr.mxu0 %v1140
    %2163 = vmatpush2.msra.mxu0 %v1139
    %2164 = vmatprep.subr.mxu0 %v1132
    %2165 = vmatpush2.msra.mxu0 %v1131
    %2166 = vmatprep.subr.mxu0 %v1124
    %2167 = vmatpush2.msra.mxu0 %v1123
    %2168 = vmatprep.subr.mxu0 %v1116
    %2169 = vmatpush2.msra.mxu0 %v1115
    %2170 = vmatprep.subr.mxu0 %v1108
    %2171 = vmatpush2.msra.mxu0 %v1107
    %2172 = vmatprep.subr.mxu0 %v1100
    %2173 = vmatpush2.msra.mxu0 %v1099
    %2174 = vmatprep.mubr.f32.mxu0 %v142
    %2175 = vmatmul.mubr.f32.gmra.mxu0 %v141
    %v2176 = vpop.f32.mrf.mxu0
    %v2177 = vadd.f32 %v2100, %v2176
    %v2178 = vpop.f32.mrf.mxu0
    %v2179 = vadd.f32 %v2102, %v2178
    %2180 = vmatprep.mubr.f32.mxu0 %v148
    %2181 = vmatmul.mubr.f32.gmra.mxu0 %v147
    %v2182 = vpop.f32.mrf.mxu0
    %v2183 = vadd.f32 %v2106, %v2182
    %v2184 = vpop.f32.mrf.mxu0
    %v2185 = vadd.f32 %v2108, %v2184
    %2186 = vdwg.mxu0
    %vm2187 = vcmask 523264
    %v2189 = vsel %vm2187, %v366, 0
    %v2192 = vsel %vm2187, %v1484, 0
    %2194 = vmatprep.subr.mxu0 0.0
    %2195 = vmatpush1.xpose.msra.mxu0 0.0
    %2196 = vmatprep.subr.mxu0 0.0
    %2197 = vmatpush1.xpose.msra.mxu0 0.0
    %2198 = vmatprep.subr.mxu0 0.0
    %2199 = vmatpush1.xpose.msra.mxu0 0.0
    %2200 = vmatprep.subr.mxu0 0.0
    %2201 = vmatpush1.xpose.msra.mxu0 0.0
    %2202 = vmatprep.subr.mxu0 0.0
    %2203 = vmatpush1.xpose.msra.mxu0 0.0
    %2204 = vmatprep.subr.mxu0 0.0
    %2205 = vmatpush1.xpose.msra.mxu0 0.0
    %2206 = vmatprep.subr.mxu0 0.0
    %2207 = vmatpush1.xpose.msra.mxu0 0.0
    %2208 = vmatprep.subr.mxu0 0.0
    %2209 = vmatpush1.xpose.msra.mxu0 0.0
    %2210 = vmatprep.subr.mxu0 0.0
    %2211 = vmatpush1.xpose.msra.mxu0 0.0
    %2212 = vmatprep.subr.mxu0 0.0
    %2213 = vmatpush1.xpose.msra.mxu0 0.0
    %2214 = vmatprep.subr.mxu0 0.0
    %2215 = vmatpush1.xpose.msra.mxu0 0.0
    %2216 = vmatprep.subr.mxu0 0.0
    %2217 = vmatpush1.xpose.msra.mxu0 0.0
    %2218 = vmatprep.subr.mxu0 0.0
    %2219 = vmatpush1.xpose.msra.mxu0 0.0
    %2220 = vmatprep.subr.mxu0 0.0
    %2221 = vmatpush1.xpose.msra.mxu0 0.0
    %2222 = vmatprep.subr.mxu0 0.0
    %2223 = vmatpush1.xpose.msra.mxu0 0.0
    %2224 = vmatprep.subr.mxu0 0.0
    %2225 = vmatpush1.xpose.msra.mxu0 %v2192
    %2226 = vmatprep.subr.mxu0 0.0
    %2227 = vmatpush2.xpose.msra.mxu0 0.0
    %2228 = vmatprep.subr.mxu0 0.0
    %2229 = vmatpush2.xpose.msra.mxu0 0.0
    %2230 = vmatprep.subr.mxu0 0.0
    %2231 = vmatpush2.xpose.msra.mxu0 0.0
    %2232 = vmatprep.subr.mxu0 0.0
    %2233 = vmatpush2.xpose.msra.mxu0 0.0
    %2234 = vmatprep.subr.mxu0 0.0
    %2235 = vmatpush2.xpose.msra.mxu0 0.0
    %2236 = vmatprep.subr.mxu0 0.0
    %2237 = vmatpush2.xpose.msra.mxu0 0.0
    %2238 = vmatprep.subr.mxu0 0.0
    %2239 = vmatpush2.xpose.msra.mxu0 0.0
    %2240 = vmatprep.subr.mxu0 0.0
    %2241 = vmatpush2.xpose.msra.mxu0 0.0
    %2242 = vmatprep.subr.mxu0 0.0
    %2243 = vmatpush2.xpose.msra.mxu0 0.0
    %2244 = vmatprep.subr.mxu0 0.0
    %2245 = vmatpush2.xpose.msra.mxu0 0.0
    %2246 = vmatprep.subr.mxu0 0.0
    %2247 = vmatpush2.xpose.msra.mxu0 0.0
    %2248 = vmatprep.subr.mxu0 0.0
    %2249 = vmatpush2.xpose.msra.mxu0 0.0
    %2250 = vmatprep.subr.mxu0 0.0
    %2251 = vmatpush2.xpose.msra.mxu0 0.0
    %2252 = vmatprep.subr.mxu0 0.0
    %2253 = vmatpush2.xpose.msra.mxu0 0.0
    %2254 = vmatprep.subr.mxu0 0.0
    %2255 = vmatpush2.xpose.msra.mxu0 0.0
    %2256 = vmatprep.subr.mxu0 0.0
    %2257 = vmatpush2.xpose.msra.mxu0 0.0
    %2258 = vmatprep.mubr.f32.mxu0 0.0
    %2259 = vmatmul.mubr.f32.gmra.mxu0 %v2189
    %v2260 = vpop.f32.mrf.mxu0
    %v2261 = vadd.f32 0.0, %v2260
    %v2262 = vpop.f32.mrf.mxu0
    %2263 = vdwg.mxu0
    %v2265 = vsel %vm2187, %v372, 0
    %v2268 = vsel %vm2187, %v1490, 0
    %2270 = vmatprep.subr.mxu0 0.0
    %2271 = vmatpush1.xpose.msra.mxu0 0.0
    %2272 = vmatprep.subr.mxu0 0.0
    %2273 = vmatpush1.xpose.msra.mxu0 0.0
    %2274 = vmatprep.subr.mxu0 0.0
    %2275 = vmatpush1.xpose.msra.mxu0 0.0
    %2276 = vmatprep.subr.mxu0 0.0
    %2277 = vmatpush1.xpose.msra.mxu0 0.0
    %2278 = vmatprep.subr.mxu0 0.0
    %2279 = vmatpush1.xpose.msra.mxu0 0.0
    %2280 = vmatprep.subr.mxu0 0.0
    %2281 = vmatpush1.xpose.msra.mxu0 0.0
    %2282 = vmatprep.subr.mxu0 0.0
    %2283 = vmatpush1.xpose.msra.mxu0 0.0
    %2284 = vmatprep.subr.mxu0 0.0
    %2285 = vmatpush1.xpose.msra.mxu0 0.0
    %2286 = vmatprep.subr.mxu0 0.0
    %2287 = vmatpush1.xpose.msra.mxu0 0.0
    %2288 = vmatprep.subr.mxu0 0.0
    %2289 = vmatpush1.xpose.msra.mxu0 0.0
    %2290 = vmatprep.subr.mxu0 0.0
    %2291 = vmatpush1.xpose.msra.mxu0 0.0
    %2292 = vmatprep.subr.mxu0 0.0
    %2293 = vmatpush1.xpose.msra.mxu0 0.0
    %2294 = vmatprep.subr.mxu0 0.0
    %2295 = vmatpush1.xpose.msra.mxu0 0.0
    %2296 = vmatprep.subr.mxu0 0.0
    %2297 = vmatpush1.xpose.msra.mxu0 0.0
    %2298 = vmatprep.subr.mxu0 0.0
    %2299 = vmatpush1.xpose.msra.mxu0 0.0
    %2300 = vmatprep.subr.mxu0 0.0
    %2301 = vmatpush1.xpose.msra.mxu0 %v2268
    %2302 = vmatprep.subr.mxu0 0.0
    %2303 = vmatpush2.xpose.msra.mxu0 0.0
    %2304 = vmatprep.subr.mxu0 0.0
    %2305 = vmatpush2.xpose.msra.mxu0 0.0
    %2306 = vmatprep.subr.mxu0 0.0
    %2307 = vmatpush2.xpose.msra.mxu0 0.0
    %2308 = vmatprep.subr.mxu0 0.0
    %2309 = vmatpush2.xpose.msra.mxu0 0.0
    %2310 = vmatprep.subr.mxu0 0.0
    %2311 = vmatpush2.xpose.msra.mxu0 0.0
    %2312 = vmatprep.subr.mxu0 0.0
    %2313 = vmatpush2.xpose.msra.mxu0 0.0
    %2314 = vmatprep.subr.mxu0 0.0
    %2315 = vmatpush2.xpose.msra.mxu0 0.0
    %2316 = vmatprep.subr.mxu0 0.0
    %2317 = vmatpush2.xpose.msra.mxu0 0.0
    %2318 = vmatprep.subr.mxu0 0.0
    %2319 = vmatpush2.xpose.msra.mxu0 0.0
    %2320 = vmatprep.subr.mxu0 0.0
    %2321 = vmatpush2.xpose.msra.mxu0 0.0
    %2322 = vmatprep.subr.mxu0 0.0
    %2323 = vmatpush2.xpose.msra.mxu0 0.0
    %2324 = vmatprep.subr.mxu0 0.0
    %2325 = vmatpush2.xpose.msra.mxu0 0.0
    %2326 = vmatprep.subr.mxu0 0.0
    %2327 = vmatpush2.xpose.msra.mxu0 0.0
    %2328 = vmatprep.subr.mxu0 0.0
    %2329 = vmatpush2.xpose.msra.mxu0 0.0
    %2330 = vmatprep.subr.mxu0 0.0
    %2331 = vmatpush2.xpose.msra.mxu0 0.0
    %2332 = vmatprep.subr.mxu0 0.0
    %2333 = vmatpush2.xpose.msra.mxu0 0.0
    %2334 = vmatprep.mubr.f32.mxu0 0.0
    %2335 = vmatmul.mubr.f32.gmra.mxu0 %v2265
    %v2336 = vpop.f32.mrf.mxu0
    %v2337 = vadd.f32 0.0, %v2336
    %v2338 = vpop.f32.mrf.mxu0
    %2339 = vdwg.mxu0
    %vm2340 = vcmask 64512
    %v2341 = vsel %vm2340, %v2261, -inf
    %2342 = vmax.xlane.f32.xlu0 %v2341
    %v2343 = vpop.xlane.xlu0 %2342
    %v2344 = vsel %vm2340, %v2337, -inf
    %2345 = vmax.xlane.f32.xlu0 %v2344
    %v2346 = vpop.xlane.xlu0 %2345
    %v2347 = vsub.f32 %v2261, %v2343
    %v2348 = vsub.f32 %v2337, %v2346
    %v2349 = vmul.f32 %v2347, 1.442695
    %v2350 = vpow.pop %v2349
    %v2351 = vmul.f32 %v2348, 1.442695
    %v2352 = vpow.pop %v2351
    %v2353 = vsel %vm2340, %v2350, 0.0
    %2354 = vadd.xlane.f32.xlu0 %v2353
    %v2355 = vpop.xlane.xlu0 %2354
    %v2356 = vsel %vm2340, %v2352, 0.0
    %2357 = vadd.xlane.f32.xlu0 %v2356
    %v2358 = vpop.xlane.xlu0 %2357
    %v2359 = vrcp.pop %v2355
    %v2360 = vrcp.pop %v2358
    %v2361 = vmul.f32 %v2350, %v2359
    %v2362 = vmul.f32 %v2352, %v2360
    %v2364 = vsel %vm2340, %v2361, 0
    %2366 = vmatprep.subr.mxu0 0.0
    %2367 = vmatpush1.msra.mxu0 0.0
    %2368 = vmatprep.subr.mxu0 0.0
    %2369 = vmatpush1.msra.mxu0 0.0
    %2370 = vmatprep.subr.mxu0 0.0
    %2371 = vmatpush1.msra.mxu0 0.0
    %2372 = vmatprep.subr.mxu0 0.0
    %2373 = vmatpush1.msra.mxu0 0.0
    %2374 = vmatprep.subr.mxu0 0.0
    %2375 = vmatpush1.msra.mxu0 0.0
    %2376 = vmatprep.subr.mxu0 0.0
    %2377 = vmatpush1.msra.mxu0 0.0
    %2378 = vmatprep.subr.mxu0 0.0
    %2379 = vmatpush1.msra.mxu0 0.0
    %2380 = vmatprep.subr.mxu0 0.0
    %2381 = vmatpush1.msra.mxu0 0.0
    %2382 = vmatprep.subr.mxu0 0.0
    %2383 = vmatpush1.msra.mxu0 0.0
    %2384 = vmatprep.subr.mxu0 0.0
    %2385 = vmatpush1.msra.mxu0 0.0
    %2386 = vmatprep.subr.mxu0 0.0
    %2387 = vmatpush1.msra.mxu0 0.0
    %2388 = vmatprep.subr.mxu0 0.0
    %2389 = vmatpush1.msra.mxu0 0.0
    %2390 = vmatprep.subr.mxu0 0.0
    %2391 = vmatpush1.msra.mxu0 0.0
    %2392 = vmatprep.subr.mxu0 0.0
    %2393 = vmatpush1.msra.mxu0 0.0
    %2394 = vmatprep.subr.mxu0 0.0
    %2395 = vmatpush1.msra.mxu0 0.0
    %2396 = vmatprep.subr.mxu0 0.0
    %2397 = vmatpush1.msra.mxu0 %v1946
    %2398 = vmatprep.subr.mxu0 0.0
    %2399 = vmatpush2.msra.mxu0 0.0
    %2400 = vmatprep.subr.mxu0 0.0
    %2401 = vmatpush2.msra.mxu0 0.0
    %2402 = vmatprep.subr.mxu0 0.0
    %2403 = vmatpush2.msra.mxu0 0.0
    %2404 = vmatprep.subr.mxu0 0.0
    %2405 = vmatpush2.msra.mxu0 0.0
    %2406 = vmatprep.subr.mxu0 0.0
    %2407 = vmatpush2.msra.mxu0 0.0
    %2408 = vmatprep.subr.mxu0 0.0
    %2409 = vmatpush2.msra.mxu0 0.0
    %2410 = vmatprep.subr.mxu0 0.0
    %2411 = vmatpush2.msra.mxu0 0.0
    %2412 = vmatprep.subr.mxu0 0.0
    %2413 = vmatpush2.msra.mxu0 0.0
    %2414 = vmatprep.subr.mxu0 0.0
    %2415 = vmatpush2.msra.mxu0 0.0
    %2416 = vmatprep.subr.mxu0 0.0
    %2417 = vmatpush2.msra.mxu0 0.0
    %2418 = vmatprep.subr.mxu0 0.0
    %2419 = vmatpush2.msra.mxu0 0.0
    %2420 = vmatprep.subr.mxu0 0.0
    %2421 = vmatpush2.msra.mxu0 0.0
    %2422 = vmatprep.subr.mxu0 0.0
    %2423 = vmatpush2.msra.mxu0 0.0
    %2424 = vmatprep.subr.mxu0 0.0
    %2425 = vmatpush2.msra.mxu0 0.0
    %2426 = vmatprep.subr.mxu0 0.0
    %2427 = vmatpush2.msra.mxu0 0.0
    %2428 = vmatprep.subr.mxu0 0.0
    %2429 = vmatpush2.msra.mxu0 0.0
    %2430 = vmatprep.mubr.f32.mxu0 0.0
    %2431 = vmatmul.mubr.f32.gmra.mxu0 %v2364
    %v2432 = vpop.f32.mrf.mxu0
    %v2433 = vadd.f32 0.0, %v2432
    %v2434 = vpop.f32.mrf.mxu0
    %2435 = vdwg.mxu0
    %v2437 = vsel %vm2340, %v2362, 0
    %2439 = vmatprep.subr.mxu0 0.0
    %2440 = vmatpush1.msra.mxu0 0.0
    %2441 = vmatprep.subr.mxu0 0.0
    %2442 = vmatpush1.msra.mxu0 0.0
    %2443 = vmatprep.subr.mxu0 0.0
    %2444 = vmatpush1.msra.mxu0 0.0
    %2445 = vmatprep.subr.mxu0 0.0
    %2446 = vmatpush1.msra.mxu0 0.0
    %2447 = vmatprep.subr.mxu0 0.0
    %2448 = vmatpush1.msra.mxu0 0.0
    %2449 = vmatprep.subr.mxu0 0.0
    %2450 = vmatpush1.msra.mxu0 0.0
    %2451 = vmatprep.subr.mxu0 0.0
    %2452 = vmatpush1.msra.mxu0 0.0
    %2453 = vmatprep.subr.mxu0 0.0
    %2454 = vmatpush1.msra.mxu0 0.0
    %2455 = vmatprep.subr.mxu0 0.0
    %2456 = vmatpush1.msra.mxu0 0.0
    %2457 = vmatprep.subr.mxu0 0.0
    %2458 = vmatpush1.msra.mxu0 0.0
    %2459 = vmatprep.subr.mxu0 0.0
    %2460 = vmatpush1.msra.mxu0 0.0
    %2461 = vmatprep.subr.mxu0 0.0
    %2462 = vmatpush1.msra.mxu0 0.0
    %2463 = vmatprep.subr.mxu0 0.0
    %2464 = vmatpush1.msra.mxu0 0.0
    %2465 = vmatprep.subr.mxu0 0.0
    %2466 = vmatpush1.msra.mxu0 0.0
    %2467 = vmatprep.subr.mxu0 0.0
    %2468 = vmatpush1.msra.mxu0 0.0
    %2469 = vmatprep.subr.mxu0 0.0
    %2470 = vmatpush1.msra.mxu0 %v1952
    %2471 = vmatprep.subr.mxu0 0.0
    %2472 = vmatpush2.msra.mxu0 0.0
    %2473 = vmatprep.subr.mxu0 0.0
    %2474 = vmatpush2.msra.mxu0 0.0
    %2475 = vmatprep.subr.mxu0 0.0
    %2476 = vmatpush2.msra.mxu0 0.0
    %2477 = vmatprep.subr.mxu0 0.0
    %2478 = vmatpush2.msra.mxu0 0.0
    %2479 = vmatprep.subr.mxu0 0.0
    %2480 = vmatpush2.msra.mxu0 0.0
    %2481 = vmatprep.subr.mxu0 0.0
    %2482 = vmatpush2.msra.mxu0 0.0
    %2483 = vmatprep.subr.mxu0 0.0
    %2484 = vmatpush2.msra.mxu0 0.0
    %2485 = vmatprep.subr.mxu0 0.0
    %2486 = vmatpush2.msra.mxu0 0.0
    %2487 = vmatprep.subr.mxu0 0.0
    %2488 = vmatpush2.msra.mxu0 0.0
    %2489 = vmatprep.subr.mxu0 0.0
    %2490 = vmatpush2.msra.mxu0 0.0
    %2491 = vmatprep.subr.mxu0 0.0
    %2492 = vmatpush2.msra.mxu0 0.0
    %2493 = vmatprep.subr.mxu0 0.0
    %2494 = vmatpush2.msra.mxu0 0.0
    %2495 = vmatprep.subr.mxu0 0.0
    %2496 = vmatpush2.msra.mxu0 0.0
    %2497 = vmatprep.subr.mxu0 0.0
    %2498 = vmatpush2.msra.mxu0 0.0
    %2499 = vmatprep.subr.mxu0 0.0
    %2500 = vmatpush2.msra.mxu0 0.0
    %2501 = vmatprep.subr.mxu0 0.0
    %2502 = vmatpush2.msra.mxu0 0.0
    %2503 = vmatprep.mubr.f32.mxu0 0.0
    %2504 = vmatmul.mubr.f32.gmra.mxu0 %v2437
    %v2505 = vpop.f32.mrf.mxu0
    %v2506 = vadd.f32 0.0, %v2505
    %v2507 = vpop.f32.mrf.mxu0
    %2508 = vdwg.mxu0
    %v2509 = vld [vmem:[#allocation13] sm:$0xff]
    %v2510 = vld [vmem:[#allocation13 + $0x8] sm:$0xff]
    %v2511 = vld [vmem:[#allocation13 + $0x10] sm:$0xff]
    %v2512 = vld [vmem:[#allocation13 + $0x18] sm:$0xff]
    %v2513 = vld [vmem:[#allocation13 + $0x20] sm:$0xff]
    %v2514 = vld [vmem:[#allocation13 + $0x28] sm:$0xff]
    %v2515 = vld [vmem:[#allocation13 + $0x30] sm:$0xff]
    %v2516 = vld [vmem:[#allocation13 + $0x38] sm:$0xff]
    %v2517 = vld [vmem:[#allocation13 + $0x40] sm:$0xff]
    %v2518 = vld [vmem:[#allocation13 + $0x48] sm:$0xff]
    %v2519 = vld [vmem:[#allocation13 + $0x50] sm:$0xff]
    %v2520 = vld [vmem:[#allocation13 + $0x58] sm:$0xff]
    %v2521 = vld [vmem:[#allocation13 + $0x60] sm:$0xff]
    %v2522 = vld [vmem:[#allocation13 + $0x68] sm:$0xff]
    %v2523 = vld [vmem:[#allocation13 + $0x70] sm:$0xff]
    %v2524 = vld [vmem:[#allocation13 + $0x78] sm:$0xff]
    %v2525 = vld [vmem:[#allocation13 + $0x80] sm:$0xff]
    %v2526 = vld [vmem:[#allocation13 + $0x88] sm:$0xff]
    %v2527 = vld [vmem:[#allocation13 + $0x90] sm:$0xff]
    %v2528 = vld [vmem:[#allocation13 + $0x98] sm:$0xff]
    %v2529 = vld [vmem:[#allocation13 + $0xa0] sm:$0xff]
    %v2530 = vld [vmem:[#allocation13 + $0xa8] sm:$0xff]
    %v2531 = vld [vmem:[#allocation13 + $0xb0] sm:$0xff]
    %v2532 = vld [vmem:[#allocation13 + $0xb8] sm:$0xff]
    %v2533 = vld [vmem:[#allocation13 + $0xc0] sm:$0xff]
    %v2534 = vld [vmem:[#allocation13 + $0xc8] sm:$0xff]
    %v2535 = vld [vmem:[#allocation13 + $0xd0] sm:$0xff]
    %v2536 = vld [vmem:[#allocation13 + $0xd8] sm:$0xff]
    %v2537 = vld [vmem:[#allocation13 + $0xe0] sm:$0xff]
    %v2538 = vld [vmem:[#allocation13 + $0xe8] sm:$0xff]
    %v2539 = vld [vmem:[#allocation13 + $0xf0] sm:$0xff]
    %v2540 = vld [vmem:[#allocation13 + $0xf8] sm:$0xff]
    %2541 = vrot.lane.b32.xlu0 %v366, 64
    %v2542 = vpop.permute.xlu0 %2541
    %2543 = vrot.lane.b32.xlu0 %v1484, 64
    %v2544 = vpop.permute.xlu0 %2543
    %v2545 = vsel %vm2187, %v2542, 0
    %v2547 = vsel %vm2187, %v2544, 0
    %2549 = vmatprep.subr.mxu0 0.0
    %2550 = vmatpush1.xpose.msra.mxu0 0.0
    %2551 = vmatprep.subr.mxu0 0.0
    %2552 = vmatpush1.xpose.msra.mxu0 0.0
    %2553 = vmatprep.subr.mxu0 0.0
    %2554 = vmatpush1.xpose.msra.mxu0 0.0
    %2555 = vmatprep.subr.mxu0 0.0
    %2556 = vmatpush1.xpose.msra.mxu0 0.0
    %2557 = vmatprep.subr.mxu0 0.0
    %2558 = vmatpush1.xpose.msra.mxu0 0.0
    %2559 = vmatprep.subr.mxu0 0.0
    %2560 = vmatpush1.xpose.msra.mxu0 0.0
    %2561 = vmatprep.subr.mxu0 0.0
    %2562 = vmatpush1.xpose.msra.mxu0 0.0
    %2563 = vmatprep.subr.mxu0 0.0
    %2564 = vmatpush1.xpose.msra.mxu0 0.0
    %2565 = vmatprep.subr.mxu0 0.0
    %2566 = vmatpush1.xpose.msra.mxu0 0.0
    %2567 = vmatprep.subr.mxu0 0.0
    %2568 = vmatpush1.xpose.msra.mxu0 0.0
    %2569 = vmatprep.subr.mxu0 0.0
    %2570 = vmatpush1.xpose.msra.mxu0 0.0
    %2571 = vmatprep.subr.mxu0 0.0
    %2572 = vmatpush1.xpose.msra.mxu0 0.0
    %2573 = vmatprep.subr.mxu0 0.0
    %2574 = vmatpush1.xpose.msra.mxu0 0.0
    %2575 = vmatprep.subr.mxu0 0.0
    %2576 = vmatpush1.xpose.msra.mxu0 0.0
    %2577 = vmatprep.subr.mxu0 0.0
    %2578 = vmatpush1.xpose.msra.mxu0 0.0
    %2579 = vmatprep.subr.mxu0 0.0
    %2580 = vmatpush1.xpose.msra.mxu0 %v2547
    %2581 = vmatprep.subr.mxu0 0.0
    %2582 = vmatpush2.xpose.msra.mxu0 0.0
    %2583 = vmatprep.subr.mxu0 0.0
    %2584 = vmatpush2.xpose.msra.mxu0 0.0
    %2585 = vmatprep.subr.mxu0 0.0
    %2586 = vmatpush2.xpose.msra.mxu0 0.0
    %2587 = vmatprep.subr.mxu0 0.0
    %2588 = vmatpush2.xpose.msra.mxu0 0.0
    %2589 = vmatprep.subr.mxu0 0.0
    %2590 = vmatpush2.xpose.msra.mxu0 0.0
    %2591 = vmatprep.subr.mxu0 0.0
    %2592 = vmatpush2.xpose.msra.mxu0 0.0
    %2593 = vmatprep.subr.mxu0 0.0
    %2594 = vmatpush2.xpose.msra.mxu0 0.0
    %2595 = vmatprep.subr.mxu0 0.0
    %2596 = vmatpush2.xpose.msra.mxu0 0.0
    %2597 = vmatprep.subr.mxu0 0.0
    %2598 = vmatpush2.xpose.msra.mxu0 0.0
    %2599 = vmatprep.subr.mxu0 0.0
    %2600 = vmatpush2.xpose.msra.mxu0 0.0
    %2601 = vmatprep.subr.mxu0 0.0
    %2602 = vmatpush2.xpose.msra.mxu0 0.0
    %2603 = vmatprep.subr.mxu0 0.0
    %2604 = vmatpush2.xpose.msra.mxu0 0.0
    %2605 = vmatprep.subr.mxu0 0.0
    %2606 = vmatpush2.xpose.msra.mxu0 0.0
    %2607 = vmatprep.subr.mxu0 0.0
    %2608 = vmatpush2.xpose.msra.mxu0 0.0
    %2609 = vmatprep.subr.mxu0 0.0
    %2610 = vmatpush2.xpose.msra.mxu0 0.0
    %2611 = vmatprep.subr.mxu0 0.0
    %2612 = vmatpush2.xpose.msra.mxu0 0.0
    %2613 = vmatprep.mubr.f32.mxu0 0.0
    %2614 = vmatmul.mubr.f32.gmra.mxu0 %v2545
    %v2615 = vpop.f32.mrf.mxu0
    %v2616 = vadd.f32 0.0, %v2615
    %v2617 = vpop.f32.mrf.mxu0
    %2618 = vdwg.mxu0
    %2619 = vrot.lane.b32.xlu0 %v372, 64
    %v2620 = vpop.permute.xlu0 %2619
    %2621 = vrot.lane.b32.xlu0 %v1490, 64
    %v2622 = vpop.permute.xlu0 %2621
    %v2623 = vsel %vm2187, %v2620, 0
    %v2625 = vsel %vm2187, %v2622, 0
    %2627 = vmatprep.subr.mxu0 0.0
    %2628 = vmatpush1.xpose.msra.mxu0 0.0
    %2629 = vmatprep.subr.mxu0 0.0
    %2630 = vmatpush1.xpose.msra.mxu0 0.0
    %2631 = vmatprep.subr.mxu0 0.0
    %2632 = vmatpush1.xpose.msra.mxu0 0.0
    %2633 = vmatprep.subr.mxu0 0.0
    %2634 = vmatpush1.xpose.msra.mxu0 0.0
    %2635 = vmatprep.subr.mxu0 0.0
    %2636 = vmatpush1.xpose.msra.mxu0 0.0
    %2637 = vmatprep.subr.mxu0 0.0
    %2638 = vmatpush1.xpose.msra.mxu0 0.0
    %2639 = vmatprep.subr.mxu0 0.0
    %2640 = vmatpush1.xpose.msra.mxu0 0.0
    %2641 = vmatprep.subr.mxu0 0.0
    %2642 = vmatpush1.xpose.msra.mxu0 0.0
    %2643 = vmatprep.subr.mxu0 0.0
    %2644 = vmatpush1.xpose.msra.mxu0 0.0
    %2645 = vmatprep.subr.mxu0 0.0
    %2646 = vmatpush1.xpose.msra.mxu0 0.0
    %2647 = vmatprep.subr.mxu0 0.0
    %2648 = vmatpush1.xpose.msra.mxu0 0.0
    %2649 = vmatprep.subr.mxu0 0.0
    %2650 = vmatpush1.xpose.msra.mxu0 0.0
    %2651 = vmatprep.subr.mxu0 0.0
    %2652 = vmatpush1.xpose.msra.mxu0 0.0
    %2653 = vmatprep.subr.mxu0 0.0
    %2654 = vmatpush1.xpose.msra.mxu0 0.0
    %2655 = vmatprep.subr.mxu0 0.0
    %2656 = vmatpush1.xpose.msra.mxu0 0.0
    %2657 = vmatprep.subr.mxu0 0.0
    %2658 = vmatpush1.xpose.msra.mxu0 %v2625
    %2659 = vmatprep.subr.mxu0 0.0
    %2660 = vmatpush2.xpose.msra.mxu0 0.0
    %2661 = vmatprep.subr.mxu0 0.0
    %2662 = vmatpush2.xpose.msra.mxu0 0.0
    %2663 = vmatprep.subr.mxu0 0.0
    %2664 = vmatpush2.xpose.msra.mxu0 0.0
    %2665 = vmatprep.subr.mxu0 0.0
    %2666 = vmatpush2.xpose.msra.mxu0 0.0
    %2667 = vmatprep.subr.mxu0 0.0
    %2668 = vmatpush2.xpose.msra.mxu0 0.0
    %2669 = vmatprep.subr.mxu0 0.0
    %2670 = vmatpush2.xpose.msra.mxu0 0.0
    %2671 = vmatprep.subr.mxu0 0.0
    %2672 = vmatpush2.xpose.msra.mxu0 0.0
    %2673 = vmatprep.subr.mxu0 0.0
    %2674 = vmatpush2.xpose.msra.mxu0 0.0
    %2675 = vmatprep.subr.mxu0 0.0
    %2676 = vmatpush2.xpose.msra.mxu0 0.0
    %2677 = vmatprep.subr.mxu0 0.0
    %2678 = vmatpush2.xpose.msra.mxu0 0.0
    %2679 = vmatprep.subr.mxu0 0.0
    %2680 = vmatpush2.xpose.msra.mxu0 0.0
    %2681 = vmatprep.subr.mxu0 0.0
    %2682 = vmatpush2.xpose.msra.mxu0 0.0
    %2683 = vmatprep.subr.mxu0 0.0
    %2684 = vmatpush2.xpose.msra.mxu0 0.0
    %2685 = vmatprep.subr.mxu0 0.0
    %2686 = vmatpush2.xpose.msra.mxu0 0.0
    %2687 = vmatprep.subr.mxu0 0.0
    %2688 = vmatpush2.xpose.msra.mxu0 0.0
    %2689 = vmatprep.subr.mxu0 0.0
    %2690 = vmatpush2.xpose.msra.mxu0 0.0
    %2691 = vmatprep.mubr.f32.mxu0 0.0
    %2692 = vmatmul.mubr.f32.gmra.mxu0 %v2623
    %v2693 = vpop.f32.mrf.mxu0
    %v2694 = vadd.f32 0.0, %v2693
    %v2695 = vpop.f32.mrf.mxu0
    %2696 = vdwg.mxu0
    %v2697 = vsel %vm2340, %v2616, -inf
    %2698 = vmax.xlane.f32.xlu0 %v2697
    %v2699 = vpop.xlane.xlu0 %2698
    %v2700 = vsel %vm2340, %v2694, -inf
    %2701 = vmax.xlane.f32.xlu0 %v2700
    %v2702 = vpop.xlane.xlu0 %2701
    %v2703 = vsub.f32 %v2616, %v2699
    %v2704 = vsub.f32 %v2694, %v2702
    %v2705 = vmul.f32 %v2703, 1.442695
    %v2706 = vpow.pop %v2705
    %v2707 = vmul.f32 %v2704, 1.442695
    %v2708 = vpow.pop %v2707
    %v2709 = vsel %vm2340, %v2706, 0.0
    %2710 = vadd.xlane.f32.xlu0 %v2709
    %v2711 = vpop.xlane.xlu0 %2710
    %v2712 = vsel %vm2340, %v2708, 0.0
    %2713 = vadd.xlane.f32.xlu0 %v2712
    %v2714 = vpop.xlane.xlu0 %2713
    %v2715 = vrcp.pop %v2711
    %v2716 = vrcp.pop %v2714
    %v2717 = vmul.f32 %v2706, %v2715
    %v2718 = vmul.f32 %v2708, %v2716
    %2720 = vrot.lane.b32.xlu0 %v1946, 64
    %v2721 = vpop.permute.xlu0 %2720
    %v2724 = vsel %vm2340, %v2717, 0
    %2726 = vmatprep.subr.mxu0 0.0
    %2727 = vmatpush1.msra.mxu0 0.0
    %2728 = vmatprep.subr.mxu0 0.0
    %2729 = vmatpush1.msra.mxu0 0.0
    %2730 = vmatprep.subr.mxu0 0.0
    %2731 = vmatpush1.msra.mxu0 0.0
    %2732 = vmatprep.subr.mxu0 0.0
    %2733 = vmatpush1.msra.mxu0 0.0
    %2734 = vmatprep.subr.mxu0 0.0
    %2735 = vmatpush1.msra.mxu0 0.0
    %2736 = vmatprep.subr.mxu0 0.0
    %2737 = vmatpush1.msra.mxu0 0.0
    %2738 = vmatprep.subr.mxu0 0.0
    %2739 = vmatpush1.msra.mxu0 0.0
    %2740 = vmatprep.subr.mxu0 0.0
    %2741 = vmatpush1.msra.mxu0 0.0
    %2742 = vmatprep.subr.mxu0 0.0
    %2743 = vmatpush1.msra.mxu0 0.0
    %2744 = vmatprep.subr.mxu0 0.0
    %2745 = vmatpush1.msra.mxu0 0.0
    %2746 = vmatprep.subr.mxu0 0.0
    %2747 = vmatpush1.msra.mxu0 0.0
    %2748 = vmatprep.subr.mxu0 0.0
    %2749 = vmatpush1.msra.mxu0 0.0
    %2750 = vmatprep.subr.mxu0 0.0
    %2751 = vmatpush1.msra.mxu0 0.0
    %2752 = vmatprep.subr.mxu0 0.0
    %2753 = vmatpush1.msra.mxu0 0.0
    %2754 = vmatprep.subr.mxu0 0.0
    %2755 = vmatpush1.msra.mxu0 0.0
    %2756 = vmatprep.subr.mxu0 0.0
    %2757 = vmatpush1.msra.mxu0 %v2721
    %2758 = vmatprep.subr.mxu0 0.0
    %2759 = vmatpush2.msra.mxu0 0.0
    %2760 = vmatprep.subr.mxu0 0.0
    %2761 = vmatpush2.msra.mxu0 0.0
    %2762 = vmatprep.subr.mxu0 0.0
    %2763 = vmatpush2.msra.mxu0 0.0
    %2764 = vmatprep.subr.mxu0 0.0
    %2765 = vmatpush2.msra.mxu0 0.0
    %2766 = vmatprep.subr.mxu0 0.0
    %2767 = vmatpush2.msra.mxu0 0.0
    %2768 = vmatprep.subr.mxu0 0.0
    %2769 = vmatpush2.msra.mxu0 0.0
    %2770 = vmatprep.subr.mxu0 0.0
    %2771 = vmatpush2.msra.mxu0 0.0
    %2772 = vmatprep.subr.mxu0 0.0
    %2773 = vmatpush2.msra.mxu0 0.0
    %2774 = vmatprep.subr.mxu0 0.0
    %2775 = vmatpush2.msra.mxu0 0.0
    %2776 = vmatprep.subr.mxu0 0.0
    %2777 = vmatpush2.msra.mxu0 0.0
    %2778 = vmatprep.subr.mxu0 0.0
    %2779 = vmatpush2.msra.mxu0 0.0
    %2780 = vmatprep.subr.mxu0 0.0
    %2781 = vmatpush2.msra.mxu0 0.0
    %2782 = vmatprep.subr.mxu0 0.0
    %2783 = vmatpush2.msra.mxu0 0.0
    %2784 = vmatprep.subr.mxu0 0.0
    %2785 = vmatpush2.msra.mxu0 0.0
    %2786 = vmatprep.subr.mxu0 0.0
    %2787 = vmatpush2.msra.mxu0 0.0
    %2788 = vmatprep.subr.mxu0 0.0
    %2789 = vmatpush2.msra.mxu0 0.0
    %2790 = vmatprep.mubr.f32.mxu0 0.0
    %2791 = vmatmul.mubr.f32.gmra.mxu0 %v2724
    %v2792 = vpop.f32.mrf.mxu0
    %v2793 = vadd.f32 0.0, %v2792
    %v2794 = vpop.f32.mrf.mxu0
    %2795 = vdwg.mxu0
    %2797 = vrot.lane.b32.xlu0 %v1952, 64
    %v2798 = vpop.permute.xlu0 %2797
    %v2801 = vsel %vm2340, %v2718, 0
    %2803 = vmatprep.subr.mxu0 0.0
    %2804 = vmatpush1.msra.mxu0 0.0
    %2805 = vmatprep.subr.mxu0 0.0
    %2806 = vmatpush1.msra.mxu0 0.0
    %2807 = vmatprep.subr.mxu0 0.0
    %2808 = vmatpush1.msra.mxu0 0.0
    %2809 = vmatprep.subr.mxu0 0.0
    %2810 = vmatpush1.msra.mxu0 0.0
    %2811 = vmatprep.subr.mxu0 0.0
    %2812 = vmatpush1.msra.mxu0 0.0
    %2813 = vmatprep.subr.mxu0 0.0
    %2814 = vmatpush1.msra.mxu0 0.0
    %2815 = vmatprep.subr.mxu0 0.0
    %2816 = vmatpush1.msra.mxu0 0.0
    %2817 = vmatprep.subr.mxu0 0.0
    %2818 = vmatpush1.msra.mxu0 0.0
    %2819 = vmatprep.subr.mxu0 0.0
    %2820 = vmatpush1.msra.mxu0 0.0
    %2821 = vmatprep.subr.mxu0 0.0
    %2822 = vmatpush1.msra.mxu0 0.0
    %2823 = vmatprep.subr.mxu0 0.0
    %2824 = vmatpush1.msra.mxu0 0.0
    %2825 = vmatprep.subr.mxu0 0.0
    %2826 = vmatpush1.msra.mxu0 0.0
    %2827 = vmatprep.subr.mxu0 0.0
    %2828 = vmatpush1.msra.mxu0 0.0
    %2829 = vmatprep.subr.mxu0 0.0
    %2830 = vmatpush1.msra.mxu0 0.0
    %2831 = vmatprep.subr.mxu0 0.0
    %2832 = vmatpush1.msra.mxu0 0.0
    %2833 = vmatprep.subr.mxu0 0.0
    %2834 = vmatpush1.msra.mxu0 %v2798
    %2835 = vmatprep.subr.mxu0 0.0
    %2836 = vmatpush2.msra.mxu0 0.0
    %2837 = vmatprep.subr.mxu0 0.0
    %2838 = vmatpush2.msra.mxu0 0.0
    %2839 = vmatprep.subr.mxu0 0.0
    %2840 = vmatpush2.msra.mxu0 0.0
    %2841 = vmatprep.subr.mxu0 0.0
    %2842 = vmatpush2.msra.mxu0 0.0
    %2843 = vmatprep.subr.mxu0 0.0
    %2844 = vmatpush2.msra.mxu0 0.0
    %2845 = vmatprep.subr.mxu0 0.0
    %2846 = vmatpush2.msra.mxu0 0.0
    %2847 = vmatprep.subr.mxu0 0.0
    %2848 = vmatpush2.msra.mxu0 0.0
    %2849 = vmatprep.subr.mxu0 0.0
    %2850 = vmatpush2.msra.mxu0 0.0
    %2851 = vmatprep.subr.mxu0 0.0
    %2852 = vmatpush2.msra.mxu0 0.0
    %2853 = vmatprep.subr.mxu0 0.0
    %2854 = vmatpush2.msra.mxu0 0.0
    %2855 = vmatprep.subr.mxu0 0.0
    %2856 = vmatpush2.msra.mxu0 0.0
    %2857 = vmatprep.subr.mxu0 0.0
    %2858 = vmatpush2.msra.mxu0 0.0
    %2859 = vmatprep.subr.mxu0 0.0
    %2860 = vmatpush2.msra.mxu0 0.0
    %2861 = vmatprep.subr.mxu0 0.0
    %2862 = vmatpush2.msra.mxu0 0.0
    %2863 = vmatprep.subr.mxu0 0.0
    %2864 = vmatpush2.msra.mxu0 0.0
    %2865 = vmatprep.subr.mxu0 0.0
    %2866 = vmatpush2.msra.mxu0 0.0
    %2867 = vmatprep.mubr.f32.mxu0 0.0
    %2868 = vmatmul.mubr.f32.gmra.mxu0 %v2801
    %v2869 = vpop.f32.mrf.mxu0
    %v2870 = vadd.f32 0.0, %v2869
    %v2871 = vpop.f32.mrf.mxu0
    %2872 = vdwg.mxu0
    %v2873 = vld [vmem:[#allocation13 + $0x100] sm:$0xff]
    %v2874 = vld [vmem:[#allocation13 + $0x108] sm:$0xff]
    %v2875 = vld [vmem:[#allocation13 + $0x110] sm:$0xff]
    %v2876 = vld [vmem:[#allocation13 + $0x118] sm:$0xff]
    %v2877 = vld [vmem:[#allocation13 + $0x120] sm:$0xff]
    %v2878 = vld [vmem:[#allocation13 + $0x128] sm:$0xff]
    %v2879 = vld [vmem:[#allocation13 + $0x130] sm:$0xff]
    %v2880 = vld [vmem:[#allocation13 + $0x138] sm:$0xff]
    %v2881 = vld [vmem:[#allocation13 + $0x140] sm:$0xff]
    %v2882 = vld [vmem:[#allocation13 + $0x148] sm:$0xff]
    %v2883 = vld [vmem:[#allocation13 + $0x150] sm:$0xff]
    %v2884 = vld [vmem:[#allocation13 + $0x158] sm:$0xff]
    %v2885 = vld [vmem:[#allocation13 + $0x160] sm:$0xff]
    %v2886 = vld [vmem:[#allocation13 + $0x168] sm:$0xff]
    %v2887 = vld [vmem:[#allocation13 + $0x170] sm:$0xff]
    %v2888 = vld [vmem:[#allocation13 + $0x178] sm:$0xff]
    %v2889 = vld [vmem:[#allocation13 + $0x180] sm:$0xff]
    %v2890 = vld [vmem:[#allocation13 + $0x188] sm:$0xff]
    %v2891 = vld [vmem:[#allocation13 + $0x190] sm:$0xff]
    %v2892 = vld [vmem:[#allocation13 + $0x198] sm:$0xff]
    %v2893 = vld [vmem:[#allocation13 + $0x1a0] sm:$0xff]
    %v2894 = vld [vmem:[#allocation13 + $0x1a8] sm:$0xff]
    %v2895 = vld [vmem:[#allocation13 + $0x1b0] sm:$0xff]
    %v2896 = vld [vmem:[#allocation13 + $0x1b8] sm:$0xff]
    %v2897 = vld [vmem:[#allocation13 + $0x1c0] sm:$0xff]
    %v2898 = vld [vmem:[#allocation13 + $0x1c8] sm:$0xff]
    %v2899 = vld [vmem:[#allocation13 + $0x1d0] sm:$0xff]
    %v2900 = vld [vmem:[#allocation13 + $0x1d8] sm:$0xff]
    %v2901 = vld [vmem:[#allocation13 + $0x1e0] sm:$0xff]
    %v2902 = vld [vmem:[#allocation13 + $0x1e8] sm:$0xff]
    %v2903 = vld [vmem:[#allocation13 + $0x1f0] sm:$0xff]
    %v2904 = vld [vmem:[#allocation13 + $0x1f8] sm:$0xff]
    %v2906 = vsel %vm2187, %v2793, 0
    %v2909 = vsel %vm2187, %v2870, 0
    %2911 = vmatprep.subr.mxu0 0.0
    %2912 = vmatpush1.msra.mxu0 0.0
    %2913 = vmatprep.subr.mxu0 0.0
    %2914 = vmatpush1.msra.mxu0 0.0
    %2915 = vmatprep.subr.mxu0 0.0
    %2916 = vmatpush1.msra.mxu0 0.0
    %2917 = vmatprep.subr.mxu0 0.0
    %2918 = vmatpush1.msra.mxu0 0.0
    %2919 = vmatprep.subr.mxu0 0.0
    %2920 = vmatpush1.msra.mxu0 0.0
    %2921 = vmatprep.subr.mxu0 0.0
    %2922 = vmatpush1.msra.mxu0 0.0
    %2923 = vmatprep.subr.mxu0 0.0
    %2924 = vmatpush1.msra.mxu0 0.0
    %2925 = vmatprep.subr.mxu0 0.0
    %2926 = vmatpush1.msra.mxu0 0.0
    %2927 = vmatprep.subr.mxu0 %v2902
    %2928 = vmatpush1.msra.mxu0 %v2901
    %2929 = vmatprep.subr.mxu0 %v2898
    %2930 = vmatpush1.msra.mxu0 %v2897
    %2931 = vmatprep.subr.mxu0 %v2894
    %2932 = vmatpush1.msra.mxu0 %v2893
    %2933 = vmatprep.subr.mxu0 %v2890
    %2934 = vmatpush1.msra.mxu0 %v2889
    %2935 = vmatprep.subr.mxu0 %v2886
    %2936 = vmatpush1.msra.mxu0 %v2885
    %2937 = vmatprep.subr.mxu0 %v2882
    %2938 = vmatpush1.msra.mxu0 %v2881
    %2939 = vmatprep.subr.mxu0 %v2878
    %2940 = vmatpush1.msra.mxu0 %v2877
    %2941 = vmatprep.subr.mxu0 %v2874
    %2942 = vmatpush1.msra.mxu0 %v2873
    %2943 = vmatprep.subr.mxu0 0.0
    %2944 = vmatpush2.msra.mxu0 0.0
    %2945 = vmatprep.subr.mxu0 0.0
    %2946 = vmatpush2.msra.mxu0 0.0
    %2947 = vmatprep.subr.mxu0 0.0
    %2948 = vmatpush2.msra.mxu0 0.0
    %2949 = vmatprep.subr.mxu0 0.0
    %2950 = vmatpush2.msra.mxu0 0.0
    %2951 = vmatprep.subr.mxu0 0.0
    %2952 = vmatpush2.msra.mxu0 0.0
    %2953 = vmatprep.subr.mxu0 0.0
    %2954 = vmatpush2.msra.mxu0 0.0
    %2955 = vmatprep.subr.mxu0 0.0
    %2956 = vmatpush2.msra.mxu0 0.0
    %2957 = vmatprep.subr.mxu0 0.0
    %2958 = vmatpush2.msra.mxu0 0.0
    %2959 = vmatprep.subr.mxu0 0.0
    %2960 = vmatpush2.msra.mxu0 0.0
    %2961 = vmatprep.subr.mxu0 0.0
    %2962 = vmatpush2.msra.mxu0 0.0
    %2963 = vmatprep.subr.mxu0 0.0
    %2964 = vmatpush2.msra.mxu0 0.0
    %2965 = vmatprep.subr.mxu0 0.0
    %2966 = vmatpush2.msra.mxu0 0.0
    %2967 = vmatprep.subr.mxu0 0.0
    %2968 = vmatpush2.msra.mxu0 0.0
    %2969 = vmatprep.subr.mxu0 0.0
    %2970 = vmatpush2.msra.mxu0 0.0
    %2971 = vmatprep.subr.mxu0 0.0
    %2972 = vmatpush2.msra.mxu0 0.0
    %2973 = vmatprep.subr.mxu0 0.0
    %2974 = vmatpush2.msra.mxu0 0.0
    %2975 = vmatprep.mubr.f32.mxu0 0.0
    %2976 = vmatmul.mubr.f32.gmra.mxu0 %v2906
    %v2977 = vpop.f32.mrf.mxu0
    %v2978 = vadd.f32 0.0, %v2977
    %v2979 = vpop.f32.mrf.mxu0
    %v2980 = vadd.f32 0.0, %v2979
    %2981 = vmatprep.mubr.f32.mxu0 0.0
    %2982 = vmatmul.mubr.f32.gmra.mxu0 %v2909
    %v2983 = vpop.f32.mrf.mxu0
    %v2984 = vadd.f32 0.0, %v2983
    %v2985 = vpop.f32.mrf.mxu0
    %v2986 = vadd.f32 0.0, %v2985
    %2987 = vdwg.mxu0
    %2988 = vmatprep.subr.mxu0 0.0
    %2989 = vmatpush1.msra.mxu0 0.0
    %2990 = vmatprep.subr.mxu0 0.0
    %2991 = vmatpush1.msra.mxu0 0.0
    %2992 = vmatprep.subr.mxu0 0.0
    %2993 = vmatpush1.msra.mxu0 0.0
    %2994 = vmatprep.subr.mxu0 0.0
    %2995 = vmatpush1.msra.mxu0 0.0
    %2996 = vmatprep.subr.mxu0 0.0
    %2997 = vmatpush1.msra.mxu0 0.0
    %2998 = vmatprep.subr.mxu0 0.0
    %2999 = vmatpush1.msra.mxu0 0.0
    %3000 = vmatprep.subr.mxu0 0.0
    %3001 = vmatpush1.msra.mxu0 0.0
    %3002 = vmatprep.subr.mxu0 0.0
    %3003 = vmatpush1.msra.mxu0 0.0
    %3004 = vmatprep.subr.mxu0 %v2904
    %3005 = vmatpush1.msra.mxu0 %v2903
    %3006 = vmatprep.subr.mxu0 %v2900
    %3007 = vmatpush1.msra.mxu0 %v2899
    %3008 = vmatprep.subr.mxu0 %v2896
    %3009 = vmatpush1.msra.mxu0 %v2895
    %3010 = vmatprep.subr.mxu0 %v2892
    %3011 = vmatpush1.msra.mxu0 %v2891
    %3012 = vmatprep.subr.mxu0 %v2888
    %3013 = vmatpush1.msra.mxu0 %v2887
    %3014 = vmatprep.subr.mxu0 %v2884
    %3015 = vmatpush1.msra.mxu0 %v2883
    %3016 = vmatprep.subr.mxu0 %v2880
    %3017 = vmatpush1.msra.mxu0 %v2879
    %3018 = vmatprep.subr.mxu0 %v2876
    %3019 = vmatpush1.msra.mxu0 %v2875
    %3020 = vmatprep.subr.mxu0 0.0
    %3021 = vmatpush2.msra.mxu0 0.0
    %3022 = vmatprep.subr.mxu0 0.0
    %3023 = vmatpush2.msra.mxu0 0.0
    %3024 = vmatprep.subr.mxu0 0.0
    %3025 = vmatpush2.msra.mxu0 0.0
    %3026 = vmatprep.subr.mxu0 0.0
    %3027 = vmatpush2.msra.mxu0 0.0
    %3028 = vmatprep.subr.mxu0 0.0
    %3029 = vmatpush2.msra.mxu0 0.0
    %3030 = vmatprep.subr.mxu0 0.0
    %3031 = vmatpush2.msra.mxu0 0.0
    %3032 = vmatprep.subr.mxu0 0.0
    %3033 = vmatpush2.msra.mxu0 0.0
    %3034 = vmatprep.subr.mxu0 0.0
    %3035 = vmatpush2.msra.mxu0 0.0
    %3036 = vmatprep.subr.mxu0 0.0
    %3037 = vmatpush2.msra.mxu0 0.0
    %3038 = vmatprep.subr.mxu0 0.0
    %3039 = vmatpush2.msra.mxu0 0.0
    %3040 = vmatprep.subr.mxu0 0.0
    %3041 = vmatpush2.msra.mxu0 0.0
    %3042 = vmatprep.subr.mxu0 0.0
    %3043 = vmatpush2.msra.mxu0 0.0
    %3044 = vmatprep.subr.mxu0 0.0
    %3045 = vmatpush2.msra.mxu0 0.0
    %3046 = vmatprep.subr.mxu0 0.0
    %3047 = vmatpush2.msra.mxu0 0.0
    %3048 = vmatprep.subr.mxu0 0.0
    %3049 = vmatpush2.msra.mxu0 0.0
    %3050 = vmatprep.subr.mxu0 0.0
    %3051 = vmatpush2.msra.mxu0 0.0
    %3052 = vmatprep.mubr.f32.mxu0 0.0
    %3053 = vmatmul.mubr.f32.gmra.mxu0 %v2906
    %v3054 = vpop.f32.mrf.mxu0
    %v3055 = vadd.f32 0.0, %v3054
    %v3056 = vpop.f32.mrf.mxu0
    %v3057 = vadd.f32 0.0, %v3056
    %3058 = vmatprep.mubr.f32.mxu0 0.0
    %3059 = vmatmul.mubr.f32.gmra.mxu0 %v2909
    %v3060 = vpop.f32.mrf.mxu0
    %v3061 = vadd.f32 0.0, %v3060
    %v3062 = vpop.f32.mrf.mxu0
    %v3063 = vadd.f32 0.0, %v3062
    %3064 = vdwg.mxu0
    %v3066 = vsel %vm2187, %v2433, 0
    %v3069 = vsel %vm2187, %v2506, 0
    %3071 = vmatprep.subr.mxu0 0.0
    %3072 = vmatpush1.msra.mxu0 0.0
    %3073 = vmatprep.subr.mxu0 0.0
    %3074 = vmatpush1.msra.mxu0 0.0
    %3075 = vmatprep.subr.mxu0 0.0
    %3076 = vmatpush1.msra.mxu0 0.0
    %3077 = vmatprep.subr.mxu0 0.0
    %3078 = vmatpush1.msra.mxu0 0.0
    %3079 = vmatprep.subr.mxu0 0.0
    %3080 = vmatpush1.msra.mxu0 0.0
    %3081 = vmatprep.subr.mxu0 0.0
    %3082 = vmatpush1.msra.mxu0 0.0
    %3083 = vmatprep.subr.mxu0 0.0
    %3084 = vmatpush1.msra.mxu0 0.0
    %3085 = vmatprep.subr.mxu0 0.0
    %3086 = vmatpush1.msra.mxu0 0.0
    %3087 = vmatprep.subr.mxu0 %v2538
    %3088 = vmatpush1.msra.mxu0 %v2537
    %3089 = vmatprep.subr.mxu0 %v2534
    %3090 = vmatpush1.msra.mxu0 %v2533
    %3091 = vmatprep.subr.mxu0 %v2530
    %3092 = vmatpush1.msra.mxu0 %v2529
    %3093 = vmatprep.subr.mxu0 %v2526
    %3094 = vmatpush1.msra.mxu0 %v2525
    %3095 = vmatprep.subr.mxu0 %v2522
    %3096 = vmatpush1.msra.mxu0 %v2521
    %3097 = vmatprep.subr.mxu0 %v2518
    %3098 = vmatpush1.msra.mxu0 %v2517
    %3099 = vmatprep.subr.mxu0 %v2514
    %3100 = vmatpush1.msra.mxu0 %v2513
    %3101 = vmatprep.subr.mxu0 %v2510
    %3102 = vmatpush1.msra.mxu0 %v2509
    %3103 = vmatprep.subr.mxu0 0.0
    %3104 = vmatpush2.msra.mxu0 0.0
    %3105 = vmatprep.subr.mxu0 0.0
    %3106 = vmatpush2.msra.mxu0 0.0
    %3107 = vmatprep.subr.mxu0 0.0
    %3108 = vmatpush2.msra.mxu0 0.0
    %3109 = vmatprep.subr.mxu0 0.0
    %3110 = vmatpush2.msra.mxu0 0.0
    %3111 = vmatprep.subr.mxu0 0.0
    %3112 = vmatpush2.msra.mxu0 0.0
    %3113 = vmatprep.subr.mxu0 0.0
    %3114 = vmatpush2.msra.mxu0 0.0
    %3115 = vmatprep.subr.mxu0 0.0
    %3116 = vmatpush2.msra.mxu0 0.0
    %3117 = vmatprep.subr.mxu0 0.0
    %3118 = vmatpush2.msra.mxu0 0.0
    %3119 = vmatprep.subr.mxu0 0.0
    %3120 = vmatpush2.msra.mxu0 0.0
    %3121 = vmatprep.subr.mxu0 0.0
    %3122 = vmatpush2.msra.mxu0 0.0
    %3123 = vmatprep.subr.mxu0 0.0
    %3124 = vmatpush2.msra.mxu0 0.0
    %3125 = vmatprep.subr.mxu0 0.0
    %3126 = vmatpush2.msra.mxu0 0.0
    %3127 = vmatprep.subr.mxu0 0.0
    %3128 = vmatpush2.msra.mxu0 0.0
    %3129 = vmatprep.subr.mxu0 0.0
    %3130 = vmatpush2.msra.mxu0 0.0
    %3131 = vmatprep.subr.mxu0 0.0
    %3132 = vmatpush2.msra.mxu0 0.0
    %3133 = vmatprep.subr.mxu0 0.0
    %3134 = vmatpush2.msra.mxu0 0.0
    %3135 = vmatprep.mubr.f32.mxu0 0.0
    %3136 = vmatmul.mubr.f32.gmra.mxu0 %v3066
    %v3137 = vpop.f32.mrf.mxu0
    %v3138 = vadd.f32 %v2978, %v3137
    %v3139 = vpop.f32.mrf.mxu0
    %v3140 = vadd.f32 %v2980, %v3139
    %3141 = vmatprep.mubr.f32.mxu0 0.0
    %3142 = vmatmul.mubr.f32.gmra.mxu0 %v3069
    %v3143 = vpop.f32.mrf.mxu0
    %v3144 = vadd.f32 %v2984, %v3143
    %v3145 = vpop.f32.mrf.mxu0
    %v3146 = vadd.f32 %v2986, %v3145
    %3147 = vdwg.mxu0
    %3148 = vmatprep.subr.mxu0 0.0
    %3149 = vmatpush1.msra.mxu0 0.0
    %3150 = vmatprep.subr.mxu0 0.0
    %3151 = vmatpush1.msra.mxu0 0.0
    %3152 = vmatprep.subr.mxu0 0.0
    %3153 = vmatpush1.msra.mxu0 0.0
    %3154 = vmatprep.subr.mxu0 0.0
    %3155 = vmatpush1.msra.mxu0 0.0
    %3156 = vmatprep.subr.mxu0 0.0
    %3157 = vmatpush1.msra.mxu0 0.0
    %3158 = vmatprep.subr.mxu0 0.0
    %3159 = vmatpush1.msra.mxu0 0.0
    %3160 = vmatprep.subr.mxu0 0.0
    %3161 = vmatpush1.msra.mxu0 0.0
    %3162 = vmatprep.subr.mxu0 0.0
    %3163 = vmatpush1.msra.mxu0 0.0
    %3164 = vmatprep.subr.mxu0 %v2540
    %3165 = vmatpush1.msra.mxu0 %v2539
    %3166 = vmatprep.subr.mxu0 %v2536
    %3167 = vmatpush1.msra.mxu0 %v2535
    %3168 = vmatprep.subr.mxu0 %v2532
    %3169 = vmatpush1.msra.mxu0 %v2531
    %3170 = vmatprep.subr.mxu0 %v2528
    %3171 = vmatpush1.msra.mxu0 %v2527
    %3172 = vmatprep.subr.mxu0 %v2524
    %3173 = vmatpush1.msra.mxu0 %v2523
    %3174 = vmatprep.subr.mxu0 %v2520
    %3175 = vmatpush1.msra.mxu0 %v2519
    %3176 = vmatprep.subr.mxu0 %v2516
    %3177 = vmatpush1.msra.mxu0 %v2515
    %3178 = vmatprep.subr.mxu0 %v2512
    %3179 = vmatpush1.msra.mxu0 %v2511
    %3180 = vmatprep.subr.mxu0 0.0
    %3181 = vmatpush2.msra.mxu0 0.0
    %3182 = vmatprep.subr.mxu0 0.0
    %3183 = vmatpush2.msra.mxu0 0.0
    %3184 = vmatprep.subr.mxu0 0.0
    %3185 = vmatpush2.msra.mxu0 0.0
    %3186 = vmatprep.subr.mxu0 0.0
    %3187 = vmatpush2.msra.mxu0 0.0
    %3188 = vmatprep.subr.mxu0 0.0
    %3189 = vmatpush2.msra.mxu0 0.0
    %3190 = vmatprep.subr.mxu0 0.0
    %3191 = vmatpush2.msra.mxu0 0.0
    %3192 = vmatprep.subr.mxu0 0.0
    %3193 = vmatpush2.msra.mxu0 0.0
    %3194 = vmatprep.subr.mxu0 0.0
    %3195 = vmatpush2.msra.mxu0 0.0
    %3196 = vmatprep.subr.mxu0 0.0
    %3197 = vmatpush2.msra.mxu0 0.0
    %3198 = vmatprep.subr.mxu0 0.0
    %3199 = vmatpush2.msra.mxu0 0.0
    %3200 = vmatprep.subr.mxu0 0.0
    %3201 = vmatpush2.msra.mxu0 0.0
    %3202 = vmatprep.subr.mxu0 0.0
    %3203 = vmatpush2.msra.mxu0 0.0
    %3204 = vmatprep.subr.mxu0 0.0
    %3205 = vmatpush2.msra.mxu0 0.0
    %3206 = vmatprep.subr.mxu0 0.0
    %3207 = vmatpush2.msra.mxu0 0.0
    %3208 = vmatprep.subr.mxu0 0.0
    %3209 = vmatpush2.msra.mxu0 0.0
    %3210 = vmatprep.subr.mxu0 0.0
    %3211 = vmatpush2.msra.mxu0 0.0
    %3212 = vmatprep.mubr.f32.mxu0 0.0
    %3213 = vmatmul.mubr.f32.gmra.mxu0 %v3066
    %v3214 = vpop.f32.mrf.mxu0
    %v3215 = vadd.f32 %v3055, %v3214
    %v3216 = vpop.f32.mrf.mxu0
    %v3217 = vadd.f32 %v3057, %v3216
    %3218 = vmatprep.mubr.f32.mxu0 0.0
    %3219 = vmatmul.mubr.f32.gmra.mxu0 %v3069
    %v3220 = vpop.f32.mrf.mxu0
    %v3221 = vadd.f32 %v3061, %v3220
    %v3222 = vpop.f32.mrf.mxu0
    %v3223 = vadd.f32 %v3063, %v3222
    %3224 = vdwg.mxu0
    %v3226 = vsel %vm2187, %v368, 0
    %v3229 = vsel %vm2187, %v1486, 0
    %3231 = vmatprep.subr.mxu0 0.0
    %3232 = vmatpush1.xpose.msra.mxu0 0.0
    %3233 = vmatprep.subr.mxu0 0.0
    %3234 = vmatpush1.xpose.msra.mxu0 0.0
    %3235 = vmatprep.subr.mxu0 0.0
    %3236 = vmatpush1.xpose.msra.mxu0 0.0
    %3237 = vmatprep.subr.mxu0 0.0
    %3238 = vmatpush1.xpose.msra.mxu0 0.0
    %3239 = vmatprep.subr.mxu0 0.0
    %3240 = vmatpush1.xpose.msra.mxu0 0.0
    %3241 = vmatprep.subr.mxu0 0.0
    %3242 = vmatpush1.xpose.msra.mxu0 0.0
    %3243 = vmatprep.subr.mxu0 0.0
    %3244 = vmatpush1.xpose.msra.mxu0 0.0
    %3245 = vmatprep.subr.mxu0 0.0
    %3246 = vmatpush1.xpose.msra.mxu0 0.0
    %3247 = vmatprep.subr.mxu0 0.0
    %3248 = vmatpush1.xpose.msra.mxu0 0.0
    %3249 = vmatprep.subr.mxu0 0.0
    %3250 = vmatpush1.xpose.msra.mxu0 0.0
    %3251 = vmatprep.subr.mxu0 0.0
    %3252 = vmatpush1.xpose.msra.mxu0 0.0
    %3253 = vmatprep.subr.mxu0 0.0
    %3254 = vmatpush1.xpose.msra.mxu0 0.0
    %3255 = vmatprep.subr.mxu0 0.0
    %3256 = vmatpush1.xpose.msra.mxu0 0.0
    %3257 = vmatprep.subr.mxu0 0.0
    %3258 = vmatpush1.xpose.msra.mxu0 0.0
    %3259 = vmatprep.subr.mxu0 0.0
    %3260 = vmatpush1.xpose.msra.mxu0 0.0
    %3261 = vmatprep.subr.mxu0 0.0
    %3262 = vmatpush1.xpose.msra.mxu0 %v3229
    %3263 = vmatprep.subr.mxu0 0.0
    %3264 = vmatpush2.xpose.msra.mxu0 0.0
    %3265 = vmatprep.subr.mxu0 0.0
    %3266 = vmatpush2.xpose.msra.mxu0 0.0
    %3267 = vmatprep.subr.mxu0 0.0
    %3268 = vmatpush2.xpose.msra.mxu0 0.0
    %3269 = vmatprep.subr.mxu0 0.0
    %3270 = vmatpush2.xpose.msra.mxu0 0.0
    %3271 = vmatprep.subr.mxu0 0.0
    %3272 = vmatpush2.xpose.msra.mxu0 0.0
    %3273 = vmatprep.subr.mxu0 0.0
    %3274 = vmatpush2.xpose.msra.mxu0 0.0
    %3275 = vmatprep.subr.mxu0 0.0
    %3276 = vmatpush2.xpose.msra.mxu0 0.0
    %3277 = vmatprep.subr.mxu0 0.0
    %3278 = vmatpush2.xpose.msra.mxu0 0.0
    %3279 = vmatprep.subr.mxu0 0.0
    %3280 = vmatpush2.xpose.msra.mxu0 0.0
    %3281 = vmatprep.subr.mxu0 0.0
    %3282 = vmatpush2.xpose.msra.mxu0 0.0
    %3283 = vmatprep.subr.mxu0 0.0
    %3284 = vmatpush2.xpose.msra.mxu0 0.0
    %3285 = vmatprep.subr.mxu0 0.0
    %3286 = vmatpush2.xpose.msra.mxu0 0.0
    %3287 = vmatprep.subr.mxu0 0.0
    %3288 = vmatpush2.xpose.msra.mxu0 0.0
    %3289 = vmatprep.subr.mxu0 0.0
    %3290 = vmatpush2.xpose.msra.mxu0 0.0
    %3291 = vmatprep.subr.mxu0 0.0
    %3292 = vmatpush2.xpose.msra.mxu0 0.0
    %3293 = vmatprep.subr.mxu0 0.0
    %3294 = vmatpush2.xpose.msra.mxu0 0.0
    %3295 = vmatprep.mubr.f32.mxu0 0.0
    %3296 = vmatmul.mubr.f32.gmra.mxu0 %v3226
    %v3297 = vpop.f32.mrf.mxu0
    %v3298 = vadd.f32 0.0, %v3297
    %v3299 = vpop.f32.mrf.mxu0
    %3300 = vdwg.mxu0
    %v3302 = vsel %vm2187, %v374, 0
    %v3305 = vsel %vm2187, %v1492, 0
    %3307 = vmatprep.subr.mxu0 0.0
    %3308 = vmatpush1.xpose.msra.mxu0 0.0
    %3309 = vmatprep.subr.mxu0 0.0
    %3310 = vmatpush1.xpose.msra.mxu0 0.0
    %3311 = vmatprep.subr.mxu0 0.0
    %3312 = vmatpush1.xpose.msra.mxu0 0.0
    %3313 = vmatprep.subr.mxu0 0.0
    %3314 = vmatpush1.xpose.msra.mxu0 0.0
    %3315 = vmatprep.subr.mxu0 0.0
    %3316 = vmatpush1.xpose.msra.mxu0 0.0
    %3317 = vmatprep.subr.mxu0 0.0
    %3318 = vmatpush1.xpose.msra.mxu0 0.0
    %3319 = vmatprep.subr.mxu0 0.0
    %3320 = vmatpush1.xpose.msra.mxu0 0.0
    %3321 = vmatprep.subr.mxu0 0.0
    %3322 = vmatpush1.xpose.msra.mxu0 0.0
    %3323 = vmatprep.subr.mxu0 0.0
    %3324 = vmatpush1.xpose.msra.mxu0 0.0
    %3325 = vmatprep.subr.mxu0 0.0
    %3326 = vmatpush1.xpose.msra.mxu0 0.0
    %3327 = vmatprep.subr.mxu0 0.0
    %3328 = vmatpush1.xpose.msra.mxu0 0.0
    %3329 = vmatprep.subr.mxu0 0.0
    %3330 = vmatpush1.xpose.msra.mxu0 0.0
    %3331 = vmatprep.subr.mxu0 0.0
    %3332 = vmatpush1.xpose.msra.mxu0 0.0
    %3333 = vmatprep.subr.mxu0 0.0
    %3334 = vmatpush1.xpose.msra.mxu0 0.0
    %3335 = vmatprep.subr.mxu0 0.0
    %3336 = vmatpush1.xpose.msra.mxu0 0.0
    %3337 = vmatprep.subr.mxu0 0.0
    %3338 = vmatpush1.xpose.msra.mxu0 %v3305
    %3339 = vmatprep.subr.mxu0 0.0
    %3340 = vmatpush2.xpose.msra.mxu0 0.0
    %3341 = vmatprep.subr.mxu0 0.0
    %3342 = vmatpush2.xpose.msra.mxu0 0.0
    %3343 = vmatprep.subr.mxu0 0.0
    %3344 = vmatpush2.xpose.msra.mxu0 0.0
    %3345 = vmatprep.subr.mxu0 0.0
    %3346 = vmatpush2.xpose.msra.mxu0 0.0
    %3347 = vmatprep.subr.mxu0 0.0
    %3348 = vmatpush2.xpose.msra.mxu0 0.0
    %3349 = vmatprep.subr.mxu0 0.0
    %3350 = vmatpush2.xpose.msra.mxu0 0.0
    %3351 = vmatprep.subr.mxu0 0.0
    %3352 = vmatpush2.xpose.msra.mxu0 0.0
    %3353 = vmatprep.subr.mxu0 0.0
    %3354 = vmatpush2.xpose.msra.mxu0 0.0
    %3355 = vmatprep.subr.mxu0 0.0
    %3356 = vmatpush2.xpose.msra.mxu0 0.0
    %3357 = vmatprep.subr.mxu0 0.0
    %3358 = vmatpush2.xpose.msra.mxu0 0.0
    %3359 = vmatprep.subr.mxu0 0.0
    %3360 = vmatpush2.xpose.msra.mxu0 0.0
    %3361 = vmatprep.subr.mxu0 0.0
    %3362 = vmatpush2.xpose.msra.mxu0 0.0
    %3363 = vmatprep.subr.mxu0 0.0
    %3364 = vmatpush2.xpose.msra.mxu0 0.0
    %3365 = vmatprep.subr.mxu0 0.0
    %3366 = vmatpush2.xpose.msra.mxu0 0.0
    %3367 = vmatprep.subr.mxu0 0.0
    %3368 = vmatpush2.xpose.msra.mxu0 0.0
    %3369 = vmatprep.subr.mxu0 0.0
    %3370 = vmatpush2.xpose.msra.mxu0 0.0
    %3371 = vmatprep.mubr.f32.mxu0 0.0
    %3372 = vmatmul.mubr.f32.gmra.mxu0 %v3302
    %v3373 = vpop.f32.mrf.mxu0
    %v3374 = vadd.f32 0.0, %v3373
    %v3375 = vpop.f32.mrf.mxu0
    %3376 = vdwg.mxu0
    %v3377 = vsel %vm2340, %v3298, -inf
    %3378 = vmax.xlane.f32.xlu0 %v3377
    %v3379 = vpop.xlane.xlu0 %3378
    %v3380 = vsel %vm2340, %v3374, -inf
    %3381 = vmax.xlane.f32.xlu0 %v3380
    %v3382 = vpop.xlane.xlu0 %3381
    %v3383 = vsub.f32 %v3298, %v3379
    %v3384 = vsub.f32 %v3374, %v3382
    %v3385 = vmul.f32 %v3383, 1.442695
    %v3386 = vpow.pop %v3385
    %v3387 = vmul.f32 %v3384, 1.442695
    %v3388 = vpow.pop %v3387
    %v3389 = vsel %vm2340, %v3386, 0.0
    %3390 = vadd.xlane.f32.xlu0 %v3389
    %v3391 = vpop.xlane.xlu0 %3390
    %v3392 = vsel %vm2340, %v3388, 0.0
    %3393 = vadd.xlane.f32.xlu0 %v3392
    %v3394 = vpop.xlane.xlu0 %3393
    %v3395 = vrcp.pop %v3391
    %v3396 = vrcp.pop %v3394
    %v3397 = vmul.f32 %v3386, %v3395
    %v3398 = vmul.f32 %v3388, %v3396
    %v3400 = vsel %vm2340, %v3397, 0
    %3402 = vmatprep.subr.mxu0 0.0
    %3403 = vmatpush1.msra.mxu0 0.0
    %3404 = vmatprep.subr.mxu0 0.0
    %3405 = vmatpush1.msra.mxu0 0.0
    %3406 = vmatprep.subr.mxu0 0.0
    %3407 = vmatpush1.msra.mxu0 0.0
    %3408 = vmatprep.subr.mxu0 0.0
    %3409 = vmatpush1.msra.mxu0 0.0
    %3410 = vmatprep.subr.mxu0 0.0
    %3411 = vmatpush1.msra.mxu0 0.0
    %3412 = vmatprep.subr.mxu0 0.0
    %3413 = vmatpush1.msra.mxu0 0.0
    %3414 = vmatprep.subr.mxu0 0.0
    %3415 = vmatpush1.msra.mxu0 0.0
    %3416 = vmatprep.subr.mxu0 0.0
    %3417 = vmatpush1.msra.mxu0 0.0
    %3418 = vmatprep.subr.mxu0 0.0
    %3419 = vmatpush1.msra.mxu0 0.0
    %3420 = vmatprep.subr.mxu0 0.0
    %3421 = vmatpush1.msra.mxu0 0.0
    %3422 = vmatprep.subr.mxu0 0.0
    %3423 = vmatpush1.msra.mxu0 0.0
    %3424 = vmatprep.subr.mxu0 0.0
    %3425 = vmatpush1.msra.mxu0 0.0
    %3426 = vmatprep.subr.mxu0 0.0
    %3427 = vmatpush1.msra.mxu0 0.0
    %3428 = vmatprep.subr.mxu0 0.0
    %3429 = vmatpush1.msra.mxu0 0.0
    %3430 = vmatprep.subr.mxu0 0.0
    %3431 = vmatpush1.msra.mxu0 0.0
    %3432 = vmatprep.subr.mxu0 0.0
    %3433 = vmatpush1.msra.mxu0 %v1948
    %3434 = vmatprep.subr.mxu0 0.0
    %3435 = vmatpush2.msra.mxu0 0.0
    %3436 = vmatprep.subr.mxu0 0.0
    %3437 = vmatpush2.msra.mxu0 0.0
    %3438 = vmatprep.subr.mxu0 0.0
    %3439 = vmatpush2.msra.mxu0 0.0
    %3440 = vmatprep.subr.mxu0 0.0
    %3441 = vmatpush2.msra.mxu0 0.0
    %3442 = vmatprep.subr.mxu0 0.0
    %3443 = vmatpush2.msra.mxu0 0.0
    %3444 = vmatprep.subr.mxu0 0.0
    %3445 = vmatpush2.msra.mxu0 0.0
    %3446 = vmatprep.subr.mxu0 0.0
    %3447 = vmatpush2.msra.mxu0 0.0
    %3448 = vmatprep.subr.mxu0 0.0
    %3449 = vmatpush2.msra.mxu0 0.0
    %3450 = vmatprep.subr.mxu0 0.0
    %3451 = vmatpush2.msra.mxu0 0.0
    %3452 = vmatprep.subr.mxu0 0.0
    %3453 = vmatpush2.msra.mxu0 0.0
    %3454 = vmatprep.subr.mxu0 0.0
    %3455 = vmatpush2.msra.mxu0 0.0
    %3456 = vmatprep.subr.mxu0 0.0
    %3457 = vmatpush2.msra.mxu0 0.0
    %3458 = vmatprep.subr.mxu0 0.0
    %3459 = vmatpush2.msra.mxu0 0.0
    %3460 = vmatprep.subr.mxu0 0.0
    %3461 = vmatpush2.msra.mxu0 0.0
    %3462 = vmatprep.subr.mxu0 0.0
    %3463 = vmatpush2.msra.mxu0 0.0
    %3464 = vmatprep.subr.mxu0 0.0
    %3465 = vmatpush2.msra.mxu0 0.0
    %3466 = vmatprep.mubr.f32.mxu0 0.0
    %3467 = vmatmul.mubr.f32.gmra.mxu0 %v3400
    %v3468 = vpop.f32.mrf.mxu0
    %v3469 = vadd.f32 0.0, %v3468
    %v3470 = vpop.f32.mrf.mxu0
    %3471 = vdwg.mxu0
    %v3473 = vsel %vm2340, %v3398, 0
    %3475 = vmatprep.subr.mxu0 0.0
    %3476 = vmatpush1.msra.mxu0 0.0
    %3477 = vmatprep.subr.mxu0 0.0
    %3478 = vmatpush1.msra.mxu0 0.0
    %3479 = vmatprep.subr.mxu0 0.0
    %3480 = vmatpush1.msra.mxu0 0.0
    %3481 = vmatprep.subr.mxu0 0.0
    %3482 = vmatpush1.msra.mxu0 0.0
    %3483 = vmatprep.subr.mxu0 0.0
    %3484 = vmatpush1.msra.mxu0 0.0
    %3485 = vmatprep.subr.mxu0 0.0
    %3486 = vmatpush1.msra.mxu0 0.0
    %3487 = vmatprep.subr.mxu0 0.0
    %3488 = vmatpush1.msra.mxu0 0.0
    %3489 = vmatprep.subr.mxu0 0.0
    %3490 = vmatpush1.msra.mxu0 0.0
    %3491 = vmatprep.subr.mxu0 0.0
    %3492 = vmatpush1.msra.mxu0 0.0
    %3493 = vmatprep.subr.mxu0 0.0
    %3494 = vmatpush1.msra.mxu0 0.0
    %3495 = vmatprep.subr.mxu0 0.0
    %3496 = vmatpush1.msra.mxu0 0.0
    %3497 = vmatprep.subr.mxu0 0.0
    %3498 = vmatpush1.msra.mxu0 0.0
    %3499 = vmatprep.subr.mxu0 0.0
    %3500 = vmatpush1.msra.mxu0 0.0
    %3501 = vmatprep.subr.mxu0 0.0
    %3502 = vmatpush1.msra.mxu0 0.0
    %3503 = vmatprep.subr.mxu0 0.0
    %3504 = vmatpush1.msra.mxu0 0.0
    %3505 = vmatprep.subr.mxu0 0.0
    %3506 = vmatpush1.msra.mxu0 %v1954
    %3507 = vmatprep.subr.mxu0 0.0
    %3508 = vmatpush2.msra.mxu0 0.0
    %3509 = vmatprep.subr.mxu0 0.0
    %3510 = vmatpush2.msra.mxu0 0.0
    %3511 = vmatprep.subr.mxu0 0.0
    %3512 = vmatpush2.msra.mxu0 0.0
    %3513 = vmatprep.subr.mxu0 0.0
    %3514 = vmatpush2.msra.mxu0 0.0
    %3515 = vmatprep.subr.mxu0 0.0
    %3516 = vmatpush2.msra.mxu0 0.0
    %3517 = vmatprep.subr.mxu0 0.0
    %3518 = vmatpush2.msra.mxu0 0.0
    %3519 = vmatprep.subr.mxu0 0.0
    %3520 = vmatpush2.msra.mxu0 0.0
    %3521 = vmatprep.subr.mxu0 0.0
    %3522 = vmatpush2.msra.mxu0 0.0
    %3523 = vmatprep.subr.mxu0 0.0
    %3524 = vmatpush2.msra.mxu0 0.0
    %3525 = vmatprep.subr.mxu0 0.0
    %3526 = vmatpush2.msra.mxu0 0.0
    %3527 = vmatprep.subr.mxu0 0.0
    %3528 = vmatpush2.msra.mxu0 0.0
    %3529 = vmatprep.subr.mxu0 0.0
    %3530 = vmatpush2.msra.mxu0 0.0
    %3531 = vmatprep.subr.mxu0 0.0
    %3532 = vmatpush2.msra.mxu0 0.0
    %3533 = vmatprep.subr.mxu0 0.0
    %3534 = vmatpush2.msra.mxu0 0.0
    %3535 = vmatprep.subr.mxu0 0.0
    %3536 = vmatpush2.msra.mxu0 0.0
    %3537 = vmatprep.subr.mxu0 0.0
    %3538 = vmatpush2.msra.mxu0 0.0
    %3539 = vmatprep.mubr.f32.mxu0 0.0
    %3540 = vmatmul.mubr.f32.gmra.mxu0 %v3473
    %v3541 = vpop.f32.mrf.mxu0
    %v3542 = vadd.f32 0.0, %v3541
    %v3543 = vpop.f32.mrf.mxu0
    %3544 = vdwg.mxu0
    %v3545 = vld [vmem:[#allocation13 + $0x200] sm:$0xff]
    %v3546 = vld [vmem:[#allocation13 + $0x208] sm:$0xff]
    %v3547 = vld [vmem:[#allocation13 + $0x210] sm:$0xff]
    %v3548 = vld [vmem:[#allocation13 + $0x218] sm:$0xff]
    %v3549 = vld [vmem:[#allocation13 + $0x220] sm:$0xff]
    %v3550 = vld [vmem:[#allocation13 + $0x228] sm:$0xff]
    %v3551 = vld [vmem:[#allocation13 + $0x230] sm:$0xff]
    %v3552 = vld [vmem:[#allocation13 + $0x238] sm:$0xff]
    %v3553 = vld [vmem:[#allocation13 + $0x240] sm:$0xff]
    %v3554 = vld [vmem:[#allocation13 + $0x248] sm:$0xff]
    %v3555 = vld [vmem:[#allocation13 + $0x250] sm:$0xff]
    %v3556 = vld [vmem:[#allocation13 + $0x258] sm:$0xff]
    %v3557 = vld [vmem:[#allocation13 + $0x260] sm:$0xff]
    %v3558 = vld [vmem:[#allocation13 + $0x268] sm:$0xff]
    %v3559 = vld [vmem:[#allocation13 + $0x270] sm:$0xff]
    %v3560 = vld [vmem:[#allocation13 + $0x278] sm:$0xff]
    %v3561 = vld [vmem:[#allocation13 + $0x280] sm:$0xff]
    %v3562 = vld [vmem:[#allocation13 + $0x288] sm:$0xff]
    %v3563 = vld [vmem:[#allocation13 + $0x290] sm:$0xff]
    %v3564 = vld [vmem:[#allocation13 + $0x298] sm:$0xff]
    %v3565 = vld [vmem:[#allocation13 + $0x2a0] sm:$0xff]
    %v3566 = vld [vmem:[#allocation13 + $0x2a8] sm:$0xff]
    %v3567 = vld [vmem:[#allocation13 + $0x2b0] sm:$0xff]
    %v3568 = vld [vmem:[#allocation13 + $0x2b8] sm:$0xff]
    %v3569 = vld [vmem:[#allocation13 + $0x2c0] sm:$0xff]
    %v3570 = vld [vmem:[#allocation13 + $0x2c8] sm:$0xff]
    %v3571 = vld [vmem:[#allocation13 + $0x2d0] sm:$0xff]
    %v3572 = vld [vmem:[#allocation13 + $0x2d8] sm:$0xff]
    %v3573 = vld [vmem:[#allocation13 + $0x2e0] sm:$0xff]
    %v3574 = vld [vmem:[#allocation13 + $0x2e8] sm:$0xff]
    %v3575 = vld [vmem:[#allocation13 + $0x2f0] sm:$0xff]
    %v3576 = vld [vmem:[#allocation13 + $0x2f8] sm:$0xff]
    %v3578 = vsel %vm2187, %v3469, 0
    %v3581 = vsel %vm2187, %v3542, 0
    %3583 = vmatprep.subr.mxu0 0.0
    %3584 = vmatpush1.msra.mxu0 0.0
    %3585 = vmatprep.subr.mxu0 0.0
    %3586 = vmatpush1.msra.mxu0 0.0
    %3587 = vmatprep.subr.mxu0 0.0
    %3588 = vmatpush1.msra.mxu0 0.0
    %3589 = vmatprep.subr.mxu0 0.0
    %3590 = vmatpush1.msra.mxu0 0.0
    %3591 = vmatprep.subr.mxu0 0.0
    %3592 = vmatpush1.msra.mxu0 0.0
    %3593 = vmatprep.subr.mxu0 0.0
    %3594 = vmatpush1.msra.mxu0 0.0
    %3595 = vmatprep.subr.mxu0 0.0
    %3596 = vmatpush1.msra.mxu0 0.0
    %3597 = vmatprep.subr.mxu0 0.0
    %3598 = vmatpush1.msra.mxu0 0.0
    %3599 = vmatprep.subr.mxu0 %v3574
    %3600 = vmatpush1.msra.mxu0 %v3573
    %3601 = vmatprep.subr.mxu0 %v3570
    %3602 = vmatpush1.msra.mxu0 %v3569
    %3603 = vmatprep.subr.mxu0 %v3566
    %3604 = vmatpush1.msra.mxu0 %v3565
    %3605 = vmatprep.subr.mxu0 %v3562
    %3606 = vmatpush1.msra.mxu0 %v3561
    %3607 = vmatprep.subr.mxu0 %v3558
    %3608 = vmatpush1.msra.mxu0 %v3557
    %3609 = vmatprep.subr.mxu0 %v3554
    %3610 = vmatpush1.msra.mxu0 %v3553
    %3611 = vmatprep.subr.mxu0 %v3550
    %3612 = vmatpush1.msra.mxu0 %v3549
    %3613 = vmatprep.subr.mxu0 %v3546
    %3614 = vmatpush1.msra.mxu0 %v3545
    %3615 = vmatprep.subr.mxu0 0.0
    %3616 = vmatpush2.msra.mxu0 0.0
    %3617 = vmatprep.subr.mxu0 0.0
    %3618 = vmatpush2.msra.mxu0 0.0
    %3619 = vmatprep.subr.mxu0 0.0
    %3620 = vmatpush2.msra.mxu0 0.0
    %3621 = vmatprep.subr.mxu0 0.0
    %3622 = vmatpush2.msra.mxu0 0.0
    %3623 = vmatprep.subr.mxu0 0.0
    %3624 = vmatpush2.msra.mxu0 0.0
    %3625 = vmatprep.subr.mxu0 0.0
    %3626 = vmatpush2.msra.mxu0 0.0
    %3627 = vmatprep.subr.mxu0 0.0
    %3628 = vmatpush2.msra.mxu0 0.0
    %3629 = vmatprep.subr.mxu0 0.0
    %3630 = vmatpush2.msra.mxu0 0.0
    %3631 = vmatprep.subr.mxu0 0.0
    %3632 = vmatpush2.msra.mxu0 0.0
    %3633 = vmatprep.subr.mxu0 0.0
    %3634 = vmatpush2.msra.mxu0 0.0
    %3635 = vmatprep.subr.mxu0 0.0
    %3636 = vmatpush2.msra.mxu0 0.0
    %3637 = vmatprep.subr.mxu0 0.0
    %3638 = vmatpush2.msra.mxu0 0.0
    %3639 = vmatprep.subr.mxu0 0.0
    %3640 = vmatpush2.msra.mxu0 0.0
    %3641 = vmatprep.subr.mxu0 0.0
    %3642 = vmatpush2.msra.mxu0 0.0
    %3643 = vmatprep.subr.mxu0 0.0
    %3644 = vmatpush2.msra.mxu0 0.0
    %3645 = vmatprep.subr.mxu0 0.0
    %3646 = vmatpush2.msra.mxu0 0.0
    %3647 = vmatprep.mubr.f32.mxu0 0.0
    %3648 = vmatmul.mubr.f32.gmra.mxu0 %v3578
    %v3649 = vpop.f32.mrf.mxu0
    %v3650 = vadd.f32 0.0, %v3649
    %v3651 = vpop.f32.mrf.mxu0
    %v3652 = vadd.f32 0.0, %v3651
    %3653 = vmatprep.mubr.f32.mxu0 0.0
    %3654 = vmatmul.mubr.f32.gmra.mxu0 %v3581
    %v3655 = vpop.f32.mrf.mxu0
    %v3656 = vadd.f32 0.0, %v3655
    %v3657 = vpop.f32.mrf.mxu0
    %v3658 = vadd.f32 0.0, %v3657
    %3659 = vdwg.mxu0
    %3660 = vmatprep.subr.mxu0 0.0
    %3661 = vmatpush1.msra.mxu0 0.0
    %3662 = vmatprep.subr.mxu0 0.0
    %3663 = vmatpush1.msra.mxu0 0.0
    %3664 = vmatprep.subr.mxu0 0.0
    %3665 = vmatpush1.msra.mxu0 0.0
    %3666 = vmatprep.subr.mxu0 0.0
    %3667 = vmatpush1.msra.mxu0 0.0
    %3668 = vmatprep.subr.mxu0 0.0
    %3669 = vmatpush1.msra.mxu0 0.0
    %3670 = vmatprep.subr.mxu0 0.0
    %3671 = vmatpush1.msra.mxu0 0.0
    %3672 = vmatprep.subr.mxu0 0.0
    %3673 = vmatpush1.msra.mxu0 0.0
    %3674 = vmatprep.subr.mxu0 0.0
    %3675 = vmatpush1.msra.mxu0 0.0
    %3676 = vmatprep.subr.mxu0 %v3576
    %3677 = vmatpush1.msra.mxu0 %v3575
    %3678 = vmatprep.subr.mxu0 %v3572
    %3679 = vmatpush1.msra.mxu0 %v3571
    %3680 = vmatprep.subr.mxu0 %v3568
    %3681 = vmatpush1.msra.mxu0 %v3567
    %3682 = vmatprep.subr.mxu0 %v3564
    %3683 = vmatpush1.msra.mxu0 %v3563
    %3684 = vmatprep.subr.mxu0 %v3560
    %3685 = vmatpush1.msra.mxu0 %v3559
    %3686 = vmatprep.subr.mxu0 %v3556
    %3687 = vmatpush1.msra.mxu0 %v3555
    %3688 = vmatprep.subr.mxu0 %v3552
    %3689 = vmatpush1.msra.mxu0 %v3551
    %3690 = vmatprep.subr.mxu0 %v3548
    %3691 = vmatpush1.msra.mxu0 %v3547
    %3692 = vmatprep.subr.mxu0 0.0
    %3693 = vmatpush2.msra.mxu0 0.0
    %3694 = vmatprep.subr.mxu0 0.0
    %3695 = vmatpush2.msra.mxu0 0.0
    %3696 = vmatprep.subr.mxu0 0.0
    %3697 = vmatpush2.msra.mxu0 0.0
    %3698 = vmatprep.subr.mxu0 0.0
    %3699 = vmatpush2.msra.mxu0 0.0
    %3700 = vmatprep.subr.mxu0 0.0
    %3701 = vmatpush2.msra.mxu0 0.0
    %3702 = vmatprep.subr.mxu0 0.0
    %3703 = vmatpush2.msra.mxu0 0.0
    %3704 = vmatprep.subr.mxu0 0.0
    %3705 = vmatpush2.msra.mxu0 0.0
    %3706 = vmatprep.subr.mxu0 0.0
    %3707 = vmatpush2.msra.mxu0 0.0
    %3708 = vmatprep.subr.mxu0 0.0
    %3709 = vmatpush2.msra.mxu0 0.0
    %3710 = vmatprep.subr.mxu0 0.0
    %3711 = vmatpush2.msra.mxu0 0.0
    %3712 = vmatprep.subr.mxu0 0.0
    %3713 = vmatpush2.msra.mxu0 0.0
    %3714 = vmatprep.subr.mxu0 0.0
    %3715 = vmatpush2.msra.mxu0 0.0
    %3716 = vmatprep.subr.mxu0 0.0
    %3717 = vmatpush2.msra.mxu0 0.0
    %3718 = vmatprep.subr.mxu0 0.0
    %3719 = vmatpush2.msra.mxu0 0.0
    %3720 = vmatprep.subr.mxu0 0.0
    %3721 = vmatpush2.msra.mxu0 0.0
    %3722 = vmatprep.subr.mxu0 0.0
    %3723 = vmatpush2.msra.mxu0 0.0
    %3724 = vmatprep.mubr.f32.mxu0 0.0
    %3725 = vmatmul.mubr.f32.gmra.mxu0 %v3578
    %v3726 = vpop.f32.mrf.mxu0
    %v3727 = vadd.f32 0.0, %v3726
    %v3728 = vpop.f32.mrf.mxu0
    %v3729 = vadd.f32 0.0, %v3728
    %3730 = vmatprep.mubr.f32.mxu0 0.0
    %3731 = vmatmul.mubr.f32.gmra.mxu0 %v3581
    %v3732 = vpop.f32.mrf.mxu0
    %v3733 = vadd.f32 0.0, %v3732
    %v3734 = vpop.f32.mrf.mxu0
    %v3735 = vadd.f32 0.0, %v3734
    %3736 = vdwg.mxu0
    %v3737 = vadd.f32 %v3138, %v3650
    %v3738 = vadd.f32 %v3140, %v3652
    %v3739 = vadd.f32 %v3215, %v3727
    %v3740 = vadd.f32 %v3217, %v3729
    %v3741 = vadd.f32 %v3144, %v3656
    %v3742 = vadd.f32 %v3146, %v3658
    %v3743 = vadd.f32 %v3221, %v3733
    %v3744 = vadd.f32 %v3223, %v3735
    %3745 = vrot.lane.b32.xlu0 %v368, 64
    %v3746 = vpop.permute.xlu0 %3745
    %3747 = vrot.lane.b32.xlu0 %v1486, 64
    %v3748 = vpop.permute.xlu0 %3747
    %v3749 = vsel %vm2187, %v3746, 0
    %v3751 = vsel %vm2187, %v3748, 0
    %3753 = vmatprep.subr.mxu0 0.0
    %3754 = vmatpush1.xpose.msra.mxu0 0.0
    %3755 = vmatprep.subr.mxu0 0.0
    %3756 = vmatpush1.xpose.msra.mxu0 0.0
    %3757 = vmatprep.subr.mxu0 0.0
    %3758 = vmatpush1.xpose.msra.mxu0 0.0
    %3759 = vmatprep.subr.mxu0 0.0
    %3760 = vmatpush1.xpose.msra.mxu0 0.0
    %3761 = vmatprep.subr.mxu0 0.0
    %3762 = vmatpush1.xpose.msra.mxu0 0.0
    %3763 = vmatprep.subr.mxu0 0.0
    %3764 = vmatpush1.xpose.msra.mxu0 0.0
    %3765 = vmatprep.subr.mxu0 0.0
    %3766 = vmatpush1.xpose.msra.mxu0 0.0
    %3767 = vmatprep.subr.mxu0 0.0
    %3768 = vmatpush1.xpose.msra.mxu0 0.0
    %3769 = vmatprep.subr.mxu0 0.0
    %3770 = vmatpush1.xpose.msra.mxu0 0.0
    %3771 = vmatprep.subr.mxu0 0.0
    %3772 = vmatpush1.xpose.msra.mxu0 0.0
    %3773 = vmatprep.subr.mxu0 0.0
    %3774 = vmatpush1.xpose.msra.mxu0 0.0
    %3775 = vmatprep.subr.mxu0 0.0
    %3776 = vmatpush1.xpose.msra.mxu0 0.0
    %3777 = vmatprep.subr.mxu0 0.0
    %3778 = vmatpush1.xpose.msra.mxu0 0.0
    %3779 = vmatprep.subr.mxu0 0.0
    %3780 = vmatpush1.xpose.msra.mxu0 0.0
    %3781 = vmatprep.subr.mxu0 0.0
    %3782 = vmatpush1.xpose.msra.mxu0 0.0
    %3783 = vmatprep.subr.mxu0 0.0
    %3784 = vmatpush1.xpose.msra.mxu0 %v3751
    %3785 = vmatprep.subr.mxu0 0.0
    %3786 = vmatpush2.xpose.msra.mxu0 0.0
    %3787 = vmatprep.subr.mxu0 0.0
    %3788 = vmatpush2.xpose.msra.mxu0 0.0
    %3789 = vmatprep.subr.mxu0 0.0
    %3790 = vmatpush2.xpose.msra.mxu0 0.0
    %3791 = vmatprep.subr.mxu0 0.0
    %3792 = vmatpush2.xpose.msra.mxu0 0.0
    %3793 = vmatprep.subr.mxu0 0.0
    %3794 = vmatpush2.xpose.msra.mxu0 0.0
    %3795 = vmatprep.subr.mxu0 0.0
    %3796 = vmatpush2.xpose.msra.mxu0 0.0
    %3797 = vmatprep.subr.mxu0 0.0
    %3798 = vmatpush2.xpose.msra.mxu0 0.0
    %3799 = vmatprep.subr.mxu0 0.0
    %3800 = vmatpush2.xpose.msra.mxu0 0.0
    %3801 = vmatprep.subr.mxu0 0.0
    %3802 = vmatpush2.xpose.msra.mxu0 0.0
    %3803 = vmatprep.subr.mxu0 0.0
    %3804 = vmatpush2.xpose.msra.mxu0 0.0
    %3805 = vmatprep.subr.mxu0 0.0
    %3806 = vmatpush2.xpose.msra.mxu0 0.0
    %3807 = vmatprep.subr.mxu0 0.0
    %3808 = vmatpush2.xpose.msra.mxu0 0.0
    %3809 = vmatprep.subr.mxu0 0.0
    %3810 = vmatpush2.xpose.msra.mxu0 0.0
    %3811 = vmatprep.subr.mxu0 0.0
    %3812 = vmatpush2.xpose.msra.mxu0 0.0
    %3813 = vmatprep.subr.mxu0 0.0
    %3814 = vmatpush2.xpose.msra.mxu0 0.0
    %3815 = vmatprep.subr.mxu0 0.0
    %3816 = vmatpush2.xpose.msra.mxu0 0.0
    %3817 = vmatprep.mubr.f32.mxu0 0.0
    %3818 = vmatmul.mubr.f32.gmra.mxu0 %v3749
    %v3819 = vpop.f32.mrf.mxu0
    %v3820 = vadd.f32 0.0, %v3819
    %v3821 = vpop.f32.mrf.mxu0
    %3822 = vdwg.mxu0
    %3823 = vrot.lane.b32.xlu0 %v374, 64
    %v3824 = vpop.permute.xlu0 %3823
    %3825 = vrot.lane.b32.xlu0 %v1492, 64
    %v3826 = vpop.permute.xlu0 %3825
    %v3827 = vsel %vm2187, %v3824, 0
    %v3829 = vsel %vm2187, %v3826, 0
    %3831 = vmatprep.subr.mxu0 0.0
    %3832 = vmatpush1.xpose.msra.mxu0 0.0
    %3833 = vmatprep.subr.mxu0 0.0
    %3834 = vmatpush1.xpose.msra.mxu0 0.0
    %3835 = vmatprep.subr.mxu0 0.0
    %3836 = vmatpush1.xpose.msra.mxu0 0.0
    %3837 = vmatprep.subr.mxu0 0.0
    %3838 = vmatpush1.xpose.msra.mxu0 0.0
    %3839 = vmatprep.subr.mxu0 0.0
    %3840 = vmatpush1.xpose.msra.mxu0 0.0
    %3841 = vmatprep.subr.mxu0 0.0
    %3842 = vmatpush1.xpose.msra.mxu0 0.0
    %3843 = vmatprep.subr.mxu0 0.0
    %3844 = vmatpush1.xpose.msra.mxu0 0.0
    %3845 = vmatprep.subr.mxu0 0.0
    %3846 = vmatpush1.xpose.msra.mxu0 0.0
    %3847 = vmatprep.subr.mxu0 0.0
    %3848 = vmatpush1.xpose.msra.mxu0 0.0
    %3849 = vmatprep.subr.mxu0 0.0
    %3850 = vmatpush1.xpose.msra.mxu0 0.0
    %3851 = vmatprep.subr.mxu0 0.0
    %3852 = vmatpush1.xpose.msra.mxu0 0.0
    %3853 = vmatprep.subr.mxu0 0.0
    %3854 = vmatpush1.xpose.msra.mxu0 0.0
    %3855 = vmatprep.subr.mxu0 0.0
    %3856 = vmatpush1.xpose.msra.mxu0 0.0
    %3857 = vmatprep.subr.mxu0 0.0
    %3858 = vmatpush1.xpose.msra.mxu0 0.0
    %3859 = vmatprep.subr.mxu0 0.0
    %3860 = vmatpush1.xpose.msra.mxu0 0.0
    %3861 = vmatprep.subr.mxu0 0.0
    %3862 = vmatpush1.xpose.msra.mxu0 %v3829
    %3863 = vmatprep.subr.mxu0 0.0
    %3864 = vmatpush2.xpose.msra.mxu0 0.0
    %3865 = vmatprep.subr.mxu0 0.0
    %3866 = vmatpush2.xpose.msra.mxu0 0.0
    %3867 = vmatprep.subr.mxu0 0.0
    %3868 = vmatpush2.xpose.msra.mxu0 0.0
    %3869 = vmatprep.subr.mxu0 0.0
    %3870 = vmatpush2.xpose.msra.mxu0 0.0
    %3871 = vmatprep.subr.mxu0 0.0
    %3872 = vmatpush2.xpose.msra.mxu0 0.0
    %3873 = vmatprep.subr.mxu0 0.0
    %3874 = vmatpush2.xpose.msra.mxu0 0.0
    %3875 = vmatprep.subr.mxu0 0.0
    %3876 = vmatpush2.xpose.msra.mxu0 0.0
    %3877 = vmatprep.subr.mxu0 0.0
    %3878 = vmatpush2.xpose.msra.mxu0 0.0
    %3879 = vmatprep.subr.mxu0 0.0
    %3880 = vmatpush2.xpose.msra.mxu0 0.0
    %3881 = vmatprep.subr.mxu0 0.0
    %3882 = vmatpush2.xpose.msra.mxu0 0.0
    %3883 = vmatprep.subr.mxu0 0.0
    %3884 = vmatpush2.xpose.msra.mxu0 0.0
    %3885 = vmatprep.subr.mxu0 0.0
    %3886 = vmatpush2.xpose.msra.mxu0 0.0
    %3887 = vmatprep.subr.mxu0 0.0
    %3888 = vmatpush2.xpose.msra.mxu0 0.0
    %3889 = vmatprep.subr.mxu0 0.0
    %3890 = vmatpush2.xpose.msra.mxu0 0.0
    %3891 = vmatprep.subr.mxu0 0.0
    %3892 = vmatpush2.xpose.msra.mxu0 0.0
    %3893 = vmatprep.subr.mxu0 0.0
    %3894 = vmatpush2.xpose.msra.mxu0 0.0
    %3895 = vmatprep.mubr.f32.mxu0 0.0
    %3896 = vmatmul.mubr.f32.gmra.mxu0 %v3827
    %v3897 = vpop.f32.mrf.mxu0
    %v3898 = vadd.f32 0.0, %v3897
    %v3899 = vpop.f32.mrf.mxu0
    %3900 = vdwg.mxu0
    %v3901 = vsel %vm2340, %v3820, -inf
    %3902 = vmax.xlane.f32.xlu0 %v3901
    %v3903 = vpop.xlane.xlu0 %3902
    %v3904 = vsel %vm2340, %v3898, -inf
    %3905 = vmax.xlane.f32.xlu0 %v3904
    %v3906 = vpop.xlane.xlu0 %3905
    %v3907 = vsub.f32 %v3820, %v3903
    %v3908 = vsub.f32 %v3898, %v3906
    %v3909 = vmul.f32 %v3907, 1.442695
    %v3910 = vpow.pop %v3909
    %v3911 = vmul.f32 %v3908, 1.442695
    %v3912 = vpow.pop %v3911
    %v3913 = vsel %vm2340, %v3910, 0.0
    %3914 = vadd.xlane.f32.xlu0 %v3913
    %v3915 = vpop.xlane.xlu0 %3914
    %v3916 = vsel %vm2340, %v3912, 0.0
    %3917 = vadd.xlane.f32.xlu0 %v3916
    %v3918 = vpop.xlane.xlu0 %3917
    %v3919 = vrcp.pop %v3915
    %v3920 = vrcp.pop %v3918
    %v3921 = vmul.f32 %v3910, %v3919
    %v3922 = vmul.f32 %v3912, %v3920
    %3924 = vrot.lane.b32.xlu0 %v1948, 64
    %v3925 = vpop.permute.xlu0 %3924
    %v3928 = vsel %vm2340, %v3921, 0
    %3930 = vmatprep.subr.mxu0 0.0
    %3931 = vmatpush1.msra.mxu0 0.0
    %3932 = vmatprep.subr.mxu0 0.0
    %3933 = vmatpush1.msra.mxu0 0.0
    %3934 = vmatprep.subr.mxu0 0.0
    %3935 = vmatpush1.msra.mxu0 0.0
    %3936 = vmatprep.subr.mxu0 0.0
    %3937 = vmatpush1.msra.mxu0 0.0
    %3938 = vmatprep.subr.mxu0 0.0
    %3939 = vmatpush1.msra.mxu0 0.0
    %3940 = vmatprep.subr.mxu0 0.0
    %3941 = vmatpush1.msra.mxu0 0.0
    %3942 = vmatprep.subr.mxu0 0.0
    %3943 = vmatpush1.msra.mxu0 0.0
    %3944 = vmatprep.subr.mxu0 0.0
    %3945 = vmatpush1.msra.mxu0 0.0
    %3946 = vmatprep.subr.mxu0 0.0
    %3947 = vmatpush1.msra.mxu0 0.0
    %3948 = vmatprep.subr.mxu0 0.0
    %3949 = vmatpush1.msra.mxu0 0.0
    %3950 = vmatprep.subr.mxu0 0.0
    %3951 = vmatpush1.msra.mxu0 0.0
    %3952 = vmatprep.subr.mxu0 0.0
    %3953 = vmatpush1.msra.mxu0 0.0
    %3954 = vmatprep.subr.mxu0 0.0
    %3955 = vmatpush1.msra.mxu0 0.0
    %3956 = vmatprep.subr.mxu0 0.0
    %3957 = vmatpush1.msra.mxu0 0.0
    %3958 = vmatprep.subr.mxu0 0.0
    %3959 = vmatpush1.msra.mxu0 0.0
    %3960 = vmatprep.subr.mxu0 0.0
    %3961 = vmatpush1.msra.mxu0 %v3925
    %3962 = vmatprep.subr.mxu0 0.0
    %3963 = vmatpush2.msra.mxu0 0.0
    %3964 = vmatprep.subr.mxu0 0.0
    %3965 = vmatpush2.msra.mxu0 0.0
    %3966 = vmatprep.subr.mxu0 0.0
    %3967 = vmatpush2.msra.mxu0 0.0
    %3968 = vmatprep.subr.mxu0 0.0
    %3969 = vmatpush2.msra.mxu0 0.0
    %3970 = vmatprep.subr.mxu0 0.0
    %3971 = vmatpush2.msra.mxu0 0.0
    %3972 = vmatprep.subr.mxu0 0.0
    %3973 = vmatpush2.msra.mxu0 0.0
    %3974 = vmatprep.subr.mxu0 0.0
    %3975 = vmatpush2.msra.mxu0 0.0
    %3976 = vmatprep.subr.mxu0 0.0
    %3977 = vmatpush2.msra.mxu0 0.0
    %3978 = vmatprep.subr.mxu0 0.0
    %3979 = vmatpush2.msra.mxu0 0.0
    %3980 = vmatprep.subr.mxu0 0.0
    %3981 = vmatpush2.msra.mxu0 0.0
    %3982 = vmatprep.subr.mxu0 0.0
    %3983 = vmatpush2.msra.mxu0 0.0
    %3984 = vmatprep.subr.mxu0 0.0
    %3985 = vmatpush2.msra.mxu0 0.0
    %3986 = vmatprep.subr.mxu0 0.0
    %3987 = vmatpush2.msra.mxu0 0.0
    %3988 = vmatprep.subr.mxu0 0.0
    %3989 = vmatpush2.msra.mxu0 0.0
    %3990 = vmatprep.subr.mxu0 0.0
    %3991 = vmatpush2.msra.mxu0 0.0
    %3992 = vmatprep.subr.mxu0 0.0
    %3993 = vmatpush2.msra.mxu0 0.0
    %3994 = vmatprep.mubr.f32.mxu0 0.0
    %3995 = vmatmul.mubr.f32.gmra.mxu0 %v3928
    %v3996 = vpop.f32.mrf.mxu0
    %v3997 = vadd.f32 0.0, %v3996
    %v3998 = vpop.f32.mrf.mxu0
    %3999 = vdwg.mxu0
    %4001 = vrot.lane.b32.xlu0 %v1954, 64
    %v4002 = vpop.permute.xlu0 %4001
    %v4005 = vsel %vm2340, %v3922, 0
    %4007 = vmatprep.subr.mxu0 0.0
    %4008 = vmatpush1.msra.mxu0 0.0
    %4009 = vmatprep.subr.mxu0 0.0
    %4010 = vmatpush1.msra.mxu0 0.0
    %4011 = vmatprep.subr.mxu0 0.0
    %4012 = vmatpush1.msra.mxu0 0.0
    %4013 = vmatprep.subr.mxu0 0.0
    %4014 = vmatpush1.msra.mxu0 0.0
    %4015 = vmatprep.subr.mxu0 0.0
    %4016 = vmatpush1.msra.mxu0 0.0
    %4017 = vmatprep.subr.mxu0 0.0
    %4018 = vmatpush1.msra.mxu0 0.0
    %4019 = vmatprep.subr.mxu0 0.0
    %4020 = vmatpush1.msra.mxu0 0.0
    %4021 = vmatprep.subr.mxu0 0.0
    %4022 = vmatpush1.msra.mxu0 0.0
    %4023 = vmatprep.subr.mxu0 0.0
    %4024 = vmatpush1.msra.mxu0 0.0
    %4025 = vmatprep.subr.mxu0 0.0
    %4026 = vmatpush1.msra.mxu0 0.0
    %4027 = vmatprep.subr.mxu0 0.0
    %4028 = vmatpush1.msra.mxu0 0.0
    %4029 = vmatprep.subr.mxu0 0.0
    %4030 = vmatpush1.msra.mxu0 0.0
    %4031 = vmatprep.subr.mxu0 0.0
    %4032 = vmatpush1.msra.mxu0 0.0
    %4033 = vmatprep.subr.mxu0 0.0
    %4034 = vmatpush1.msra.mxu0 0.0
    %4035 = vmatprep.subr.mxu0 0.0
    %4036 = vmatpush1.msra.mxu0 0.0
    %4037 = vmatprep.subr.mxu0 0.0
    %4038 = vmatpush1.msra.mxu0 %v4002
    %4039 = vmatprep.subr.mxu0 0.0
    %4040 = vmatpush2.msra.mxu0 0.0
    %4041 = vmatprep.subr.mxu0 0.0
    %4042 = vmatpush2.msra.mxu0 0.0
    %4043 = vmatprep.subr.mxu0 0.0
    %4044 = vmatpush2.msra.mxu0 0.0
    %4045 = vmatprep.subr.mxu0 0.0
    %4046 = vmatpush2.msra.mxu0 0.0
    %4047 = vmatprep.subr.mxu0 0.0
    %4048 = vmatpush2.msra.mxu0 0.0
    %4049 = vmatprep.subr.mxu0 0.0
    %4050 = vmatpush2.msra.mxu0 0.0
    %4051 = vmatprep.subr.mxu0 0.0
    %4052 = vmatpush2.msra.mxu0 0.0
    %4053 = vmatprep.subr.mxu0 0.0
    %4054 = vmatpush2.msra.mxu0 0.0
    %4055 = vmatprep.subr.mxu0 0.0
    %4056 = vmatpush2.msra.mxu0 0.0
    %4057 = vmatprep.subr.mxu0 0.0
    %4058 = vmatpush2.msra.mxu0 0.0
    %4059 = vmatprep.subr.mxu0 0.0
    %4060 = vmatpush2.msra.mxu0 0.0
    %4061 = vmatprep.subr.mxu0 0.0
    %4062 = vmatpush2.msra.mxu0 0.0
    %4063 = vmatprep.subr.mxu0 0.0
    %4064 = vmatpush2.msra.mxu0 0.0
    %4065 = vmatprep.subr.mxu0 0.0
    %4066 = vmatpush2.msra.mxu0 0.0
    %4067 = vmatprep.subr.mxu0 0.0
    %4068 = vmatpush2.msra.mxu0 0.0
    %4069 = vmatprep.subr.mxu0 0.0
    %4070 = vmatpush2.msra.mxu0 0.0
    %4071 = vmatprep.mubr.f32.mxu0 0.0
    %4072 = vmatmul.mubr.f32.gmra.mxu0 %v4005
    %v4073 = vpop.f32.mrf.mxu0
    %v4074 = vadd.f32 0.0, %v4073
    %v4075 = vpop.f32.mrf.mxu0
    %4076 = vdwg.mxu0
    %v4077 = vld [vmem:[#allocation13 + $0x300] sm:$0xff]
    %v4078 = vld [vmem:[#allocation13 + $0x308] sm:$0xff]
    %v4079 = vld [vmem:[#allocation13 + $0x310] sm:$0xff]
    %v4080 = vld [vmem:[#allocation13 + $0x318] sm:$0xff]
    %v4081 = vld [vmem:[#allocation13 + $0x320] sm:$0xff]
    %v4082 = vld [vmem:[#allocation13 + $0x328] sm:$0xff]
    %v4083 = vld [vmem:[#allocation13 + $0x330] sm:$0xff]
    %v4084 = vld [vmem:[#allocation13 + $0x338] sm:$0xff]
    %v4085 = vld [vmem:[#allocation13 + $0x340] sm:$0xff]
    %v4086 = vld [vmem:[#allocation13 + $0x348] sm:$0xff]
    %v4087 = vld [vmem:[#allocation13 + $0x350] sm:$0xff]
    %v4088 = vld [vmem:[#allocation13 + $0x358] sm:$0xff]
    %v4089 = vld [vmem:[#allocation13 + $0x360] sm:$0xff]
    %v4090 = vld [vmem:[#allocation13 + $0x368] sm:$0xff]
    %v4091 = vld [vmem:[#allocation13 + $0x370] sm:$0xff]
    %v4092 = vld [vmem:[#allocation13 + $0x378] sm:$0xff]
    %v4093 = vld [vmem:[#allocation13 + $0x380] sm:$0xff]
    %v4094 = vld [vmem:[#allocation13 + $0x388] sm:$0xff]
    %v4095 = vld [vmem:[#allocation13 + $0x390] sm:$0xff]
    %v4096 = vld [vmem:[#allocation13 + $0x398] sm:$0xff]
    %v4097 = vld [vmem:[#allocation13 + $0x3a0] sm:$0xff]
    %v4098 = vld [vmem:[#allocation13 + $0x3a8] sm:$0xff]
    %v4099 = vld [vmem:[#allocation13 + $0x3b0] sm:$0xff]
    %v4100 = vld [vmem:[#allocation13 + $0x3b8] sm:$0xff]
    %v4101 = vld [vmem:[#allocation13 + $0x3c0] sm:$0xff]
    %v4102 = vld [vmem:[#allocation13 + $0x3c8] sm:$0xff]
    %v4103 = vld [vmem:[#allocation13 + $0x3d0] sm:$0xff]
    %v4104 = vld [vmem:[#allocation13 + $0x3d8] sm:$0xff]
    %v4105 = vld [vmem:[#allocation13 + $0x3e0] sm:$0xff]
    %v4106 = vld [vmem:[#allocation13 + $0x3e8] sm:$0xff]
    %v4107 = vld [vmem:[#allocation13 + $0x3f0] sm:$0xff]
    %v4108 = vld [vmem:[#allocation13 + $0x3f8] sm:$0xff]
    %v4110 = vsel %vm2187, %v3997, 0
    %v4113 = vsel %vm2187, %v4074, 0
    %4115 = vmatprep.subr.mxu0 0.0
    %4116 = vmatpush1.msra.mxu0 0.0
    %4117 = vmatprep.subr.mxu0 0.0
    %4118 = vmatpush1.msra.mxu0 0.0
    %4119 = vmatprep.subr.mxu0 0.0
    %4120 = vmatpush1.msra.mxu0 0.0
    %4121 = vmatprep.subr.mxu0 0.0
    %4122 = vmatpush1.msra.mxu0 0.0
    %4123 = vmatprep.subr.mxu0 0.0
    %4124 = vmatpush1.msra.mxu0 0.0
    %4125 = vmatprep.subr.mxu0 0.0
    %4126 = vmatpush1.msra.mxu0 0.0
    %4127 = vmatprep.subr.mxu0 0.0
    %4128 = vmatpush1.msra.mxu0 0.0
    %4129 = vmatprep.subr.mxu0 0.0
    %4130 = vmatpush1.msra.mxu0 0.0
    %4131 = vmatprep.subr.mxu0 %v4106
    %4132 = vmatpush1.msra.mxu0 %v4105
    %4133 = vmatprep.subr.mxu0 %v4102
    %4134 = vmatpush1.msra.mxu0 %v4101
    %4135 = vmatprep.subr.mxu0 %v4098
    %4136 = vmatpush1.msra.mxu0 %v4097
    %4137 = vmatprep.subr.mxu0 %v4094
    %4138 = vmatpush1.msra.mxu0 %v4093
    %4139 = vmatprep.subr.mxu0 %v4090
    %4140 = vmatpush1.msra.mxu0 %v4089
    %4141 = vmatprep.subr.mxu0 %v4086
    %4142 = vmatpush1.msra.mxu0 %v4085
    %4143 = vmatprep.subr.mxu0 %v4082
    %4144 = vmatpush1.msra.mxu0 %v4081
    %4145 = vmatprep.subr.mxu0 %v4078
    %4146 = vmatpush1.msra.mxu0 %v4077
    %4147 = vmatprep.subr.mxu0 0.0
    %4148 = vmatpush2.msra.mxu0 0.0
    %4149 = vmatprep.subr.mxu0 0.0
    %4150 = vmatpush2.msra.mxu0 0.0
    %4151 = vmatprep.subr.mxu0 0.0
    %4152 = vmatpush2.msra.mxu0 0.0
    %4153 = vmatprep.subr.mxu0 0.0
    %4154 = vmatpush2.msra.mxu0 0.0
    %4155 = vmatprep.subr.mxu0 0.0
    %4156 = vmatpush2.msra.mxu0 0.0
    %4157 = vmatprep.subr.mxu0 0.0
    %4158 = vmatpush2.msra.mxu0 0.0
    %4159 = vmatprep.subr.mxu0 0.0
    %4160 = vmatpush2.msra.mxu0 0.0
    %4161 = vmatprep.subr.mxu0 0.0
    %4162 = vmatpush2.msra.mxu0 0.0
    %4163 = vmatprep.subr.mxu0 0.0
    %4164 = vmatpush2.msra.mxu0 0.0
    %4165 = vmatprep.subr.mxu0 0.0
    %4166 = vmatpush2.msra.mxu0 0.0
    %4167 = vmatprep.subr.mxu0 0.0
    %4168 = vmatpush2.msra.mxu0 0.0
    %4169 = vmatprep.subr.mxu0 0.0
    %4170 = vmatpush2.msra.mxu0 0.0
    %4171 = vmatprep.subr.mxu0 0.0
    %4172 = vmatpush2.msra.mxu0 0.0
    %4173 = vmatprep.subr.mxu0 0.0
    %4174 = vmatpush2.msra.mxu0 0.0
    %4175 = vmatprep.subr.mxu0 0.0
    %4176 = vmatpush2.msra.mxu0 0.0
    %4177 = vmatprep.subr.mxu0 0.0
    %4178 = vmatpush2.msra.mxu0 0.0
    %4179 = vmatprep.mubr.f32.mxu0 0.0
    %4180 = vmatmul.mubr.f32.gmra.mxu0 %v4110
    %v4181 = vpop.f32.mrf.mxu0
    %v4182 = vadd.f32 0.0, %v4181
    %v4183 = vpop.f32.mrf.mxu0
    %v4184 = vadd.f32 0.0, %v4183
    %4185 = vmatprep.mubr.f32.mxu0 0.0
    %4186 = vmatmul.mubr.f32.gmra.mxu0 %v4113
    %v4187 = vpop.f32.mrf.mxu0
    %v4188 = vadd.f32 0.0, %v4187
    %v4189 = vpop.f32.mrf.mxu0
    %v4190 = vadd.f32 0.0, %v4189
    %4191 = vdwg.mxu0
    %4192 = vmatprep.subr.mxu0 0.0
    %4193 = vmatpush1.msra.mxu0 0.0
    %4194 = vmatprep.subr.mxu0 0.0
    %4195 = vmatpush1.msra.mxu0 0.0
    %4196 = vmatprep.subr.mxu0 0.0
    %4197 = vmatpush1.msra.mxu0 0.0
    %4198 = vmatprep.subr.mxu0 0.0
    %4199 = vmatpush1.msra.mxu0 0.0
    %4200 = vmatprep.subr.mxu0 0.0
    %4201 = vmatpush1.msra.mxu0 0.0
    %4202 = vmatprep.subr.mxu0 0.0
    %4203 = vmatpush1.msra.mxu0 0.0
    %4204 = vmatprep.subr.mxu0 0.0
    %4205 = vmatpush1.msra.mxu0 0.0
    %4206 = vmatprep.subr.mxu0 0.0
    %4207 = vmatpush1.msra.mxu0 0.0
    %4208 = vmatprep.subr.mxu0 %v4108
    %4209 = vmatpush1.msra.mxu0 %v4107
    %4210 = vmatprep.subr.mxu0 %v4104
    %4211 = vmatpush1.msra.mxu0 %v4103
    %4212 = vmatprep.subr.mxu0 %v4100
    %4213 = vmatpush1.msra.mxu0 %v4099
    %4214 = vmatprep.subr.mxu0 %v4096
    %4215 = vmatpush1.msra.mxu0 %v4095
    %4216 = vmatprep.subr.mxu0 %v4092
    %4217 = vmatpush1.msra.mxu0 %v4091
    %4218 = vmatprep.subr.mxu0 %v4088
    %4219 = vmatpush1.msra.mxu0 %v4087
    %4220 = vmatprep.subr.mxu0 %v4084
    %4221 = vmatpush1.msra.mxu0 %v4083
    %4222 = vmatprep.subr.mxu0 %v4080
    %4223 = vmatpush1.msra.mxu0 %v4079
    %4224 = vmatprep.subr.mxu0 0.0
    %4225 = vmatpush2.msra.mxu0 0.0
    %4226 = vmatprep.subr.mxu0 0.0
    %4227 = vmatpush2.msra.mxu0 0.0
    %4228 = vmatprep.subr.mxu0 0.0
    %4229 = vmatpush2.msra.mxu0 0.0
    %4230 = vmatprep.subr.mxu0 0.0
    %4231 = vmatpush2.msra.mxu0 0.0
    %4232 = vmatprep.subr.mxu0 0.0
    %4233 = vmatpush2.msra.mxu0 0.0
    %4234 = vmatprep.subr.mxu0 0.0
    %4235 = vmatpush2.msra.mxu0 0.0
    %4236 = vmatprep.subr.mxu0 0.0
    %4237 = vmatpush2.msra.mxu0 0.0
    %4238 = vmatprep.subr.mxu0 0.0
    %4239 = vmatpush2.msra.mxu0 0.0
    %4240 = vmatprep.subr.mxu0 0.0
    %4241 = vmatpush2.msra.mxu0 0.0
    %4242 = vmatprep.subr.mxu0 0.0
    %4243 = vmatpush2.msra.mxu0 0.0
    %4244 = vmatprep.subr.mxu0 0.0
    %4245 = vmatpush2.msra.mxu0 0.0
    %4246 = vmatprep.subr.mxu0 0.0
    %4247 = vmatpush2.msra.mxu0 0.0
    %4248 = vmatprep.subr.mxu0 0.0
    %4249 = vmatpush2.msra.mxu0 0.0
    %4250 = vmatprep.subr.mxu0 0.0
    %4251 = vmatpush2.msra.mxu0 0.0
    %4252 = vmatprep.subr.mxu0 0.0
    %4253 = vmatpush2.msra.mxu0 0.0
    %4254 = vmatprep.subr.mxu0 0.0
    %4255 = vmatpush2.msra.mxu0 0.0
    %4256 = vmatprep.mubr.f32.mxu0 0.0
    %4257 = vmatmul.mubr.f32.gmra.mxu0 %v4110
    %v4258 = vpop.f32.mrf.mxu0
    %v4259 = vadd.f32 0.0, %v4258
    %v4260 = vpop.f32.mrf.mxu0
    %v4261 = vadd.f32 0.0, %v4260
    %4262 = vmatprep.mubr.f32.mxu0 0.0
    %4263 = vmatmul.mubr.f32.gmra.mxu0 %v4113
    %v4264 = vpop.f32.mrf.mxu0
    %v4265 = vadd.f32 0.0, %v4264
    %v4266 = vpop.f32.mrf.mxu0
    %v4267 = vadd.f32 0.0, %v4266
    %4268 = vdwg.mxu0
    %v4269 = vadd.f32 %v3737, %v4182
    %v4270 = vadd.f32 %v3738, %v4184
    %v4271 = vadd.f32 %v3739, %v4259
    %v4272 = vadd.f32 %v3740, %v4261
    %v4273 = vadd.f32 %v3741, %v4188
    %v4274 = vadd.f32 %v3742, %v4190
    %v4275 = vadd.f32 %v3743, %v4265
    %v4276 = vadd.f32 %v3744, %v4267
    %v4278 = vsel %vm2187, %v443, 0
    %v4281 = vsel %vm2187, %v1715, 0
    %4283 = vmatprep.subr.mxu0 0.0
    %4284 = vmatpush1.xpose.msra.mxu0 0.0
    %4285 = vmatprep.subr.mxu0 0.0
    %4286 = vmatpush1.xpose.msra.mxu0 0.0
    %4287 = vmatprep.subr.mxu0 0.0
    %4288 = vmatpush1.xpose.msra.mxu0 0.0
    %4289 = vmatprep.subr.mxu0 0.0
    %4290 = vmatpush1.xpose.msra.mxu0 0.0
    %4291 = vmatprep.subr.mxu0 0.0
    %4292 = vmatpush1.xpose.msra.mxu0 0.0
    %4293 = vmatprep.subr.mxu0 0.0
    %4294 = vmatpush1.xpose.msra.mxu0 0.0
    %4295 = vmatprep.subr.mxu0 0.0
    %4296 = vmatpush1.xpose.msra.mxu0 0.0
    %4297 = vmatprep.subr.mxu0 0.0
    %4298 = vmatpush1.xpose.msra.mxu0 0.0
    %4299 = vmatprep.subr.mxu0 0.0
    %4300 = vmatpush1.xpose.msra.mxu0 0.0
    %4301 = vmatprep.subr.mxu0 0.0
    %4302 = vmatpush1.xpose.msra.mxu0 0.0
    %4303 = vmatprep.subr.mxu0 0.0
    %4304 = vmatpush1.xpose.msra.mxu0 0.0
    %4305 = vmatprep.subr.mxu0 0.0
    %4306 = vmatpush1.xpose.msra.mxu0 0.0
    %4307 = vmatprep.subr.mxu0 0.0
    %4308 = vmatpush1.xpose.msra.mxu0 0.0
    %4309 = vmatprep.subr.mxu0 0.0
    %4310 = vmatpush1.xpose.msra.mxu0 0.0
    %4311 = vmatprep.subr.mxu0 0.0
    %4312 = vmatpush1.xpose.msra.mxu0 0.0
    %4313 = vmatprep.subr.mxu0 0.0
    %4314 = vmatpush1.xpose.msra.mxu0 %v4281
    %4315 = vmatprep.subr.mxu0 0.0
    %4316 = vmatpush2.xpose.msra.mxu0 0.0
    %4317 = vmatprep.subr.mxu0 0.0
    %4318 = vmatpush2.xpose.msra.mxu0 0.0
    %4319 = vmatprep.subr.mxu0 0.0
    %4320 = vmatpush2.xpose.msra.mxu0 0.0
    %4321 = vmatprep.subr.mxu0 0.0
    %4322 = vmatpush2.xpose.msra.mxu0 0.0
    %4323 = vmatprep.subr.mxu0 0.0
    %4324 = vmatpush2.xpose.msra.mxu0 0.0
    %4325 = vmatprep.subr.mxu0 0.0
    %4326 = vmatpush2.xpose.msra.mxu0 0.0
    %4327 = vmatprep.subr.mxu0 0.0
    %4328 = vmatpush2.xpose.msra.mxu0 0.0
    %4329 = vmatprep.subr.mxu0 0.0
    %4330 = vmatpush2.xpose.msra.mxu0 0.0
    %4331 = vmatprep.subr.mxu0 0.0
    %4332 = vmatpush2.xpose.msra.mxu0 0.0
    %4333 = vmatprep.subr.mxu0 0.0
    %4334 = vmatpush2.xpose.msra.mxu0 0.0
    %4335 = vmatprep.subr.mxu0 0.0
    %4336 = vmatpush2.xpose.msra.mxu0 0.0
    %4337 = vmatprep.subr.mxu0 0.0
    %4338 = vmatpush2.xpose.msra.mxu0 0.0
    %4339 = vmatprep.subr.mxu0 0.0
    %4340 = vmatpush2.xpose.msra.mxu0 0.0
    %4341 = vmatprep.subr.mxu0 0.0
    %4342 = vmatpush2.xpose.msra.mxu0 0.0
    %4343 = vmatprep.subr.mxu0 0.0
    %4344 = vmatpush2.xpose.msra.mxu0 0.0
    %4345 = vmatprep.subr.mxu0 0.0
    %4346 = vmatpush2.xpose.msra.mxu0 0.0
    %4347 = vmatprep.mubr.f32.mxu0 0.0
    %4348 = vmatmul.mubr.f32.gmra.mxu0 %v4278
    %v4349 = vpop.f32.mrf.mxu0
    %v4350 = vadd.f32 0.0, %v4349
    %v4351 = vpop.f32.mrf.mxu0
    %4352 = vdwg.mxu0
    %v4354 = vsel %vm2187, %v449, 0
    %v4357 = vsel %vm2187, %v1721, 0
    %4359 = vmatprep.subr.mxu0 0.0
    %4360 = vmatpush1.xpose.msra.mxu0 0.0
    %4361 = vmatprep.subr.mxu0 0.0
    %4362 = vmatpush1.xpose.msra.mxu0 0.0
    %4363 = vmatprep.subr.mxu0 0.0
    %4364 = vmatpush1.xpose.msra.mxu0 0.0
    %4365 = vmatprep.subr.mxu0 0.0
    %4366 = vmatpush1.xpose.msra.mxu0 0.0
    %4367 = vmatprep.subr.mxu0 0.0
    %4368 = vmatpush1.xpose.msra.mxu0 0.0
    %4369 = vmatprep.subr.mxu0 0.0
    %4370 = vmatpush1.xpose.msra.mxu0 0.0
    %4371 = vmatprep.subr.mxu0 0.0
    %4372 = vmatpush1.xpose.msra.mxu0 0.0
    %4373 = vmatprep.subr.mxu0 0.0
    %4374 = vmatpush1.xpose.msra.mxu0 0.0
    %4375 = vmatprep.subr.mxu0 0.0
    %4376 = vmatpush1.xpose.msra.mxu0 0.0
    %4377 = vmatprep.subr.mxu0 0.0
    %4378 = vmatpush1.xpose.msra.mxu0 0.0
    %4379 = vmatprep.subr.mxu0 0.0
    %4380 = vmatpush1.xpose.msra.mxu0 0.0
    %4381 = vmatprep.subr.mxu0 0.0
    %4382 = vmatpush1.xpose.msra.mxu0 0.0
    %4383 = vmatprep.subr.mxu0 0.0
    %4384 = vmatpush1.xpose.msra.mxu0 0.0
    %4385 = vmatprep.subr.mxu0 0.0
    %4386 = vmatpush1.xpose.msra.mxu0 0.0
    %4387 = vmatprep.subr.mxu0 0.0
    %4388 = vmatpush1.xpose.msra.mxu0 0.0
    %4389 = vmatprep.subr.mxu0 0.0
    %4390 = vmatpush1.xpose.msra.mxu0 %v4357
    %4391 = vmatprep.subr.mxu0 0.0
    %4392 = vmatpush2.xpose.msra.mxu0 0.0
    %4393 = vmatprep.subr.mxu0 0.0
    %4394 = vmatpush2.xpose.msra.mxu0 0.0
    %4395 = vmatprep.subr.mxu0 0.0
    %4396 = vmatpush2.xpose.msra.mxu0 0.0
    %4397 = vmatprep.subr.mxu0 0.0
    %4398 = vmatpush2.xpose.msra.mxu0 0.0
    %4399 = vmatprep.subr.mxu0 0.0
    %4400 = vmatpush2.xpose.msra.mxu0 0.0
    %4401 = vmatprep.subr.mxu0 0.0
    %4402 = vmatpush2.xpose.msra.mxu0 0.0
    %4403 = vmatprep.subr.mxu0 0.0
    %4404 = vmatpush2.xpose.msra.mxu0 0.0
    %4405 = vmatprep.subr.mxu0 0.0
    %4406 = vmatpush2.xpose.msra.mxu0 0.0
    %4407 = vmatprep.subr.mxu0 0.0
    %4408 = vmatpush2.xpose.msra.mxu0 0.0
    %4409 = vmatprep.subr.mxu0 0.0
    %4410 = vmatpush2.xpose.msra.mxu0 0.0
    %4411 = vmatprep.subr.mxu0 0.0
    %4412 = vmatpush2.xpose.msra.mxu0 0.0
    %4413 = vmatprep.subr.mxu0 0.0
    %4414 = vmatpush2.xpose.msra.mxu0 0.0
    %4415 = vmatprep.subr.mxu0 0.0
    %4416 = vmatpush2.xpose.msra.mxu0 0.0
    %4417 = vmatprep.subr.mxu0 0.0
    %4418 = vmatpush2.xpose.msra.mxu0 0.0
    %4419 = vmatprep.subr.mxu0 0.0
    %4420 = vmatpush2.xpose.msra.mxu0 0.0
    %4421 = vmatprep.subr.mxu0 0.0
    %4422 = vmatpush2.xpose.msra.mxu0 0.0
    %4423 = vmatprep.mubr.f32.mxu0 0.0
    %4424 = vmatmul.mubr.f32.gmra.mxu0 %v4354
    %v4425 = vpop.f32.mrf.mxu0
    %v4426 = vadd.f32 0.0, %v4425
    %v4427 = vpop.f32.mrf.mxu0
    %4428 = vdwg.mxu0
    %v4429 = vsel %vm2340, %v4350, -inf
    %4430 = vmax.xlane.f32.xlu0 %v4429
    %v4431 = vpop.xlane.xlu0 %4430
    %v4432 = vsel %vm2340, %v4426, -inf
    %4433 = vmax.xlane.f32.xlu0 %v4432
    %v4434 = vpop.xlane.xlu0 %4433
    %v4435 = vsub.f32 %v4350, %v4431
    %v4436 = vsub.f32 %v4426, %v4434
    %v4437 = vmul.f32 %v4435, 1.442695
    %v4438 = vpow.pop %v4437
    %v4439 = vmul.f32 %v4436, 1.442695
    %v4440 = vpow.pop %v4439
    %v4441 = vsel %vm2340, %v4438, 0.0
    %4442 = vadd.xlane.f32.xlu0 %v4441
    %v4443 = vpop.xlane.xlu0 %4442
    %v4444 = vsel %vm2340, %v4440, 0.0
    %4445 = vadd.xlane.f32.xlu0 %v4444
    %v4446 = vpop.xlane.xlu0 %4445
    %v4447 = vrcp.pop %v4443
    %v4448 = vrcp.pop %v4446
    %v4449 = vmul.f32 %v4438, %v4447
    %v4450 = vmul.f32 %v4440, %v4448
    %v4452 = vsel %vm2340, %v4449, 0
    %4454 = vmatprep.subr.mxu0 0.0
    %4455 = vmatpush1.msra.mxu0 0.0
    %4456 = vmatprep.subr.mxu0 0.0
    %4457 = vmatpush1.msra.mxu0 0.0
    %4458 = vmatprep.subr.mxu0 0.0
    %4459 = vmatpush1.msra.mxu0 0.0
    %4460 = vmatprep.subr.mxu0 0.0
    %4461 = vmatpush1.msra.mxu0 0.0
    %4462 = vmatprep.subr.mxu0 0.0
    %4463 = vmatpush1.msra.mxu0 0.0
    %4464 = vmatprep.subr.mxu0 0.0
    %4465 = vmatpush1.msra.mxu0 0.0
    %4466 = vmatprep.subr.mxu0 0.0
    %4467 = vmatpush1.msra.mxu0 0.0
    %4468 = vmatprep.subr.mxu0 0.0
    %4469 = vmatpush1.msra.mxu0 0.0
    %4470 = vmatprep.subr.mxu0 0.0
    %4471 = vmatpush1.msra.mxu0 0.0
    %4472 = vmatprep.subr.mxu0 0.0
    %4473 = vmatpush1.msra.mxu0 0.0
    %4474 = vmatprep.subr.mxu0 0.0
    %4475 = vmatpush1.msra.mxu0 0.0
    %4476 = vmatprep.subr.mxu0 0.0
    %4477 = vmatpush1.msra.mxu0 0.0
    %4478 = vmatprep.subr.mxu0 0.0
    %4479 = vmatpush1.msra.mxu0 0.0
    %4480 = vmatprep.subr.mxu0 0.0
    %4481 = vmatpush1.msra.mxu0 0.0
    %4482 = vmatprep.subr.mxu0 0.0
    %4483 = vmatpush1.msra.mxu0 0.0
    %4484 = vmatprep.subr.mxu0 0.0
    %4485 = vmatpush1.msra.mxu0 %v2177
    %4486 = vmatprep.subr.mxu0 0.0
    %4487 = vmatpush2.msra.mxu0 0.0
    %4488 = vmatprep.subr.mxu0 0.0
    %4489 = vmatpush2.msra.mxu0 0.0
    %4490 = vmatprep.subr.mxu0 0.0
    %4491 = vmatpush2.msra.mxu0 0.0
    %4492 = vmatprep.subr.mxu0 0.0
    %4493 = vmatpush2.msra.mxu0 0.0
    %4494 = vmatprep.subr.mxu0 0.0
    %4495 = vmatpush2.msra.mxu0 0.0
    %4496 = vmatprep.subr.mxu0 0.0
    %4497 = vmatpush2.msra.mxu0 0.0
    %4498 = vmatprep.subr.mxu0 0.0
    %4499 = vmatpush2.msra.mxu0 0.0
    %4500 = vmatprep.subr.mxu0 0.0
    %4501 = vmatpush2.msra.mxu0 0.0
    %4502 = vmatprep.subr.mxu0 0.0
    %4503 = vmatpush2.msra.mxu0 0.0
    %4504 = vmatprep.subr.mxu0 0.0
    %4505 = vmatpush2.msra.mxu0 0.0
    %4506 = vmatprep.subr.mxu0 0.0
    %4507 = vmatpush2.msra.mxu0 0.0
    %4508 = vmatprep.subr.mxu0 0.0
    %4509 = vmatpush2.msra.mxu0 0.0
    %4510 = vmatprep.subr.mxu0 0.0
    %4511 = vmatpush2.msra.mxu0 0.0
    %4512 = vmatprep.subr.mxu0 0.0
    %4513 = vmatpush2.msra.mxu0 0.0
    %4514 = vmatprep.subr.mxu0 0.0
    %4515 = vmatpush2.msra.mxu0 0.0
    %4516 = vmatprep.subr.mxu0 0.0
    %4517 = vmatpush2.msra.mxu0 0.0
    %4518 = vmatprep.mubr.f32.mxu0 0.0
    %4519 = vmatmul.mubr.f32.gmra.mxu0 %v4452
    %v4520 = vpop.f32.mrf.mxu0
    %v4521 = vadd.f32 0.0, %v4520
    %v4522 = vpop.f32.mrf.mxu0
    %4523 = vdwg.mxu0
    %v4525 = vsel %vm2340, %v4450, 0
    %4527 = vmatprep.subr.mxu0 0.0
    %4528 = vmatpush1.msra.mxu0 0.0
    %4529 = vmatprep.subr.mxu0 0.0
    %4530 = vmatpush1.msra.mxu0 0.0
    %4531 = vmatprep.subr.mxu0 0.0
    %4532 = vmatpush1.msra.mxu0 0.0
    %4533 = vmatprep.subr.mxu0 0.0
    %4534 = vmatpush1.msra.mxu0 0.0
    %4535 = vmatprep.subr.mxu0 0.0
    %4536 = vmatpush1.msra.mxu0 0.0
    %4537 = vmatprep.subr.mxu0 0.0
    %4538 = vmatpush1.msra.mxu0 0.0
    %4539 = vmatprep.subr.mxu0 0.0
    %4540 = vmatpush1.msra.mxu0 0.0
    %4541 = vmatprep.subr.mxu0 0.0
    %4542 = vmatpush1.msra.mxu0 0.0
    %4543 = vmatprep.subr.mxu0 0.0
    %4544 = vmatpush1.msra.mxu0 0.0
    %4545 = vmatprep.subr.mxu0 0.0
    %4546 = vmatpush1.msra.mxu0 0.0
    %4547 = vmatprep.subr.mxu0 0.0
    %4548 = vmatpush1.msra.mxu0 0.0
    %4549 = vmatprep.subr.mxu0 0.0
    %4550 = vmatpush1.msra.mxu0 0.0
    %4551 = vmatprep.subr.mxu0 0.0
    %4552 = vmatpush1.msra.mxu0 0.0
    %4553 = vmatprep.subr.mxu0 0.0
    %4554 = vmatpush1.msra.mxu0 0.0
    %4555 = vmatprep.subr.mxu0 0.0
    %4556 = vmatpush1.msra.mxu0 0.0
    %4557 = vmatprep.subr.mxu0 0.0
    %4558 = vmatpush1.msra.mxu0 %v2183
    %4559 = vmatprep.subr.mxu0 0.0
    %4560 = vmatpush2.msra.mxu0 0.0
    %4561 = vmatprep.subr.mxu0 0.0
    %4562 = vmatpush2.msra.mxu0 0.0
    %4563 = vmatprep.subr.mxu0 0.0
    %4564 = vmatpush2.msra.mxu0 0.0
    %4565 = vmatprep.subr.mxu0 0.0
    %4566 = vmatpush2.msra.mxu0 0.0
    %4567 = vmatprep.subr.mxu0 0.0
    %4568 = vmatpush2.msra.mxu0 0.0
    %4569 = vmatprep.subr.mxu0 0.0
    %4570 = vmatpush2.msra.mxu0 0.0
    %4571 = vmatprep.subr.mxu0 0.0
    %4572 = vmatpush2.msra.mxu0 0.0
    %4573 = vmatprep.subr.mxu0 0.0
    %4574 = vmatpush2.msra.mxu0 0.0
    %4575 = vmatprep.subr.mxu0 0.0
    %4576 = vmatpush2.msra.mxu0 0.0
    %4577 = vmatprep.subr.mxu0 0.0
    %4578 = vmatpush2.msra.mxu0 0.0
    %4579 = vmatprep.subr.mxu0 0.0
    %4580 = vmatpush2.msra.mxu0 0.0
    %4581 = vmatprep.subr.mxu0 0.0
    %4582 = vmatpush2.msra.mxu0 0.0
    %4583 = vmatprep.subr.mxu0 0.0
    %4584 = vmatpush2.msra.mxu0 0.0
    %4585 = vmatprep.subr.mxu0 0.0
    %4586 = vmatpush2.msra.mxu0 0.0
    %4587 = vmatprep.subr.mxu0 0.0
    %4588 = vmatpush2.msra.mxu0 0.0
    %4589 = vmatprep.subr.mxu0 0.0
    %4590 = vmatpush2.msra.mxu0 0.0
    %4591 = vmatprep.mubr.f32.mxu0 0.0
    %4592 = vmatmul.mubr.f32.gmra.mxu0 %v4525
    %v4593 = vpop.f32.mrf.mxu0
    %v4594 = vadd.f32 0.0, %v4593
    %v4595 = vpop.f32.mrf.mxu0
    %4596 = vdwg.mxu0
    %v4597 = vld [vmem:[#allocation13 + $0x400] sm:$0xff]
    %v4598 = vld [vmem:[#allocation13 + $0x408] sm:$0xff]
    %v4599 = vld [vmem:[#allocation13 + $0x410] sm:$0xff]
    %v4600 = vld [vmem:[#allocation13 + $0x418] sm:$0xff]
    %v4601 = vld [vmem:[#allocation13 + $0x420] sm:$0xff]
    %v4602 = vld [vmem:[#allocation13 + $0x428] sm:$0xff]
    %v4603 = vld [vmem:[#allocation13 + $0x430] sm:$0xff]
    %v4604 = vld [vmem:[#allocation13 + $0x438] sm:$0xff]
    %v4605 = vld [vmem:[#allocation13 + $0x440] sm:$0xff]
    %v4606 = vld [vmem:[#allocation13 + $0x448] sm:$0xff]
    %v4607 = vld [vmem:[#allocation13 + $0x450] sm:$0xff]
    %v4608 = vld [vmem:[#allocation13 + $0x458] sm:$0xff]
    %v4609 = vld [vmem:[#allocation13 + $0x460] sm:$0xff]
    %v4610 = vld [vmem:[#allocation13 + $0x468] sm:$0xff]
    %v4611 = vld [vmem:[#allocation13 + $0x470] sm:$0xff]
    %v4612 = vld [vmem:[#allocation13 + $0x478] sm:$0xff]
    %v4613 = vld [vmem:[#allocation13 + $0x480] sm:$0xff]
    %v4614 = vld [vmem:[#allocation13 + $0x488] sm:$0xff]
    %v4615 = vld [vmem:[#allocation13 + $0x490] sm:$0xff]
    %v4616 = vld [vmem:[#allocation13 + $0x498] sm:$0xff]
    %v4617 = vld [vmem:[#allocation13 + $0x4a0] sm:$0xff]
    %v4618 = vld [vmem:[#allocation13 + $0x4a8] sm:$0xff]
    %v4619 = vld [vmem:[#allocation13 + $0x4b0] sm:$0xff]
    %v4620 = vld [vmem:[#allocation13 + $0x4b8] sm:$0xff]
    %v4621 = vld [vmem:[#allocation13 + $0x4c0] sm:$0xff]
    %v4622 = vld [vmem:[#allocation13 + $0x4c8] sm:$0xff]
    %v4623 = vld [vmem:[#allocation13 + $0x4d0] sm:$0xff]
    %v4624 = vld [vmem:[#allocation13 + $0x4d8] sm:$0xff]
    %v4625 = vld [vmem:[#allocation13 + $0x4e0] sm:$0xff]
    %v4626 = vld [vmem:[#allocation13 + $0x4e8] sm:$0xff]
    %v4627 = vld [vmem:[#allocation13 + $0x4f0] sm:$0xff]
    %v4628 = vld [vmem:[#allocation13 + $0x4f8] sm:$0xff]
    %v4630 = vsel %vm2187, %v4521, 0
    %v4633 = vsel %vm2187, %v4594, 0
    %4635 = vmatprep.subr.mxu0 0.0
    %4636 = vmatpush1.msra.mxu0 0.0
    %4637 = vmatprep.subr.mxu0 0.0
    %4638 = vmatpush1.msra.mxu0 0.0
    %4639 = vmatprep.subr.mxu0 0.0
    %4640 = vmatpush1.msra.mxu0 0.0
    %4641 = vmatprep.subr.mxu0 0.0
    %4642 = vmatpush1.msra.mxu0 0.0
    %4643 = vmatprep.subr.mxu0 0.0
    %4644 = vmatpush1.msra.mxu0 0.0
    %4645 = vmatprep.subr.mxu0 0.0
    %4646 = vmatpush1.msra.mxu0 0.0
    %4647 = vmatprep.subr.mxu0 0.0
    %4648 = vmatpush1.msra.mxu0 0.0
    %4649 = vmatprep.subr.mxu0 0.0
    %4650 = vmatpush1.msra.mxu0 0.0
    %4651 = vmatprep.subr.mxu0 %v4626
    %4652 = vmatpush1.msra.mxu0 %v4625
    %4653 = vmatprep.subr.mxu0 %v4622
    %4654 = vmatpush1.msra.mxu0 %v4621
    %4655 = vmatprep.subr.mxu0 %v4618
    %4656 = vmatpush1.msra.mxu0 %v4617
    %4657 = vmatprep.subr.mxu0 %v4614
    %4658 = vmatpush1.msra.mxu0 %v4613
    %4659 = vmatprep.subr.mxu0 %v4610
    %4660 = vmatpush1.msra.mxu0 %v4609
    %4661 = vmatprep.subr.mxu0 %v4606
    %4662 = vmatpush1.msra.mxu0 %v4605
    %4663 = vmatprep.subr.mxu0 %v4602
    %4664 = vmatpush1.msra.mxu0 %v4601
    %4665 = vmatprep.subr.mxu0 %v4598
    %4666 = vmatpush1.msra.mxu0 %v4597
    %4667 = vmatprep.subr.mxu0 0.0
    %4668 = vmatpush2.msra.mxu0 0.0
    %4669 = vmatprep.subr.mxu0 0.0
    %4670 = vmatpush2.msra.mxu0 0.0
    %4671 = vmatprep.subr.mxu0 0.0
    %4672 = vmatpush2.msra.mxu0 0.0
    %4673 = vmatprep.subr.mxu0 0.0
    %4674 = vmatpush2.msra.mxu0 0.0
    %4675 = vmatprep.subr.mxu0 0.0
    %4676 = vmatpush2.msra.mxu0 0.0
    %4677 = vmatprep.subr.mxu0 0.0
    %4678 = vmatpush2.msra.mxu0 0.0
    %4679 = vmatprep.subr.mxu0 0.0
    %4680 = vmatpush2.msra.mxu0 0.0
    %4681 = vmatprep.subr.mxu0 0.0
    %4682 = vmatpush2.msra.mxu0 0.0
    %4683 = vmatprep.subr.mxu0 0.0
    %4684 = vmatpush2.msra.mxu0 0.0
    %4685 = vmatprep.subr.mxu0 0.0
    %4686 = vmatpush2.msra.mxu0 0.0
    %4687 = vmatprep.subr.mxu0 0.0
    %4688 = vmatpush2.msra.mxu0 0.0
    %4689 = vmatprep.subr.mxu0 0.0
    %4690 = vmatpush2.msra.mxu0 0.0
    %4691 = vmatprep.subr.mxu0 0.0
    %4692 = vmatpush2.msra.mxu0 0.0
    %4693 = vmatprep.subr.mxu0 0.0
    %4694 = vmatpush2.msra.mxu0 0.0
    %4695 = vmatprep.subr.mxu0 0.0
    %4696 = vmatpush2.msra.mxu0 0.0
    %4697 = vmatprep.subr.mxu0 0.0
    %4698 = vmatpush2.msra.mxu0 0.0
    %4699 = vmatprep.mubr.f32.mxu0 0.0
    %4700 = vmatmul.mubr.f32.gmra.mxu0 %v4630
    %v4701 = vpop.f32.mrf.mxu0
    %v4702 = vadd.f32 0.0, %v4701
    %v4703 = vpop.f32.mrf.mxu0
    %v4704 = vadd.f32 0.0, %v4703
    %4705 = vmatprep.mubr.f32.mxu0 0.0
    %4706 = vmatmul.mubr.f32.gmra.mxu0 %v4633
    %v4707 = vpop.f32.mrf.mxu0
    %v4708 = vadd.f32 0.0, %v4707
    %v4709 = vpop.f32.mrf.mxu0
    %v4710 = vadd.f32 0.0, %v4709
    %4711 = vdwg.mxu0
    %4712 = vmatprep.subr.mxu0 0.0
    %4713 = vmatpush1.msra.mxu0 0.0
    %4714 = vmatprep.subr.mxu0 0.0
    %4715 = vmatpush1.msra.mxu0 0.0
    %4716 = vmatprep.subr.mxu0 0.0
    %4717 = vmatpush1.msra.mxu0 0.0
    %4718 = vmatprep.subr.mxu0 0.0
    %4719 = vmatpush1.msra.mxu0 0.0
    %4720 = vmatprep.subr.mxu0 0.0
    %4721 = vmatpush1.msra.mxu0 0.0
    %4722 = vmatprep.subr.mxu0 0.0
    %4723 = vmatpush1.msra.mxu0 0.0
    %4724 = vmatprep.subr.mxu0 0.0
    %4725 = vmatpush1.msra.mxu0 0.0
    %4726 = vmatprep.subr.mxu0 0.0
    %4727 = vmatpush1.msra.mxu0 0.0
    %4728 = vmatprep.subr.mxu0 %v4628
    %4729 = vmatpush1.msra.mxu0 %v4627
    %4730 = vmatprep.subr.mxu0 %v4624
    %4731 = vmatpush1.msra.mxu0 %v4623
    %4732 = vmatprep.subr.mxu0 %v4620
    %4733 = vmatpush1.msra.mxu0 %v4619
    %4734 = vmatprep.subr.mxu0 %v4616
    %4735 = vmatpush1.msra.mxu0 %v4615
    %4736 = vmatprep.subr.mxu0 %v4612
    %4737 = vmatpush1.msra.mxu0 %v4611
    %4738 = vmatprep.subr.mxu0 %v4608
    %4739 = vmatpush1.msra.mxu0 %v4607
    %4740 = vmatprep.subr.mxu0 %v4604
    %4741 = vmatpush1.msra.mxu0 %v4603
    %4742 = vmatprep.subr.mxu0 %v4600
    %4743 = vmatpush1.msra.mxu0 %v4599
    %4744 = vmatprep.subr.mxu0 0.0
    %4745 = vmatpush2.msra.mxu0 0.0
    %4746 = vmatprep.subr.mxu0 0.0
    %4747 = vmatpush2.msra.mxu0 0.0
    %4748 = vmatprep.subr.mxu0 0.0
    %4749 = vmatpush2.msra.mxu0 0.0
    %4750 = vmatprep.subr.mxu0 0.0
    %4751 = vmatpush2.msra.mxu0 0.0
    %4752 = vmatprep.subr.mxu0 0.0
    %4753 = vmatpush2.msra.mxu0 0.0
    %4754 = vmatprep.subr.mxu0 0.0
    %4755 = vmatpush2.msra.mxu0 0.0
    %4756 = vmatprep.subr.mxu0 0.0
    %4757 = vmatpush2.msra.mxu0 0.0
    %4758 = vmatprep.subr.mxu0 0.0
    %4759 = vmatpush2.msra.mxu0 0.0
    %4760 = vmatprep.subr.mxu0 0.0
    %4761 = vmatpush2.msra.mxu0 0.0
    %4762 = vmatprep.subr.mxu0 0.0
    %4763 = vmatpush2.msra.mxu0 0.0
    %4764 = vmatprep.subr.mxu0 0.0
    %4765 = vmatpush2.msra.mxu0 0.0
    %4766 = vmatprep.subr.mxu0 0.0
    %4767 = vmatpush2.msra.mxu0 0.0
    %4768 = vmatprep.subr.mxu0 0.0
    %4769 = vmatpush2.msra.mxu0 0.0
    %4770 = vmatprep.subr.mxu0 0.0
    %4771 = vmatpush2.msra.mxu0 0.0
    %4772 = vmatprep.subr.mxu0 0.0
    %4773 = vmatpush2.msra.mxu0 0.0
    %4774 = vmatprep.subr.mxu0 0.0
    %4775 = vmatpush2.msra.mxu0 0.0
    %4776 = vmatprep.mubr.f32.mxu0 0.0
    %4777 = vmatmul.mubr.f32.gmra.mxu0 %v4630
    %v4778 = vpop.f32.mrf.mxu0
    %v4779 = vadd.f32 0.0, %v4778
    %v4780 = vpop.f32.mrf.mxu0
    %v4781 = vadd.f32 0.0, %v4780
    %4782 = vmatprep.mubr.f32.mxu0 0.0
    %4783 = vmatmul.mubr.f32.gmra.mxu0 %v4633
    %v4784 = vpop.f32.mrf.mxu0
    %v4785 = vadd.f32 0.0, %v4784
    %v4786 = vpop.f32.mrf.mxu0
    %v4787 = vadd.f32 0.0, %v4786
    %4788 = vdwg.mxu0
    %v4789 = vadd.f32 %v4269, %v4702
    %v4790 = vadd.f32 %v4270, %v4704
    %v4791 = vadd.f32 %v4271, %v4779
    %v4792 = vadd.f32 %v4272, %v4781
    %v4793 = vadd.f32 %v4273, %v4708
    %v4794 = vadd.f32 %v4274, %v4710
    %v4795 = vadd.f32 %v4275, %v4785
    %v4796 = vadd.f32 %v4276, %v4787
    %4797 = vrot.lane.b32.xlu0 %v443, 64
    %v4798 = vpop.permute.xlu0 %4797
    %4799 = vrot.lane.b32.xlu0 %v1715, 64
    %v4800 = vpop.permute.xlu0 %4799
    %v4801 = vsel %vm2187, %v4798, 0
    %v4803 = vsel %vm2187, %v4800, 0
    %4805 = vmatprep.subr.mxu0 0.0
    %4806 = vmatpush1.xpose.msra.mxu0 0.0
    %4807 = vmatprep.subr.mxu0 0.0
    %4808 = vmatpush1.xpose.msra.mxu0 0.0
    %4809 = vmatprep.subr.mxu0 0.0
    %4810 = vmatpush1.xpose.msra.mxu0 0.0
    %4811 = vmatprep.subr.mxu0 0.0
    %4812 = vmatpush1.xpose.msra.mxu0 0.0
    %4813 = vmatprep.subr.mxu0 0.0
    %4814 = vmatpush1.xpose.msra.mxu0 0.0
    %4815 = vmatprep.subr.mxu0 0.0
    %4816 = vmatpush1.xpose.msra.mxu0 0.0
    %4817 = vmatprep.subr.mxu0 0.0
    %4818 = vmatpush1.xpose.msra.mxu0 0.0
    %4819 = vmatprep.subr.mxu0 0.0
    %4820 = vmatpush1.xpose.msra.mxu0 0.0
    %4821 = vmatprep.subr.mxu0 0.0
    %4822 = vmatpush1.xpose.msra.mxu0 0.0
    %4823 = vmatprep.subr.mxu0 0.0
    %4824 = vmatpush1.xpose.msra.mxu0 0.0
    %4825 = vmatprep.subr.mxu0 0.0
    %4826 = vmatpush1.xpose.msra.mxu0 0.0
    %4827 = vmatprep.subr.mxu0 0.0
    %4828 = vmatpush1.xpose.msra.mxu0 0.0
    %4829 = vmatprep.subr.mxu0 0.0
    %4830 = vmatpush1.xpose.msra.mxu0 0.0
    %4831 = vmatprep.subr.mxu0 0.0
    %4832 = vmatpush1.xpose.msra.mxu0 0.0
    %4833 = vmatprep.subr.mxu0 0.0
    %4834 = vmatpush1.xpose.msra.mxu0 0.0
    %4835 = vmatprep.subr.mxu0 0.0
    %4836 = vmatpush1.xpose.msra.mxu0 %v4803
    %4837 = vmatprep.subr.mxu0 0.0
    %4838 = vmatpush2.xpose.msra.mxu0 0.0
    %4839 = vmatprep.subr.mxu0 0.0
    %4840 = vmatpush2.xpose.msra.mxu0 0.0
    %4841 = vmatprep.subr.mxu0 0.0
    %4842 = vmatpush2.xpose.msra.mxu0 0.0
    %4843 = vmatprep.subr.mxu0 0.0
    %4844 = vmatpush2.xpose.msra.mxu0 0.0
    %4845 = vmatprep.subr.mxu0 0.0
    %4846 = vmatpush2.xpose.msra.mxu0 0.0
    %4847 = vmatprep.subr.mxu0 0.0
    %4848 = vmatpush2.xpose.msra.mxu0 0.0
    %4849 = vmatprep.subr.mxu0 0.0
    %4850 = vmatpush2.xpose.msra.mxu0 0.0
    %4851 = vmatprep.subr.mxu0 0.0
    %4852 = vmatpush2.xpose.msra.mxu0 0.0
    %4853 = vmatprep.subr.mxu0 0.0
    %4854 = vmatpush2.xpose.msra.mxu0 0.0
    %4855 = vmatprep.subr.mxu0 0.0
    %4856 = vmatpush2.xpose.msra.mxu0 0.0
    %4857 = vmatprep.subr.mxu0 0.0
    %4858 = vmatpush2.xpose.msra.mxu0 0.0
    %4859 = vmatprep.subr.mxu0 0.0
    %4860 = vmatpush2.xpose.msra.mxu0 0.0
    %4861 = vmatprep.subr.mxu0 0.0
    %4862 = vmatpush2.xpose.msra.mxu0 0.0
    %4863 = vmatprep.subr.mxu0 0.0
    %4864 = vmatpush2.xpose.msra.mxu0 0.0
    %4865 = vmatprep.subr.mxu0 0.0
    %4866 = vmatpush2.xpose.msra.mxu0 0.0
    %4867 = vmatprep.subr.mxu0 0.0
    %4868 = vmatpush2.xpose.msra.mxu0 0.0
    %4869 = vmatprep.mubr.f32.mxu0 0.0
    %4870 = vmatmul.mubr.f32.gmra.mxu0 %v4801
    %v4871 = vpop.f32.mrf.mxu0
    %v4872 = vadd.f32 0.0, %v4871
    %v4873 = vpop.f32.mrf.mxu0
    %4874 = vdwg.mxu0
    %4875 = vrot.lane.b32.xlu0 %v449, 64
    %v4876 = vpop.permute.xlu0 %4875
    %4877 = vrot.lane.b32.xlu0 %v1721, 64
    %v4878 = vpop.permute.xlu0 %4877
    %v4879 = vsel %vm2187, %v4876, 0
    %v4881 = vsel %vm2187, %v4878, 0
    %4883 = vmatprep.subr.mxu0 0.0
    %4884 = vmatpush1.xpose.msra.mxu0 0.0
    %4885 = vmatprep.subr.mxu0 0.0
    %4886 = vmatpush1.xpose.msra.mxu0 0.0
    %4887 = vmatprep.subr.mxu0 0.0
    %4888 = vmatpush1.xpose.msra.mxu0 0.0
    %4889 = vmatprep.subr.mxu0 0.0
    %4890 = vmatpush1.xpose.msra.mxu0 0.0
    %4891 = vmatprep.subr.mxu0 0.0
    %4892 = vmatpush1.xpose.msra.mxu0 0.0
    %4893 = vmatprep.subr.mxu0 0.0
    %4894 = vmatpush1.xpose.msra.mxu0 0.0
    %4895 = vmatprep.subr.mxu0 0.0
    %4896 = vmatpush1.xpose.msra.mxu0 0.0
    %4897 = vmatprep.subr.mxu0 0.0
    %4898 = vmatpush1.xpose.msra.mxu0 0.0
    %4899 = vmatprep.subr.mxu0 0.0
    %4900 = vmatpush1.xpose.msra.mxu0 0.0
    %4901 = vmatprep.subr.mxu0 0.0
    %4902 = vmatpush1.xpose.msra.mxu0 0.0
    %4903 = vmatprep.subr.mxu0 0.0
    %4904 = vmatpush1.xpose.msra.mxu0 0.0
    %4905 = vmatprep.subr.mxu0 0.0
    %4906 = vmatpush1.xpose.msra.mxu0 0.0
    %4907 = vmatprep.subr.mxu0 0.0
    %4908 = vmatpush1.xpose.msra.mxu0 0.0
    %4909 = vmatprep.subr.mxu0 0.0
    %4910 = vmatpush1.xpose.msra.mxu0 0.0
    %4911 = vmatprep.subr.mxu0 0.0
    %4912 = vmatpush1.xpose.msra.mxu0 0.0
    %4913 = vmatprep.subr.mxu0 0.0
    %4914 = vmatpush1.xpose.msra.mxu0 %v4881
    %4915 = vmatprep.subr.mxu0 0.0
    %4916 = vmatpush2.xpose.msra.mxu0 0.0
    %4917 = vmatprep.subr.mxu0 0.0
    %4918 = vmatpush2.xpose.msra.mxu0 0.0
    %4919 = vmatprep.subr.mxu0 0.0
    %4920 = vmatpush2.xpose.msra.mxu0 0.0
    %4921 = vmatprep.subr.mxu0 0.0
    %4922 = vmatpush2.xpose.msra.mxu0 0.0
    %4923 = vmatprep.subr.mxu0 0.0
    %4924 = vmatpush2.xpose.msra.mxu0 0.0
    %4925 = vmatprep.subr.mxu0 0.0
    %4926 = vmatpush2.xpose.msra.mxu0 0.0
    %4927 = vmatprep.subr.mxu0 0.0
    %4928 = vmatpush2.xpose.msra.mxu0 0.0
    %4929 = vmatprep.subr.mxu0 0.0
    %4930 = vmatpush2.xpose.msra.mxu0 0.0
    %4931 = vmatprep.subr.mxu0 0.0
    %4932 = vmatpush2.xpose.msra.mxu0 0.0
    %4933 = vmatprep.subr.mxu0 0.0
    %4934 = vmatpush2.xpose.msra.mxu0 0.0
    %4935 = vmatprep.subr.mxu0 0.0
    %4936 = vmatpush2.xpose.msra.mxu0 0.0
    %4937 = vmatprep.subr.mxu0 0.0
    %4938 = vmatpush2.xpose.msra.mxu0 0.0
    %4939 = vmatprep.subr.mxu0 0.0
    %4940 = vmatpush2.xpose.msra.mxu0 0.0
    %4941 = vmatprep.subr.mxu0 0.0
    %4942 = vmatpush2.xpose.msra.mxu0 0.0
    %4943 = vmatprep.subr.mxu0 0.0
    %4944 = vmatpush2.xpose.msra.mxu0 0.0
    %4945 = vmatprep.subr.mxu0 0.0
    %4946 = vmatpush2.xpose.msra.mxu0 0.0
    %4947 = vmatprep.mubr.f32.mxu0 0.0
    %4948 = vmatmul.mubr.f32.gmra.mxu0 %v4879
    %v4949 = vpop.f32.mrf.mxu0
    %v4950 = vadd.f32 0.0, %v4949
    %v4951 = vpop.f32.mrf.mxu0
    %4952 = vdwg.mxu0
    %v4953 = vsel %vm2340, %v4872, -inf
    %4954 = vmax.xlane.f32.xlu0 %v4953
    %v4955 = vpop.xlane.xlu0 %4954
    %v4956 = vsel %vm2340, %v4950, -inf
    %4957 = vmax.xlane.f32.xlu0 %v4956
    %v4958 = vpop.xlane.xlu0 %4957
    %v4959 = vsub.f32 %v4872, %v4955
    %v4960 = vsub.f32 %v4950, %v4958
    %v4961 = vmul.f32 %v4959, 1.442695
    %v4962 = vpow.pop %v4961
    %v4963 = vmul.f32 %v4960, 1.442695
    %v4964 = vpow.pop %v4963
    %v4965 = vsel %vm2340, %v4962, 0.0
    %4966 = vadd.xlane.f32.xlu0 %v4965
    %v4967 = vpop.xlane.xlu0 %4966
    %v4968 = vsel %vm2340, %v4964, 0.0
    %4969 = vadd.xlane.f32.xlu0 %v4968
    %v4970 = vpop.xlane.xlu0 %4969
    %v4971 = vrcp.pop %v4967
    %v4972 = vrcp.pop %v4970
    %v4973 = vmul.f32 %v4962, %v4971
    %v4974 = vmul.f32 %v4964, %v4972
    %4976 = vrot.lane.b32.xlu0 %v2177, 64
    %v4977 = vpop.permute.xlu0 %4976
    %v4980 = vsel %vm2340, %v4973, 0
    %4982 = vmatprep.subr.mxu0 0.0
    %4983 = vmatpush1.msra.mxu0 0.0
    %4984 = vmatprep.subr.mxu0 0.0
    %4985 = vmatpush1.msra.mxu0 0.0
    %4986 = vmatprep.subr.mxu0 0.0
    %4987 = vmatpush1.msra.mxu0 0.0
    %4988 = vmatprep.subr.mxu0 0.0
    %4989 = vmatpush1.msra.mxu0 0.0
    %4990 = vmatprep.subr.mxu0 0.0
    %4991 = vmatpush1.msra.mxu0 0.0
    %4992 = vmatprep.subr.mxu0 0.0
    %4993 = vmatpush1.msra.mxu0 0.0
    %4994 = vmatprep.subr.mxu0 0.0
    %4995 = vmatpush1.msra.mxu0 0.0
    %4996 = vmatprep.subr.mxu0 0.0
    %4997 = vmatpush1.msra.mxu0 0.0
    %4998 = vmatprep.subr.mxu0 0.0
    %4999 = vmatpush1.msra.mxu0 0.0
    %5000 = vmatprep.subr.mxu0 0.0
    %5001 = vmatpush1.msra.mxu0 0.0
    %5002 = vmatprep.subr.mxu0 0.0
    %5003 = vmatpush1.msra.mxu0 0.0
    %5004 = vmatprep.subr.mxu0 0.0
    %5005 = vmatpush1.msra.mxu0 0.0
    %5006 = vmatprep.subr.mxu0 0.0
    %5007 = vmatpush1.msra.mxu0 0.0
    %5008 = vmatprep.subr.mxu0 0.0
    %5009 = vmatpush1.msra.mxu0 0.0
    %5010 = vmatprep.subr.mxu0 0.0
    %5011 = vmatpush1.msra.mxu0 0.0
    %5012 = vmatprep.subr.mxu0 0.0
    %5013 = vmatpush1.msra.mxu0 %v4977
    %5014 = vmatprep.subr.mxu0 0.0
    %5015 = vmatpush2.msra.mxu0 0.0
    %5016 = vmatprep.subr.mxu0 0.0
    %5017 = vmatpush2.msra.mxu0 0.0
    %5018 = vmatprep.subr.mxu0 0.0
    %5019 = vmatpush2.msra.mxu0 0.0
    %5020 = vmatprep.subr.mxu0 0.0
    %5021 = vmatpush2.msra.mxu0 0.0
    %5022 = vmatprep.subr.mxu0 0.0
    %5023 = vmatpush2.msra.mxu0 0.0
    %5024 = vmatprep.subr.mxu0 0.0
    %5025 = vmatpush2.msra.mxu0 0.0
    %5026 = vmatprep.subr.mxu0 0.0
    %5027 = vmatpush2.msra.mxu0 0.0
    %5028 = vmatprep.subr.mxu0 0.0
    %5029 = vmatpush2.msra.mxu0 0.0
    %5030 = vmatprep.subr.mxu0 0.0
    %5031 = vmatpush2.msra.mxu0 0.0
    %5032 = vmatprep.subr.mxu0 0.0
    %5033 = vmatpush2.msra.mxu0 0.0
    %5034 = vmatprep.subr.mxu0 0.0
    %5035 = vmatpush2.msra.mxu0 0.0
    %5036 = vmatprep.subr.mxu0 0.0
    %5037 = vmatpush2.msra.mxu0 0.0
    %5038 = vmatprep.subr.mxu0 0.0
    %5039 = vmatpush2.msra.mxu0 0.0
    %5040 = vmatprep.subr.mxu0 0.0
    %5041 = vmatpush2.msra.mxu0 0.0
    %5042 = vmatprep.subr.mxu0 0.0
    %5043 = vmatpush2.msra.mxu0 0.0
    %5044 = vmatprep.subr.mxu0 0.0
    %5045 = vmatpush2.msra.mxu0 0.0
    %5046 = vmatprep.mubr.f32.mxu0 0.0
    %5047 = vmatmul.mubr.f32.gmra.mxu0 %v4980
    %v5048 = vpop.f32.mrf.mxu0
    %v5049 = vadd.f32 0.0, %v5048
    %v5050 = vpop.f32.mrf.mxu0
    %5051 = vdwg.mxu0
    %5053 = vrot.lane.b32.xlu0 %v2183, 64
    %v5054 = vpop.permute.xlu0 %5053
    %v5057 = vsel %vm2340, %v4974, 0
    %5059 = vmatprep.subr.mxu0 0.0
    %5060 = vmatpush1.msra.mxu0 0.0
    %5061 = vmatprep.subr.mxu0 0.0
    %5062 = vmatpush1.msra.mxu0 0.0
    %5063 = vmatprep.subr.mxu0 0.0
    %5064 = vmatpush1.msra.mxu0 0.0
    %5065 = vmatprep.subr.mxu0 0.0
    %5066 = vmatpush1.msra.mxu0 0.0
    %5067 = vmatprep.subr.mxu0 0.0
    %5068 = vmatpush1.msra.mxu0 0.0
    %5069 = vmatprep.subr.mxu0 0.0
    %5070 = vmatpush1.msra.mxu0 0.0
    %5071 = vmatprep.subr.mxu0 0.0
    %5072 = vmatpush1.msra.mxu0 0.0
    %5073 = vmatprep.subr.mxu0 0.0
    %5074 = vmatpush1.msra.mxu0 0.0
    %5075 = vmatprep.subr.mxu0 0.0
    %5076 = vmatpush1.msra.mxu0 0.0
    %5077 = vmatprep.subr.mxu0 0.0
    %5078 = vmatpush1.msra.mxu0 0.0
    %5079 = vmatprep.subr.mxu0 0.0
    %5080 = vmatpush1.msra.mxu0 0.0
    %5081 = vmatprep.subr.mxu0 0.0
    %5082 = vmatpush1.msra.mxu0 0.0
    %5083 = vmatprep.subr.mxu0 0.0
    %5084 = vmatpush1.msra.mxu0 0.0
    %5085 = vmatprep.subr.mxu0 0.0
    %5086 = vmatpush1.msra.mxu0 0.0
    %5087 = vmatprep.subr.mxu0 0.0
    %5088 = vmatpush1.msra.mxu0 0.0
    %5089 = vmatprep.subr.mxu0 0.0
    %5090 = vmatpush1.msra.mxu0 %v5054
    %5091 = vmatprep.subr.mxu0 0.0
    %5092 = vmatpush2.msra.mxu0 0.0
    %5093 = vmatprep.subr.mxu0 0.0
    %5094 = vmatpush2.msra.mxu0 0.0
    %5095 = vmatprep.subr.mxu0 0.0
    %5096 = vmatpush2.msra.mxu0 0.0
    %5097 = vmatprep.subr.mxu0 0.0
    %5098 = vmatpush2.msra.mxu0 0.0
    %5099 = vmatprep.subr.mxu0 0.0
    %5100 = vmatpush2.msra.mxu0 0.0
    %5101 = vmatprep.subr.mxu0 0.0
    %5102 = vmatpush2.msra.mxu0 0.0
    %5103 = vmatprep.subr.mxu0 0.0
    %5104 = vmatpush2.msra.mxu0 0.0
    %5105 = vmatprep.subr.mxu0 0.0
    %5106 = vmatpush2.msra.mxu0 0.0
    %5107 = vmatprep.subr.mxu0 0.0
    %5108 = vmatpush2.msra.mxu0 0.0
    %5109 = vmatprep.subr.mxu0 0.0
    %5110 = vmatpush2.msra.mxu0 0.0
    %5111 = vmatprep.subr.mxu0 0.0
    %5112 = vmatpush2.msra.mxu0 0.0
    %5113 = vmatprep.subr.mxu0 0.0
    %5114 = vmatpush2.msra.mxu0 0.0
    %5115 = vmatprep.subr.mxu0 0.0
    %5116 = vmatpush2.msra.mxu0 0.0
    %5117 = vmatprep.subr.mxu0 0.0
    %5118 = vmatpush2.msra.mxu0 0.0
    %5119 = vmatprep.subr.mxu0 0.0
    %5120 = vmatpush2.msra.mxu0 0.0
    %5121 = vmatprep.subr.mxu0 0.0
    %5122 = vmatpush2.msra.mxu0 0.0
    %5123 = vmatprep.mubr.f32.mxu0 0.0
    %5124 = vmatmul.mubr.f32.gmra.mxu0 %v5057
    %v5125 = vpop.f32.mrf.mxu0
    %v5126 = vadd.f32 0.0, %v5125
    %v5127 = vpop.f32.mrf.mxu0
    %5128 = vdwg.mxu0
    %v5129 = vld [vmem:[#allocation13 + $0x500] sm:$0xff]
    %v5130 = vld [vmem:[#allocation13 + $0x508] sm:$0xff]
    %v5131 = vld [vmem:[#allocation13 + $0x510] sm:$0xff]
    %v5132 = vld [vmem:[#allocation13 + $0x518] sm:$0xff]
    %v5133 = vld [vmem:[#allocation13 + $0x520] sm:$0xff]
    %v5134 = vld [vmem:[#allocation13 + $0x528] sm:$0xff]
    %v5135 = vld [vmem:[#allocation13 + $0x530] sm:$0xff]
    %v5136 = vld [vmem:[#allocation13 + $0x538] sm:$0xff]
    %v5137 = vld [vmem:[#allocation13 + $0x540] sm:$0xff]
    %v5138 = vld [vmem:[#allocation13 + $0x548] sm:$0xff]
    %v5139 = vld [vmem:[#allocation13 + $0x550] sm:$0xff]
    %v5140 = vld [vmem:[#allocation13 + $0x558] sm:$0xff]
    %v5141 = vld [vmem:[#allocation13 + $0x560] sm:$0xff]
    %v5142 = vld [vmem:[#allocation13 + $0x568] sm:$0xff]
    %v5143 = vld [vmem:[#allocation13 + $0x570] sm:$0xff]
    %v5144 = vld [vmem:[#allocation13 + $0x578] sm:$0xff]
    %v5145 = vld [vmem:[#allocation13 + $0x580] sm:$0xff]
    %v5146 = vld [vmem:[#allocation13 + $0x588] sm:$0xff]
    %v5147 = vld [vmem:[#allocation13 + $0x590] sm:$0xff]
    %v5148 = vld [vmem:[#allocation13 + $0x598] sm:$0xff]
    %v5149 = vld [vmem:[#allocation13 + $0x5a0] sm:$0xff]
    %v5150 = vld [vmem:[#allocation13 + $0x5a8] sm:$0xff]
    %v5151 = vld [vmem:[#allocation13 + $0x5b0] sm:$0xff]
    %v5152 = vld [vmem:[#allocation13 + $0x5b8] sm:$0xff]
    %v5153 = vld [vmem:[#allocation13 + $0x5c0] sm:$0xff]
    %v5154 = vld [vmem:[#allocation13 + $0x5c8] sm:$0xff]
    %v5155 = vld [vmem:[#allocation13 + $0x5d0] sm:$0xff]
    %v5156 = vld [vmem:[#allocation13 + $0x5d8] sm:$0xff]
    %v5157 = vld [vmem:[#allocation13 + $0x5e0] sm:$0xff]
    %v5158 = vld [vmem:[#allocation13 + $0x5e8] sm:$0xff]
    %v5159 = vld [vmem:[#allocation13 + $0x5f0] sm:$0xff]
    %v5160 = vld [vmem:[#allocation13 + $0x5f8] sm:$0xff]
    %v5162 = vsel %vm2187, %v5049, 0
    %v5165 = vsel %vm2187, %v5126, 0
    %5167 = vmatprep.subr.mxu0 0.0
    %5168 = vmatpush1.msra.mxu0 0.0
    %5169 = vmatprep.subr.mxu0 0.0
    %5170 = vmatpush1.msra.mxu0 0.0
    %5171 = vmatprep.subr.mxu0 0.0
    %5172 = vmatpush1.msra.mxu0 0.0
    %5173 = vmatprep.subr.mxu0 0.0
    %5174 = vmatpush1.msra.mxu0 0.0
    %5175 = vmatprep.subr.mxu0 0.0
    %5176 = vmatpush1.msra.mxu0 0.0
    %5177 = vmatprep.subr.mxu0 0.0
    %5178 = vmatpush1.msra.mxu0 0.0
    %5179 = vmatprep.subr.mxu0 0.0
    %5180 = vmatpush1.msra.mxu0 0.0
    %5181 = vmatprep.subr.mxu0 0.0
    %5182 = vmatpush1.msra.mxu0 0.0
    %5183 = vmatprep.subr.mxu0 %v5158
    %5184 = vmatpush1.msra.mxu0 %v5157
    %5185 = vmatprep.subr.mxu0 %v5154
    %5186 = vmatpush1.msra.mxu0 %v5153
    %5187 = vmatprep.subr.mxu0 %v5150
    %5188 = vmatpush1.msra.mxu0 %v5149
    %5189 = vmatprep.subr.mxu0 %v5146
    %5190 = vmatpush1.msra.mxu0 %v5145
    %5191 = vmatprep.subr.mxu0 %v5142
    %5192 = vmatpush1.msra.mxu0 %v5141
    %5193 = vmatprep.subr.mxu0 %v5138
    %5194 = vmatpush1.msra.mxu0 %v5137
    %5195 = vmatprep.subr.mxu0 %v5134
    %5196 = vmatpush1.msra.mxu0 %v5133
    %5197 = vmatprep.subr.mxu0 %v5130
    %5198 = vmatpush1.msra.mxu0 %v5129
    %5199 = vmatprep.subr.mxu0 0.0
    %5200 = vmatpush2.msra.mxu0 0.0
    %5201 = vmatprep.subr.mxu0 0.0
    %5202 = vmatpush2.msra.mxu0 0.0
    %5203 = vmatprep.subr.mxu0 0.0
    %5204 = vmatpush2.msra.mxu0 0.0
    %5205 = vmatprep.subr.mxu0 0.0
    %5206 = vmatpush2.msra.mxu0 0.0
    %5207 = vmatprep.subr.mxu0 0.0
    %5208 = vmatpush2.msra.mxu0 0.0
    %5209 = vmatprep.subr.mxu0 0.0
    %5210 = vmatpush2.msra.mxu0 0.0
    %5211 = vmatprep.subr.mxu0 0.0
    %5212 = vmatpush2.msra.mxu0 0.0
    %5213 = vmatprep.subr.mxu0 0.0
    %5214 = vmatpush2.msra.mxu0 0.0
    %5215 = vmatprep.subr.mxu0 0.0
    %5216 = vmatpush2.msra.mxu0 0.0
    %5217 = vmatprep.subr.mxu0 0.0
    %5218 = vmatpush2.msra.mxu0 0.0
    %5219 = vmatprep.subr.mxu0 0.0
    %5220 = vmatpush2.msra.mxu0 0.0
    %5221 = vmatprep.subr.mxu0 0.0
    %5222 = vmatpush2.msra.mxu0 0.0
    %5223 = vmatprep.subr.mxu0 0.0
    %5224 = vmatpush2.msra.mxu0 0.0
    %5225 = vmatprep.subr.mxu0 0.0
    %5226 = vmatpush2.msra.mxu0 0.0
    %5227 = vmatprep.subr.mxu0 0.0
    %5228 = vmatpush2.msra.mxu0 0.0
    %5229 = vmatprep.subr.mxu0 0.0
    %5230 = vmatpush2.msra.mxu0 0.0
    %5231 = vmatprep.mubr.f32.mxu0 0.0
    %5232 = vmatmul.mubr.f32.gmra.mxu0 %v5162
    %v5233 = vpop.f32.mrf.mxu0
    %v5234 = vadd.f32 0.0, %v5233
    %v5235 = vpop.f32.mrf.mxu0
    %v5236 = vadd.f32 0.0, %v5235
    %5237 = vmatprep.mubr.f32.mxu0 0.0
    %5238 = vmatmul.mubr.f32.gmra.mxu0 %v5165
    %v5239 = vpop.f32.mrf.mxu0
    %v5240 = vadd.f32 0.0, %v5239
    %v5241 = vpop.f32.mrf.mxu0
    %v5242 = vadd.f32 0.0, %v5241
    %5243 = vdwg.mxu0
    %5244 = vmatprep.subr.mxu0 0.0
    %5245 = vmatpush1.msra.mxu0 0.0
    %5246 = vmatprep.subr.mxu0 0.0
    %5247 = vmatpush1.msra.mxu0 0.0
    %5248 = vmatprep.subr.mxu0 0.0
    %5249 = vmatpush1.msra.mxu0 0.0
    %5250 = vmatprep.subr.mxu0 0.0
    %5251 = vmatpush1.msra.mxu0 0.0
    %5252 = vmatprep.subr.mxu0 0.0
    %5253 = vmatpush1.msra.mxu0 0.0
    %5254 = vmatprep.subr.mxu0 0.0
    %5255 = vmatpush1.msra.mxu0 0.0
    %5256 = vmatprep.subr.mxu0 0.0
    %5257 = vmatpush1.msra.mxu0 0.0
    %5258 = vmatprep.subr.mxu0 0.0
    %5259 = vmatpush1.msra.mxu0 0.0
    %5260 = vmatprep.subr.mxu0 %v5160
    %5261 = vmatpush1.msra.mxu0 %v5159
    %5262 = vmatprep.subr.mxu0 %v5156
    %5263 = vmatpush1.msra.mxu0 %v5155
    %5264 = vmatprep.subr.mxu0 %v5152
    %5265 = vmatpush1.msra.mxu0 %v5151
    %5266 = vmatprep.subr.mxu0 %v5148
    %5267 = vmatpush1.msra.mxu0 %v5147
    %5268 = vmatprep.subr.mxu0 %v5144
    %5269 = vmatpush1.msra.mxu0 %v5143
    %5270 = vmatprep.subr.mxu0 %v5140
    %5271 = vmatpush1.msra.mxu0 %v5139
    %5272 = vmatprep.subr.mxu0 %v5136
    %5273 = vmatpush1.msra.mxu0 %v5135
    %5274 = vmatprep.subr.mxu0 %v5132
    %5275 = vmatpush1.msra.mxu0 %v5131
    %5276 = vmatprep.subr.mxu0 0.0
    %5277 = vmatpush2.msra.mxu0 0.0
    %5278 = vmatprep.subr.mxu0 0.0
    %5279 = vmatpush2.msra.mxu0 0.0
    %5280 = vmatprep.subr.mxu0 0.0
    %5281 = vmatpush2.msra.mxu0 0.0
    %5282 = vmatprep.subr.mxu0 0.0
    %5283 = vmatpush2.msra.mxu0 0.0
    %5284 = vmatprep.subr.mxu0 0.0
    %5285 = vmatpush2.msra.mxu0 0.0
    %5286 = vmatprep.subr.mxu0 0.0
    %5287 = vmatpush2.msra.mxu0 0.0
    %5288 = vmatprep.subr.mxu0 0.0
    %5289 = vmatpush2.msra.mxu0 0.0
    %5290 = vmatprep.subr.mxu0 0.0
    %5291 = vmatpush2.msra.mxu0 0.0
    %5292 = vmatprep.subr.mxu0 0.0
    %5293 = vmatpush2.msra.mxu0 0.0
    %5294 = vmatprep.subr.mxu0 0.0
    %5295 = vmatpush2.msra.mxu0 0.0
    %5296 = vmatprep.subr.mxu0 0.0
    %5297 = vmatpush2.msra.mxu0 0.0
    %5298 = vmatprep.subr.mxu0 0.0
    %5299 = vmatpush2.msra.mxu0 0.0
    %5300 = vmatprep.subr.mxu0 0.0
    %5301 = vmatpush2.msra.mxu0 0.0
    %5302 = vmatprep.subr.mxu0 0.0
    %5303 = vmatpush2.msra.mxu0 0.0
    %5304 = vmatprep.subr.mxu0 0.0
    %5305 = vmatpush2.msra.mxu0 0.0
    %5306 = vmatprep.subr.mxu0 0.0
    %5307 = vmatpush2.msra.mxu0 0.0
    %5308 = vmatprep.mubr.f32.mxu0 0.0
    %5309 = vmatmul.mubr.f32.gmra.mxu0 %v5162
    %v5310 = vpop.f32.mrf.mxu0
    %v5311 = vadd.f32 0.0, %v5310
    %v5312 = vpop.f32.mrf.mxu0
    %v5313 = vadd.f32 0.0, %v5312
    %5314 = vmatprep.mubr.f32.mxu0 0.0
    %5315 = vmatmul.mubr.f32.gmra.mxu0 %v5165
    %v5316 = vpop.f32.mrf.mxu0
    %v5317 = vadd.f32 0.0, %v5316
    %v5318 = vpop.f32.mrf.mxu0
    %v5319 = vadd.f32 0.0, %v5318
    %5320 = vdwg.mxu0
    %v5321 = vadd.f32 %v4789, %v5234
    %v5322 = vadd.f32 %v4790, %v5236
    %v5323 = vadd.f32 %v4791, %v5311
    %v5324 = vadd.f32 %v4792, %v5313
    %v5325 = vadd.f32 %v4793, %v5240
    %v5326 = vadd.f32 %v4794, %v5242
    %v5327 = vadd.f32 %v4795, %v5317
    %v5328 = vadd.f32 %v4796, %v5319
    %v5330 = vsel %vm2187, %v445, 0
    %v5333 = vsel %vm2187, %v1717, 0
    %5335 = vmatprep.subr.mxu0 0.0
    %5336 = vmatpush1.xpose.msra.mxu0 0.0
    %5337 = vmatprep.subr.mxu0 0.0
    %5338 = vmatpush1.xpose.msra.mxu0 0.0
    %5339 = vmatprep.subr.mxu0 0.0
    %5340 = vmatpush1.xpose.msra.mxu0 0.0
    %5341 = vmatprep.subr.mxu0 0.0
    %5342 = vmatpush1.xpose.msra.mxu0 0.0
    %5343 = vmatprep.subr.mxu0 0.0
    %5344 = vmatpush1.xpose.msra.mxu0 0.0
    %5345 = vmatprep.subr.mxu0 0.0
    %5346 = vmatpush1.xpose.msra.mxu0 0.0
    %5347 = vmatprep.subr.mxu0 0.0
    %5348 = vmatpush1.xpose.msra.mxu0 0.0
    %5349 = vmatprep.subr.mxu0 0.0
    %5350 = vmatpush1.xpose.msra.mxu0 0.0
    %5351 = vmatprep.subr.mxu0 0.0
    %5352 = vmatpush1.xpose.msra.mxu0 0.0
    %5353 = vmatprep.subr.mxu0 0.0
    %5354 = vmatpush1.xpose.msra.mxu0 0.0
    %5355 = vmatprep.subr.mxu0 0.0
    %5356 = vmatpush1.xpose.msra.mxu0 0.0
    %5357 = vmatprep.subr.mxu0 0.0
    %5358 = vmatpush1.xpose.msra.mxu0 0.0
    %5359 = vmatprep.subr.mxu0 0.0
    %5360 = vmatpush1.xpose.msra.mxu0 0.0
    %5361 = vmatprep.subr.mxu0 0.0
    %5362 = vmatpush1.xpose.msra.mxu0 0.0
    %5363 = vmatprep.subr.mxu0 0.0
    %5364 = vmatpush1.xpose.msra.mxu0 0.0
    %5365 = vmatprep.subr.mxu0 0.0
    %5366 = vmatpush1.xpose.msra.mxu0 %v5333
    %5367 = vmatprep.subr.mxu0 0.0
    %5368 = vmatpush2.xpose.msra.mxu0 0.0
    %5369 = vmatprep.subr.mxu0 0.0
    %5370 = vmatpush2.xpose.msra.mxu0 0.0
    %5371 = vmatprep.subr.mxu0 0.0
    %5372 = vmatpush2.xpose.msra.mxu0 0.0
    %5373 = vmatprep.subr.mxu0 0.0
    %5374 = vmatpush2.xpose.msra.mxu0 0.0
    %5375 = vmatprep.subr.mxu0 0.0
    %5376 = vmatpush2.xpose.msra.mxu0 0.0
    %5377 = vmatprep.subr.mxu0 0.0
    %5378 = vmatpush2.xpose.msra.mxu0 0.0
    %5379 = vmatprep.subr.mxu0 0.0
    %5380 = vmatpush2.xpose.msra.mxu0 0.0
    %5381 = vmatprep.subr.mxu0 0.0
    %5382 = vmatpush2.xpose.msra.mxu0 0.0
    %5383 = vmatprep.subr.mxu0 0.0
    %5384 = vmatpush2.xpose.msra.mxu0 0.0
    %5385 = vmatprep.subr.mxu0 0.0
    %5386 = vmatpush2.xpose.msra.mxu0 0.0
    %5387 = vmatprep.subr.mxu0 0.0
    %5388 = vmatpush2.xpose.msra.mxu0 0.0
    %5389 = vmatprep.subr.mxu0 0.0
    %5390 = vmatpush2.xpose.msra.mxu0 0.0
    %5391 = vmatprep.subr.mxu0 0.0
    %5392 = vmatpush2.xpose.msra.mxu0 0.0
    %5393 = vmatprep.subr.mxu0 0.0
    %5394 = vmatpush2.xpose.msra.mxu0 0.0
    %5395 = vmatprep.subr.mxu0 0.0
    %5396 = vmatpush2.xpose.msra.mxu0 0.0
    %5397 = vmatprep.subr.mxu0 0.0
    %5398 = vmatpush2.xpose.msra.mxu0 0.0
    %5399 = vmatprep.mubr.f32.mxu0 0.0
    %5400 = vmatmul.mubr.f32.gmra.mxu0 %v5330
    %v5401 = vpop.f32.mrf.mxu0
    %v5402 = vadd.f32 0.0, %v5401
    %v5403 = vpop.f32.mrf.mxu0
    %5404 = vdwg.mxu0
    %v5406 = vsel %vm2187, %v451, 0
    %v5409 = vsel %vm2187, %v1723, 0
    %5411 = vmatprep.subr.mxu0 0.0
    %5412 = vmatpush1.xpose.msra.mxu0 0.0
    %5413 = vmatprep.subr.mxu0 0.0
    %5414 = vmatpush1.xpose.msra.mxu0 0.0
    %5415 = vmatprep.subr.mxu0 0.0
    %5416 = vmatpush1.xpose.msra.mxu0 0.0
    %5417 = vmatprep.subr.mxu0 0.0
    %5418 = vmatpush1.xpose.msra.mxu0 0.0
    %5419 = vmatprep.subr.mxu0 0.0
    %5420 = vmatpush1.xpose.msra.mxu0 0.0
    %5421 = vmatprep.subr.mxu0 0.0
    %5422 = vmatpush1.xpose.msra.mxu0 0.0
    %5423 = vmatprep.subr.mxu0 0.0
    %5424 = vmatpush1.xpose.msra.mxu0 0.0
    %5425 = vmatprep.subr.mxu0 0.0
    %5426 = vmatpush1.xpose.msra.mxu0 0.0
    %5427 = vmatprep.subr.mxu0 0.0
    %5428 = vmatpush1.xpose.msra.mxu0 0.0
    %5429 = vmatprep.subr.mxu0 0.0
    %5430 = vmatpush1.xpose.msra.mxu0 0.0
    %5431 = vmatprep.subr.mxu0 0.0
    %5432 = vmatpush1.xpose.msra.mxu0 0.0
    %5433 = vmatprep.subr.mxu0 0.0
    %5434 = vmatpush1.xpose.msra.mxu0 0.0
    %5435 = vmatprep.subr.mxu0 0.0
    %5436 = vmatpush1.xpose.msra.mxu0 0.0
    %5437 = vmatprep.subr.mxu0 0.0
    %5438 = vmatpush1.xpose.msra.mxu0 0.0
    %5439 = vmatprep.subr.mxu0 0.0
    %5440 = vmatpush1.xpose.msra.mxu0 0.0
    %5441 = vmatprep.subr.mxu0 0.0
    %5442 = vmatpush1.xpose.msra.mxu0 %v5409
    %5443 = vmatprep.subr.mxu0 0.0
    %5444 = vmatpush2.xpose.msra.mxu0 0.0
    %5445 = vmatprep.subr.mxu0 0.0
    %5446 = vmatpush2.xpose.msra.mxu0 0.0
    %5447 = vmatprep.subr.mxu0 0.0
    %5448 = vmatpush2.xpose.msra.mxu0 0.0
    %5449 = vmatprep.subr.mxu0 0.0
    %5450 = vmatpush2.xpose.msra.mxu0 0.0
    %5451 = vmatprep.subr.mxu0 0.0
    %5452 = vmatpush2.xpose.msra.mxu0 0.0
    %5453 = vmatprep.subr.mxu0 0.0
    %5454 = vmatpush2.xpose.msra.mxu0 0.0
    %5455 = vmatprep.subr.mxu0 0.0
    %5456 = vmatpush2.xpose.msra.mxu0 0.0
    %5457 = vmatprep.subr.mxu0 0.0
    %5458 = vmatpush2.xpose.msra.mxu0 0.0
    %5459 = vmatprep.subr.mxu0 0.0
    %5460 = vmatpush2.xpose.msra.mxu0 0.0
    %5461 = vmatprep.subr.mxu0 0.0
    %5462 = vmatpush2.xpose.msra.mxu0 0.0
    %5463 = vmatprep.subr.mxu0 0.0
    %5464 = vmatpush2.xpose.msra.mxu0 0.0
    %5465 = vmatprep.subr.mxu0 0.0
    %5466 = vmatpush2.xpose.msra.mxu0 0.0
    %5467 = vmatprep.subr.mxu0 0.0
    %5468 = vmatpush2.xpose.msra.mxu0 0.0
    %5469 = vmatprep.subr.mxu0 0.0
    %5470 = vmatpush2.xpose.msra.mxu0 0.0
    %5471 = vmatprep.subr.mxu0 0.0
    %5472 = vmatpush2.xpose.msra.mxu0 0.0
    %5473 = vmatprep.subr.mxu0 0.0
    %5474 = vmatpush2.xpose.msra.mxu0 0.0
    %5475 = vmatprep.mubr.f32.mxu0 0.0
    %5476 = vmatmul.mubr.f32.gmra.mxu0 %v5406
    %v5477 = vpop.f32.mrf.mxu0
    %v5478 = vadd.f32 0.0, %v5477
    %v5479 = vpop.f32.mrf.mxu0
    %5480 = vdwg.mxu0
    %v5481 = vsel %vm2340, %v5402, -inf
    %5482 = vmax.xlane.f32.xlu0 %v5481
    %v5483 = vpop.xlane.xlu0 %5482
    %v5484 = vsel %vm2340, %v5478, -inf
    %5485 = vmax.xlane.f32.xlu0 %v5484
    %v5486 = vpop.xlane.xlu0 %5485
    %v5487 = vsub.f32 %v5402, %v5483
    %v5488 = vsub.f32 %v5478, %v5486
    %v5489 = vmul.f32 %v5487, 1.442695
    %v5490 = vpow.pop %v5489
    %v5491 = vmul.f32 %v5488, 1.442695
    %v5492 = vpow.pop %v5491
    %v5493 = vsel %vm2340, %v5490, 0.0
    %5494 = vadd.xlane.f32.xlu0 %v5493
    %v5495 = vpop.xlane.xlu0 %5494
    %v5496 = vsel %vm2340, %v5492, 0.0
    %5497 = vadd.xlane.f32.xlu0 %v5496
    %v5498 = vpop.xlane.xlu0 %5497
    %v5499 = vrcp.pop %v5495
    %v5500 = vrcp.pop %v5498
    %v5501 = vmul.f32 %v5490, %v5499
    %v5502 = vmul.f32 %v5492, %v5500
    %v5504 = vsel %vm2340, %v5501, 0
    %5506 = vmatprep.subr.mxu0 0.0
    %5507 = vmatpush1.msra.mxu0 0.0
    %5508 = vmatprep.subr.mxu0 0.0
    %5509 = vmatpush1.msra.mxu0 0.0
    %5510 = vmatprep.subr.mxu0 0.0
    %5511 = vmatpush1.msra.mxu0 0.0
    %5512 = vmatprep.subr.mxu0 0.0
    %5513 = vmatpush1.msra.mxu0 0.0
    %5514 = vmatprep.subr.mxu0 0.0
    %5515 = vmatpush1.msra.mxu0 0.0
    %5516 = vmatprep.subr.mxu0 0.0
    %5517 = vmatpush1.msra.mxu0 0.0
    %5518 = vmatprep.subr.mxu0 0.0
    %5519 = vmatpush1.msra.mxu0 0.0
    %5520 = vmatprep.subr.mxu0 0.0
    %5521 = vmatpush1.msra.mxu0 0.0
    %5522 = vmatprep.subr.mxu0 0.0
    %5523 = vmatpush1.msra.mxu0 0.0
    %5524 = vmatprep.subr.mxu0 0.0
    %5525 = vmatpush1.msra.mxu0 0.0
    %5526 = vmatprep.subr.mxu0 0.0
    %5527 = vmatpush1.msra.mxu0 0.0
    %5528 = vmatprep.subr.mxu0 0.0
    %5529 = vmatpush1.msra.mxu0 0.0
    %5530 = vmatprep.subr.mxu0 0.0
    %5531 = vmatpush1.msra.mxu0 0.0
    %5532 = vmatprep.subr.mxu0 0.0
    %5533 = vmatpush1.msra.mxu0 0.0
    %5534 = vmatprep.subr.mxu0 0.0
    %5535 = vmatpush1.msra.mxu0 0.0
    %5536 = vmatprep.subr.mxu0 0.0
    %5537 = vmatpush1.msra.mxu0 %v2179
    %5538 = vmatprep.subr.mxu0 0.0
    %5539 = vmatpush2.msra.mxu0 0.0
    %5540 = vmatprep.subr.mxu0 0.0
    %5541 = vmatpush2.msra.mxu0 0.0
    %5542 = vmatprep.subr.mxu0 0.0
    %5543 = vmatpush2.msra.mxu0 0.0
    %5544 = vmatprep.subr.mxu0 0.0
    %5545 = vmatpush2.msra.mxu0 0.0
    %5546 = vmatprep.subr.mxu0 0.0
    %5547 = vmatpush2.msra.mxu0 0.0
    %5548 = vmatprep.subr.mxu0 0.0
    %5549 = vmatpush2.msra.mxu0 0.0
    %5550 = vmatprep.subr.mxu0 0.0
    %5551 = vmatpush2.msra.mxu0 0.0
    %5552 = vmatprep.subr.mxu0 0.0
    %5553 = vmatpush2.msra.mxu0 0.0
    %5554 = vmatprep.subr.mxu0 0.0
    %5555 = vmatpush2.msra.mxu0 0.0
    %5556 = vmatprep.subr.mxu0 0.0
    %5557 = vmatpush2.msra.mxu0 0.0
    %5558 = vmatprep.subr.mxu0 0.0
    %5559 = vmatpush2.msra.mxu0 0.0
    %5560 = vmatprep.subr.mxu0 0.0
    %5561 = vmatpush2.msra.mxu0 0.0
    %5562 = vmatprep.subr.mxu0 0.0
    %5563 = vmatpush2.msra.mxu0 0.0
    %5564 = vmatprep.subr.mxu0 0.0
    %5565 = vmatpush2.msra.mxu0 0.0
    %5566 = vmatprep.subr.mxu0 0.0
    %5567 = vmatpush2.msra.mxu0 0.0
    %5568 = vmatprep.subr.mxu0 0.0
    %5569 = vmatpush2.msra.mxu0 0.0
    %5570 = vmatprep.mubr.f32.mxu0 0.0
    %5571 = vmatmul.mubr.f32.gmra.mxu0 %v5504
    %v5572 = vpop.f32.mrf.mxu0
    %v5573 = vadd.f32 0.0, %v5572
    %v5574 = vpop.f32.mrf.mxu0
    %5575 = vdwg.mxu0
    %v5577 = vsel %vm2340, %v5502, 0
    %5579 = vmatprep.subr.mxu0 0.0
    %5580 = vmatpush1.msra.mxu0 0.0
    %5581 = vmatprep.subr.mxu0 0.0
    %5582 = vmatpush1.msra.mxu0 0.0
    %5583 = vmatprep.subr.mxu0 0.0
    %5584 = vmatpush1.msra.mxu0 0.0
    %5585 = vmatprep.subr.mxu0 0.0
    %5586 = vmatpush1.msra.mxu0 0.0
    %5587 = vmatprep.subr.mxu0 0.0
    %5588 = vmatpush1.msra.mxu0 0.0
    %5589 = vmatprep.subr.mxu0 0.0
    %5590 = vmatpush1.msra.mxu0 0.0
    %5591 = vmatprep.subr.mxu0 0.0
    %5592 = vmatpush1.msra.mxu0 0.0
    %5593 = vmatprep.subr.mxu0 0.0
    %5594 = vmatpush1.msra.mxu0 0.0
    %5595 = vmatprep.subr.mxu0 0.0
    %5596 = vmatpush1.msra.mxu0 0.0
    %5597 = vmatprep.subr.mxu0 0.0
    %5598 = vmatpush1.msra.mxu0 0.0
    %5599 = vmatprep.subr.mxu0 0.0
    %5600 = vmatpush1.msra.mxu0 0.0
    %5601 = vmatprep.subr.mxu0 0.0
    %5602 = vmatpush1.msra.mxu0 0.0
    %5603 = vmatprep.subr.mxu0 0.0
    %5604 = vmatpush1.msra.mxu0 0.0
    %5605 = vmatprep.subr.mxu0 0.0
    %5606 = vmatpush1.msra.mxu0 0.0
    %5607 = vmatprep.subr.mxu0 0.0
    %5608 = vmatpush1.msra.mxu0 0.0
    %5609 = vmatprep.subr.mxu0 0.0
    %5610 = vmatpush1.msra.mxu0 %v2185
    %5611 = vmatprep.subr.mxu0 0.0
    %5612 = vmatpush2.msra.mxu0 0.0
    %5613 = vmatprep.subr.mxu0 0.0
    %5614 = vmatpush2.msra.mxu0 0.0
    %5615 = vmatprep.subr.mxu0 0.0
    %5616 = vmatpush2.msra.mxu0 0.0
    %5617 = vmatprep.subr.mxu0 0.0
    %5618 = vmatpush2.msra.mxu0 0.0
    %5619 = vmatprep.subr.mxu0 0.0
    %5620 = vmatpush2.msra.mxu0 0.0
    %5621 = vmatprep.subr.mxu0 0.0
    %5622 = vmatpush2.msra.mxu0 0.0
    %5623 = vmatprep.subr.mxu0 0.0
    %5624 = vmatpush2.msra.mxu0 0.0
    %5625 = vmatprep.subr.mxu0 0.0
    %5626 = vmatpush2.msra.mxu0 0.0
    %5627 = vmatprep.subr.mxu0 0.0
    %5628 = vmatpush2.msra.mxu0 0.0
    %5629 = vmatprep.subr.mxu0 0.0
    %5630 = vmatpush2.msra.mxu0 0.0
    %5631 = vmatprep.subr.mxu0 0.0
    %5632 = vmatpush2.msra.mxu0 0.0
    %5633 = vmatprep.subr.mxu0 0.0
    %5634 = vmatpush2.msra.mxu0 0.0
    %5635 = vmatprep.subr.mxu0 0.0
    %5636 = vmatpush2.msra.mxu0 0.0
    %5637 = vmatprep.subr.mxu0 0.0
    %5638 = vmatpush2.msra.mxu0 0.0
    %5639 = vmatprep.subr.mxu0 0.0
    %5640 = vmatpush2.msra.mxu0 0.0
    %5641 = vmatprep.subr.mxu0 0.0
    %5642 = vmatpush2.msra.mxu0 0.0
    %5643 = vmatprep.mubr.f32.mxu0 0.0
    %5644 = vmatmul.mubr.f32.gmra.mxu0 %v5577
    %v5645 = vpop.f32.mrf.mxu0
    %v5646 = vadd.f32 0.0, %v5645
    %v5647 = vpop.f32.mrf.mxu0
    %5648 = vdwg.mxu0
    %v5649 = vld [vmem:[#allocation13 + $0x600] sm:$0xff]
    %v5650 = vld [vmem:[#allocation13 + $0x608] sm:$0xff]
    %v5651 = vld [vmem:[#allocation13 + $0x610] sm:$0xff]
    %v5652 = vld [vmem:[#allocation13 + $0x618] sm:$0xff]
    %v5653 = vld [vmem:[#allocation13 + $0x620] sm:$0xff]
    %v5654 = vld [vmem:[#allocation13 + $0x628] sm:$0xff]
    %v5655 = vld [vmem:[#allocation13 + $0x630] sm:$0xff]
    %v5656 = vld [vmem:[#allocation13 + $0x638] sm:$0xff]
    %v5657 = vld [vmem:[#allocation13 + $0x640] sm:$0xff]
    %v5658 = vld [vmem:[#allocation13 + $0x648] sm:$0xff]
    %v5659 = vld [vmem:[#allocation13 + $0x650] sm:$0xff]
    %v5660 = vld [vmem:[#allocation13 + $0x658] sm:$0xff]
    %v5661 = vld [vmem:[#allocation13 + $0x660] sm:$0xff]
    %v5662 = vld [vmem:[#allocation13 + $0x668] sm:$0xff]
    %v5663 = vld [vmem:[#allocation13 + $0x670] sm:$0xff]
    %v5664 = vld [vmem:[#allocation13 + $0x678] sm:$0xff]
    %v5665 = vld [vmem:[#allocation13 + $0x680] sm:$0xff]
    %v5666 = vld [vmem:[#allocation13 + $0x688] sm:$0xff]
    %v5667 = vld [vmem:[#allocation13 + $0x690] sm:$0xff]
    %v5668 = vld [vmem:[#allocation13 + $0x698] sm:$0xff]
    %v5669 = vld [vmem:[#allocation13 + $0x6a0] sm:$0xff]
    %v5670 = vld [vmem:[#allocation13 + $0x6a8] sm:$0xff]
    %v5671 = vld [vmem:[#allocation13 + $0x6b0] sm:$0xff]
    %v5672 = vld [vmem:[#allocation13 + $0x6b8] sm:$0xff]
    %v5673 = vld [vmem:[#allocation13 + $0x6c0] sm:$0xff]
    %v5674 = vld [vmem:[#allocation13 + $0x6c8] sm:$0xff]
    %v5675 = vld [vmem:[#allocation13 + $0x6d0] sm:$0xff]
    %v5676 = vld [vmem:[#allocation13 + $0x6d8] sm:$0xff]
    %v5677 = vld [vmem:[#allocation13 + $0x6e0] sm:$0xff]
    %v5678 = vld [vmem:[#allocation13 + $0x6e8] sm:$0xff]
    %v5679 = vld [vmem:[#allocation13 + $0x6f0] sm:$0xff]
    %v5680 = vld [vmem:[#allocation13 + $0x6f8] sm:$0xff]
    %v5682 = vsel %vm2187, %v5573, 0
    %v5685 = vsel %vm2187, %v5646, 0
    %5687 = vmatprep.subr.mxu0 0.0
    %5688 = vmatpush1.msra.mxu0 0.0
    %5689 = vmatprep.subr.mxu0 0.0
    %5690 = vmatpush1.msra.mxu0 0.0
    %5691 = vmatprep.subr.mxu0 0.0
    %5692 = vmatpush1.msra.mxu0 0.0
    %5693 = vmatprep.subr.mxu0 0.0
    %5694 = vmatpush1.msra.mxu0 0.0
    %5695 = vmatprep.subr.mxu0 0.0
    %5696 = vmatpush1.msra.mxu0 0.0
    %5697 = vmatprep.subr.mxu0 0.0
    %5698 = vmatpush1.msra.mxu0 0.0
    %5699 = vmatprep.subr.mxu0 0.0
    %5700 = vmatpush1.msra.mxu0 0.0
    %5701 = vmatprep.subr.mxu0 0.0
    %5702 = vmatpush1.msra.mxu0 0.0
    %5703 = vmatprep.subr.mxu0 %v5678
    %5704 = vmatpush1.msra.mxu0 %v5677
    %5705 = vmatprep.subr.mxu0 %v5674
    %5706 = vmatpush1.msra.mxu0 %v5673
    %5707 = vmatprep.subr.mxu0 %v5670
    %5708 = vmatpush1.msra.mxu0 %v5669
    %5709 = vmatprep.subr.mxu0 %v5666
    %5710 = vmatpush1.msra.mxu0 %v5665
    %5711 = vmatprep.subr.mxu0 %v5662
    %5712 = vmatpush1.msra.mxu0 %v5661
    %5713 = vmatprep.subr.mxu0 %v5658
    %5714 = vmatpush1.msra.mxu0 %v5657
    %5715 = vmatprep.subr.mxu0 %v5654
    %5716 = vmatpush1.msra.mxu0 %v5653
    %5717 = vmatprep.subr.mxu0 %v5650
    %5718 = vmatpush1.msra.mxu0 %v5649
    %5719 = vmatprep.subr.mxu0 0.0
    %5720 = vmatpush2.msra.mxu0 0.0
    %5721 = vmatprep.subr.mxu0 0.0
    %5722 = vmatpush2.msra.mxu0 0.0
    %5723 = vmatprep.subr.mxu0 0.0
    %5724 = vmatpush2.msra.mxu0 0.0
    %5725 = vmatprep.subr.mxu0 0.0
    %5726 = vmatpush2.msra.mxu0 0.0
    %5727 = vmatprep.subr.mxu0 0.0
    %5728 = vmatpush2.msra.mxu0 0.0
    %5729 = vmatprep.subr.mxu0 0.0
    %5730 = vmatpush2.msra.mxu0 0.0
    %5731 = vmatprep.subr.mxu0 0.0
    %5732 = vmatpush2.msra.mxu0 0.0
    %5733 = vmatprep.subr.mxu0 0.0
    %5734 = vmatpush2.msra.mxu0 0.0
    %5735 = vmatprep.subr.mxu0 0.0
    %5736 = vmatpush2.msra.mxu0 0.0
    %5737 = vmatprep.subr.mxu0 0.0
    %5738 = vmatpush2.msra.mxu0 0.0
    %5739 = vmatprep.subr.mxu0 0.0
    %5740 = vmatpush2.msra.mxu0 0.0
    %5741 = vmatprep.subr.mxu0 0.0
    %5742 = vmatpush2.msra.mxu0 0.0
    %5743 = vmatprep.subr.mxu0 0.0
    %5744 = vmatpush2.msra.mxu0 0.0
    %5745 = vmatprep.subr.mxu0 0.0
    %5746 = vmatpush2.msra.mxu0 0.0
    %5747 = vmatprep.subr.mxu0 0.0
    %5748 = vmatpush2.msra.mxu0 0.0
    %5749 = vmatprep.subr.mxu0 0.0
    %5750 = vmatpush2.msra.mxu0 0.0
    %5751 = vmatprep.mubr.f32.mxu0 0.0
    %5752 = vmatmul.mubr.f32.gmra.mxu0 %v5682
    %v5753 = vpop.f32.mrf.mxu0
    %v5754 = vadd.f32 0.0, %v5753
    %v5755 = vpop.f32.mrf.mxu0
    %v5756 = vadd.f32 0.0, %v5755
    %5757 = vmatprep.mubr.f32.mxu0 0.0
    %5758 = vmatmul.mubr.f32.gmra.mxu0 %v5685
    %v5759 = vpop.f32.mrf.mxu0
    %v5760 = vadd.f32 0.0, %v5759
    %v5761 = vpop.f32.mrf.mxu0
    %v5762 = vadd.f32 0.0, %v5761
    %5763 = vdwg.mxu0
    %5764 = vmatprep.subr.mxu0 0.0
    %5765 = vmatpush1.msra.mxu0 0.0
    %5766 = vmatprep.subr.mxu0 0.0
    %5767 = vmatpush1.msra.mxu0 0.0
    %5768 = vmatprep.subr.mxu0 0.0
    %5769 = vmatpush1.msra.mxu0 0.0
    %5770 = vmatprep.subr.mxu0 0.0
    %5771 = vmatpush1.msra.mxu0 0.0
    %5772 = vmatprep.subr.mxu0 0.0
    %5773 = vmatpush1.msra.mxu0 0.0
    %5774 = vmatprep.subr.mxu0 0.0
    %5775 = vmatpush1.msra.mxu0 0.0
    %5776 = vmatprep.subr.mxu0 0.0
    %5777 = vmatpush1.msra.mxu0 0.0
    %5778 = vmatprep.subr.mxu0 0.0
    %5779 = vmatpush1.msra.mxu0 0.0
    %5780 = vmatprep.subr.mxu0 %v5680
    %5781 = vmatpush1.msra.mxu0 %v5679
    %5782 = vmatprep.subr.mxu0 %v5676
    %5783 = vmatpush1.msra.mxu0 %v5675
    %5784 = vmatprep.subr.mxu0 %v5672
    %5785 = vmatpush1.msra.mxu0 %v5671
    %5786 = vmatprep.subr.mxu0 %v5668
    %5787 = vmatpush1.msra.mxu0 %v5667
    %5788 = vmatprep.subr.mxu0 %v5664
    %5789 = vmatpush1.msra.mxu0 %v5663
    %5790 = vmatprep.subr.mxu0 %v5660
    %5791 = vmatpush1.msra.mxu0 %v5659
    %5792 = vmatprep.subr.mxu0 %v5656
    %5793 = vmatpush1.msra.mxu0 %v5655
    %5794 = vmatprep.subr.mxu0 %v5652
    %5795 = vmatpush1.msra.mxu0 %v5651
    %5796 = vmatprep.subr.mxu0 0.0
    %5797 = vmatpush2.msra.mxu0 0.0
    %5798 = vmatprep.subr.mxu0 0.0
    %5799 = vmatpush2.msra.mxu0 0.0
    %5800 = vmatprep.subr.mxu0 0.0
    %5801 = vmatpush2.msra.mxu0 0.0
    %5802 = vmatprep.subr.mxu0 0.0
    %5803 = vmatpush2.msra.mxu0 0.0
    %5804 = vmatprep.subr.mxu0 0.0
    %5805 = vmatpush2.msra.mxu0 0.0
    %5806 = vmatprep.subr.mxu0 0.0
    %5807 = vmatpush2.msra.mxu0 0.0
    %5808 = vmatprep.subr.mxu0 0.0
    %5809 = vmatpush2.msra.mxu0 0.0
    %5810 = vmatprep.subr.mxu0 0.0
    %5811 = vmatpush2.msra.mxu0 0.0
    %5812 = vmatprep.subr.mxu0 0.0
    %5813 = vmatpush2.msra.mxu0 0.0
    %5814 = vmatprep.subr.mxu0 0.0
    %5815 = vmatpush2.msra.mxu0 0.0
    %5816 = vmatprep.subr.mxu0 0.0
    %5817 = vmatpush2.msra.mxu0 0.0
    %5818 = vmatprep.subr.mxu0 0.0
    %5819 = vmatpush2.msra.mxu0 0.0
    %5820 = vmatprep.subr.mxu0 0.0
    %5821 = vmatpush2.msra.mxu0 0.0
    %5822 = vmatprep.subr.mxu0 0.0
    %5823 = vmatpush2.msra.mxu0 0.0
    %5824 = vmatprep.subr.mxu0 0.0
    %5825 = vmatpush2.msra.mxu0 0.0
    %5826 = vmatprep.subr.mxu0 0.0
    %5827 = vmatpush2.msra.mxu0 0.0
    %5828 = vmatprep.mubr.f32.mxu0 0.0
    %5829 = vmatmul.mubr.f32.gmra.mxu0 %v5682
    %v5830 = vpop.f32.mrf.mxu0
    %v5831 = vadd.f32 0.0, %v5830
    %v5832 = vpop.f32.mrf.mxu0
    %v5833 = vadd.f32 0.0, %v5832
    %5834 = vmatprep.mubr.f32.mxu0 0.0
    %5835 = vmatmul.mubr.f32.gmra.mxu0 %v5685
    %v5836 = vpop.f32.mrf.mxu0
    %v5837 = vadd.f32 0.0, %v5836
    %v5838 = vpop.f32.mrf.mxu0
    %v5839 = vadd.f32 0.0, %v5838
    %5840 = vdwg.mxu0
    %v5841 = vadd.f32 %v5321, %v5754
    %v5842 = vadd.f32 %v5322, %v5756
    %v5843 = vadd.f32 %v5323, %v5831
    %v5844 = vadd.f32 %v5324, %v5833
    %v5845 = vadd.f32 %v5325, %v5760
    %v5846 = vadd.f32 %v5326, %v5762
    %v5847 = vadd.f32 %v5327, %v5837
    %v5848 = vadd.f32 %v5328, %v5839
    %5849 = vrot.lane.b32.xlu0 %v445, 64
    %v5850 = vpop.permute.xlu0 %5849
    %5851 = vrot.lane.b32.xlu0 %v1717, 64
    %v5852 = vpop.permute.xlu0 %5851
    %v5853 = vsel %vm2187, %v5850, 0
    %v5855 = vsel %vm2187, %v5852, 0
    %5857 = vmatprep.subr.mxu0 0.0
    %5858 = vmatpush1.xpose.msra.mxu0 0.0
    %5859 = vmatprep.subr.mxu0 0.0
    %5860 = vmatpush1.xpose.msra.mxu0 0.0
    %5861 = vmatprep.subr.mxu0 0.0
    %5862 = vmatpush1.xpose.msra.mxu0 0.0
    %5863 = vmatprep.subr.mxu0 0.0
    %5864 = vmatpush1.xpose.msra.mxu0 0.0
    %5865 = vmatprep.subr.mxu0 0.0
    %5866 = vmatpush1.xpose.msra.mxu0 0.0
    %5867 = vmatprep.subr.mxu0 0.0
    %5868 = vmatpush1.xpose.msra.mxu0 0.0
    %5869 = vmatprep.subr.mxu0 0.0
    %5870 = vmatpush1.xpose.msra.mxu0 0.0
    %5871 = vmatprep.subr.mxu0 0.0
    %5872 = vmatpush1.xpose.msra.mxu0 0.0
    %5873 = vmatprep.subr.mxu0 0.0
    %5874 = vmatpush1.xpose.msra.mxu0 0.0
    %5875 = vmatprep.subr.mxu0 0.0
    %5876 = vmatpush1.xpose.msra.mxu0 0.0
    %5877 = vmatprep.subr.mxu0 0.0
    %5878 = vmatpush1.xpose.msra.mxu0 0.0
    %5879 = vmatprep.subr.mxu0 0.0
    %5880 = vmatpush1.xpose.msra.mxu0 0.0
    %5881 = vmatprep.subr.mxu0 0.0
    %5882 = vmatpush1.xpose.msra.mxu0 0.0
    %5883 = vmatprep.subr.mxu0 0.0
    %5884 = vmatpush1.xpose.msra.mxu0 0.0
    %5885 = vmatprep.subr.mxu0 0.0
    %5886 = vmatpush1.xpose.msra.mxu0 0.0
    %5887 = vmatprep.subr.mxu0 0.0
    %5888 = vmatpush1.xpose.msra.mxu0 %v5855
    %5889 = vmatprep.subr.mxu0 0.0
    %5890 = vmatpush2.xpose.msra.mxu0 0.0
    %5891 = vmatprep.subr.mxu0 0.0
    %5892 = vmatpush2.xpose.msra.mxu0 0.0
    %5893 = vmatprep.subr.mxu0 0.0
    %5894 = vmatpush2.xpose.msra.mxu0 0.0
    %5895 = vmatprep.subr.mxu0 0.0
    %5896 = vmatpush2.xpose.msra.mxu0 0.0
    %5897 = vmatprep.subr.mxu0 0.0
    %5898 = vmatpush2.xpose.msra.mxu0 0.0
    %5899 = vmatprep.subr.mxu0 0.0
    %5900 = vmatpush2.xpose.msra.mxu0 0.0
    %5901 = vmatprep.subr.mxu0 0.0
    %5902 = vmatpush2.xpose.msra.mxu0 0.0
    %5903 = vmatprep.subr.mxu0 0.0
    %5904 = vmatpush2.xpose.msra.mxu0 0.0
    %5905 = vmatprep.subr.mxu0 0.0
    %5906 = vmatpush2.xpose.msra.mxu0 0.0
    %5907 = vmatprep.subr.mxu0 0.0
    %5908 = vmatpush2.xpose.msra.mxu0 0.0
    %5909 = vmatprep.subr.mxu0 0.0
    %5910 = vmatpush2.xpose.msra.mxu0 0.0
    %5911 = vmatprep.subr.mxu0 0.0
    %5912 = vmatpush2.xpose.msra.mxu0 0.0
    %5913 = vmatprep.subr.mxu0 0.0
    %5914 = vmatpush2.xpose.msra.mxu0 0.0
    %5915 = vmatprep.subr.mxu0 0.0
    %5916 = vmatpush2.xpose.msra.mxu0 0.0
    %5917 = vmatprep.subr.mxu0 0.0
    %5918 = vmatpush2.xpose.msra.mxu0 0.0
    %5919 = vmatprep.subr.mxu0 0.0
    %5920 = vmatpush2.xpose.msra.mxu0 0.0
    %5921 = vmatprep.mubr.f32.mxu0 0.0
    %5922 = vmatmul.mubr.f32.gmra.mxu0 %v5853
    %v5923 = vpop.f32.mrf.mxu0
    %v5924 = vadd.f32 0.0, %v5923
    %v5925 = vpop.f32.mrf.mxu0
    %5926 = vdwg.mxu0
    %5927 = vrot.lane.b32.xlu0 %v451, 64
    %v5928 = vpop.permute.xlu0 %5927
    %5929 = vrot.lane.b32.xlu0 %v1723, 64
    %v5930 = vpop.permute.xlu0 %5929
    %v5931 = vsel %vm2187, %v5928, 0
    %v5933 = vsel %vm2187, %v5930, 0
    %5935 = vmatprep.subr.mxu0 0.0
    %5936 = vmatpush1.xpose.msra.mxu0 0.0
    %5937 = vmatprep.subr.mxu0 0.0
    %5938 = vmatpush1.xpose.msra.mxu0 0.0
    %5939 = vmatprep.subr.mxu0 0.0
    %5940 = vmatpush1.xpose.msra.mxu0 0.0
    %5941 = vmatprep.subr.mxu0 0.0
    %5942 = vmatpush1.xpose.msra.mxu0 0.0
    %5943 = vmatprep.subr.mxu0 0.0
    %5944 = vmatpush1.xpose.msra.mxu0 0.0
    %5945 = vmatprep.subr.mxu0 0.0
    %5946 = vmatpush1.xpose.msra.mxu0 0.0
    %5947 = vmatprep.subr.mxu0 0.0
    %5948 = vmatpush1.xpose.msra.mxu0 0.0
    %5949 = vmatprep.subr.mxu0 0.0
    %5950 = vmatpush1.xpose.msra.mxu0 0.0
    %5951 = vmatprep.subr.mxu0 0.0
    %5952 = vmatpush1.xpose.msra.mxu0 0.0
    %5953 = vmatprep.subr.mxu0 0.0
    %5954 = vmatpush1.xpose.msra.mxu0 0.0
    %5955 = vmatprep.subr.mxu0 0.0
    %5956 = vmatpush1.xpose.msra.mxu0 0.0
    %5957 = vmatprep.subr.mxu0 0.0
    %5958 = vmatpush1.xpose.msra.mxu0 0.0
    %5959 = vmatprep.subr.mxu0 0.0
    %5960 = vmatpush1.xpose.msra.mxu0 0.0
    %5961 = vmatprep.subr.mxu0 0.0
    %5962 = vmatpush1.xpose.msra.mxu0 0.0
    %5963 = vmatprep.subr.mxu0 0.0
    %5964 = vmatpush1.xpose.msra.mxu0 0.0
    %5965 = vmatprep.subr.mxu0 0.0
    %5966 = vmatpush1.xpose.msra.mxu0 %v5933
    %5967 = vmatprep.subr.mxu0 0.0
    %5968 = vmatpush2.xpose.msra.mxu0 0.0
    %5969 = vmatprep.subr.mxu0 0.0
    %5970 = vmatpush2.xpose.msra.mxu0 0.0
    %5971 = vmatprep.subr.mxu0 0.0
    %5972 = vmatpush2.xpose.msra.mxu0 0.0
    %5973 = vmatprep.subr.mxu0 0.0
    %5974 = vmatpush2.xpose.msra.mxu0 0.0
    %5975 = vmatprep.subr.mxu0 0.0
    %5976 = vmatpush2.xpose.msra.mxu0 0.0
    %5977 = vmatprep.subr.mxu0 0.0
    %5978 = vmatpush2.xpose.msra.mxu0 0.0
    %5979 = vmatprep.subr.mxu0 0.0
    %5980 = vmatpush2.xpose.msra.mxu0 0.0
    %5981 = vmatprep.subr.mxu0 0.0
    %5982 = vmatpush2.xpose.msra.mxu0 0.0
    %5983 = vmatprep.subr.mxu0 0.0
    %5984 = vmatpush2.xpose.msra.mxu0 0.0
    %5985 = vmatprep.subr.mxu0 0.0
    %5986 = vmatpush2.xpose.msra.mxu0 0.0
    %5987 = vmatprep.subr.mxu0 0.0
    %5988 = vmatpush2.xpose.msra.mxu0 0.0
    %5989 = vmatprep.subr.mxu0 0.0
    %5990 = vmatpush2.xpose.msra.mxu0 0.0
    %5991 = vmatprep.subr.mxu0 0.0
    %5992 = vmatpush2.xpose.msra.mxu0 0.0
    %5993 = vmatprep.subr.mxu0 0.0
    %5994 = vmatpush2.xpose.msra.mxu0 0.0
    %5995 = vmatprep.subr.mxu0 0.0
    %5996 = vmatpush2.xpose.msra.mxu0 0.0
    %5997 = vmatprep.subr.mxu0 0.0
    %5998 = vmatpush2.xpose.msra.mxu0 0.0
    %5999 = vmatprep.mubr.f32.mxu0 0.0
    %6000 = vmatmul.mubr.f32.gmra.mxu0 %v5931
    %v6001 = vpop.f32.mrf.mxu0
    %v6002 = vadd.f32 0.0, %v6001
    %v6003 = vpop.f32.mrf.mxu0
    %6004 = vdwg.mxu0
    %v6005 = vsel %vm2340, %v5924, -inf
    %6006 = vmax.xlane.f32.xlu0 %v6005
    %v6007 = vpop.xlane.xlu0 %6006
    %v6008 = vsel %vm2340, %v6002, -inf
    %6009 = vmax.xlane.f32.xlu0 %v6008
    %v6010 = vpop.xlane.xlu0 %6009
    %v6011 = vsub.f32 %v5924, %v6007
    %v6012 = vsub.f32 %v6002, %v6010
    %v6013 = vmul.f32 %v6011, 1.442695
    %v6014 = vpow.pop %v6013
    %v6015 = vmul.f32 %v6012, 1.442695
    %v6016 = vpow.pop %v6015
    %v6017 = vsel %vm2340, %v6014, 0.0
    %6018 = vadd.xlane.f32.xlu0 %v6017
    %v6019 = vpop.xlane.xlu0 %6018
    %v6020 = vsel %vm2340, %v6016, 0.0
    %6021 = vadd.xlane.f32.xlu0 %v6020
    %v6022 = vpop.xlane.xlu0 %6021
    %v6023 = vrcp.pop %v6019
    %v6024 = vrcp.pop %v6022
    %v6025 = vmul.f32 %v6014, %v6023
    %v6026 = vmul.f32 %v6016, %v6024
    %6028 = vrot.lane.b32.xlu0 %v2179, 64
    %v6029 = vpop.permute.xlu0 %6028
    %v6032 = vsel %vm2340, %v6025, 0
    %6034 = vmatprep.subr.mxu0 0.0
    %6035 = vmatpush1.msra.mxu0 0.0
    %6036 = vmatprep.subr.mxu0 0.0
    %6037 = vmatpush1.msra.mxu0 0.0
    %6038 = vmatprep.subr.mxu0 0.0
    %6039 = vmatpush1.msra.mxu0 0.0
    %6040 = vmatprep.subr.mxu0 0.0
    %6041 = vmatpush1.msra.mxu0 0.0
    %6042 = vmatprep.subr.mxu0 0.0
    %6043 = vmatpush1.msra.mxu0 0.0
    %6044 = vmatprep.subr.mxu0 0.0
    %6045 = vmatpush1.msra.mxu0 0.0
    %6046 = vmatprep.subr.mxu0 0.0
    %6047 = vmatpush1.msra.mxu0 0.0
    %6048 = vmatprep.subr.mxu0 0.0
    %6049 = vmatpush1.msra.mxu0 0.0
    %6050 = vmatprep.subr.mxu0 0.0
    %6051 = vmatpush1.msra.mxu0 0.0
    %6052 = vmatprep.subr.mxu0 0.0
    %6053 = vmatpush1.msra.mxu0 0.0
    %6054 = vmatprep.subr.mxu0 0.0
    %6055 = vmatpush1.msra.mxu0 0.0
    %6056 = vmatprep.subr.mxu0 0.0
    %6057 = vmatpush1.msra.mxu0 0.0
    %6058 = vmatprep.subr.mxu0 0.0
    %6059 = vmatpush1.msra.mxu0 0.0
    %6060 = vmatprep.subr.mxu0 0.0
    %6061 = vmatpush1.msra.mxu0 0.0
    %6062 = vmatprep.subr.mxu0 0.0
    %6063 = vmatpush1.msra.mxu0 0.0
    %6064 = vmatprep.subr.mxu0 0.0
    %6065 = vmatpush1.msra.mxu0 %v6029
    %6066 = vmatprep.subr.mxu0 0.0
    %6067 = vmatpush2.msra.mxu0 0.0
    %6068 = vmatprep.subr.mxu0 0.0
    %6069 = vmatpush2.msra.mxu0 0.0
    %6070 = vmatprep.subr.mxu0 0.0
    %6071 = vmatpush2.msra.mxu0 0.0
    %6072 = vmatprep.subr.mxu0 0.0
    %6073 = vmatpush2.msra.mxu0 0.0
    %6074 = vmatprep.subr.mxu0 0.0
    %6075 = vmatpush2.msra.mxu0 0.0
    %6076 = vmatprep.subr.mxu0 0.0
    %6077 = vmatpush2.msra.mxu0 0.0
    %6078 = vmatprep.subr.mxu0 0.0
    %6079 = vmatpush2.msra.mxu0 0.0
    %6080 = vmatprep.subr.mxu0 0.0
    %6081 = vmatpush2.msra.mxu0 0.0
    %6082 = vmatprep.subr.mxu0 0.0
    %6083 = vmatpush2.msra.mxu0 0.0
    %6084 = vmatprep.subr.mxu0 0.0
    %6085 = vmatpush2.msra.mxu0 0.0
    %6086 = vmatprep.subr.mxu0 0.0
    %6087 = vmatpush2.msra.mxu0 0.0
    %6088 = vmatprep.subr.mxu0 0.0
    %6089 = vmatpush2.msra.mxu0 0.0
    %6090 = vmatprep.subr.mxu0 0.0
    %6091 = vmatpush2.msra.mxu0 0.0
    %6092 = vmatprep.subr.mxu0 0.0
    %6093 = vmatpush2.msra.mxu0 0.0
    %6094 = vmatprep.subr.mxu0 0.0
    %6095 = vmatpush2.msra.mxu0 0.0
    %6096 = vmatprep.subr.mxu0 0.0
    %6097 = vmatpush2.msra.mxu0 0.0
    %6098 = vmatprep.mubr.f32.mxu0 0.0
    %6099 = vmatmul.mubr.f32.gmra.mxu0 %v6032
    %v6100 = vpop.f32.mrf.mxu0
    %v6101 = vadd.f32 0.0, %v6100
    %v6102 = vpop.f32.mrf.mxu0
    %6103 = vdwg.mxu0
    %6105 = vrot.lane.b32.xlu0 %v2185, 64
    %v6106 = vpop.permute.xlu0 %6105
    %v6109 = vsel %vm2340, %v6026, 0
    %6111 = vmatprep.subr.mxu0 0.0
    %6112 = vmatpush1.msra.mxu0 0.0
    %6113 = vmatprep.subr.mxu0 0.0
    %6114 = vmatpush1.msra.mxu0 0.0
    %6115 = vmatprep.subr.mxu0 0.0
    %6116 = vmatpush1.msra.mxu0 0.0
    %6117 = vmatprep.subr.mxu0 0.0
    %6118 = vmatpush1.msra.mxu0 0.0
    %6119 = vmatprep.subr.mxu0 0.0
    %6120 = vmatpush1.msra.mxu0 0.0
    %6121 = vmatprep.subr.mxu0 0.0
    %6122 = vmatpush1.msra.mxu0 0.0
    %6123 = vmatprep.subr.mxu0 0.0
    %6124 = vmatpush1.msra.mxu0 0.0
    %6125 = vmatprep.subr.mxu0 0.0
    %6126 = vmatpush1.msra.mxu0 0.0
    %6127 = vmatprep.subr.mxu0 0.0
    %6128 = vmatpush1.msra.mxu0 0.0
    %6129 = vmatprep.subr.mxu0 0.0
    %6130 = vmatpush1.msra.mxu0 0.0
    %6131 = vmatprep.subr.mxu0 0.0
    %6132 = vmatpush1.msra.mxu0 0.0
    %6133 = vmatprep.subr.mxu0 0.0
    %6134 = vmatpush1.msra.mxu0 0.0
    %6135 = vmatprep.subr.mxu0 0.0
    %6136 = vmatpush1.msra.mxu0 0.0
    %6137 = vmatprep.subr.mxu0 0.0
    %6138 = vmatpush1.msra.mxu0 0.0
    %6139 = vmatprep.subr.mxu0 0.0
    %6140 = vmatpush1.msra.mxu0 0.0
    %6141 = vmatprep.subr.mxu0 0.0
    %6142 = vmatpush1.msra.mxu0 %v6106
    %6143 = vmatprep.subr.mxu0 0.0
    %6144 = vmatpush2.msra.mxu0 0.0
    %6145 = vmatprep.subr.mxu0 0.0
    %6146 = vmatpush2.msra.mxu0 0.0
    %6147 = vmatprep.subr.mxu0 0.0
    %6148 = vmatpush2.msra.mxu0 0.0
    %6149 = vmatprep.subr.mxu0 0.0
    %6150 = vmatpush2.msra.mxu0 0.0
    %6151 = vmatprep.subr.mxu0 0.0
    %6152 = vmatpush2.msra.mxu0 0.0
    %6153 = vmatprep.subr.mxu0 0.0
    %6154 = vmatpush2.msra.mxu0 0.0
    %6155 = vmatprep.subr.mxu0 0.0
    %6156 = vmatpush2.msra.mxu0 0.0
    %6157 = vmatprep.subr.mxu0 0.0
    %6158 = vmatpush2.msra.mxu0 0.0
    %6159 = vmatprep.subr.mxu0 0.0
    %6160 = vmatpush2.msra.mxu0 0.0
    %6161 = vmatprep.subr.mxu0 0.0
    %6162 = vmatpush2.msra.mxu0 0.0
    %6163 = vmatprep.subr.mxu0 0.0
    %6164 = vmatpush2.msra.mxu0 0.0
    %6165 = vmatprep.subr.mxu0 0.0
    %6166 = vmatpush2.msra.mxu0 0.0
    %6167 = vmatprep.subr.mxu0 0.0
    %6168 = vmatpush2.msra.mxu0 0.0
    %6169 = vmatprep.subr.mxu0 0.0
    %6170 = vmatpush2.msra.mxu0 0.0
    %6171 = vmatprep.subr.mxu0 0.0
    %6172 = vmatpush2.msra.mxu0 0.0
    %6173 = vmatprep.subr.mxu0 0.0
    %6174 = vmatpush2.msra.mxu0 0.0
    %6175 = vmatprep.mubr.f32.mxu0 0.0
    %6176 = vmatmul.mubr.f32.gmra.mxu0 %v6109
    %v6177 = vpop.f32.mrf.mxu0
    %v6178 = vadd.f32 0.0, %v6177
    %v6179 = vpop.f32.mrf.mxu0
    %6180 = vdwg.mxu0
    %v6181 = vld [vmem:[#allocation13 + $0x700] sm:$0xff]
    %v6182 = vld [vmem:[#allocation13 + $0x708] sm:$0xff]
    %v6183 = vld [vmem:[#allocation13 + $0x710] sm:$0xff]
    %v6184 = vld [vmem:[#allocation13 + $0x718] sm:$0xff]
    %v6185 = vld [vmem:[#allocation13 + $0x720] sm:$0xff]
    %v6186 = vld [vmem:[#allocation13 + $0x728] sm:$0xff]
    %v6187 = vld [vmem:[#allocation13 + $0x730] sm:$0xff]
    %v6188 = vld [vmem:[#allocation13 + $0x738] sm:$0xff]
    %v6189 = vld [vmem:[#allocation13 + $0x740] sm:$0xff]
    %v6190 = vld [vmem:[#allocation13 + $0x748] sm:$0xff]
    %v6191 = vld [vmem:[#allocation13 + $0x750] sm:$0xff]
    %v6192 = vld [vmem:[#allocation13 + $0x758] sm:$0xff]
    %v6193 = vld [vmem:[#allocation13 + $0x760] sm:$0xff]
    %v6194 = vld [vmem:[#allocation13 + $0x768] sm:$0xff]
    %v6195 = vld [vmem:[#allocation13 + $0x770] sm:$0xff]
    %v6196 = vld [vmem:[#allocation13 + $0x778] sm:$0xff]
    %v6197 = vld [vmem:[#allocation13 + $0x780] sm:$0xff]
    %v6198 = vld [vmem:[#allocation13 + $0x788] sm:$0xff]
    %v6199 = vld [vmem:[#allocation13 + $0x790] sm:$0xff]
    %v6200 = vld [vmem:[#allocation13 + $0x798] sm:$0xff]
    %v6201 = vld [vmem:[#allocation13 + $0x7a0] sm:$0xff]
    %v6202 = vld [vmem:[#allocation13 + $0x7a8] sm:$0xff]
    %v6203 = vld [vmem:[#allocation13 + $0x7b0] sm:$0xff]
    %v6204 = vld [vmem:[#allocation13 + $0x7b8] sm:$0xff]
    %v6205 = vld [vmem:[#allocation13 + $0x7c0] sm:$0xff]
    %v6206 = vld [vmem:[#allocation13 + $0x7c8] sm:$0xff]
    %v6207 = vld [vmem:[#allocation13 + $0x7d0] sm:$0xff]
    %v6208 = vld [vmem:[#allocation13 + $0x7d8] sm:$0xff]
    %v6209 = vld [vmem:[#allocation13 + $0x7e0] sm:$0xff]
    %v6210 = vld [vmem:[#allocation13 + $0x7e8] sm:$0xff]
    %v6211 = vld [vmem:[#allocation13 + $0x7f0] sm:$0xff]
    %v6212 = vld [vmem:[#allocation13 + $0x7f8] sm:$0xff]
    %v6214 = vsel %vm2187, %v6101, 0
    %v6217 = vsel %vm2187, %v6178, 0
    %6219 = vmatprep.subr.mxu0 0.0
    %6220 = vmatpush1.msra.mxu0 0.0
    %6221 = vmatprep.subr.mxu0 0.0
    %6222 = vmatpush1.msra.mxu0 0.0
    %6223 = vmatprep.subr.mxu0 0.0
    %6224 = vmatpush1.msra.mxu0 0.0
    %6225 = vmatprep.subr.mxu0 0.0
    %6226 = vmatpush1.msra.mxu0 0.0
    %6227 = vmatprep.subr.mxu0 0.0
    %6228 = vmatpush1.msra.mxu0 0.0
    %6229 = vmatprep.subr.mxu0 0.0
    %6230 = vmatpush1.msra.mxu0 0.0
    %6231 = vmatprep.subr.mxu0 0.0
    %6232 = vmatpush1.msra.mxu0 0.0
    %6233 = vmatprep.subr.mxu0 0.0
    %6234 = vmatpush1.msra.mxu0 0.0
    %6235 = vmatprep.subr.mxu0 %v6210
    %6236 = vmatpush1.msra.mxu0 %v6209
    %6237 = vmatprep.subr.mxu0 %v6206
    %6238 = vmatpush1.msra.mxu0 %v6205
    %6239 = vmatprep.subr.mxu0 %v6202
    %6240 = vmatpush1.msra.mxu0 %v6201
    %6241 = vmatprep.subr.mxu0 %v6198
    %6242 = vmatpush1.msra.mxu0 %v6197
    %6243 = vmatprep.subr.mxu0 %v6194
    %6244 = vmatpush1.msra.mxu0 %v6193
    %6245 = vmatprep.subr.mxu0 %v6190
    %6246 = vmatpush1.msra.mxu0 %v6189
    %6247 = vmatprep.subr.mxu0 %v6186
    %6248 = vmatpush1.msra.mxu0 %v6185
    %6249 = vmatprep.subr.mxu0 %v6182
    %6250 = vmatpush1.msra.mxu0 %v6181
    %6251 = vmatprep.subr.mxu0 0.0
    %6252 = vmatpush2.msra.mxu0 0.0
    %6253 = vmatprep.subr.mxu0 0.0
    %6254 = vmatpush2.msra.mxu0 0.0
    %6255 = vmatprep.subr.mxu0 0.0
    %6256 = vmatpush2.msra.mxu0 0.0
    %6257 = vmatprep.subr.mxu0 0.0
    %6258 = vmatpush2.msra.mxu0 0.0
    %6259 = vmatprep.subr.mxu0 0.0
    %6260 = vmatpush2.msra.mxu0 0.0
    %6261 = vmatprep.subr.mxu0 0.0
    %6262 = vmatpush2.msra.mxu0 0.0
    %6263 = vmatprep.subr.mxu0 0.0
    %6264 = vmatpush2.msra.mxu0 0.0
    %6265 = vmatprep.subr.mxu0 0.0
    %6266 = vmatpush2.msra.mxu0 0.0
    %6267 = vmatprep.subr.mxu0 0.0
    %6268 = vmatpush2.msra.mxu0 0.0
    %6269 = vmatprep.subr.mxu0 0.0
    %6270 = vmatpush2.msra.mxu0 0.0
    %6271 = vmatprep.subr.mxu0 0.0
    %6272 = vmatpush2.msra.mxu0 0.0
    %6273 = vmatprep.subr.mxu0 0.0
    %6274 = vmatpush2.msra.mxu0 0.0
    %6275 = vmatprep.subr.mxu0 0.0
    %6276 = vmatpush2.msra.mxu0 0.0
    %6277 = vmatprep.subr.mxu0 0.0
    %6278 = vmatpush2.msra.mxu0 0.0
    %6279 = vmatprep.subr.mxu0 0.0
    %6280 = vmatpush2.msra.mxu0 0.0
    %6281 = vmatprep.subr.mxu0 0.0
    %6282 = vmatpush2.msra.mxu0 0.0
    %6283 = vmatprep.mubr.f32.mxu0 0.0
    %6284 = vmatmul.mubr.f32.gmra.mxu0 %v6214
    %v6285 = vpop.f32.mrf.mxu0
    %v6286 = vadd.f32 0.0, %v6285
    %v6287 = vpop.f32.mrf.mxu0
    %v6288 = vadd.f32 0.0, %v6287
    %6289 = vmatprep.mubr.f32.mxu0 0.0
    %6290 = vmatmul.mubr.f32.gmra.mxu0 %v6217
    %v6291 = vpop.f32.mrf.mxu0
    %v6292 = vadd.f32 0.0, %v6291
    %v6293 = vpop.f32.mrf.mxu0
    %v6294 = vadd.f32 0.0, %v6293
    %6295 = vdwg.mxu0
    %6296 = vmatprep.subr.mxu0 0.0
    %6297 = vmatpush1.msra.mxu0 0.0
    %6298 = vmatprep.subr.mxu0 0.0
    %6299 = vmatpush1.msra.mxu0 0.0
    %6300 = vmatprep.subr.mxu0 0.0
    %6301 = vmatpush1.msra.mxu0 0.0
    %6302 = vmatprep.subr.mxu0 0.0
    %6303 = vmatpush1.msra.mxu0 0.0
    %6304 = vmatprep.subr.mxu0 0.0
    %6305 = vmatpush1.msra.mxu0 0.0
    %6306 = vmatprep.subr.mxu0 0.0
    %6307 = vmatpush1.msra.mxu0 0.0
    %6308 = vmatprep.subr.mxu0 0.0
    %6309 = vmatpush1.msra.mxu0 0.0
    %6310 = vmatprep.subr.mxu0 0.0
    %6311 = vmatpush1.msra.mxu0 0.0
    %6312 = vmatprep.subr.mxu0 %v6212
    %6313 = vmatpush1.msra.mxu0 %v6211
    %6314 = vmatprep.subr.mxu0 %v6208
    %6315 = vmatpush1.msra.mxu0 %v6207
    %6316 = vmatprep.subr.mxu0 %v6204
    %6317 = vmatpush1.msra.mxu0 %v6203
    %6318 = vmatprep.subr.mxu0 %v6200
    %6319 = vmatpush1.msra.mxu0 %v6199
    %6320 = vmatprep.subr.mxu0 %v6196
    %6321 = vmatpush1.msra.mxu0 %v6195
    %6322 = vmatprep.subr.mxu0 %v6192
    %6323 = vmatpush1.msra.mxu0 %v6191
    %6324 = vmatprep.subr.mxu0 %v6188
    %6325 = vmatpush1.msra.mxu0 %v6187
    %6326 = vmatprep.subr.mxu0 %v6184
    %6327 = vmatpush1.msra.mxu0 %v6183
    %6328 = vmatprep.subr.mxu0 0.0
    %6329 = vmatpush2.msra.mxu0 0.0
    %6330 = vmatprep.subr.mxu0 0.0
    %6331 = vmatpush2.msra.mxu0 0.0
    %6332 = vmatprep.subr.mxu0 0.0
    %6333 = vmatpush2.msra.mxu0 0.0
    %6334 = vmatprep.subr.mxu0 0.0
    %6335 = vmatpush2.msra.mxu0 0.0
    %6336 = vmatprep.subr.mxu0 0.0
    %6337 = vmatpush2.msra.mxu0 0.0
    %6338 = vmatprep.subr.mxu0 0.0
    %6339 = vmatpush2.msra.mxu0 0.0
    %6340 = vmatprep.subr.mxu0 0.0
    %6341 = vmatpush2.msra.mxu0 0.0
    %6342 = vmatprep.subr.mxu0 0.0
    %6343 = vmatpush2.msra.mxu0 0.0
    %6344 = vmatprep.subr.mxu0 0.0
    %6345 = vmatpush2.msra.mxu0 0.0
    %6346 = vmatprep.subr.mxu0 0.0
    %6347 = vmatpush2.msra.mxu0 0.0
    %6348 = vmatprep.subr.mxu0 0.0
    %6349 = vmatpush2.msra.mxu0 0.0
    %6350 = vmatprep.subr.mxu0 0.0
    %6351 = vmatpush2.msra.mxu0 0.0
    %6352 = vmatprep.subr.mxu0 0.0
    %6353 = vmatpush2.msra.mxu0 0.0
    %6354 = vmatprep.subr.mxu0 0.0
    %6355 = vmatpush2.msra.mxu0 0.0
    %6356 = vmatprep.subr.mxu0 0.0
    %6357 = vmatpush2.msra.mxu0 0.0
    %6358 = vmatprep.subr.mxu0 0.0
    %6359 = vmatpush2.msra.mxu0 0.0
    %6360 = vmatprep.mubr.f32.mxu0 0.0
    %6361 = vmatmul.mubr.f32.gmra.mxu0 %v6214
    %v6362 = vpop.f32.mrf.mxu0
    %v6363 = vadd.f32 0.0, %v6362
    %v6364 = vpop.f32.mrf.mxu0
    %v6365 = vadd.f32 0.0, %v6364
    %6366 = vmatprep.mubr.f32.mxu0 0.0
    %6367 = vmatmul.mubr.f32.gmra.mxu0 %v6217
    %v6368 = vpop.f32.mrf.mxu0
    %v6369 = vadd.f32 0.0, %v6368
    %v6370 = vpop.f32.mrf.mxu0
    %v6371 = vadd.f32 0.0, %v6370
    %6372 = vdwg.mxu0
    %v6373 = vadd.f32 %v5841, %v6286
    %v6374 = vadd.f32 %v5842, %v6288
    %v6375 = vadd.f32 %v5843, %v6363
    %v6376 = vadd.f32 %v5844, %v6365
    %v6377 = vadd.f32 %v5845, %v6292
    %v6378 = vadd.f32 %v5846, %v6294
    %v6379 = vadd.f32 %v5847, %v6369
    %v6380 = vadd.f32 %v5848, %v6371
    %v6381 = vld [vmem:[#allocation14] sm:$0xf]
    %v6383 = vlaneseq
    %v6384 = vshrl.u32 %v6383, 7
    %v6385 = vsub.s32 0, %v6384
    %v6386 = vrot.slane %v6381, %v6385
    %v6387 = vlaneseq
    %v6388 = vshrl.u32 %v6387, 7
    %v6389 = vsub.s32 1, %v6388
    %v6390 = vrot.slane %v6381, %v6389
    %v6391 = vlaneseq
    %v6392 = vshrl.u32 %v6391, 7
    %v6393 = vsub.s32 2, %v6392
    %v6394 = vrot.slane %v6381, %v6393
    %v6395 = vlaneseq
    %v6396 = vshrl.u32 %v6395, 7
    %v6397 = vsub.s32 3, %v6396
    %v6398 = vrot.slane %v6381, %v6397
    %v6403 = vadd.f32 %v6373, %v6386
    %v6404 = vadd.f32 %v6374, %v6390
    %v6405 = vadd.f32 %v6375, %v6394
    %v6406 = vadd.f32 %v6376, %v6398
    %v6407 = vadd.f32 %v6377, %v6386
    %v6408 = vadd.f32 %v6378, %v6390
    %v6409 = vadd.f32 %v6379, %v6394
    %v6410 = vadd.f32 %v6380, %v6398
    %6411 = vst [vmem:[#allocation16] sm:$0xff] %v6403
    %6412 = vst [vmem:[#allocation16 + $0x8] sm:$0xff] %v6404
    %6413 = vst [vmem:[#allocation16 + $0x10] sm:$0xff] %v6405
    %6414 = vst [vmem:[#allocation16 + $0x18] sm:$0xff] %v6406
    %6415 = vst [vmem:[#allocation16 + $0x20] sm:$0xff] %v6407
    %6416 = vst [vmem:[#allocation16 + $0x28] sm:$0xff] %v6408
    %6417 = vst [vmem:[#allocation16 + $0x30] sm:$0xff] %v6409
    %6418 = vst [vmem:[#allocation16 + $0x38] sm:$0xff] %v6410
    // Predicated region
    $region66: #{tpu_custom_call.1} parent=1 // pred_check
      _
    $region67: #{tpu_custom_call.1} parent=1 // pred_check_branch
      %6420 = sbr.rel (0) target = $region69
    $region68: #{tpu_custom_call.1} parent=1 // pred_region
      %s6422 = ssub.s32 1024, 1024
      %6423 = vsyncadd [#allocation4], %s6422
      %s6424 = sshll.u32 [#allocation16], 4
      %s6425 = int_to_ptr.vmem [resolvable:$true] %s6424
      %6430 = dma.vmem_to_hbm [thread:$0]  %s6425, 1024, %s8, [#allocation4], 512, 512, 32
    $region69: #{tpu_custom_call.1} parent=1 // pred_fallthru
      _
    // Predicated region
    $region70: #{tpu_custom_call.1} parent=1 // pred_check
      _
    $region71: #{tpu_custom_call.1} parent=1 // pred_check_branch
      %6432 = sbr.rel (0) target = $region73
    $region72: #{tpu_custom_call.1} parent=1 // pred_region
      %6433 = dma.done [#allocation4], 1024
    $region73: #{tpu_custom_call.1} parent=1 // pred_fallthru
      _
    %6434 = vsyncpa [#allocation3], 1
    %6435 = vsyncpa [#allocation6], 1
    %6436 = vsyncpa [#allocation9], 1
    %6437 = vsyncpa [#allocation12], 1
    %6438 = vsyncpa [#allocation15], 1
    %6439 = vsyncpa [#allocation4], 1

</llo_original>
